<compile_context>
chip_gen: v6e
topology: v6e:2x2x1
jax: 0.10.0
libtpu: 0.0.40
codegen_flags: <defaults>
</compile_context>

<pallas_src>
import functools
import math

import jax
import jax.numpy as jnp
from jax.experimental import pallas as pl
from jax.experimental.pallas import tpu as pltpu

# ----------------------------- small FLAVA config -----------------------------
HID = 32          # hidden_size (FLAVA: 768)
NHEADS = 4        # num_attention_heads
HEAD = HID // NHEADS
NLAYERS = 2       # num_hidden_layers per encoder (FLAVA: 12/12/6)
INTER = 64        # intermediate_size
VOCAB = 100
MAXPOS = 32
TYPE_VOCAB = 2
NUM_LABELS = 3
EPS = 1e-12       # FLAVA layer_norm_eps
PATCH = 8
IMG = 16
CHANS = 3
NPATCH = (IMG // PATCH) ** 2          # 4 patches -> image seq = 5 (with CLS)
CPP = CHANS * PATCH * PATCH
NEG_INF = -1e9

_N_PREP = {"text": 3, "image": 5, "mm": 7}


# ------------------------------ in-kernel helpers ------------------------------
def _ln(x, g, b):
    mean = jnp.mean(x, axis=-1, keepdims=True)
    var = jnp.mean((x - mean) ** 2, axis=-1, keepdims=True)
    return (x - mean) * jax.lax.rsqrt(var + EPS) * g + b


def _gelu(x):   # exact (erf) GELU — matches nn.GELU()
    return 0.5 * x * (1.0 + jax.lax.erf(x * (1.0 / math.sqrt(2.0))))


def _bf(x):
    return x.astype(jnp.bfloat16)


# --------------------------- fused encoder (per modality) ----------------------
def _encoder_kernel(*refs, S, mode, pooling):
    """Grid = (batch, layer).  One step == one transformer layer for one batch
    element; the hidden state persists in a VMEM scratch across the layer axis.
    Layer 0 builds the encoder input (embedding LN / patch embed / mm concat);
    the last layer applies the final LN, pooler and classifier head."""
    n_prep = _N_PREP[mode]
    prep = refs[:n_prep]
    (bias_ref,
     wqkv_ref, bqkv_ref, wo_ref, bo_ref,
     ln1_g_ref, ln1_b_ref, ln2_g_ref, ln2_b_ref,
     wi_ref, bi_ref, wo2_ref, bo2_ref,
     fin_g_ref, fin_b_ref, pool_w_ref, pool_b_ref, head_w_ref, head_b_ref,
     hid_ref, logits_ref, h_scratch) = refs[n_prep:]

    l = pl.program_id(1)

    # ---- layer 0: build the encoder input for this batch element ----
    @pl.when(l == 0)
    def _():
        if mode == "text":
            emb_ref, iln_g_ref, iln_b_ref = prep
            x0 = _ln(emb_ref[0], iln_g_ref[...], iln_b_ref[...])        # (S, H)
        elif mode == "image":
            patch_ref, pw_ref, pb_ref, cls_ref, pos_ref = prep
            pe = jnp.dot(_bf(patch_ref[0]), pw_ref[...],
                         preferred_element_type=jnp.float32) + pb_ref[...]
            pos = pos_ref[...]                                          # (S, H)
            x0 = jnp.concatenate([cls_ref[...] + pos[0:1, :],
                                  pe + pos[1:, :]], axis=0)
        else:  # "mm"
            imgh_ref, txth_ref, iw_ref, ib_ref, tw_ref, tb_ref, cls_ref = prep
            img_p = jnp.dot(_bf(imgh_ref[0]), iw_ref[...],
                            preferred_element_type=jnp.float32) + ib_ref[...]
            txt_p = jnp.dot(_bf(txth_ref[0]), tw_ref[...],
                            preferred_element_type=jnp.float32) + tb_ref[...]
            x0 = jnp.concatenate([cls_ref[...], img_p, txt_p], axis=0)
        h_scratch[...] = x0

    x = h_scratch[...]                                                  # (S, H) f32

    # ---- attention block (pre-LN); 1/sqrt(HEAD) folded into Wq/bq ----
    h = _ln(x, ln1_g_ref[0], ln1_b_ref[0])
    qkv = jnp.dot(_bf(h), wqkv_ref[0],
                  preferred_element_type=jnp.float32) + bqkv_ref[0]     # (S, 3H)

    bias = bias_ref[0]                                                  # (1, S)
    scores = []
    for hh in range(NHEADS):
        qh = _bf(qkv[:, hh * HEAD:(hh + 1) * HEAD])
        kh = _bf(qkv[:, HID + hh * HEAD:HID + (hh + 1) * HEAD])
        scores.append(jax.lax.dot_general(qh, kh, (((1,), (1,)), ((), ())),
                                          preferred_element_type=jnp.float32))
    # single fused softmax over all heads (one max/exp/sum/reciprocal chain)
    s_all = jnp.concatenate(scores, axis=0) + bias                      # (nH*S, S)
    s_all = s_all - jnp.max(s_all, axis=-1, keepdims=True)
    p_all = jnp.exp(s_all)
    p_all = p_all * pl.reciprocal(jnp.sum(p_all, axis=-1, keepdims=True),
                                  approx=True)

    ctx_parts = []
    for hh in range(NHEADS):
        vh = _bf(qkv[:, 2 * HID + hh * HEAD:2 * HID + (hh + 1) * HEAD])
        ph = _bf(p_all[hh * S:(hh + 1) * S, :])
        ctx_parts.append(jnp.dot(ph, vh, preferred_element_type=jnp.float32))
    ctx = jnp.concatenate(ctx_parts, axis=-1)                           # (S, H)

    attn_out = jnp.dot(_bf(ctx), wo_ref[0],
                       preferred_element_type=jnp.float32) + bo_ref[0]
    x = x + attn_out                                                    # residual 1

    # ---- MLP block (pre-LN) ----
    h2 = _ln(x, ln2_g_ref[0], ln2_b_ref[0])
    inter = jnp.dot(_bf(h2), wi_ref[0],
                    preferred_element_type=jnp.float32) + bi_ref[0]
    inter = _gelu(inter)
    mlp = jnp.dot(_bf(inter), wo2_ref[0],
                  preferred_element_type=jnp.float32) + bo2_ref[0]
    x = x + mlp                                                         # residual 2
    h_scratch[...] = x

    # ---- last layer: final LayerNorm, hidden out, tanh pooler, classifier ----
    @pl.when(l == pl.num_programs(1) - 1)
    def _():
        y = _ln(x, fin_g_ref[...], fin_b_ref[...])
        hid_ref[0] = y
        cls_row = y[0:1, :]
        pooled = jnp.tanh(jnp.dot(cls_row, pool_w_ref[...],
                                  preferred_element_type=jnp.float32)
                          + pool_b_ref[...])
        head_in = pooled if pooling else cls_row
        logits_ref[0] = (jnp.dot(head_in, head_w_ref[...],
                                 preferred_element_type=jnp.float32)
                         + head_b_ref[...])


def fused_encoder(mode, prep, mask_bias, enc, head_w, head_b, *, B, S, pooling):
    """Whole transformer stack + final LN + pooler + classifier head in one
    pallas_call.  prep: mode-specific inputs (3-D arrays are per-batch blocked,
    2-D arrays are constants).  Returns (hidden (B,S,H), logits (B,1,NUM_LABELS))."""
    L = enc["wqkv"].shape[0]
    cst2 = lambda b, l: (0, 0)
    bat3 = lambda b, l: (b, 0, 0)
    lay3 = lambda b, l: (l, 0, 0)

    prep_specs = []
    for arr in prep:
        if arr.ndim == 3:   # batched activation input
            prep_specs.append(pl.BlockSpec((1,) + arr.shape[1:], bat3))
        else:               # 2-D constant (weights / biases / cls / pos)
            prep_specs.append(pl.BlockSpec(arr.shape, cst2))

    layer_keys = ["wqkv", "bqkv", "wo", "bo", "ln1_g", "ln1_b", "ln2_g", "ln2_b",
                  "wi", "bi", "wo2", "bo2"]
    layer_specs = [pl.BlockSpec((1,) + enc[k].shape[1:], lay3) for k in layer_keys]
    const_arrs = [enc["fin_g"], enc["fin_b"], enc["pool_w"], enc["pool_b"],
                  head_w, head_b]
    const_specs = [pl.BlockSpec(a.shape, cst2) for a in const_arrs]

    hidden, logits = pl.pallas_call(
        functools.partial(_encoder_kernel, S=S, mode=mode, pooling=pooling),
        out_shape=(jax.ShapeDtypeStruct((B, S, HID), jnp.float32),
                   jax.ShapeDtypeStruct((B, 1, NUM_LABELS), jnp.float32)),
        grid=(B, L),
        in_specs=(prep_specs
                  + [pl.BlockSpec((1, 1, S), bat3)]        # additive key mask
                  + layer_specs + const_specs),
        out_specs=(pl.BlockSpec((1, S, HID), bat3),
                   pl.BlockSpec((1, 1, NUM_LABELS), bat3)),
        scratch_shapes=[pltpu.VMEM((S, HID), jnp.float32)],
        compiler_params=pltpu.CompilerParams(
            dimension_semantics=("parallel", "arbitrary"),
            vmem_limit_bytes=32 * 1024 * 1024),
    )(*prep, mask_bias, *[enc[k] for k in layer_keys], *const_arrs)
    return hidden, logits


# ---------------------------------- parameters ---------------------------------
def init_params(key):
    keys = iter(jax.random.split(key, 256))

    def w(shape, dtype=jnp.float32):
        return (0.02 * jax.random.normal(next(keys), shape, jnp.float32)).astype(dtype)

    def enc_stack(n_layers):
        scale = 1.0 / math.sqrt(HEAD)           # folded into Wq AND bq
        def layer():
            wq, wk, wv = w((HID, HID)), w((HID, HID)), w((HID, HID))
            bq = jnp.zeros((1, HID), jnp.float32)
            return dict(
                wqkv=jnp.concatenate([wq * scale, wk, wv], axis=1).astype(jnp.bfloat16),
                bqkv=jnp.concatenate([bq * scale,
                                      jnp.zeros((1, 2 * HID), jnp.float32)], axis=1),
                wo=w((HID, HID), jnp.bfloat16), bo=jnp.zeros((1, HID), jnp.float32),
                ln1_g=jnp.ones((1, HID), jnp.float32), ln1_b=jnp.zeros((1, HID), jnp.float32),
                ln2_g=jnp.ones((1, HID), jnp.float32), ln2_b=jnp.zeros((1, HID), jnp.float32),
                wi=w((HID, INTER), jnp.bfloat16), bi=jnp.zeros((1, INTER), jnp.float32),
                wo2=w((INTER, HID), jnp.bfloat16), bo2=jnp.zeros((1, HID), jnp.float32),
            )
        layers = [layer() for _ in range(n_layers)]
        stacked = {k: jnp.stack([lyr[k] for lyr in layers], axis=0) for k in layers[0]}
        stacked.update(
            fin_g=jnp.ones((1, HID), jnp.float32), fin_b=jnp.zeros((1, HID), jnp.float32),
            pool_w=w((HID, HID)), pool_b=jnp.zeros((1, HID), jnp.float32),
        )
        return stacked

    text = enc_stack(NLAYERS)
    text.update({
        "word_emb": w((VOCAB, HID)),
        "pos_emb": w((MAXPOS, HID)),
        "type_emb": w((TYPE_VOCAB, HID)),
        "in_ln_g": jnp.ones((1, HID), jnp.float32),
        "in_ln_b": jnp.zeros((1, HID), jnp.float32),
    })

    image = enc_stack(NLAYERS)
    image.update({
        "cls": w((1, HID)),
        # Conv2d(C, HID, kernel=stride=PATCH) weight reshaped (C*P*P, HID)
        "patch_w": w((CPP, HID), jnp.bfloat16),
        "patch_b": jnp.zeros((1, HID), jnp.float32),
        "pos_emb": w((NPATCH + 1, HID)),
    })

    mm = enc_stack(NLAYERS)
    mm.update({
        "cls": w((1, HID)),
        "img_proj_w": w((HID, HID), jnp.bfloat16),
        "img_proj_b": jnp.zeros((1, HID), jnp.float32),
        "txt_proj_w": w((HID, HID), jnp.bfloat16),
        "txt_proj_b": jnp.zeros((1, HID), jnp.float32),
    })

    return {
        "text": text, "image": image, "mm": mm,
        "text_cls_w": w((HID, NUM_LABELS)), "text_cls_b": jnp.zeros((1, NUM_LABELS), jnp.float32),
        "image_cls_w": w((HID, NUM_LABELS)), "image_cls_b": jnp.zeros((1, NUM_LABELS), jnp.float32),
        "mm_cls_w": w((HID, NUM_LABELS)), "mm_cls_b": jnp.zeros((1, NUM_LABELS), jnp.float32),
    }


# ----------------------------------- forward -----------------------------------
def flava_forward(params, input_ids, attention_mask, pixel_values, pooling=True):
    B, T = input_ids.shape

    # --- text model (token_type_ids implicitly zero; gather stays in JAX) ---
    tp = params["text"]
    emb = (jnp.take(tp["word_emb"], input_ids, axis=0)
           + tp["pos_emb"][:T][None]
           + tp["type_emb"][0][None, None])                              # (B, T, H)
    text_bias = ((1.0 - attention_mask.astype(jnp.float32)) * NEG_INF)[:, None, :]
    text_hidden, text_logits = fused_encoder(
        "text", (emb, tp["in_ln_g"], tp["in_ln_b"]), text_bias, tp,
        params["text_cls_w"], params["text_cls_b"], B=B, S=T, pooling=pooling)

    # --- image model (pixel_values NCHW; patch conv as matmul, fused in-kernel) ---
    ip = params["image"]
    _, C, Himg, Wimg = pixel_values.shape
    Hp, Wp = Himg // PATCH, Wimg // PATCH
    patches = (pixel_values.reshape(B, C, Hp, PATCH, Wp, PATCH)
               .transpose(0, 2, 4, 1, 3, 5)                              # (B,Hp,Wp,C,p,p)
               .reshape(B, Hp * Wp, C * PATCH * PATCH))                  # (B, NPATCH, CPP)
    S_img = Hp * Wp + 1
    img_bias = jnp.zeros((B, 1, S_img), jnp.float32)
    image_hidden, image_logits = fused_encoder(
        "image", (patches, ip["patch_w"], ip["patch_b"], ip["cls"], ip["pos_emb"]),
        img_bias, ip, params["image_cls_w"], params["image_cls_b"],
        B=B, S=S_img, pooling=pooling)

    # --- multimodal model (projections + concat + CLS fused in-kernel) ---
    mp = params["mm"]
    S_mm = 1 + S_img + T
    mm_mask = jnp.concatenate(
        [jnp.ones((B, 1 + S_img), jnp.float32), attention_mask.astype(jnp.float32)],
        axis=1)
    mm_bias = ((1.0 - mm_mask) * NEG_INF)[:, None, :]
    _, mm_logits = fused_encoder(
        "mm", (image_hidden, text_hidden, mp["img_proj_w"], mp["img_proj_b"],
               mp["txt_proj_w"], mp["txt_proj_b"], mp["cls"]),
        mm_bias, mp, params["mm_cls_w"], params["mm_cls_b"],
        B=B, S=S_mm, pooling=pooling)

    return text_logits[:, 0, :], image_logits[:, 0, :], mm_logits[:, 0, :]


# ------------------------------------- main -------------------------------------
if __name__ == "__main__":
    key = jax.random.PRNGKey(0)
    k_param, k_ids, k_pix = jax.random.split(key, 3)

    params = init_params(k_param)

    B, T = 2, 8
    input_ids = jax.random.randint(k_ids, (B, T), 0, VOCAB, dtype=jnp.int32)
    attention_mask = jnp.ones((B, T), jnp.int32).at[1, 6:].set(0)   # padded tail in row 1
    pixel_values = jax.random.normal(k_pix, (B, CHANS, IMG, IMG), jnp.float32)

    fwd = jax.jit(flava_forward, static_argnames=("pooling",))
    text_logits, image_logits, mm_logits = fwd(
        params, input_ids, attention_mask, pixel_values, pooling=True)

    jax.block_until_ready((text_logits, image_logits, mm_logits))
    assert text_logits.shape == (B, NUM_LABELS)
    assert image_logits.shape == (B, NUM_LABELS)
    assert mm_logits.shape == (B, NUM_LABELS)
    assert bool(jnp.all(jnp.isfinite(text_logits)))
    assert bool(jnp.all(jnp.isfinite(image_logits)))
    assert bool(jnp.all(jnp.isfinite(mm_logits)))
    print("KERNEL_OK")
</pallas_src>

<mosaic_0001>
module attributes {stable_mosaic.version = 11 : i64} {
  func.func @_encoder_kernel(%arg0: i32, %arg1: i32, %arg2: memref<1x4x192xf32, #tpu.memory_space<vmem>>, %arg3: memref<192x32xbf16, #tpu.memory_space<vmem>>, %arg4: memref<1x32xf32, #tpu.memory_space<vmem>>, %arg5: memref<1x32xf32, #tpu.memory_space<vmem>>, %arg6: memref<5x32xf32, #tpu.memory_space<vmem>>, %arg7: memref<1x1x5xf32, #tpu.memory_space<vmem>>, %arg8: memref<1x32x96xbf16, #tpu.memory_space<vmem>>, %arg9: memref<1x1x96xf32, #tpu.memory_space<vmem>>, %arg10: memref<1x32x32xbf16, #tpu.memory_space<vmem>>, %arg11: memref<1x1x32xf32, #tpu.memory_space<vmem>>, %arg12: memref<1x1x32xf32, #tpu.memory_space<vmem>>, %arg13: memref<1x1x32xf32, #tpu.memory_space<vmem>>, %arg14: memref<1x1x32xf32, #tpu.memory_space<vmem>>, %arg15: memref<1x1x32xf32, #tpu.memory_space<vmem>>, %arg16: memref<1x32x64xbf16, #tpu.memory_space<vmem>>, %arg17: memref<1x1x64xf32, #tpu.memory_space<vmem>>, %arg18: memref<1x64x32xbf16, #tpu.memory_space<vmem>>, %arg19: memref<1x1x32xf32, #tpu.memory_space<vmem>>, %arg20: memref<1x32xf32, #tpu.memory_space<vmem>>, %arg21: memref<1x32xf32, #tpu.memory_space<vmem>>, %arg22: memref<32x32xf32, #tpu.memory_space<vmem>>, %arg23: memref<1x32xf32, #tpu.memory_space<vmem>>, %arg24: memref<32x3xf32, #tpu.memory_space<vmem>>, %arg25: memref<1x3xf32, #tpu.memory_space<vmem>>, %arg26: memref<1x5x32xf32, #tpu.memory_space<vmem>>, %arg27: memref<1x1x3xf32, #tpu.memory_space<vmem>>, %arg28: memref<5x32xf32, #tpu.memory_space<vmem>>) attributes {dimension_semantics = [#tpu.dimension_semantics<parallel>, #tpu.dimension_semantics<arbitrary>], iteration_bounds = array<i64: 2, 2>, scalar_prefetch = 0 : i64, scratch_operands = 1 : i64, tpu.core_type = #tpu.core_type<tc>, window_params = [{transform_indices = @transform_0, window_bounds = array<i64: 1, 4, 192>}, {pipeline_mode = #tpu.pipeline_mode<synchronous>, transform_indices = @transform_1, window_bounds = array<i64: 192, 32>}, {pipeline_mode = #tpu.pipeline_mode<synchronous>, transform_indices = @transform_2, window_bounds = array<i64: 1, 32>}, {pipeline_mode = #tpu.pipeline_mode<synchronous>, transform_indices = @transform_3, window_bounds = array<i64: 1, 32>}, {pipeline_mode = #tpu.pipeline_mode<synchronous>, transform_indices = @transform_4, window_bounds = array<i64: 5, 32>}, {transform_indices = @transform_5, window_bounds = array<i64: 1, 1, 5>}, {transform_indices = @transform_6, window_bounds = array<i64: 1, 32, 96>}, {transform_indices = @transform_7, window_bounds = array<i64: 1, 1, 96>}, {transform_indices = @transform_8, window_bounds = array<i64: 1, 32, 32>}, {transform_indices = @transform_9, window_bounds = array<i64: 1, 1, 32>}, {transform_indices = @transform_10, window_bounds = array<i64: 1, 1, 32>}, {transform_indices = @transform_11, window_bounds = array<i64: 1, 1, 32>}, {transform_indices = @transform_12, window_bounds = array<i64: 1, 1, 32>}, {transform_indices = @transform_13, window_bounds = array<i64: 1, 1, 32>}, {transform_indices = @transform_14, window_bounds = array<i64: 1, 32, 64>}, {transform_indices = @transform_15, window_bounds = array<i64: 1, 1, 64>}, {transform_indices = @transform_16, window_bounds = array<i64: 1, 64, 32>}, {transform_indices = @transform_17, window_bounds = array<i64: 1, 1, 32>}, {pipeline_mode = #tpu.pipeline_mode<synchronous>, transform_indices = @transform_18, window_bounds = array<i64: 1, 32>}, {pipeline_mode = #tpu.pipeline_mode<synchronous>, transform_indices = @transform_19, window_bounds = array<i64: 1, 32>}, {pipeline_mode = #tpu.pipeline_mode<synchronous>, transform_indices = @transform_20, window_bounds = array<i64: 32, 32>}, {pipeline_mode = #tpu.pipeline_mode<synchronous>, transform_indices = @transform_21, window_bounds = array<i64: 1, 32>}, {pipeline_mode = #tpu.pipeline_mode<synchronous>, transform_indices = @transform_22, window_bounds = array<i64: 32, 3>}, {pipeline_mode = #tpu.pipeline_mode<synchronous>, transform_indices = @transform_23, window_bounds = array<i64: 1, 3>}, {transform_indices = @transform_24, window_bounds = array<i64: 1, 5, 32>}, {transform_indices = @transform_25, window_bounds = array<i64: 1, 1, 3>}]} {
    %c0_i32 = arith.constant 0 : i32
    %0 = arith.cmpi eq, %arg1, %c0_i32 : i32
    %1 = arith.extui %0 : i1 to i32
    %c0_i32_0 = arith.constant 0 : i32
    %2 = arith.cmpi ne, %1, %c0_i32_0 : i32
    scf.if %2 {
      %c0_70 = arith.constant 0 : index
      %c0_71 = arith.constant 0 : index
      %c0_72 = arith.constant 0 : index
      %158 = vector.load %arg2[%c0_70, %c0_71, %c0_72] : memref<1x4x192xf32, #tpu.memory_space<vmem>>, vector<1x4x192xf32>
      %159 = vector.shape_cast %158 : vector<1x4x192xf32> to vector<4x192xf32>
      %160 = arith.truncf %159 : vector<4x192xf32> to vector<4x192xbf16>
      %c0_73 = arith.constant 0 : index
      %c0_74 = arith.constant 0 : index
      %161 = vector.load %arg3[%c0_73, %c0_74] : memref<192x32xbf16, #tpu.memory_space<vmem>>, vector<192x32xbf16>
      %cst_75 = arith.constant dense<0.000000e+00> : vector<4x32xf32>
      %162 = tpu.matmul %160, %161, %cst_75 {dimension_numbers = #tpu.dot_dimension_numbers<[1], [0], [0], [1], [0, 0, 1, 1], [], []>} : vector<4x192xbf16>, vector<192x32xbf16>, vector<4x32xf32> -> vector<4x32xf32>
      %c0_76 = arith.constant 0 : index
      %c0_77 = arith.constant 0 : index
      %163 = vector.load %arg4[%c0_76, %c0_77] : memref<1x32xf32, #tpu.memory_space<vmem>>, vector<1x32xf32>
      %164 = vector.broadcast %163 : vector<1x32xf32> to vector<4x32xf32>
      %165 = arith.addf %162, %164 : vector<4x32xf32>
      %c0_78 = arith.constant 0 : index
      %c0_79 = arith.constant 0 : index
      %166 = vector.load %arg6[%c0_78, %c0_79] : memref<5x32xf32, #tpu.memory_space<vmem>>, vector<5x32xf32>
      %c0_80 = arith.constant 0 : index
      %c0_81 = arith.constant 0 : index
      %167 = vector.load %arg5[%c0_80, %c0_81] : memref<1x32xf32, #tpu.memory_space<vmem>>, vector<1x32xf32>
      %168 = vector.extract_strided_slice %166 {offsets = [0, 0], sizes = [1, 32], strides = [1, 1]} : vector<5x32xf32> to vector<1x32xf32>
      %169 = arith.addf %167, %168 : vector<1x32xf32>
      %170 = vector.extract_strided_slice %166 {offsets = [1, 0], sizes = [4, 32], strides = [1, 1]} : vector<5x32xf32> to vector<4x32xf32>
      %171 = arith.addf %165, %170 : vector<4x32xf32>
      %172 = tpu.concatenate %169, %171 in 0 : vector<1x32xf32>, vector<4x32xf32> -> vector<5x32xf32>
      %c0_82 = arith.constant 0 : index
      %c0_83 = arith.constant 0 : index
      %173 = vector.load %arg28[%c0_82, %c0_83] : memref<5x32xf32, #tpu.memory_space<vmem>>, vector<5x32xf32>
      tpu.vector_store %arg28[%c0_82, %c0_83], %172 {strides = array<i32>} : memref<5x32xf32, #tpu.memory_space<vmem>>, vector<5x32xf32>,
    } else {
    }
    %c0 = arith.constant 0 : index
    %c0_1 = arith.constant 0 : index
    %3 = vector.load %arg28[%c0, %c0_1] : memref<5x32xf32, #tpu.memory_space<vmem>>, vector<5x32xf32>
    %c0_2 = arith.constant 0 : index
    %c0_3 = arith.constant 0 : index
    %c0_4 = arith.constant 0 : index
    %4 = vector.load %arg12[%c0_2, %c0_3, %c0_4] : memref<1x1x32xf32, #tpu.memory_space<vmem>>, vector<1x1x32xf32>
    %5 = vector.shape_cast %4 : vector<1x1x32xf32> to vector<1x32xf32>
    %c0_5 = arith.constant 0 : index
    %c0_6 = arith.constant 0 : index
    %c0_7 = arith.constant 0 : index
    %6 = vector.load %arg13[%c0_5, %c0_6, %c0_7] : memref<1x1x32xf32, #tpu.memory_space<vmem>>, vector<1x1x32xf32>
    %7 = vector.shape_cast %6 : vector<1x1x32xf32> to vector<1x32xf32>
    %cst = arith.constant dense<0.000000e+00> : vector<5xf32>
    %8 = vector.multi_reduction <add>, %3, %cst [1] : vector<5x32xf32> to vector<5xf32>
    %9 = vector.shape_cast %8 : vector<5xf32> to vector<5x1xf32>
    %cst_8 = arith.constant 3.200000e+01 : f32
    %10 = vector.broadcast %cst_8 : f32 to vector<5x1xf32>
    %11 = arith.divf %9, %10 : vector<5x1xf32>
    %12 = vector.broadcast %11 : vector<5x1xf32> to vector<5x32xf32>
    %13 = arith.subf %3, %12 : vector<5x32xf32>
    %14 = arith.mulf %13, %13 : vector<5x32xf32>
    %cst_9 = arith.constant dense<0.000000e+00> : vector<5xf32>
    %15 = vector.multi_reduction <add>, %14, %cst_9 [1] : vector<5x32xf32> to vector<5xf32>
    %16 = vector.shape_cast %15 : vector<5xf32> to vector<5x1xf32>
    %cst_10 = arith.constant 3.200000e+01 : f32
    %17 = vector.broadcast %cst_10 : f32 to vector<5x1xf32>
    %18 = arith.divf %16, %17 : vector<5x1xf32>
    %19 = vector.broadcast %11 : vector<5x1xf32> to vector<5x32xf32>
    %20 = arith.subf %3, %19 : vector<5x32xf32>
    %cst_11 = arith.constant 9.99999996E-13 : f32
    %21 = vector.broadcast %cst_11 : f32 to vector<5x1xf32>
    %22 = arith.addf %18, %21 : vector<5x1xf32>
    %23 = math.rsqrt %22 : vector<5x1xf32>
    %24 = vector.broadcast %23 : vector<5x1xf32> to vector<5x32xf32>
    %25 = arith.mulf %20, %24 : vector<5x32xf32>
    %26 = vector.broadcast %5 : vector<1x32xf32> to vector<5x32xf32>
    %27 = arith.mulf %25, %26 : vector<5x32xf32>
    %28 = vector.broadcast %7 : vector<1x32xf32> to vector<5x32xf32>
    %29 = arith.addf %27, %28 : vector<5x32xf32>
    %30 = arith.truncf %29 : vector<5x32xf32> to vector<5x32xbf16>
    %c0_12 = arith.constant 0 : index
    %c0_13 = arith.constant 0 : index
    %c0_14 = arith.constant 0 : index
    %31 = vector.load %arg8[%c0_12, %c0_13, %c0_14] : memref<1x32x96xbf16, #tpu.memory_space<vmem>>, vector<1x32x96xbf16>
    %32 = vector.shape_cast %31 : vector<1x32x96xbf16> to vector<32x96xbf16>
    %cst_15 = arith.constant dense<0.000000e+00> : vector<5x96xf32>
    %33 = tpu.matmul %30, %32, %cst_15 {dimension_numbers = #tpu.dot_dimension_numbers<[1], [0], [0], [1], [0, 0, 1, 1], [], []>} : vector<5x32xbf16>, vector<32x96xbf16>, vector<5x96xf32> -> vector<5x96xf32>
    %c0_16 = arith.constant 0 : index
    %c0_17 = arith.constant 0 : index
    %c0_18 = arith.constant 0 : index
    %34 = vector.load %arg9[%c0_16, %c0_17, %c0_18] : memref<1x1x96xf32, #tpu.memory_space<vmem>>, vector<1x1x96xf32>
    %35 = vector.shape_cast %34 : vector<1x1x96xf32> to vector<1x96xf32>
    %36 = vector.broadcast %35 : vector<1x96xf32> to vector<5x96xf32>
    %37 = arith.addf %33, %36 : vector<5x96xf32>
    %c0_19 = arith.constant 0 : index
    %c0_20 = arith.constant 0 : index
    %c0_21 = arith.constant 0 : index
    %38 = vector.load %arg7[%c0_19, %c0_20, %c0_21] : memref<1x1x5xf32, #tpu.memory_space<vmem>>, vector<1x1x5xf32>
    %39 = vector.shape_cast %38 : vector<1x1x5xf32> to vector<1x5xf32>
    %40 = vector.extract_strided_slice %37 {offsets = [0, 0], sizes = [5, 8], strides = [1, 1]} : vector<5x96xf32> to vector<5x8xf32>
    %41 = arith.truncf %40 : vector<5x8xf32> to vector<5x8xbf16>
    %42 = vector.extract_strided_slice %37 {offsets = [0, 32], sizes = [5, 8], strides = [1, 1]} : vector<5x96xf32> to vector<5x8xf32>
    %43 = arith.truncf %42 : vector<5x8xf32> to vector<5x8xbf16>
    %cst_22 = arith.constant dense<0.000000e+00> : vector<5x5xf32>
    %44 = tpu.matmul %41, %43, %cst_22 {dimension_numbers = #tpu.dot_dimension_numbers<[1], [1], [0], [0], [0, 0, 1, 0], [], []>} : vector<5x8xbf16>, vector<5x8xbf16>, vector<5x5xf32> -> vector<5x5xf32>
    %45 = vector.extract_strided_slice %37 {offsets = [0, 8], sizes = [5, 8], strides = [1, 1]} : vector<5x96xf32> to vector<5x8xf32>
    %46 = arith.truncf %45 : vector<5x8xf32> to vector<5x8xbf16>
    %47 = vector.extract_strided_slice %37 {offsets = [0, 40], sizes = [5, 8], strides = [1, 1]} : vector<5x96xf32> to vector<5x8xf32>
    %48 = arith.truncf %47 : vector<5x8xf32> to vector<5x8xbf16>
    %cst_23 = arith.constant dense<0.000000e+00> : vector<5x5xf32>
    %49 = tpu.matmul %46, %48, %cst_23 {dimension_numbers = #tpu.dot_dimension_numbers<[1], [1], [0], [0], [0, 0, 1, 0], [], []>} : vector<5x8xbf16>, vector<5x8xbf16>, vector<5x5xf32> -> vector<5x5xf32>
    %50 = vector.extract_strided_slice %37 {offsets = [0, 16], sizes = [5, 8], strides = [1, 1]} : vector<5x96xf32> to vector<5x8xf32>
    %51 = arith.truncf %50 : vector<5x8xf32> to vector<5x8xbf16>
    %52 = vector.extract_strided_slice %37 {offsets = [0, 48], sizes = [5, 8], strides = [1, 1]} : vector<5x96xf32> to vector<5x8xf32>
    %53 = arith.truncf %52 : vector<5x8xf32> to vector<5x8xbf16>
    %cst_24 = arith.constant dense<0.000000e+00> : vector<5x5xf32>
    %54 = tpu.matmul %51, %53, %cst_24 {dimension_numbers = #tpu.dot_dimension_numbers<[1], [1], [0], [0], [0, 0, 1, 0], [], []>} : vector<5x8xbf16>, vector<5x8xbf16>, vector<5x5xf32> -> vector<5x5xf32>
    %55 = vector.extract_strided_slice %37 {offsets = [0, 24], sizes = [5, 8], strides = [1, 1]} : vector<5x96xf32> to vector<5x8xf32>
    %56 = arith.truncf %55 : vector<5x8xf32> to vector<5x8xbf16>
    %57 = vector.extract_strided_slice %37 {offsets = [0, 56], sizes = [5, 8], strides = [1, 1]} : vector<5x96xf32> to vector<5x8xf32>
    %58 = arith.truncf %57 : vector<5x8xf32> to vector<5x8xbf16>
    %cst_25 = arith.constant dense<0.000000e+00> : vector<5x5xf32>
    %59 = tpu.matmul %56, %58, %cst_25 {dimension_numbers = #tpu.dot_dimension_numbers<[1], [1], [0], [0], [0, 0, 1, 0], [], []>} : vector<5x8xbf16>, vector<5x8xbf16>, vector<5x5xf32> -> vector<5x5xf32>
    %60 = tpu.concatenate %44, %49, %54, %59 in 0 : vector<5x5xf32>, vector<5x5xf32>, vector<5x5xf32>, vector<5x5xf32> -> vector<20x5xf32>
    %61 = vector.broadcast %39 : vector<1x5xf32> to vector<20x5xf32>
    %62 = arith.addf %60, %61 : vector<20x5xf32>
    %cst_26 = arith.constant dense<0xFF800000> : vector<20xf32>
    %63 = vector.multi_reduction <maximumf>, %62, %cst_26 [1] : vector<20x5xf32> to vector<20xf32>
    %64 = vector.shape_cast %63 : vector<20xf32> to vector<20x1xf32>
    %65 = vector.broadcast %64 : vector<20x1xf32> to vector<20x5xf32>
    %66 = arith.subf %62, %65 : vector<20x5xf32>
    %67 = math.exp %66 : vector<20x5xf32>
    %cst_27 = arith.constant dense<0.000000e+00> : vector<20xf32>
    %68 = vector.multi_reduction <add>, %67, %cst_27 [1] : vector<20x5xf32> to vector<20xf32>
    %69 = vector.shape_cast %68 : vector<20xf32> to vector<20x1xf32>
    %70 = tpu.reciprocal %69 {approx = true} : vector<20x1xf32> -> vector<20x1xf32>
    %71 = vector.broadcast %70 : vector<20x1xf32> to vector<20x5xf32>
    %72 = arith.mulf %67, %71 : vector<20x5xf32>
    %73 = vector.extract_strided_slice %37 {offsets = [0, 64], sizes = [5, 8], strides = [1, 1]} : vector<5x96xf32> to vector<5x8xf32>
    %74 = arith.truncf %73 : vector<5x8xf32> to vector<5x8xbf16>
    %75 = vector.extract_strided_slice %72 {offsets = [0, 0], sizes = [5, 5], strides = [1, 1]} : vector<20x5xf32> to vector<5x5xf32>
    %76 = arith.truncf %75 : vector<5x5xf32> to vector<5x5xbf16>
    %cst_28 = arith.constant dense<0.000000e+00> : vector<5x8xf32>
    %77 = tpu.matmul %76, %74, %cst_28 {dimension_numbers = #tpu.dot_dimension_numbers<[1], [0], [0], [1], [0, 0, 1, 1], [], []>} : vector<5x5xbf16>, vector<5x8xbf16>, vector<5x8xf32> -> vector<5x8xf32>
    %78 = vector.extract_strided_slice %37 {offsets = [0, 72], sizes = [5, 8], strides = [1, 1]} : vector<5x96xf32> to vector<5x8xf32>
    %79 = arith.truncf %78 : vector<5x8xf32> to vector<5x8xbf16>
    %80 = vector.extract_strided_slice %72 {offsets = [5, 0], sizes = [5, 5], strides = [1, 1]} : vector<20x5xf32> to vector<5x5xf32>
    %81 = arith.truncf %80 : vector<5x5xf32> to vector<5x5xbf16>
    %cst_29 = arith.constant dense<0.000000e+00> : vector<5x8xf32>
    %82 = tpu.matmul %81, %79, %cst_29 {dimension_numbers = #tpu.dot_dimension_numbers<[1], [0], [0], [1], [0, 0, 1, 1], [], []>} : vector<5x5xbf16>, vector<5x8xbf16>, vector<5x8xf32> -> vector<5x8xf32>
    %83 = vector.extract_strided_slice %37 {offsets = [0, 80], sizes = [5, 8], strides = [1, 1]} : vector<5x96xf32> to vector<5x8xf32>
    %84 = arith.truncf %83 : vector<5x8xf32> to vector<5x8xbf16>
    %85 = vector.extract_strided_slice %72 {offsets = [10, 0], sizes = [5, 5], strides = [1, 1]} : vector<20x5xf32> to vector<5x5xf32>
    %86 = arith.truncf %85 : vector<5x5xf32> to vector<5x5xbf16>
    %cst_30 = arith.constant dense<0.000000e+00> : vector<5x8xf32>
    %87 = tpu.matmul %86, %84, %cst_30 {dimension_numbers = #tpu.dot_dimension_numbers<[1], [0], [0], [1], [0, 0, 1, 1], [], []>} : vector<5x5xbf16>, vector<5x8xbf16>, vector<5x8xf32> -> vector<5x8xf32>
    %88 = vector.extract_strided_slice %37 {offsets = [0, 88], sizes = [5, 8], strides = [1, 1]} : vector<5x96xf32> to vector<5x8xf32>
    %89 = arith.truncf %88 : vector<5x8xf32> to vector<5x8xbf16>
    %90 = vector.extract_strided_slice %72 {offsets = [15, 0], sizes = [5, 5], strides = [1, 1]} : vector<20x5xf32> to vector<5x5xf32>
    %91 = arith.truncf %90 : vector<5x5xf32> to vector<5x5xbf16>
    %cst_31 = arith.constant dense<0.000000e+00> : vector<5x8xf32>
    %92 = tpu.matmul %91, %89, %cst_31 {dimension_numbers = #tpu.dot_dimension_numbers<[1], [0], [0], [1], [0, 0, 1, 1], [], []>} : vector<5x5xbf16>, vector<5x8xbf16>, vector<5x8xf32> -> vector<5x8xf32>
    %93 = tpu.concatenate %77, %82, %87, %92 in 1 : vector<5x8xf32>, vector<5x8xf32>, vector<5x8xf32>, vector<5x8xf32> -> vector<5x32xf32>
    %94 = arith.truncf %93 : vector<5x32xf32> to vector<5x32xbf16>
    %c0_32 = arith.constant 0 : index
    %c0_33 = arith.constant 0 : index
    %c0_34 = arith.constant 0 : index
    %95 = vector.load %arg10[%c0_32, %c0_33, %c0_34] : memref<1x32x32xbf16, #tpu.memory_space<vmem>>, vector<1x32x32xbf16>
    %96 = vector.shape_cast %95 : vector<1x32x32xbf16> to vector<32x32xbf16>
    %cst_35 = arith.constant dense<0.000000e+00> : vector<5x32xf32>
    %97 = tpu.matmul %94, %96, %cst_35 {dimension_numbers = #tpu.dot_dimension_numbers<[1], [0], [0], [1], [0, 0, 1, 1], [], []>} : vector<5x32xbf16>, vector<32x32xbf16>, vector<5x32xf32> -> vector<5x32xf32>
    %c0_36 = arith.constant 0 : index
    %c0_37 = arith.constant 0 : index
    %c0_38 = arith.constant 0 : index
    %98 = vector.load %arg11[%c0_36, %c0_37, %c0_38] : memref<1x1x32xf32, #tpu.memory_space<vmem>>, vector<1x1x32xf32>
    %99 = vector.shape_cast %98 : vector<1x1x32xf32> to vector<1x32xf32>
    %100 = vector.broadcast %99 : vector<1x32xf32> to vector<5x32xf32>
    %101 = arith.addf %97, %100 : vector<5x32xf32>
    %102 = arith.addf %3, %101 : vector<5x32xf32>
    %c0_39 = arith.constant 0 : index
    %c0_40 = arith.constant 0 : index
    %c0_41 = arith.constant 0 : index
    %103 = vector.load %arg14[%c0_39, %c0_40, %c0_41] : memref<1x1x32xf32, #tpu.memory_space<vmem>>, vector<1x1x32xf32>
    %104 = vector.shape_cast %103 : vector<1x1x32xf32> to vector<1x32xf32>
    %c0_42 = arith.constant 0 : index
    %c0_43 = arith.constant 0 : index
    %c0_44 = arith.constant 0 : index
    %105 = vector.load %arg15[%c0_42, %c0_43, %c0_44] : memref<1x1x32xf32, #tpu.memory_space<vmem>>, vector<1x1x32xf32>
    %106 = vector.shape_cast %105 : vector<1x1x32xf32> to vector<1x32xf32>
    %cst_45 = arith.constant dense<0.000000e+00> : vector<5xf32>
    %107 = vector.multi_reduction <add>, %102, %cst_45 [1] : vector<5x32xf32> to vector<5xf32>
    %108 = vector.shape_cast %107 : vector<5xf32> to vector<5x1xf32>
    %cst_46 = arith.constant 3.200000e+01 : f32
    %109 = vector.broadcast %cst_46 : f32 to vector<5x1xf32>
    %110 = arith.divf %108, %109 : vector<5x1xf32>
    %111 = vector.broadcast %110 : vector<5x1xf32> to vector<5x32xf32>
    %112 = arith.subf %102, %111 : vector<5x32xf32>
    %113 = arith.mulf %112, %112 : vector<5x32xf32>
    %cst_47 = arith.constant dense<0.000000e+00> : vector<5xf32>
    %114 = vector.multi_reduction <add>, %113, %cst_47 [1] : vector<5x32xf32> to vector<5xf32>
    %115 = vector.shape_cast %114 : vector<5xf32> to vector<5x1xf32>
    %cst_48 = arith.constant 3.200000e+01 : f32
    %116 = vector.broadcast %cst_48 : f32 to vector<5x1xf32>
    %117 = arith.divf %115, %116 : vector<5x1xf32>
    %118 = vector.broadcast %110 : vector<5x1xf32> to vector<5x32xf32>
    %119 = arith.subf %102, %118 : vector<5x32xf32>
    %cst_49 = arith.constant 9.99999996E-13 : f32
    %120 = vector.broadcast %cst_49 : f32 to vector<5x1xf32>
    %121 = arith.addf %117, %120 : vector<5x1xf32>
    %122 = math.rsqrt %121 : vector<5x1xf32>
    %123 = vector.broadcast %122 : vector<5x1xf32> to vector<5x32xf32>
    %124 = arith.mulf %119, %123 : vector<5x32xf32>
    %125 = vector.broadcast %104 : vector<1x32xf32> to vector<5x32xf32>
    %126 = arith.mulf %124, %125 : vector<5x32xf32>
    %127 = vector.broadcast %106 : vector<1x32xf32> to vector<5x32xf32>
    %128 = arith.addf %126, %127 : vector<5x32xf32>
    %129 = arith.truncf %128 : vector<5x32xf32> to vector<5x32xbf16>
    %c0_50 = arith.constant 0 : index
    %c0_51 = arith.constant 0 : index
    %c0_52 = arith.constant 0 : index
    %130 = vector.load %arg16[%c0_50, %c0_51, %c0_52] : memref<1x32x64xbf16, #tpu.memory_space<vmem>>, vector<1x32x64xbf16>
    %131 = vector.shape_cast %130 : vector<1x32x64xbf16> to vector<32x64xbf16>
    %cst_53 = arith.constant dense<0.000000e+00> : vector<5x64xf32>
    %132 = tpu.matmul %129, %131, %cst_53 {dimension_numbers = #tpu.dot_dimension_numbers<[1], [0], [0], [1], [0, 0, 1, 1], [], []>} : vector<5x32xbf16>, vector<32x64xbf16>, vector<5x64xf32> -> vector<5x64xf32>
    %c0_54 = arith.constant 0 : index
    %c0_55 = arith.constant 0 : index
    %c0_56 = arith.constant 0 : index
    %133 = vector.load %arg17[%c0_54, %c0_55, %c0_56] : memref<1x1x64xf32, #tpu.memory_space<vmem>>, vector<1x1x64xf32>
    %134 = vector.shape_cast %133 : vector<1x1x64xf32> to vector<1x64xf32>
    %135 = vector.broadcast %134 : vector<1x64xf32> to vector<5x64xf32>
    %136 = arith.addf %132, %135 : vector<5x64xf32>
    %cst_57 = arith.constant 5.000000e-01 : f32
    %137 = vector.broadcast %cst_57 : f32 to vector<5x64xf32>
    %138 = arith.mulf %137, %136 : vector<5x64xf32>
    %cst_58 = arith.constant 0.707106769 : f32
    %139 = vector.broadcast %cst_58 : f32 to vector<5x64xf32>
    %140 = arith.mulf %136, %139 : vector<5x64xf32>
    %141 = math.erf %140 : vector<5x64xf32>
    %cst_59 = arith.constant 1.000000e+00 : f32
    %142 = vector.broadcast %cst_59 : f32 to vector<5x64xf32>
    %143 = arith.addf %142, %141 : vector<5x64xf32>
    %144 = arith.mulf %138, %143 : vector<5x64xf32>
    %145 = arith.truncf %144 : vector<5x64xf32> to vector<5x64xbf16>
    %c0_60 = arith.constant 0 : index
    %c0_61 = arith.constant 0 : index
    %c0_62 = arith.constant 0 : index
    %146 = vector.load %arg18[%c0_60, %c0_61, %c0_62] : memref<1x64x32xbf16, #tpu.memory_space<vmem>>, vector<1x64x32xbf16>
    %147 = vector.shape_cast %146 : vector<1x64x32xbf16> to vector<64x32xbf16>
    %cst_63 = arith.constant dense<0.000000e+00> : vector<5x32xf32>
    %148 = tpu.matmul %145, %147, %cst_63 {dimension_numbers = #tpu.dot_dimension_numbers<[1], [0], [0], [1], [0, 0, 1, 1], [], []>} : vector<5x64xbf16>, vector<64x32xbf16>, vector<5x32xf32> -> vector<5x32xf32>
    %c0_64 = arith.constant 0 : index
    %c0_65 = arith.constant 0 : index
    %c0_66 = arith.constant 0 : index
    %149 = vector.load %arg19[%c0_64, %c0_65, %c0_66] : memref<1x1x32xf32, #tpu.memory_space<vmem>>, vector<1x1x32xf32>
    %150 = vector.shape_cast %149 : vector<1x1x32xf32> to vector<1x32xf32>
    %151 = vector.broadcast %150 : vector<1x32xf32> to vector<5x32xf32>
    %152 = arith.addf %148, %151 : vector<5x32xf32>
    %153 = arith.addf %102, %152 : vector<5x32xf32>
    %c0_67 = arith.constant 0 : index
    %c0_68 = arith.constant 0 : index
    %154 = vector.load %arg28[%c0_67, %c0_68] : memref<5x32xf32, #tpu.memory_space<vmem>>, vector<5x32xf32>
    tpu.vector_store %arg28[%c0_67, %c0_68], %153 {strides = array<i32>} : memref<5x32xf32, #tpu.memory_space<vmem>>, vector<5x32xf32>,
    %c1_i32 = arith.constant 1 : i32
    %155 = arith.cmpi eq, %arg1, %c1_i32 : i32
    %156 = arith.extui %155 : i1 to i32
    %c0_i32_69 = arith.constant 0 : i32
    %157 = arith.cmpi ne, %156, %c0_i32_69 : i32
    scf.if %157 {
      %c0_70 = arith.constant 0 : index
      %c0_71 = arith.constant 0 : index
      %158 = vector.load %arg20[%c0_70, %c0_71] : memref<1x32xf32, #tpu.memory_space<vmem>>, vector<1x32xf32>
      %c0_72 = arith.constant 0 : index
      %c0_73 = arith.constant 0 : index
      %159 = vector.load %arg21[%c0_72, %c0_73] : memref<1x32xf32, #tpu.memory_space<vmem>>, vector<1x32xf32>
      %cst_74 = arith.constant dense<0.000000e+00> : vector<5xf32>
      %160 = vector.multi_reduction <add>, %153, %cst_74 [1] : vector<5x32xf32> to vector<5xf32>
      %161 = vector.shape_cast %160 : vector<5xf32> to vector<5x1xf32>
      %cst_75 = arith.constant 3.200000e+01 : f32
      %162 = vector.broadcast %cst_75 : f32 to vector<5x1xf32>
      %163 = arith.divf %161, %162 : vector<5x1xf32>
      %164 = vector.broadcast %163 : vector<5x1xf32> to vector<5x32xf32>
      %165 = arith.subf %153, %164 : vector<5x32xf32>
      %166 = arith.mulf %165, %165 : vector<5x32xf32>
      %cst_76 = arith.constant dense<0.000000e+00> : vector<5xf32>
      %167 = vector.multi_reduction <add>, %166, %cst_76 [1] : vector<5x32xf32> to vector<5xf32>
      %168 = vector.shape_cast %167 : vector<5xf32> to vector<5x1xf32>
      %cst_77 = arith.constant 3.200000e+01 : f32
      %169 = vector.broadcast %cst_77 : f32 to vector<5x1xf32>
      %170 = arith.divf %168, %169 : vector<5x1xf32>
      %171 = vector.broadcast %163 : vector<5x1xf32> to vector<5x32xf32>
      %172 = arith.subf %153, %171 : vector<5x32xf32>
      %cst_78 = arith.constant 9.99999996E-13 : f32
      %173 = vector.broadcast %cst_78 : f32 to vector<5x1xf32>
      %174 = arith.addf %170, %173 : vector<5x1xf32>
      %175 = math.rsqrt %174 : vector<5x1xf32>
      %176 = vector.broadcast %175 : vector<5x1xf32> to vector<5x32xf32>
      %177 = arith.mulf %172, %176 : vector<5x32xf32>
      %178 = vector.broadcast %158 : vector<1x32xf32> to vector<5x32xf32>
      %179 = arith.mulf %177, %178 : vector<5x32xf32>
      %180 = vector.broadcast %159 : vector<1x32xf32> to vector<5x32xf32>
      %181 = arith.addf %179, %180 : vector<5x32xf32>
      %c0_79 = arith.constant 0 : index
      %c0_80 = arith.constant 0 : index
      %c0_81 = arith.constant 0 : index
      %182 = vector.load %arg26[%c0_79, %c0_80, %c0_81] : memref<1x5x32xf32, #tpu.memory_space<vmem>>, vector<1x5x32xf32>
      %183 = vector.shape_cast %182 : vector<1x5x32xf32> to vector<5x32xf32>
      %184 = vector.shape_cast %181 : vector<5x32xf32> to vector<1x5x32xf32>
      tpu.vector_store %arg26[%c0_79, %c0_80, %c0_81], %184 {strides = array<i32>} : memref<1x5x32xf32, #tpu.memory_space<vmem>>, vector<1x5x32xf32>,
      %185 = vector.extract_strided_slice %181 {offsets = [0, 0], sizes = [1, 32], strides = [1, 1]} : vector<5x32xf32> to vector<1x32xf32>
      %c0_82 = arith.constant 0 : index
      %c0_83 = arith.constant 0 : index
      %186 = vector.load %arg22[%c0_82, %c0_83] : memref<32x32xf32, #tpu.memory_space<vmem>>, vector<32x32xf32>
      %cst_84 = arith.constant dense<0.000000e+00> : vector<1x32xf32>
      %187 = tpu.matmul %185, %186, %cst_84 {dimension_numbers = #tpu.dot_dimension_numbers<[1], [0], [0], [1], [0, 0, 1, 1], [], []>} : vector<1x32xf32>, vector<32x32xf32>, vector<1x32xf32> -> vector<1x32xf32>
      %c0_85 = arith.constant 0 : index
      %c0_86 = arith.constant 0 : index
      %188 = vector.load %arg23[%c0_85, %c0_86] : memref<1x32xf32, #tpu.memory_space<vmem>>, vector<1x32xf32>
      %189 = arith.addf %187, %188 : vector<1x32xf32>
      %190 = math.tanh %189 : vector<1x32xf32>
      %c0_87 = arith.constant 0 : index
      %c0_88 = arith.constant 0 : index
      %191 = vector.load %arg24[%c0_87, %c0_88] : memref<32x3xf32, #tpu.memory_space<vmem>>, vector<32x3xf32>
      %cst_89 = arith.constant dense<0.000000e+00> : vector<1x3xf32>
      %192 = tpu.matmul %190, %191, %cst_89 {dimension_numbers = #tpu.dot_dimension_numbers<[1], [0], [0], [1], [0, 0, 1, 1], [], []>} : vector<1x32xf32>, vector<32x3xf32>, vector<1x3xf32> -> vector<1x3xf32>
      %c0_90 = arith.constant 0 : index
      %c0_91 = arith.constant 0 : index
      %193 = vector.load %arg25[%c0_90, %c0_91] : memref<1x3xf32, #tpu.memory_space<vmem>>, vector<1x3xf32>
      %194 = arith.addf %192, %193 : vector<1x3xf32>
      %c0_92 = arith.constant 0 : index
      %c0_93 = arith.constant 0 : index
      %c0_94 = arith.constant 0 : index
      %195 = vector.load %arg27[%c0_92, %c0_93, %c0_94] : memref<1x1x3xf32, #tpu.memory_space<vmem>>, vector<1x1x3xf32>
      %196 = vector.shape_cast %195 : vector<1x1x3xf32> to vector<1x3xf32>
      %197 = vector.shape_cast %194 : vector<1x3xf32> to vector<1x1x3xf32>
      tpu.vector_store %arg27[%c0_92, %c0_93, %c0_94], %197 {strides = array<i32>} : memref<1x1x3xf32, #tpu.memory_space<vmem>>, vector<1x1x3xf32>,
    } else {
    }
    return
  }
  func.func @transform_0(%arg0: i32, %arg1: i32) -> (i32, i32, i32) {
    %c0_i32 = arith.constant 0 : i32
    %c0_i32_0 = arith.constant 0 : i32
    %c0_i32_1 = arith.constant 0 : i32
    return %arg0, %c0_i32, %c0_i32_0 : i32, i32, i32
  }
  func.func @transform_1(%arg0: i32, %arg1: i32) -> (i32, i32) {
    %c0_i32 = arith.constant 0 : i32
    %c0_i32_0 = arith.constant 0 : i32
    %c0_i32_1 = arith.constant 0 : i32
    return %c0_i32, %c0_i32_0 : i32, i32
  }
  func.func @transform_2(%arg0: i32, %arg1: i32) -> (i32, i32) {
    %c0_i32 = arith.constant 0 : i32
    %c0_i32_0 = arith.constant 0 : i32
    %c0_i32_1 = arith.constant 0 : i32
    return %c0_i32, %c0_i32_0 : i32, i32
  }
  func.func @transform_3(%arg0: i32, %arg1: i32) -> (i32, i32) {
    %c0_i32 = arith.constant 0 : i32
    %c0_i32_0 = arith.constant 0 : i32
    %c0_i32_1 = arith.constant 0 : i32
    return %c0_i32, %c0_i32_0 : i32, i32
  }
  func.func @transform_4(%arg0: i32, %arg1: i32) -> (i32, i32) {
    %c0_i32 = arith.constant 0 : i32
    %c0_i32_0 = arith.constant 0 : i32
    %c0_i32_1 = arith.constant 0 : i32
    return %c0_i32, %c0_i32_0 : i32, i32
  }
  func.func @transform_5(%arg0: i32, %arg1: i32) -> (i32, i32, i32) {
    %c0_i32 = arith.constant 0 : i32
    %c0_i32_0 = arith.constant 0 : i32
    %c0_i32_1 = arith.constant 0 : i32
    return %arg0, %c0_i32, %c0_i32_0 : i32, i32, i32
  }
  func.func @transform_6(%arg0: i32, %arg1: i32) -> (i32, i32, i32) {
    %c0_i32 = arith.constant 0 : i32
    %c0_i32_0 = arith.constant 0 : i32
    %c0_i32_1 = arith.constant 0 : i32
    return %arg1, %c0_i32, %c0_i32_0 : i32, i32, i32
  }
  func.func @transform_7(%arg0: i32, %arg1: i32) -> (i32, i32, i32) {
    %c0_i32 = arith.constant 0 : i32
    %c0_i32_0 = arith.constant 0 : i32
    %c0_i32_1 = arith.constant 0 : i32
    return %arg1, %c0_i32, %c0_i32_0 : i32, i32, i32
  }
  func.func @transform_8(%arg0: i32, %arg1: i32) -> (i32, i32, i32) {
    %c0_i32 = arith.constant 0 : i32
    %c0_i32_0 = arith.constant 0 : i32
    %c0_i32_1 = arith.constant 0 : i32
    return %arg1, %c0_i32, %c0_i32_0 : i32, i32, i32
  }
  func.func @transform_9(%arg0: i32, %arg1: i32) -> (i32, i32, i32) {
    %c0_i32 = arith.constant 0 : i32
    %c0_i32_0 = arith.constant 0 : i32
    %c0_i32_1 = arith.constant 0 : i32
    return %arg1, %c0_i32, %c0_i32_0 : i32, i32, i32
  }
  func.func @transform_10(%arg0: i32, %arg1: i32) -> (i32, i32, i32) {
    %c0_i32 = arith.constant 0 : i32
    %c0_i32_0 = arith.constant 0 : i32
    %c0_i32_1 = arith.constant 0 : i32
    return %arg1, %c0_i32, %c0_i32_0 : i32, i32, i32
  }
  func.func @transform_11(%arg0: i32, %arg1: i32) -> (i32, i32, i32) {
    %c0_i32 = arith.constant 0 : i32
    %c0_i32_0 = arith.constant 0 : i32
    %c0_i32_1 = arith.constant 0 : i32
    return %arg1, %c0_i32, %c0_i32_0 : i32, i32, i32
  }
  func.func @transform_12(%arg0: i32, %arg1: i32) -> (i32, i32, i32) {
    %c0_i32 = arith.constant 0 : i32
    %c0_i32_0 = arith.constant 0 : i32
    %c0_i32_1 = arith.constant 0 : i32
    return %arg1, %c0_i32, %c0_i32_0 : i32, i32, i32
  }
  func.func @transform_13(%arg0: i32, %arg1: i32) -> (i32, i32, i32) {
    %c0_i32 = arith.constant 0 : i32
    %c0_i32_0 = arith.constant 0 : i32
    %c0_i32_1 = arith.constant 0 : i32
    return %arg1, %c0_i32, %c0_i32_0 : i32, i32, i32
  }
  func.func @transform_14(%arg0: i32, %arg1: i32) -> (i32, i32, i32) {
    %c0_i32 = arith.constant 0 : i32
    %c0_i32_0 = arith.constant 0 : i32
    %c0_i32_1 = arith.constant 0 : i32
    return %arg1, %c0_i32, %c0_i32_0 : i32, i32, i32
  }
  func.func @transform_15(%arg0: i32, %arg1: i32) -> (i32, i32, i32) {
    %c0_i32 = arith.constant 0 : i32
    %c0_i32_0 = arith.constant 0 : i32
    %c0_i32_1 = arith.constant 0 : i32
    return %arg1, %c0_i32, %c0_i32_0 : i32, i32, i32
  }
  func.func @transform_16(%arg0: i32, %arg1: i32) -> (i32, i32, i32) {
    %c0_i32 = arith.constant 0 : i32
    %c0_i32_0 = arith.constant 0 : i32
    %c0_i32_1 = arith.constant 0 : i32
    return %arg1, %c0_i32, %c0_i32_0 : i32, i32, i32
  }
  func.func @transform_17(%arg0: i32, %arg1: i32) -> (i32, i32, i32) {
    %c0_i32 = arith.constant 0 : i32
    %c0_i32_0 = arith.constant 0 : i32
    %c0_i32_1 = arith.constant 0 : i32
    return %arg1, %c0_i32, %c0_i32_0 : i32, i32, i32
  }
  func.func @transform_18(%arg0: i32, %arg1: i32) -> (i32, i32) {
    %c0_i32 = arith.constant 0 : i32
    %c0_i32_0 = arith.constant 0 : i32
    %c0_i32_1 = arith.constant 0 : i32
    return %c0_i32, %c0_i32_0 : i32, i32
  }
  func.func @transform_19(%arg0: i32, %arg1: i32) -> (i32, i32) {
    %c0_i32 = arith.constant 0 : i32
    %c0_i32_0 = arith.constant 0 : i32
    %c0_i32_1 = arith.constant 0 : i32
    return %c0_i32, %c0_i32_0 : i32, i32
  }
  func.func @transform_20(%arg0: i32, %arg1: i32) -> (i32, i32) {
    %c0_i32 = arith.constant 0 : i32
    %c0_i32_0 = arith.constant 0 : i32
    %c0_i32_1 = arith.constant 0 : i32
    return %c0_i32, %c0_i32_0 : i32, i32
  }
  func.func @transform_21(%arg0: i32, %arg1: i32) -> (i32, i32) {
    %c0_i32 = arith.constant 0 : i32
    %c0_i32_0 = arith.constant 0 : i32
    %c0_i32_1 = arith.constant 0 : i32
    return %c0_i32, %c0_i32_0 : i32, i32
  }
  func.func @transform_22(%arg0: i32, %arg1: i32) -> (i32, i32) {
    %c0_i32 = arith.constant 0 : i32
    %c0_i32_0 = arith.constant 0 : i32
    %c0_i32_1 = arith.constant 0 : i32
    return %c0_i32, %c0_i32_0 : i32, i32
  }
  func.func @transform_23(%arg0: i32, %arg1: i32) -> (i32, i32) {
    %c0_i32 = arith.constant 0 : i32
    %c0_i32_0 = arith.constant 0 : i32
    %c0_i32_1 = arith.constant 0 : i32
    return %c0_i32, %c0_i32_0 : i32, i32
  }
  func.func @transform_24(%arg0: i32, %arg1: i32) -> (i32, i32, i32) {
    %c0_i32 = arith.constant 0 : i32
    %c0_i32_0 = arith.constant 0 : i32
    %c0_i32_1 = arith.constant 0 : i32
    return %arg0, %c0_i32, %c0_i32_0 : i32, i32, i32
  }
  func.func @transform_25(%arg0: i32, %arg1: i32) -> (i32, i32, i32) {
    %c0_i32 = arith.constant 0 : i32
    %c0_i32_0 = arith.constant 0 : i32
    %c0_i32_1 = arith.constant 0 : i32
    return %arg0, %c0_i32, %c0_i32_0 : i32, i32, i32
  }
}

module attributes {stable_mosaic.version = 11 : i64} {
  func.func @_encoder_kernel(%arg0: i32, %arg1: i32, %arg2: memref<1x8x32xf32, #tpu.memory_space<vmem>>, %arg3: memref<1x32xf32, #tpu.memory_space<vmem>>, %arg4: memref<1x32xf32, #tpu.memory_space<vmem>>, %arg5: memref<1x1x8xf32, #tpu.memory_space<vmem>>, %arg6: memref<1x32x96xbf16, #tpu.memory_space<vmem>>, %arg7: memref<1x1x96xf32, #tpu.memory_space<vmem>>, %arg8: memref<1x32x32xbf16, #tpu.memory_space<vmem>>, %arg9: memref<1x1x32xf32, #tpu.memory_space<vmem>>, %arg10: memref<1x1x32xf32, #tpu.memory_space<vmem>>, %arg11: memref<1x1x32xf32, #tpu.memory_space<vmem>>, %arg12: memref<1x1x32xf32, #tpu.memory_space<vmem>>, %arg13: memref<1x1x32xf32, #tpu.memory_space<vmem>>, %arg14: memref<1x32x64xbf16, #tpu.memory_space<vmem>>, %arg15: memref<1x1x64xf32, #tpu.memory_space<vmem>>, %arg16: memref<1x64x32xbf16, #tpu.memory_space<vmem>>, %arg17: memref<1x1x32xf32, #tpu.memory_space<vmem>>, %arg18: memref<1x32xf32, #tpu.memory_space<vmem>>, %arg19: memref<1x32xf32, #tpu.memory_space<vmem>>, %arg20: memref<32x32xf32, #tpu.memory_space<vmem>>, %arg21: memref<1x32xf32, #tpu.memory_space<vmem>>, %arg22: memref<32x3xf32, #tpu.memory_space<vmem>>, %arg23: memref<1x3xf32, #tpu.memory_space<vmem>>, %arg24: memref<1x8x32xf32, #tpu.memory_space<vmem>>, %arg25: memref<1x1x3xf32, #tpu.memory_space<vmem>>, %arg26: memref<8x32xf32, #tpu.memory_space<vmem>>) attributes {dimension_semantics = [#tpu.dimension_semantics<parallel>, #tpu.dimension_semantics<arbitrary>], iteration_bounds = array<i64: 2, 2>, scalar_prefetch = 0 : i64, scratch_operands = 1 : i64, tpu.core_type = #tpu.core_type<tc>, window_params = [{transform_indices = @transform_0, window_bounds = array<i64: 1, 8, 32>}, {pipeline_mode = #tpu.pipeline_mode<synchronous>, transform_indices = @transform_1, window_bounds = array<i64: 1, 32>}, {pipeline_mode = #tpu.pipeline_mode<synchronous>, transform_indices = @transform_2, window_bounds = array<i64: 1, 32>}, {transform_indices = @transform_3, window_bounds = array<i64: 1, 1, 8>}, {transform_indices = @transform_4, window_bounds = array<i64: 1, 32, 96>}, {transform_indices = @transform_5, window_bounds = array<i64: 1, 1, 96>}, {transform_indices = @transform_6, window_bounds = array<i64: 1, 32, 32>}, {transform_indices = @transform_7, window_bounds = array<i64: 1, 1, 32>}, {transform_indices = @transform_8, window_bounds = array<i64: 1, 1, 32>}, {transform_indices = @transform_9, window_bounds = array<i64: 1, 1, 32>}, {transform_indices = @transform_10, window_bounds = array<i64: 1, 1, 32>}, {transform_indices = @transform_11, window_bounds = array<i64: 1, 1, 32>}, {transform_indices = @transform_12, window_bounds = array<i64: 1, 32, 64>}, {transform_indices = @transform_13, window_bounds = array<i64: 1, 1, 64>}, {transform_indices = @transform_14, window_bounds = array<i64: 1, 64, 32>}, {transform_indices = @transform_15, window_bounds = array<i64: 1, 1, 32>}, {pipeline_mode = #tpu.pipeline_mode<synchronous>, transform_indices = @transform_16, window_bounds = array<i64: 1, 32>}, {pipeline_mode = #tpu.pipeline_mode<synchronous>, transform_indices = @transform_17, window_bounds = array<i64: 1, 32>}, {pipeline_mode = #tpu.pipeline_mode<synchronous>, transform_indices = @transform_18, window_bounds = array<i64: 32, 32>}, {pipeline_mode = #tpu.pipeline_mode<synchronous>, transform_indices = @transform_19, window_bounds = array<i64: 1, 32>}, {pipeline_mode = #tpu.pipeline_mode<synchronous>, transform_indices = @transform_20, window_bounds = array<i64: 32, 3>}, {pipeline_mode = #tpu.pipeline_mode<synchronous>, transform_indices = @transform_21, window_bounds = array<i64: 1, 3>}, {transform_indices = @transform_22, window_bounds = array<i64: 1, 8, 32>}, {transform_indices = @transform_23, window_bounds = array<i64: 1, 1, 3>}]} {
    %c0_i32 = arith.constant 0 : i32
    %0 = arith.cmpi eq, %arg1, %c0_i32 : i32
    %1 = arith.extui %0 : i1 to i32
    %c0_i32_0 = arith.constant 0 : i32
    %2 = arith.cmpi ne, %1, %c0_i32_0 : i32
    scf.if %2 {
      %c0_70 = arith.constant 0 : index
      %c0_71 = arith.constant 0 : index
      %c0_72 = arith.constant 0 : index
      %158 = vector.load %arg2[%c0_70, %c0_71, %c0_72] : memref<1x8x32xf32, #tpu.memory_space<vmem>>, vector<1x8x32xf32>
      %159 = vector.shape_cast %158 : vector<1x8x32xf32> to vector<8x32xf32>
      %c0_73 = arith.constant 0 : index
      %c0_74 = arith.constant 0 : index
      %160 = vector.load %arg3[%c0_73, %c0_74] : memref<1x32xf32, #tpu.memory_space<vmem>>, vector<1x32xf32>
      %c0_75 = arith.constant 0 : index
      %c0_76 = arith.constant 0 : index
      %161 = vector.load %arg4[%c0_75, %c0_76] : memref<1x32xf32, #tpu.memory_space<vmem>>, vector<1x32xf32>
      %cst_77 = arith.constant dense<0.000000e+00> : vector<8xf32>
      %162 = vector.multi_reduction <add>, %159, %cst_77 [1] : vector<8x32xf32> to vector<8xf32>
      %163 = vector.shape_cast %162 : vector<8xf32> to vector<8x1xf32>
      %cst_78 = arith.constant 3.200000e+01 : f32
      %164 = vector.broadcast %cst_78 : f32 to vector<8x1xf32>
      %165 = arith.divf %163, %164 : vector<8x1xf32>
      %166 = vector.broadcast %165 : vector<8x1xf32> to vector<8x32xf32>
      %167 = arith.subf %159, %166 : vector<8x32xf32>
      %168 = arith.mulf %167, %167 : vector<8x32xf32>
      %cst_79 = arith.constant dense<0.000000e+00> : vector<8xf32>
      %169 = vector.multi_reduction <add>, %168, %cst_79 [1] : vector<8x32xf32> to vector<8xf32>
      %170 = vector.shape_cast %169 : vector<8xf32> to vector<8x1xf32>
      %cst_80 = arith.constant 3.200000e+01 : f32
      %171 = vector.broadcast %cst_80 : f32 to vector<8x1xf32>
      %172 = arith.divf %170, %171 : vector<8x1xf32>
      %173 = vector.broadcast %165 : vector<8x1xf32> to vector<8x32xf32>
      %174 = arith.subf %159, %173 : vector<8x32xf32>
      %cst_81 = arith.constant 9.99999996E-13 : f32
      %175 = vector.broadcast %cst_81 : f32 to vector<8x1xf32>
      %176 = arith.addf %172, %175 : vector<8x1xf32>
      %177 = math.rsqrt %176 : vector<8x1xf32>
      %178 = vector.broadcast %177 : vector<8x1xf32> to vector<8x32xf32>
      %179 = arith.mulf %174, %178 : vector<8x32xf32>
      %180 = vector.broadcast %160 : vector<1x32xf32> to vector<8x32xf32>
      %181 = arith.mulf %179, %180 : vector<8x32xf32>
      %182 = vector.broadcast %161 : vector<1x32xf32> to vector<8x32xf32>
      %183 = arith.addf %181, %182 : vector<8x32xf32>
      %c0_82 = arith.constant 0 : index
      %c0_83 = arith.constant 0 : index
      %184 = vector.load %arg26[%c0_82, %c0_83] : memref<8x32xf32, #tpu.memory_space<vmem>>, vector<8x32xf32>
      tpu.vector_store %arg26[%c0_82, %c0_83], %183 {strides = array<i32>} : memref<8x32xf32, #tpu.memory_space<vmem>>, vector<8x32xf32>,
    } else {
    }
    %c0 = arith.constant 0 : index
    %c0_1 = arith.constant 0 : index
    %3 = vector.load %arg26[%c0, %c0_1] : memref<8x32xf32, #tpu.memory_space<vmem>>, vector<8x32xf32>
    %c0_2 = arith.constant 0 : index
    %c0_3 = arith.constant 0 : index
    %c0_4 = arith.constant 0 : index
    %4 = vector.load %arg10[%c0_2, %c0_3, %c0_4] : memref<1x1x32xf32, #tpu.memory_space<vmem>>, vector<1x1x32xf32>
    %5 = vector.shape_cast %4 : vector<1x1x32xf32> to vector<1x32xf32>
    %c0_5 = arith.constant 0 : index
    %c0_6 = arith.constant 0 : index
    %c0_7 = arith.constant 0 : index
    %6 = vector.load %arg11[%c0_5, %c0_6, %c0_7] : memref<1x1x32xf32, #tpu.memory_space<vmem>>, vector<1x1x32xf32>
    %7 = vector.shape_cast %6 : vector<1x1x32xf32> to vector<1x32xf32>
    %cst = arith.constant dense<0.000000e+00> : vector<8xf32>
    %8 = vector.multi_reduction <add>, %3, %cst [1] : vector<8x32xf32> to vector<8xf32>
    %9 = vector.shape_cast %8 : vector<8xf32> to vector<8x1xf32>
    %cst_8 = arith.constant 3.200000e+01 : f32
    %10 = vector.broadcast %cst_8 : f32 to vector<8x1xf32>
    %11 = arith.divf %9, %10 : vector<8x1xf32>
    %12 = vector.broadcast %11 : vector<8x1xf32> to vector<8x32xf32>
    %13 = arith.subf %3, %12 : vector<8x32xf32>
    %14 = arith.mulf %13, %13 : vector<8x32xf32>
    %cst_9 = arith.constant dense<0.000000e+00> : vector<8xf32>
    %15 = vector.multi_reduction <add>, %14, %cst_9 [1] : vector<8x32xf32> to vector<8xf32>
    %16 = vector.shape_cast %15 : vector<8xf32> to vector<8x1xf32>
    %cst_10 = arith.constant 3.200000e+01 : f32
    %17 = vector.broadcast %cst_10 : f32 to vector<8x1xf32>
    %18 = arith.divf %16, %17 : vector<8x1xf32>
    %19 = vector.broadcast %11 : vector<8x1xf32> to vector<8x32xf32>
    %20 = arith.subf %3, %19 : vector<8x32xf32>
    %cst_11 = arith.constant 9.99999996E-13 : f32
    %21 = vector.broadcast %cst_11 : f32 to vector<8x1xf32>
    %22 = arith.addf %18, %21 : vector<8x1xf32>
    %23 = math.rsqrt %22 : vector<8x1xf32>
    %24 = vector.broadcast %23 : vector<8x1xf32> to vector<8x32xf32>
    %25 = arith.mulf %20, %24 : vector<8x32xf32>
    %26 = vector.broadcast %5 : vector<1x32xf32> to vector<8x32xf32>
    %27 = arith.mulf %25, %26 : vector<8x32xf32>
    %28 = vector.broadcast %7 : vector<1x32xf32> to vector<8x32xf32>
    %29 = arith.addf %27, %28 : vector<8x32xf32>
    %30 = arith.truncf %29 : vector<8x32xf32> to vector<8x32xbf16>
    %c0_12 = arith.constant 0 : index
    %c0_13 = arith.constant 0 : index
    %c0_14 = arith.constant 0 : index
    %31 = vector.load %arg6[%c0_12, %c0_13, %c0_14] : memref<1x32x96xbf16, #tpu.memory_space<vmem>>, vector<1x32x96xbf16>
    %32 = vector.shape_cast %31 : vector<1x32x96xbf16> to vector<32x96xbf16>
    %cst_15 = arith.constant dense<0.000000e+00> : vector<8x96xf32>
    %33 = tpu.matmul %30, %32, %cst_15 {dimension_numbers = #tpu.dot_dimension_numbers<[1], [0], [0], [1], [0, 0, 1, 1], [], []>} : vector<8x32xbf16>, vector<32x96xbf16>, vector<8x96xf32> -> vector<8x96xf32>
    %c0_16 = arith.constant 0 : index
    %c0_17 = arith.constant 0 : index
    %c0_18 = arith.constant 0 : index
    %34 = vector.load %arg7[%c0_16, %c0_17, %c0_18] : memref<1x1x96xf32, #tpu.memory_space<vmem>>, vector<1x1x96xf32>
    %35 = vector.shape_cast %34 : vector<1x1x96xf32> to vector<1x96xf32>
    %36 = vector.broadcast %35 : vector<1x96xf32> to vector<8x96xf32>
    %37 = arith.addf %33, %36 : vector<8x96xf32>
    %c0_19 = arith.constant 0 : index
    %c0_20 = arith.constant 0 : index
    %c0_21 = arith.constant 0 : index
    %38 = vector.load %arg5[%c0_19, %c0_20, %c0_21] : memref<1x1x8xf32, #tpu.memory_space<vmem>>, vector<1x1x8xf32>
    %39 = vector.shape_cast %38 : vector<1x1x8xf32> to vector<1x8xf32>
    %40 = vector.extract_strided_slice %37 {offsets = [0, 0], sizes = [8, 8], strides = [1, 1]} : vector<8x96xf32> to vector<8x8xf32>
    %41 = arith.truncf %40 : vector<8x8xf32> to vector<8x8xbf16>
    %42 = vector.extract_strided_slice %37 {offsets = [0, 32], sizes = [8, 8], strides = [1, 1]} : vector<8x96xf32> to vector<8x8xf32>
    %43 = arith.truncf %42 : vector<8x8xf32> to vector<8x8xbf16>
    %cst_22 = arith.constant dense<0.000000e+00> : vector<8x8xf32>
    %44 = tpu.matmul %41, %43, %cst_22 {dimension_numbers = #tpu.dot_dimension_numbers<[1], [1], [0], [0], [0, 0, 1, 0], [], []>} : vector<8x8xbf16>, vector<8x8xbf16>, vector<8x8xf32> -> vector<8x8xf32>
    %45 = vector.extract_strided_slice %37 {offsets = [0, 8], sizes = [8, 8], strides = [1, 1]} : vector<8x96xf32> to vector<8x8xf32>
    %46 = arith.truncf %45 : vector<8x8xf32> to vector<8x8xbf16>
    %47 = vector.extract_strided_slice %37 {offsets = [0, 40], sizes = [8, 8], strides = [1, 1]} : vector<8x96xf32> to vector<8x8xf32>
    %48 = arith.truncf %47 : vector<8x8xf32> to vector<8x8xbf16>
    %cst_23 = arith.constant dense<0.000000e+00> : vector<8x8xf32>
    %49 = tpu.matmul %46, %48, %cst_23 {dimension_numbers = #tpu.dot_dimension_numbers<[1], [1], [0], [0], [0, 0, 1, 0], [], []>} : vector<8x8xbf16>, vector<8x8xbf16>, vector<8x8xf32> -> vector<8x8xf32>
    %50 = vector.extract_strided_slice %37 {offsets = [0, 16], sizes = [8, 8], strides = [1, 1]} : vector<8x96xf32> to vector<8x8xf32>
    %51 = arith.truncf %50 : vector<8x8xf32> to vector<8x8xbf16>
    %52 = vector.extract_strided_slice %37 {offsets = [0, 48], sizes = [8, 8], strides = [1, 1]} : vector<8x96xf32> to vector<8x8xf32>
    %53 = arith.truncf %52 : vector<8x8xf32> to vector<8x8xbf16>
    %cst_24 = arith.constant dense<0.000000e+00> : vector<8x8xf32>
    %54 = tpu.matmul %51, %53, %cst_24 {dimension_numbers = #tpu.dot_dimension_numbers<[1], [1], [0], [0], [0, 0, 1, 0], [], []>} : vector<8x8xbf16>, vector<8x8xbf16>, vector<8x8xf32> -> vector<8x8xf32>
    %55 = vector.extract_strided_slice %37 {offsets = [0, 24], sizes = [8, 8], strides = [1, 1]} : vector<8x96xf32> to vector<8x8xf32>
    %56 = arith.truncf %55 : vector<8x8xf32> to vector<8x8xbf16>
    %57 = vector.extract_strided_slice %37 {offsets = [0, 56], sizes = [8, 8], strides = [1, 1]} : vector<8x96xf32> to vector<8x8xf32>
    %58 = arith.truncf %57 : vector<8x8xf32> to vector<8x8xbf16>
    %cst_25 = arith.constant dense<0.000000e+00> : vector<8x8xf32>
    %59 = tpu.matmul %56, %58, %cst_25 {dimension_numbers = #tpu.dot_dimension_numbers<[1], [1], [0], [0], [0, 0, 1, 0], [], []>} : vector<8x8xbf16>, vector<8x8xbf16>, vector<8x8xf32> -> vector<8x8xf32>
    %60 = tpu.concatenate %44, %49, %54, %59 in 0 : vector<8x8xf32>, vector<8x8xf32>, vector<8x8xf32>, vector<8x8xf32> -> vector<32x8xf32>
    %61 = vector.broadcast %39 : vector<1x8xf32> to vector<32x8xf32>
    %62 = arith.addf %60, %61 : vector<32x8xf32>
    %cst_26 = arith.constant dense<0xFF800000> : vector<32xf32>
    %63 = vector.multi_reduction <maximumf>, %62, %cst_26 [1] : vector<32x8xf32> to vector<32xf32>
    %64 = vector.shape_cast %63 : vector<32xf32> to vector<32x1xf32>
    %65 = vector.broadcast %64 : vector<32x1xf32> to vector<32x8xf32>
    %66 = arith.subf %62, %65 : vector<32x8xf32>
    %67 = math.exp %66 : vector<32x8xf32>
    %cst_27 = arith.constant dense<0.000000e+00> : vector<32xf32>
    %68 = vector.multi_reduction <add>, %67, %cst_27 [1] : vector<32x8xf32> to vector<32xf32>
    %69 = vector.shape_cast %68 : vector<32xf32> to vector<32x1xf32>
    %70 = tpu.reciprocal %69 {approx = true} : vector<32x1xf32> -> vector<32x1xf32>
    %71 = vector.broadcast %70 : vector<32x1xf32> to vector<32x8xf32>
    %72 = arith.mulf %67, %71 : vector<32x8xf32>
    %73 = vector.extract_strided_slice %37 {offsets = [0, 64], sizes = [8, 8], strides = [1, 1]} : vector<8x96xf32> to vector<8x8xf32>
    %74 = arith.truncf %73 : vector<8x8xf32> to vector<8x8xbf16>
    %75 = vector.extract_strided_slice %72 {offsets = [0, 0], sizes = [8, 8], strides = [1, 1]} : vector<32x8xf32> to vector<8x8xf32>
    %76 = arith.truncf %75 : vector<8x8xf32> to vector<8x8xbf16>
    %cst_28 = arith.constant dense<0.000000e+00> : vector<8x8xf32>
    %77 = tpu.matmul %76, %74, %cst_28 {dimension_numbers = #tpu.dot_dimension_numbers<[1], [0], [0], [1], [0, 0, 1, 1], [], []>} : vector<8x8xbf16>, vector<8x8xbf16>, vector<8x8xf32> -> vector<8x8xf32>
    %78 = vector.extract_strided_slice %37 {offsets = [0, 72], sizes = [8, 8], strides = [1, 1]} : vector<8x96xf32> to vector<8x8xf32>
    %79 = arith.truncf %78 : vector<8x8xf32> to vector<8x8xbf16>
    %80 = vector.extract_strided_slice %72 {offsets = [8, 0], sizes = [8, 8], strides = [1, 1]} : vector<32x8xf32> to vector<8x8xf32>
    %81 = arith.truncf %80 : vector<8x8xf32> to vector<8x8xbf16>
    %cst_29 = arith.constant dense<0.000000e+00> : vector<8x8xf32>
    %82 = tpu.matmul %81, %79, %cst_29 {dimension_numbers = #tpu.dot_dimension_numbers<[1], [0], [0], [1], [0, 0, 1, 1], [], []>} : vector<8x8xbf16>, vector<8x8xbf16>, vector<8x8xf32> -> vector<8x8xf32>
    %83 = vector.extract_strided_slice %37 {offsets = [0, 80], sizes = [8, 8], strides = [1, 1]} : vector<8x96xf32> to vector<8x8xf32>
    %84 = arith.truncf %83 : vector<8x8xf32> to vector<8x8xbf16>
    %85 = vector.extract_strided_slice %72 {offsets = [16, 0], sizes = [8, 8], strides = [1, 1]} : vector<32x8xf32> to vector<8x8xf32>
    %86 = arith.truncf %85 : vector<8x8xf32> to vector<8x8xbf16>
    %cst_30 = arith.constant dense<0.000000e+00> : vector<8x8xf32>
    %87 = tpu.matmul %86, %84, %cst_30 {dimension_numbers = #tpu.dot_dimension_numbers<[1], [0], [0], [1], [0, 0, 1, 1], [], []>} : vector<8x8xbf16>, vector<8x8xbf16>, vector<8x8xf32> -> vector<8x8xf32>
    %88 = vector.extract_strided_slice %37 {offsets = [0, 88], sizes = [8, 8], strides = [1, 1]} : vector<8x96xf32> to vector<8x8xf32>
    %89 = arith.truncf %88 : vector<8x8xf32> to vector<8x8xbf16>
    %90 = vector.extract_strided_slice %72 {offsets = [24, 0], sizes = [8, 8], strides = [1, 1]} : vector<32x8xf32> to vector<8x8xf32>
    %91 = arith.truncf %90 : vector<8x8xf32> to vector<8x8xbf16>
    %cst_31 = arith.constant dense<0.000000e+00> : vector<8x8xf32>
    %92 = tpu.matmul %91, %89, %cst_31 {dimension_numbers = #tpu.dot_dimension_numbers<[1], [0], [0], [1], [0, 0, 1, 1], [], []>} : vector<8x8xbf16>, vector<8x8xbf16>, vector<8x8xf32> -> vector<8x8xf32>
    %93 = tpu.concatenate %77, %82, %87, %92 in 1 : vector<8x8xf32>, vector<8x8xf32>, vector<8x8xf32>, vector<8x8xf32> -> vector<8x32xf32>
    %94 = arith.truncf %93 : vector<8x32xf32> to vector<8x32xbf16>
    %c0_32 = arith.constant 0 : index
    %c0_33 = arith.constant 0 : index
    %c0_34 = arith.constant 0 : index
    %95 = vector.load %arg8[%c0_32, %c0_33, %c0_34] : memref<1x32x32xbf16, #tpu.memory_space<vmem>>, vector<1x32x32xbf16>
    %96 = vector.shape_cast %95 : vector<1x32x32xbf16> to vector<32x32xbf16>
    %cst_35 = arith.constant dense<0.000000e+00> : vector<8x32xf32>
    %97 = tpu.matmul %94, %96, %cst_35 {dimension_numbers = #tpu.dot_dimension_numbers<[1], [0], [0], [1], [0, 0, 1, 1], [], []>} : vector<8x32xbf16>, vector<32x32xbf16>, vector<8x32xf32> -> vector<8x32xf32>
    %c0_36 = arith.constant 0 : index
    %c0_37 = arith.constant 0 : index
    %c0_38 = arith.constant 0 : index
    %98 = vector.load %arg9[%c0_36, %c0_37, %c0_38] : memref<1x1x32xf32, #tpu.memory_space<vmem>>, vector<1x1x32xf32>
    %99 = vector.shape_cast %98 : vector<1x1x32xf32> to vector<1x32xf32>
    %100 = vector.broadcast %99 : vector<1x32xf32> to vector<8x32xf32>
    %101 = arith.addf %97, %100 : vector<8x32xf32>
    %102 = arith.addf %3, %101 : vector<8x32xf32>
    %c0_39 = arith.constant 0 : index
    %c0_40 = arith.constant 0 : index
    %c0_41 = arith.constant 0 : index
    %103 = vector.load %arg12[%c0_39, %c0_40, %c0_41] : memref<1x1x32xf32, #tpu.memory_space<vmem>>, vector<1x1x32xf32>
    %104 = vector.shape_cast %103 : vector<1x1x32xf32> to vector<1x32xf32>
    %c0_42 = arith.constant 0 : index
    %c0_43 = arith.constant 0 : index
    %c0_44 = arith.constant 0 : index
    %105 = vector.load %arg13[%c0_42, %c0_43, %c0_44] : memref<1x1x32xf32, #tpu.memory_space<vmem>>, vector<1x1x32xf32>
    %106 = vector.shape_cast %105 : vector<1x1x32xf32> to vector<1x32xf32>
    %cst_45 = arith.constant dense<0.000000e+00> : vector<8xf32>
    %107 = vector.multi_reduction <add>, %102, %cst_45 [1] : vector<8x32xf32> to vector<8xf32>
    %108 = vector.shape_cast %107 : vector<8xf32> to vector<8x1xf32>
    %cst_46 = arith.constant 3.200000e+01 : f32
    %109 = vector.broadcast %cst_46 : f32 to vector<8x1xf32>
    %110 = arith.divf %108, %109 : vector<8x1xf32>
    %111 = vector.broadcast %110 : vector<8x1xf32> to vector<8x32xf32>
    %112 = arith.subf %102, %111 : vector<8x32xf32>
    %113 = arith.mulf %112, %112 : vector<8x32xf32>
    %cst_47 = arith.constant dense<0.000000e+00> : vector<8xf32>
    %114 = vector.multi_reduction <add>, %113, %cst_47 [1] : vector<8x32xf32> to vector<8xf32>
    %115 = vector.shape_cast %114 : vector<8xf32> to vector<8x1xf32>
    %cst_48 = arith.constant 3.200000e+01 : f32
    %116 = vector.broadcast %cst_48 : f32 to vector<8x1xf32>
    %117 = arith.divf %115, %116 : vector<8x1xf32>
    %118 = vector.broadcast %110 : vector<8x1xf32> to vector<8x32xf32>
    %119 = arith.subf %102, %118 : vector<8x32xf32>
    %cst_49 = arith.constant 9.99999996E-13 : f32
    %120 = vector.broadcast %cst_49 : f32 to vector<8x1xf32>
    %121 = arith.addf %117, %120 : vector<8x1xf32>
    %122 = math.rsqrt %121 : vector<8x1xf32>
    %123 = vector.broadcast %122 : vector<8x1xf32> to vector<8x32xf32>
    %124 = arith.mulf %119, %123 : vector<8x32xf32>
    %125 = vector.broadcast %104 : vector<1x32xf32> to vector<8x32xf32>
    %126 = arith.mulf %124, %125 : vector<8x32xf32>
    %127 = vector.broadcast %106 : vector<1x32xf32> to vector<8x32xf32>
    %128 = arith.addf %126, %127 : vector<8x32xf32>
    %129 = arith.truncf %128 : vector<8x32xf32> to vector<8x32xbf16>
    %c0_50 = arith.constant 0 : index
    %c0_51 = arith.constant 0 : index
    %c0_52 = arith.constant 0 : index
    %130 = vector.load %arg14[%c0_50, %c0_51, %c0_52] : memref<1x32x64xbf16, #tpu.memory_space<vmem>>, vector<1x32x64xbf16>
    %131 = vector.shape_cast %130 : vector<1x32x64xbf16> to vector<32x64xbf16>
    %cst_53 = arith.constant dense<0.000000e+00> : vector<8x64xf32>
    %132 = tpu.matmul %129, %131, %cst_53 {dimension_numbers = #tpu.dot_dimension_numbers<[1], [0], [0], [1], [0, 0, 1, 1], [], []>} : vector<8x32xbf16>, vector<32x64xbf16>, vector<8x64xf32> -> vector<8x64xf32>
    %c0_54 = arith.constant 0 : index
    %c0_55 = arith.constant 0 : index
    %c0_56 = arith.constant 0 : index
    %133 = vector.load %arg15[%c0_54, %c0_55, %c0_56] : memref<1x1x64xf32, #tpu.memory_space<vmem>>, vector<1x1x64xf32>
    %134 = vector.shape_cast %133 : vector<1x1x64xf32> to vector<1x64xf32>
    %135 = vector.broadcast %134 : vector<1x64xf32> to vector<8x64xf32>
    %136 = arith.addf %132, %135 : vector<8x64xf32>
    %cst_57 = arith.constant 5.000000e-01 : f32
    %137 = vector.broadcast %cst_57 : f32 to vector<8x64xf32>
    %138 = arith.mulf %137, %136 : vector<8x64xf32>
    %cst_58 = arith.constant 0.707106769 : f32
    %139 = vector.broadcast %cst_58 : f32 to vector<8x64xf32>
    %140 = arith.mulf %136, %139 : vector<8x64xf32>
    %141 = math.erf %140 : vector<8x64xf32>
    %cst_59 = arith.constant 1.000000e+00 : f32
    %142 = vector.broadcast %cst_59 : f32 to vector<8x64xf32>
    %143 = arith.addf %142, %141 : vector<8x64xf32>
    %144 = arith.mulf %138, %143 : vector<8x64xf32>
    %145 = arith.truncf %144 : vector<8x64xf32> to vector<8x64xbf16>
    %c0_60 = arith.constant 0 : index
    %c0_61 = arith.constant 0 : index
    %c0_62 = arith.constant 0 : index
    %146 = vector.load %arg16[%c0_60, %c0_61, %c0_62] : memref<1x64x32xbf16, #tpu.memory_space<vmem>>, vector<1x64x32xbf16>
    %147 = vector.shape_cast %146 : vector<1x64x32xbf16> to vector<64x32xbf16>
    %cst_63 = arith.constant dense<0.000000e+00> : vector<8x32xf32>
    %148 = tpu.matmul %145, %147, %cst_63 {dimension_numbers = #tpu.dot_dimension_numbers<[1], [0], [0], [1], [0, 0, 1, 1], [], []>} : vector<8x64xbf16>, vector<64x32xbf16>, vector<8x32xf32> -> vector<8x32xf32>
    %c0_64 = arith.constant 0 : index
    %c0_65 = arith.constant 0 : index
    %c0_66 = arith.constant 0 : index
    %149 = vector.load %arg17[%c0_64, %c0_65, %c0_66] : memref<1x1x32xf32, #tpu.memory_space<vmem>>, vector<1x1x32xf32>
    %150 = vector.shape_cast %149 : vector<1x1x32xf32> to vector<1x32xf32>
    %151 = vector.broadcast %150 : vector<1x32xf32> to vector<8x32xf32>
    %152 = arith.addf %148, %151 : vector<8x32xf32>
    %153 = arith.addf %102, %152 : vector<8x32xf32>
    %c0_67 = arith.constant 0 : index
    %c0_68 = arith.constant 0 : index
    %154 = vector.load %arg26[%c0_67, %c0_68] : memref<8x32xf32, #tpu.memory_space<vmem>>, vector<8x32xf32>
    tpu.vector_store %arg26[%c0_67, %c0_68], %153 {strides = array<i32>} : memref<8x32xf32, #tpu.memory_space<vmem>>, vector<8x32xf32>,
    %c1_i32 = arith.constant 1 : i32
    %155 = arith.cmpi eq, %arg1, %c1_i32 : i32
    %156 = arith.extui %155 : i1 to i32
    %c0_i32_69 = arith.constant 0 : i32
    %157 = arith.cmpi ne, %156, %c0_i32_69 : i32
    scf.if %157 {
      %c0_70 = arith.constant 0 : index
      %c0_71 = arith.constant 0 : index
      %158 = vector.load %arg18[%c0_70, %c0_71] : memref<1x32xf32, #tpu.memory_space<vmem>>, vector<1x32xf32>
      %c0_72 = arith.constant 0 : index
      %c0_73 = arith.constant 0 : index
      %159 = vector.load %arg19[%c0_72, %c0_73] : memref<1x32xf32, #tpu.memory_space<vmem>>, vector<1x32xf32>
      %cst_74 = arith.constant dense<0.000000e+00> : vector<8xf32>
      %160 = vector.multi_reduction <add>, %153, %cst_74 [1] : vector<8x32xf32> to vector<8xf32>
      %161 = vector.shape_cast %160 : vector<8xf32> to vector<8x1xf32>
      %cst_75 = arith.constant 3.200000e+01 : f32
      %162 = vector.broadcast %cst_75 : f32 to vector<8x1xf32>
      %163 = arith.divf %161, %162 : vector<8x1xf32>
      %164 = vector.broadcast %163 : vector<8x1xf32> to vector<8x32xf32>
      %165 = arith.subf %153, %164 : vector<8x32xf32>
      %166 = arith.mulf %165, %165 : vector<8x32xf32>
      %cst_76 = arith.constant dense<0.000000e+00> : vector<8xf32>
      %167 = vector.multi_reduction <add>, %166, %cst_76 [1] : vector<8x32xf32> to vector<8xf32>
      %168 = vector.shape_cast %167 : vector<8xf32> to vector<8x1xf32>
      %cst_77 = arith.constant 3.200000e+01 : f32
      %169 = vector.broadcast %cst_77 : f32 to vector<8x1xf32>
      %170 = arith.divf %168, %169 : vector<8x1xf32>
      %171 = vector.broadcast %163 : vector<8x1xf32> to vector<8x32xf32>
      %172 = arith.subf %153, %171 : vector<8x32xf32>
      %cst_78 = arith.constant 9.99999996E-13 : f32
      %173 = vector.broadcast %cst_78 : f32 to vector<8x1xf32>
      %174 = arith.addf %170, %173 : vector<8x1xf32>
      %175 = math.rsqrt %174 : vector<8x1xf32>
      %176 = vector.broadcast %175 : vector<8x1xf32> to vector<8x32xf32>
      %177 = arith.mulf %172, %176 : vector<8x32xf32>
      %178 = vector.broadcast %158 : vector<1x32xf32> to vector<8x32xf32>
      %179 = arith.mulf %177, %178 : vector<8x32xf32>
      %180 = vector.broadcast %159 : vector<1x32xf32> to vector<8x32xf32>
      %181 = arith.addf %179, %180 : vector<8x32xf32>
      %c0_79 = arith.constant 0 : index
      %c0_80 = arith.constant 0 : index
      %c0_81 = arith.constant 0 : index
      %182 = vector.load %arg24[%c0_79, %c0_80, %c0_81] : memref<1x8x32xf32, #tpu.memory_space<vmem>>, vector<1x8x32xf32>
      %183 = vector.shape_cast %182 : vector<1x8x32xf32> to vector<8x32xf32>
      %184 = vector.shape_cast %181 : vector<8x32xf32> to vector<1x8x32xf32>
      tpu.vector_store %arg24[%c0_79, %c0_80, %c0_81], %184 {strides = array<i32>} : memref<1x8x32xf32, #tpu.memory_space<vmem>>, vector<1x8x32xf32>,
      %185 = vector.extract_strided_slice %181 {offsets = [0, 0], sizes = [1, 32], strides = [1, 1]} : vector<8x32xf32> to vector<1x32xf32>
      %c0_82 = arith.constant 0 : index
      %c0_83 = arith.constant 0 : index
      %186 = vector.load %arg20[%c0_82, %c0_83] : memref<32x32xf32, #tpu.memory_space<vmem>>, vector<32x32xf32>
      %cst_84 = arith.constant dense<0.000000e+00> : vector<1x32xf32>
      %187 = tpu.matmul %185, %186, %cst_84 {dimension_numbers = #tpu.dot_dimension_numbers<[1], [0], [0], [1], [0, 0, 1, 1], [], []>} : vector<1x32xf32>, vector<32x32xf32>, vector<1x32xf32> -> vector<1x32xf32>
      %c0_85 = arith.constant 0 : index
      %c0_86 = arith.constant 0 : index
      %188 = vector.load %arg21[%c0_85, %c0_86] : memref<1x32xf32, #tpu.memory_space<vmem>>, vector<1x32xf32>
      %189 = arith.addf %187, %188 : vector<1x32xf32>
      %190 = math.tanh %189 : vector<1x32xf32>
      %c0_87 = arith.constant 0 : index
      %c0_88 = arith.constant 0 : index
      %191 = vector.load %arg22[%c0_87, %c0_88] : memref<32x3xf32, #tpu.memory_space<vmem>>, vector<32x3xf32>
      %cst_89 = arith.constant dense<0.000000e+00> : vector<1x3xf32>
      %192 = tpu.matmul %190, %191, %cst_89 {dimension_numbers = #tpu.dot_dimension_numbers<[1], [0], [0], [1], [0, 0, 1, 1], [], []>} : vector<1x32xf32>, vector<32x3xf32>, vector<1x3xf32> -> vector<1x3xf32>
      %c0_90 = arith.constant 0 : index
      %c0_91 = arith.constant 0 : index
      %193 = vector.load %arg23[%c0_90, %c0_91] : memref<1x3xf32, #tpu.memory_space<vmem>>, vector<1x3xf32>
      %194 = arith.addf %192, %193 : vector<1x3xf32>
      %c0_92 = arith.constant 0 : index
      %c0_93 = arith.constant 0 : index
      %c0_94 = arith.constant 0 : index
      %195 = vector.load %arg25[%c0_92, %c0_93, %c0_94] : memref<1x1x3xf32, #tpu.memory_space<vmem>>, vector<1x1x3xf32>
      %196 = vector.shape_cast %195 : vector<1x1x3xf32> to vector<1x3xf32>
      %197 = vector.shape_cast %194 : vector<1x3xf32> to vector<1x1x3xf32>
      tpu.vector_store %arg25[%c0_92, %c0_93, %c0_94], %197 {strides = array<i32>} : memref<1x1x3xf32, #tpu.memory_space<vmem>>, vector<1x1x3xf32>,
    } else {
    }
    return
  }
  func.func @transform_0(%arg0: i32, %arg1: i32) -> (i32, i32, i32) {
    %c0_i32 = arith.constant 0 : i32
    %c0_i32_0 = arith.constant 0 : i32
    %c0_i32_1 = arith.constant 0 : i32
    return %arg0, %c0_i32, %c0_i32_0 : i32, i32, i32
  }
  func.func @transform_1(%arg0: i32, %arg1: i32) -> (i32, i32) {
    %c0_i32 = arith.constant 0 : i32
    %c0_i32_0 = arith.constant 0 : i32
    %c0_i32_1 = arith.constant 0 : i32
    return %c0_i32, %c0_i32_0 : i32, i32
  }
  func.func @transform_2(%arg0: i32, %arg1: i32) -> (i32, i32) {
    %c0_i32 = arith.constant 0 : i32
    %c0_i32_0 = arith.constant 0 : i32
    %c0_i32_1 = arith.constant 0 : i32
    return %c0_i32, %c0_i32_0 : i32, i32
  }
  func.func @transform_3(%arg0: i32, %arg1: i32) -> (i32, i32, i32) {
    %c0_i32 = arith.constant 0 : i32
    %c0_i32_0 = arith.constant 0 : i32
    %c0_i32_1 = arith.constant 0 : i32
    return %arg0, %c0_i32, %c0_i32_0 : i32, i32, i32
  }
  func.func @transform_4(%arg0: i32, %arg1: i32) -> (i32, i32, i32) {
    %c0_i32 = arith.constant 0 : i32
    %c0_i32_0 = arith.constant 0 : i32
    %c0_i32_1 = arith.constant 0 : i32
    return %arg1, %c0_i32, %c0_i32_0 : i32, i32, i32
  }
  func.func @transform_5(%arg0: i32, %arg1: i32) -> (i32, i32, i32) {
    %c0_i32 = arith.constant 0 : i32
    %c0_i32_0 = arith.constant 0 : i32
    %c0_i32_1 = arith.constant 0 : i32
    return %arg1, %c0_i32, %c0_i32_0 : i32, i32, i32
  }
  func.func @transform_6(%arg0: i32, %arg1: i32) -> (i32, i32, i32) {
    %c0_i32 = arith.constant 0 : i32
    %c0_i32_0 = arith.constant 0 : i32
    %c0_i32_1 = arith.constant 0 : i32
    return %arg1, %c0_i32, %c0_i32_0 : i32, i32, i32
  }
  func.func @transform_7(%arg0: i32, %arg1: i32) -> (i32, i32, i32) {
    %c0_i32 = arith.constant 0 : i32
    %c0_i32_0 = arith.constant 0 : i32
    %c0_i32_1 = arith.constant 0 : i32
    return %arg1, %c0_i32, %c0_i32_0 : i32, i32, i32
  }
  func.func @transform_8(%arg0: i32, %arg1: i32) -> (i32, i32, i32) {
    %c0_i32 = arith.constant 0 : i32
    %c0_i32_0 = arith.constant 0 : i32
    %c0_i32_1 = arith.constant 0 : i32
    return %arg1, %c0_i32, %c0_i32_0 : i32, i32, i32
  }
  func.func @transform_9(%arg0: i32, %arg1: i32) -> (i32, i32, i32) {
    %c0_i32 = arith.constant 0 : i32
    %c0_i32_0 = arith.constant 0 : i32
    %c0_i32_1 = arith.constant 0 : i32
    return %arg1, %c0_i32, %c0_i32_0 : i32, i32, i32
  }
  func.func @transform_10(%arg0: i32, %arg1: i32) -> (i32, i32, i32) {
    %c0_i32 = arith.constant 0 : i32
    %c0_i32_0 = arith.constant 0 : i32
    %c0_i32_1 = arith.constant 0 : i32
    return %arg1, %c0_i32, %c0_i32_0 : i32, i32, i32
  }
  func.func @transform_11(%arg0: i32, %arg1: i32) -> (i32, i32, i32) {
    %c0_i32 = arith.constant 0 : i32
    %c0_i32_0 = arith.constant 0 : i32
    %c0_i32_1 = arith.constant 0 : i32
    return %arg1, %c0_i32, %c0_i32_0 : i32, i32, i32
  }
  func.func @transform_12(%arg0: i32, %arg1: i32) -> (i32, i32, i32) {
    %c0_i32 = arith.constant 0 : i32
    %c0_i32_0 = arith.constant 0 : i32
    %c0_i32_1 = arith.constant 0 : i32
    return %arg1, %c0_i32, %c0_i32_0 : i32, i32, i32
  }
  func.func @transform_13(%arg0: i32, %arg1: i32) -> (i32, i32, i32) {
    %c0_i32 = arith.constant 0 : i32
    %c0_i32_0 = arith.constant 0 : i32
    %c0_i32_1 = arith.constant 0 : i32
    return %arg1, %c0_i32, %c0_i32_0 : i32, i32, i32
  }
  func.func @transform_14(%arg0: i32, %arg1: i32) -> (i32, i32, i32) {
    %c0_i32 = arith.constant 0 : i32
    %c0_i32_0 = arith.constant 0 : i32
    %c0_i32_1 = arith.constant 0 : i32
    return %arg1, %c0_i32, %c0_i32_0 : i32, i32, i32
  }
  func.func @transform_15(%arg0: i32, %arg1: i32) -> (i32, i32, i32) {
    %c0_i32 = arith.constant 0 : i32
    %c0_i32_0 = arith.constant 0 : i32
    %c0_i32_1 = arith.constant 0 : i32
    return %arg1, %c0_i32, %c0_i32_0 : i32, i32, i32
  }
  func.func @transform_16(%arg0: i32, %arg1: i32) -> (i32, i32) {
    %c0_i32 = arith.constant 0 : i32
    %c0_i32_0 = arith.constant 0 : i32
    %c0_i32_1 = arith.constant 0 : i32
    return %c0_i32, %c0_i32_0 : i32, i32
  }
  func.func @transform_17(%arg0: i32, %arg1: i32) -> (i32, i32) {
    %c0_i32 = arith.constant 0 : i32
    %c0_i32_0 = arith.constant 0 : i32
    %c0_i32_1 = arith.constant 0 : i32
    return %c0_i32, %c0_i32_0 : i32, i32
  }
  func.func @transform_18(%arg0: i32, %arg1: i32) -> (i32, i32) {
    %c0_i32 = arith.constant 0 : i32
    %c0_i32_0 = arith.constant 0 : i32
    %c0_i32_1 = arith.constant 0 : i32
    return %c0_i32, %c0_i32_0 : i32, i32
  }
  func.func @transform_19(%arg0: i32, %arg1: i32) -> (i32, i32) {
    %c0_i32 = arith.constant 0 : i32
    %c0_i32_0 = arith.constant 0 : i32
    %c0_i32_1 = arith.constant 0 : i32
    return %c0_i32, %c0_i32_0 : i32, i32
  }
  func.func @transform_20(%arg0: i32, %arg1: i32) -> (i32, i32) {
    %c0_i32 = arith.constant 0 : i32
    %c0_i32_0 = arith.constant 0 : i32
    %c0_i32_1 = arith.constant 0 : i32
    return %c0_i32, %c0_i32_0 : i32, i32
  }
  func.func @transform_21(%arg0: i32, %arg1: i32) -> (i32, i32) {
    %c0_i32 = arith.constant 0 : i32
    %c0_i32_0 = arith.constant 0 : i32
    %c0_i32_1 = arith.constant 0 : i32
    return %c0_i32, %c0_i32_0 : i32, i32
  }
  func.func @transform_22(%arg0: i32, %arg1: i32) -> (i32, i32, i32) {
    %c0_i32 = arith.constant 0 : i32
    %c0_i32_0 = arith.constant 0 : i32
    %c0_i32_1 = arith.constant 0 : i32
    return %arg0, %c0_i32, %c0_i32_0 : i32, i32, i32
  }
  func.func @transform_23(%arg0: i32, %arg1: i32) -> (i32, i32, i32) {
    %c0_i32 = arith.constant 0 : i32
    %c0_i32_0 = arith.constant 0 : i32
    %c0_i32_1 = arith.constant 0 : i32
    return %arg0, %c0_i32, %c0_i32_0 : i32, i32, i32
  }
}

module attributes {stable_mosaic.version = 11 : i64} {
  func.func @_encoder_kernel(%arg0: i32, %arg1: i32, %arg2: memref<1x5x32xf32, #tpu.memory_space<vmem>>, %arg3: memref<1x8x32xf32, #tpu.memory_space<vmem>>, %arg4: memref<32x32xbf16, #tpu.memory_space<vmem>>, %arg5: memref<1x32xf32, #tpu.memory_space<vmem>>, %arg6: memref<32x32xbf16, #tpu.memory_space<vmem>>, %arg7: memref<1x32xf32, #tpu.memory_space<vmem>>, %arg8: memref<1x32xf32, #tpu.memory_space<vmem>>, %arg9: memref<1x1x14xf32, #tpu.memory_space<vmem>>, %arg10: memref<1x32x96xbf16, #tpu.memory_space<vmem>>, %arg11: memref<1x1x96xf32, #tpu.memory_space<vmem>>, %arg12: memref<1x32x32xbf16, #tpu.memory_space<vmem>>, %arg13: memref<1x1x32xf32, #tpu.memory_space<vmem>>, %arg14: memref<1x1x32xf32, #tpu.memory_space<vmem>>, %arg15: memref<1x1x32xf32, #tpu.memory_space<vmem>>, %arg16: memref<1x1x32xf32, #tpu.memory_space<vmem>>, %arg17: memref<1x1x32xf32, #tpu.memory_space<vmem>>, %arg18: memref<1x32x64xbf16, #tpu.memory_space<vmem>>, %arg19: memref<1x1x64xf32, #tpu.memory_space<vmem>>, %arg20: memref<1x64x32xbf16, #tpu.memory_space<vmem>>, %arg21: memref<1x1x32xf32, #tpu.memory_space<vmem>>, %arg22: memref<1x32xf32, #tpu.memory_space<vmem>>, %arg23: memref<1x32xf32, #tpu.memory_space<vmem>>, %arg24: memref<32x32xf32, #tpu.memory_space<vmem>>, %arg25: memref<1x32xf32, #tpu.memory_space<vmem>>, %arg26: memref<32x3xf32, #tpu.memory_space<vmem>>, %arg27: memref<1x3xf32, #tpu.memory_space<vmem>>, %arg28: memref<1x14x32xf32, #tpu.memory_space<vmem>>, %arg29: memref<1x1x3xf32, #tpu.memory_space<vmem>>, %arg30: memref<14x32xf32, #tpu.memory_space<vmem>>) attributes {dimension_semantics = [#tpu.dimension_semantics<parallel>, #tpu.dimension_semantics<arbitrary>], iteration_bounds = array<i64: 2, 2>, scalar_prefetch = 0 : i64, scratch_operands = 1 : i64, tpu.core_type = #tpu.core_type<tc>, window_params = [{transform_indices = @transform_0, window_bounds = array<i64: 1, 5, 32>}, {transform_indices = @transform_1, window_bounds = array<i64: 1, 8, 32>}, {pipeline_mode = #tpu.pipeline_mode<synchronous>, transform_indices = @transform_2, window_bounds = array<i64: 32, 32>}, {pipeline_mode = #tpu.pipeline_mode<synchronous>, transform_indices = @transform_3, window_bounds = array<i64: 1, 32>}, {pipeline_mode = #tpu.pipeline_mode<synchronous>, transform_indices = @transform_4, window_bounds = array<i64: 32, 32>}, {pipeline_mode = #tpu.pipeline_mode<synchronous>, transform_indices = @transform_5, window_bounds = array<i64: 1, 32>}, {pipeline_mode = #tpu.pipeline_mode<synchronous>, transform_indices = @transform_6, window_bounds = array<i64: 1, 32>}, {transform_indices = @transform_7, window_bounds = array<i64: 1, 1, 14>}, {transform_indices = @transform_8, window_bounds = array<i64: 1, 32, 96>}, {transform_indices = @transform_9, window_bounds = array<i64: 1, 1, 96>}, {transform_indices = @transform_10, window_bounds = array<i64: 1, 32, 32>}, {transform_indices = @transform_11, window_bounds = array<i64: 1, 1, 32>}, {transform_indices = @transform_12, window_bounds = array<i64: 1, 1, 32>}, {transform_indices = @transform_13, window_bounds = array<i64: 1, 1, 32>}, {transform_indices = @transform_14, window_bounds = array<i64: 1, 1, 32>}, {transform_indices = @transform_15, window_bounds = array<i64: 1, 1, 32>}, {transform_indices = @transform_16, window_bounds = array<i64: 1, 32, 64>}, {transform_indices = @transform_17, window_bounds = array<i64: 1, 1, 64>}, {transform_indices = @transform_18, window_bounds = array<i64: 1, 64, 32>}, {transform_indices = @transform_19, window_bounds = array<i64: 1, 1, 32>}, {pipeline_mode = #tpu.pipeline_mode<synchronous>, transform_indices = @transform_20, window_bounds = array<i64: 1, 32>}, {pipeline_mode = #tpu.pipeline_mode<synchronous>, transform_indices = @transform_21, window_bounds = array<i64: 1, 32>}, {pipeline_mode = #tpu.pipeline_mode<synchronous>, transform_indices = @transform_22, window_bounds = array<i64: 32, 32>}, {pipeline_mode = #tpu.pipeline_mode<synchronous>, transform_indices = @transform_23, window_bounds = array<i64: 1, 32>}, {pipeline_mode = #tpu.pipeline_mode<synchronous>, transform_indices = @transform_24, window_bounds = array<i64: 32, 3>}, {pipeline_mode = #tpu.pipeline_mode<synchronous>, transform_indices = @transform_25, window_bounds = array<i64: 1, 3>}, {transform_indices = @transform_26, window_bounds = array<i64: 1, 14, 32>}, {transform_indices = @transform_27, window_bounds = array<i64: 1, 1, 3>}]} {
    %c0_i32 = arith.constant 0 : i32
    %0 = arith.cmpi eq, %arg1, %c0_i32 : i32
    %1 = arith.extui %0 : i1 to i32
    %c0_i32_0 = arith.constant 0 : i32
    %2 = arith.cmpi ne, %1, %c0_i32_0 : i32
    scf.if %2 {
      %c0_70 = arith.constant 0 : index
      %c0_71 = arith.constant 0 : index
      %c0_72 = arith.constant 0 : index
      %158 = vector.load %arg2[%c0_70, %c0_71, %c0_72] : memref<1x5x32xf32, #tpu.memory_space<vmem>>, vector<1x5x32xf32>
      %159 = vector.shape_cast %158 : vector<1x5x32xf32> to vector<5x32xf32>
      %160 = arith.truncf %159 : vector<5x32xf32> to vector<5x32xbf16>
      %c0_73 = arith.constant 0 : index
      %c0_74 = arith.constant 0 : index
      %161 = vector.load %arg4[%c0_73, %c0_74] : memref<32x32xbf16, #tpu.memory_space<vmem>>, vector<32x32xbf16>
      %cst_75 = arith.constant dense<0.000000e+00> : vector<5x32xf32>
      %162 = tpu.matmul %160, %161, %cst_75 {dimension_numbers = #tpu.dot_dimension_numbers<[1], [0], [0], [1], [0, 0, 1, 1], [], []>} : vector<5x32xbf16>, vector<32x32xbf16>, vector<5x32xf32> -> vector<5x32xf32>
      %c0_76 = arith.constant 0 : index
      %c0_77 = arith.constant 0 : index
      %163 = vector.load %arg5[%c0_76, %c0_77] : memref<1x32xf32, #tpu.memory_space<vmem>>, vector<1x32xf32>
      %164 = vector.broadcast %163 : vector<1x32xf32> to vector<5x32xf32>
      %165 = arith.addf %162, %164 : vector<5x32xf32>
      %c0_78 = arith.constant 0 : index
      %c0_79 = arith.constant 0 : index
      %c0_80 = arith.constant 0 : index
      %166 = vector.load %arg3[%c0_78, %c0_79, %c0_80] : memref<1x8x32xf32, #tpu.memory_space<vmem>>, vector<1x8x32xf32>
      %167 = vector.shape_cast %166 : vector<1x8x32xf32> to vector<8x32xf32>
      %168 = arith.truncf %167 : vector<8x32xf32> to vector<8x32xbf16>
      %c0_81 = arith.constant 0 : index
      %c0_82 = arith.constant 0 : index
      %169 = vector.load %arg6[%c0_81, %c0_82] : memref<32x32xbf16, #tpu.memory_space<vmem>>, vector<32x32xbf16>
      %cst_83 = arith.constant dense<0.000000e+00> : vector<8x32xf32>
      %170 = tpu.matmul %168, %169, %cst_83 {dimension_numbers = #tpu.dot_dimension_numbers<[1], [0], [0], [1], [0, 0, 1, 1], [], []>} : vector<8x32xbf16>, vector<32x32xbf16>, vector<8x32xf32> -> vector<8x32xf32>
      %c0_84 = arith.constant 0 : index
      %c0_85 = arith.constant 0 : index
      %171 = vector.load %arg7[%c0_84, %c0_85] : memref<1x32xf32, #tpu.memory_space<vmem>>, vector<1x32xf32>
      %172 = vector.broadcast %171 : vector<1x32xf32> to vector<8x32xf32>
      %173 = arith.addf %170, %172 : vector<8x32xf32>
      %c0_86 = arith.constant 0 : index
      %c0_87 = arith.constant 0 : index
      %174 = vector.load %arg8[%c0_86, %c0_87] : memref<1x32xf32, #tpu.memory_space<vmem>>, vector<1x32xf32>
      %175 = tpu.concatenate %174, %165, %173 in 0 : vector<1x32xf32>, vector<5x32xf32>, vector<8x32xf32> -> vector<14x32xf32>
      %c0_88 = arith.constant 0 : index
      %c0_89 = arith.constant 0 : index
      %176 = vector.load %arg30[%c0_88, %c0_89] : memref<14x32xf32, #tpu.memory_space<vmem>>, vector<14x32xf32>
      tpu.vector_store %arg30[%c0_88, %c0_89], %175 {strides = array<i32>} : memref<14x32xf32, #tpu.memory_space<vmem>>, vector<14x32xf32>,
    } else {
    }
    %c0 = arith.constant 0 : index
    %c0_1 = arith.constant 0 : index
    %3 = vector.load %arg30[%c0, %c0_1] : memref<14x32xf32, #tpu.memory_space<vmem>>, vector<14x32xf32>
    %c0_2 = arith.constant 0 : index
    %c0_3 = arith.constant 0 : index
    %c0_4 = arith.constant 0 : index
    %4 = vector.load %arg14[%c0_2, %c0_3, %c0_4] : memref<1x1x32xf32, #tpu.memory_space<vmem>>, vector<1x1x32xf32>
    %5 = vector.shape_cast %4 : vector<1x1x32xf32> to vector<1x32xf32>
    %c0_5 = arith.constant 0 : index
    %c0_6 = arith.constant 0 : index
    %c0_7 = arith.constant 0 : index
    %6 = vector.load %arg15[%c0_5, %c0_6, %c0_7] : memref<1x1x32xf32, #tpu.memory_space<vmem>>, vector<1x1x32xf32>
    %7 = vector.shape_cast %6 : vector<1x1x32xf32> to vector<1x32xf32>
    %cst = arith.constant dense<0.000000e+00> : vector<14xf32>
    %8 = vector.multi_reduction <add>, %3, %cst [1] : vector<14x32xf32> to vector<14xf32>
    %9 = vector.shape_cast %8 : vector<14xf32> to vector<14x1xf32>
    %cst_8 = arith.constant 3.200000e+01 : f32
    %10 = vector.broadcast %cst_8 : f32 to vector<14x1xf32>
    %11 = arith.divf %9, %10 : vector<14x1xf32>
    %12 = vector.broadcast %11 : vector<14x1xf32> to vector<14x32xf32>
    %13 = arith.subf %3, %12 : vector<14x32xf32>
    %14 = arith.mulf %13, %13 : vector<14x32xf32>
    %cst_9 = arith.constant dense<0.000000e+00> : vector<14xf32>
    %15 = vector.multi_reduction <add>, %14, %cst_9 [1] : vector<14x32xf32> to vector<14xf32>
    %16 = vector.shape_cast %15 : vector<14xf32> to vector<14x1xf32>
    %cst_10 = arith.constant 3.200000e+01 : f32
    %17 = vector.broadcast %cst_10 : f32 to vector<14x1xf32>
    %18 = arith.divf %16, %17 : vector<14x1xf32>
    %19 = vector.broadcast %11 : vector<14x1xf32> to vector<14x32xf32>
    %20 = arith.subf %3, %19 : vector<14x32xf32>
    %cst_11 = arith.constant 9.99999996E-13 : f32
    %21 = vector.broadcast %cst_11 : f32 to vector<14x1xf32>
    %22 = arith.addf %18, %21 : vector<14x1xf32>
    %23 = math.rsqrt %22 : vector<14x1xf32>
    %24 = vector.broadcast %23 : vector<14x1xf32> to vector<14x32xf32>
    %25 = arith.mulf %20, %24 : vector<14x32xf32>
    %26 = vector.broadcast %5 : vector<1x32xf32> to vector<14x32xf32>
    %27 = arith.mulf %25, %26 : vector<14x32xf32>
    %28 = vector.broadcast %7 : vector<1x32xf32> to vector<14x32xf32>
    %29 = arith.addf %27, %28 : vector<14x32xf32>
    %30 = arith.truncf %29 : vector<14x32xf32> to vector<14x32xbf16>
    %c0_12 = arith.constant 0 : index
    %c0_13 = arith.constant 0 : index
    %c0_14 = arith.constant 0 : index
    %31 = vector.load %arg10[%c0_12, %c0_13, %c0_14] : memref<1x32x96xbf16, #tpu.memory_space<vmem>>, vector<1x32x96xbf16>
    %32 = vector.shape_cast %31 : vector<1x32x96xbf16> to vector<32x96xbf16>
    %cst_15 = arith.constant dense<0.000000e+00> : vector<14x96xf32>
    %33 = tpu.matmul %30, %32, %cst_15 {dimension_numbers = #tpu.dot_dimension_numbers<[1], [0], [0], [1], [0, 0, 1, 1], [], []>} : vector<14x32xbf16>, vector<32x96xbf16>, vector<14x96xf32> -> vector<14x96xf32>
    %c0_16 = arith.constant 0 : index
    %c0_17 = arith.constant 0 : index
    %c0_18 = arith.constant 0 : index
    %34 = vector.load %arg11[%c0_16, %c0_17, %c0_18] : memref<1x1x96xf32, #tpu.memory_space<vmem>>, vector<1x1x96xf32>
    %35 = vector.shape_cast %34 : vector<1x1x96xf32> to vector<1x96xf32>
    %36 = vector.broadcast %35 : vector<1x96xf32> to vector<14x96xf32>
    %37 = arith.addf %33, %36 : vector<14x96xf32>
    %c0_19 = arith.constant 0 : index
    %c0_20 = arith.constant 0 : index
    %c0_21 = arith.constant 0 : index
    %38 = vector.load %arg9[%c0_19, %c0_20, %c0_21] : memref<1x1x14xf32, #tpu.memory_space<vmem>>, vector<1x1x14xf32>
    %39 = vector.shape_cast %38 : vector<1x1x14xf32> to vector<1x14xf32>
    %40 = vector.extract_strided_slice %37 {offsets = [0, 0], sizes = [14, 8], strides = [1, 1]} : vector<14x96xf32> to vector<14x8xf32>
    %41 = arith.truncf %40 : vector<14x8xf32> to vector<14x8xbf16>
    %42 = vector.extract_strided_slice %37 {offsets = [0, 32], sizes = [14, 8], strides = [1, 1]} : vector<14x96xf32> to vector<14x8xf32>
    %43 = arith.truncf %42 : vector<14x8xf32> to vector<14x8xbf16>
    %cst_22 = arith.constant dense<0.000000e+00> : vector<14x14xf32>
    %44 = tpu.matmul %41, %43, %cst_22 {dimension_numbers = #tpu.dot_dimension_numbers<[1], [1], [0], [0], [0, 0, 1, 0], [], []>} : vector<14x8xbf16>, vector<14x8xbf16>, vector<14x14xf32> -> vector<14x14xf32>
    %45 = vector.extract_strided_slice %37 {offsets = [0, 8], sizes = [14, 8], strides = [1, 1]} : vector<14x96xf32> to vector<14x8xf32>
    %46 = arith.truncf %45 : vector<14x8xf32> to vector<14x8xbf16>
    %47 = vector.extract_strided_slice %37 {offsets = [0, 40], sizes = [14, 8], strides = [1, 1]} : vector<14x96xf32> to vector<14x8xf32>
    %48 = arith.truncf %47 : vector<14x8xf32> to vector<14x8xbf16>
    %cst_23 = arith.constant dense<0.000000e+00> : vector<14x14xf32>
    %49 = tpu.matmul %46, %48, %cst_23 {dimension_numbers = #tpu.dot_dimension_numbers<[1], [1], [0], [0], [0, 0, 1, 0], [], []>} : vector<14x8xbf16>, vector<14x8xbf16>, vector<14x14xf32> -> vector<14x14xf32>
    %50 = vector.extract_strided_slice %37 {offsets = [0, 16], sizes = [14, 8], strides = [1, 1]} : vector<14x96xf32> to vector<14x8xf32>
    %51 = arith.truncf %50 : vector<14x8xf32> to vector<14x8xbf16>
    %52 = vector.extract_strided_slice %37 {offsets = [0, 48], sizes = [14, 8], strides = [1, 1]} : vector<14x96xf32> to vector<14x8xf32>
    %53 = arith.truncf %52 : vector<14x8xf32> to vector<14x8xbf16>
    %cst_24 = arith.constant dense<0.000000e+00> : vector<14x14xf32>
    %54 = tpu.matmul %51, %53, %cst_24 {dimension_numbers = #tpu.dot_dimension_numbers<[1], [1], [0], [0], [0, 0, 1, 0], [], []>} : vector<14x8xbf16>, vector<14x8xbf16>, vector<14x14xf32> -> vector<14x14xf32>
    %55 = vector.extract_strided_slice %37 {offsets = [0, 24], sizes = [14, 8], strides = [1, 1]} : vector<14x96xf32> to vector<14x8xf32>
    %56 = arith.truncf %55 : vector<14x8xf32> to vector<14x8xbf16>
    %57 = vector.extract_strided_slice %37 {offsets = [0, 56], sizes = [14, 8], strides = [1, 1]} : vector<14x96xf32> to vector<14x8xf32>
    %58 = arith.truncf %57 : vector<14x8xf32> to vector<14x8xbf16>
    %cst_25 = arith.constant dense<0.000000e+00> : vector<14x14xf32>
    %59 = tpu.matmul %56, %58, %cst_25 {dimension_numbers = #tpu.dot_dimension_numbers<[1], [1], [0], [0], [0, 0, 1, 0], [], []>} : vector<14x8xbf16>, vector<14x8xbf16>, vector<14x14xf32> -> vector<14x14xf32>
    %60 = tpu.concatenate %44, %49, %54, %59 in 0 : vector<14x14xf32>, vector<14x14xf32>, vector<14x14xf32>, vector<14x14xf32> -> vector<56x14xf32>
    %61 = vector.broadcast %39 : vector<1x14xf32> to vector<56x14xf32>
    %62 = arith.addf %60, %61 : vector<56x14xf32>
    %cst_26 = arith.constant dense<0xFF800000> : vector<56xf32>
    %63 = vector.multi_reduction <maximumf>, %62, %cst_26 [1] : vector<56x14xf32> to vector<56xf32>
    %64 = vector.shape_cast %63 : vector<56xf32> to vector<56x1xf32>
    %65 = vector.broadcast %64 : vector<56x1xf32> to vector<56x14xf32>
    %66 = arith.subf %62, %65 : vector<56x14xf32>
    %67 = math.exp %66 : vector<56x14xf32>
    %cst_27 = arith.constant dense<0.000000e+00> : vector<56xf32>
    %68 = vector.multi_reduction <add>, %67, %cst_27 [1] : vector<56x14xf32> to vector<56xf32>
    %69 = vector.shape_cast %68 : vector<56xf32> to vector<56x1xf32>
    %70 = tpu.reciprocal %69 {approx = true} : vector<56x1xf32> -> vector<56x1xf32>
    %71 = vector.broadcast %70 : vector<56x1xf32> to vector<56x14xf32>
    %72 = arith.mulf %67, %71 : vector<56x14xf32>
    %73 = vector.extract_strided_slice %37 {offsets = [0, 64], sizes = [14, 8], strides = [1, 1]} : vector<14x96xf32> to vector<14x8xf32>
    %74 = arith.truncf %73 : vector<14x8xf32> to vector<14x8xbf16>
    %75 = vector.extract_strided_slice %72 {offsets = [0, 0], sizes = [14, 14], strides = [1, 1]} : vector<56x14xf32> to vector<14x14xf32>
    %76 = arith.truncf %75 : vector<14x14xf32> to vector<14x14xbf16>
    %cst_28 = arith.constant dense<0.000000e+00> : vector<14x8xf32>
    %77 = tpu.matmul %76, %74, %cst_28 {dimension_numbers = #tpu.dot_dimension_numbers<[1], [0], [0], [1], [0, 0, 1, 1], [], []>} : vector<14x14xbf16>, vector<14x8xbf16>, vector<14x8xf32> -> vector<14x8xf32>
    %78 = vector.extract_strided_slice %37 {offsets = [0, 72], sizes = [14, 8], strides = [1, 1]} : vector<14x96xf32> to vector<14x8xf32>
    %79 = arith.truncf %78 : vector<14x8xf32> to vector<14x8xbf16>
    %80 = vector.extract_strided_slice %72 {offsets = [14, 0], sizes = [14, 14], strides = [1, 1]} : vector<56x14xf32> to vector<14x14xf32>
    %81 = arith.truncf %80 : vector<14x14xf32> to vector<14x14xbf16>
    %cst_29 = arith.constant dense<0.000000e+00> : vector<14x8xf32>
    %82 = tpu.matmul %81, %79, %cst_29 {dimension_numbers = #tpu.dot_dimension_numbers<[1], [0], [0], [1], [0, 0, 1, 1], [], []>} : vector<14x14xbf16>, vector<14x8xbf16>, vector<14x8xf32> -> vector<14x8xf32>
    %83 = vector.extract_strided_slice %37 {offsets = [0, 80], sizes = [14, 8], strides = [1, 1]} : vector<14x96xf32> to vector<14x8xf32>
    %84 = arith.truncf %83 : vector<14x8xf32> to vector<14x8xbf16>
    %85 = vector.extract_strided_slice %72 {offsets = [28, 0], sizes = [14, 14], strides = [1, 1]} : vector<56x14xf32> to vector<14x14xf32>
    %86 = arith.truncf %85 : vector<14x14xf32> to vector<14x14xbf16>
    %cst_30 = arith.constant dense<0.000000e+00> : vector<14x8xf32>
    %87 = tpu.matmul %86, %84, %cst_30 {dimension_numbers = #tpu.dot_dimension_numbers<[1], [0], [0], [1], [0, 0, 1, 1], [], []>} : vector<14x14xbf16>, vector<14x8xbf16>, vector<14x8xf32> -> vector<14x8xf32>
    %88 = vector.extract_strided_slice %37 {offsets = [0, 88], sizes = [14, 8], strides = [1, 1]} : vector<14x96xf32> to vector<14x8xf32>
    %89 = arith.truncf %88 : vector<14x8xf32> to vector<14x8xbf16>
    %90 = vector.extract_strided_slice %72 {offsets = [42, 0], sizes = [14, 14], strides = [1, 1]} : vector<56x14xf32> to vector<14x14xf32>
    %91 = arith.truncf %90 : vector<14x14xf32> to vector<14x14xbf16>
    %cst_31 = arith.constant dense<0.000000e+00> : vector<14x8xf32>
    %92 = tpu.matmul %91, %89, %cst_31 {dimension_numbers = #tpu.dot_dimension_numbers<[1], [0], [0], [1], [0, 0, 1, 1], [], []>} : vector<14x14xbf16>, vector<14x8xbf16>, vector<14x8xf32> -> vector<14x8xf32>
    %93 = tpu.concatenate %77, %82, %87, %92 in 1 : vector<14x8xf32>, vector<14x8xf32>, vector<14x8xf32>, vector<14x8xf32> -> vector<14x32xf32>
    %94 = arith.truncf %93 : vector<14x32xf32> to vector<14x32xbf16>
    %c0_32 = arith.constant 0 : index
    %c0_33 = arith.constant 0 : index
    %c0_34 = arith.constant 0 : index
    %95 = vector.load %arg12[%c0_32, %c0_33, %c0_34] : memref<1x32x32xbf16, #tpu.memory_space<vmem>>, vector<1x32x32xbf16>
    %96 = vector.shape_cast %95 : vector<1x32x32xbf16> to vector<32x32xbf16>
    %cst_35 = arith.constant dense<0.000000e+00> : vector<14x32xf32>
    %97 = tpu.matmul %94, %96, %cst_35 {dimension_numbers = #tpu.dot_dimension_numbers<[1], [0], [0], [1], [0, 0, 1, 1], [], []>} : vector<14x32xbf16>, vector<32x32xbf16>, vector<14x32xf32> -> vector<14x32xf32>
    %c0_36 = arith.constant 0 : index
    %c0_37 = arith.constant 0 : index
    %c0_38 = arith.constant 0 : index
    %98 = vector.load %arg13[%c0_36, %c0_37, %c0_38] : memref<1x1x32xf32, #tpu.memory_space<vmem>>, vector<1x1x32xf32>
    %99 = vector.shape_cast %98 : vector<1x1x32xf32> to vector<1x32xf32>
    %100 = vector.broadcast %99 : vector<1x32xf32> to vector<14x32xf32>
    %101 = arith.addf %97, %100 : vector<14x32xf32>
    %102 = arith.addf %3, %101 : vector<14x32xf32>
    %c0_39 = arith.constant 0 : index
    %c0_40 = arith.constant 0 : index
    %c0_41 = arith.constant 0 : index
    %103 = vector.load %arg16[%c0_39, %c0_40, %c0_41] : memref<1x1x32xf32, #tpu.memory_space<vmem>>, vector<1x1x32xf32>
    %104 = vector.shape_cast %103 : vector<1x1x32xf32> to vector<1x32xf32>
    %c0_42 = arith.constant 0 : index
    %c0_43 = arith.constant 0 : index
    %c0_44 = arith.constant 0 : index
    %105 = vector.load %arg17[%c0_42, %c0_43, %c0_44] : memref<1x1x32xf32, #tpu.memory_space<vmem>>, vector<1x1x32xf32>
    %106 = vector.shape_cast %105 : vector<1x1x32xf32> to vector<1x32xf32>
    %cst_45 = arith.constant dense<0.000000e+00> : vector<14xf32>
    %107 = vector.multi_reduction <add>, %102, %cst_45 [1] : vector<14x32xf32> to vector<14xf32>
    %108 = vector.shape_cast %107 : vector<14xf32> to vector<14x1xf32>
    %cst_46 = arith.constant 3.200000e+01 : f32
    %109 = vector.broadcast %cst_46 : f32 to vector<14x1xf32>
    %110 = arith.divf %108, %109 : vector<14x1xf32>
    %111 = vector.broadcast %110 : vector<14x1xf32> to vector<14x32xf32>
    %112 = arith.subf %102, %111 : vector<14x32xf32>
    %113 = arith.mulf %112, %112 : vector<14x32xf32>
    %cst_47 = arith.constant dense<0.000000e+00> : vector<14xf32>
    %114 = vector.multi_reduction <add>, %113, %cst_47 [1] : vector<14x32xf32> to vector<14xf32>
    %115 = vector.shape_cast %114 : vector<14xf32> to vector<14x1xf32>
    %cst_48 = arith.constant 3.200000e+01 : f32
    %116 = vector.broadcast %cst_48 : f32 to vector<14x1xf32>
    %117 = arith.divf %115, %116 : vector<14x1xf32>
    %118 = vector.broadcast %110 : vector<14x1xf32> to vector<14x32xf32>
    %119 = arith.subf %102, %118 : vector<14x32xf32>
    %cst_49 = arith.constant 9.99999996E-13 : f32
    %120 = vector.broadcast %cst_49 : f32 to vector<14x1xf32>
    %121 = arith.addf %117, %120 : vector<14x1xf32>
    %122 = math.rsqrt %121 : vector<14x1xf32>
    %123 = vector.broadcast %122 : vector<14x1xf32> to vector<14x32xf32>
    %124 = arith.mulf %119, %123 : vector<14x32xf32>
    %125 = vector.broadcast %104 : vector<1x32xf32> to vector<14x32xf32>
    %126 = arith.mulf %124, %125 : vector<14x32xf32>
    %127 = vector.broadcast %106 : vector<1x32xf32> to vector<14x32xf32>
    %128 = arith.addf %126, %127 : vector<14x32xf32>
    %129 = arith.truncf %128 : vector<14x32xf32> to vector<14x32xbf16>
    %c0_50 = arith.constant 0 : index
    %c0_51 = arith.constant 0 : index
    %c0_52 = arith.constant 0 : index
    %130 = vector.load %arg18[%c0_50, %c0_51, %c0_52] : memref<1x32x64xbf16, #tpu.memory_space<vmem>>, vector<1x32x64xbf16>
    %131 = vector.shape_cast %130 : vector<1x32x64xbf16> to vector<32x64xbf16>
    %cst_53 = arith.constant dense<0.000000e+00> : vector<14x64xf32>
    %132 = tpu.matmul %129, %131, %cst_53 {dimension_numbers = #tpu.dot_dimension_numbers<[1], [0], [0], [1], [0, 0, 1, 1], [], []>} : vector<14x32xbf16>, vector<32x64xbf16>, vector<14x64xf32> -> vector<14x64xf32>
    %c0_54 = arith.constant 0 : index
    %c0_55 = arith.constant 0 : index
    %c0_56 = arith.constant 0 : index
    %133 = vector.load %arg19[%c0_54, %c0_55, %c0_56] : memref<1x1x64xf32, #tpu.memory_space<vmem>>, vector<1x1x64xf32>
    %134 = vector.shape_cast %133 : vector<1x1x64xf32> to vector<1x64xf32>
    %135 = vector.broadcast %134 : vector<1x64xf32> to vector<14x64xf32>
    %136 = arith.addf %132, %135 : vector<14x64xf32>
    %cst_57 = arith.constant 5.000000e-01 : f32
    %137 = vector.broadcast %cst_57 : f32 to vector<14x64xf32>
    %138 = arith.mulf %137, %136 : vector<14x64xf32>
    %cst_58 = arith.constant 0.707106769 : f32
    %139 = vector.broadcast %cst_58 : f32 to vector<14x64xf32>
    %140 = arith.mulf %136, %139 : vector<14x64xf32>
    %141 = math.erf %140 : vector<14x64xf32>
    %cst_59 = arith.constant 1.000000e+00 : f32
    %142 = vector.broadcast %cst_59 : f32 to vector<14x64xf32>
    %143 = arith.addf %142, %141 : vector<14x64xf32>
    %144 = arith.mulf %138, %143 : vector<14x64xf32>
    %145 = arith.truncf %144 : vector<14x64xf32> to vector<14x64xbf16>
    %c0_60 = arith.constant 0 : index
    %c0_61 = arith.constant 0 : index
    %c0_62 = arith.constant 0 : index
    %146 = vector.load %arg20[%c0_60, %c0_61, %c0_62] : memref<1x64x32xbf16, #tpu.memory_space<vmem>>, vector<1x64x32xbf16>
    %147 = vector.shape_cast %146 : vector<1x64x32xbf16> to vector<64x32xbf16>
    %cst_63 = arith.constant dense<0.000000e+00> : vector<14x32xf32>
    %148 = tpu.matmul %145, %147, %cst_63 {dimension_numbers = #tpu.dot_dimension_numbers<[1], [0], [0], [1], [0, 0, 1, 1], [], []>} : vector<14x64xbf16>, vector<64x32xbf16>, vector<14x32xf32> -> vector<14x32xf32>
    %c0_64 = arith.constant 0 : index
    %c0_65 = arith.constant 0 : index
    %c0_66 = arith.constant 0 : index
    %149 = vector.load %arg21[%c0_64, %c0_65, %c0_66] : memref<1x1x32xf32, #tpu.memory_space<vmem>>, vector<1x1x32xf32>
    %150 = vector.shape_cast %149 : vector<1x1x32xf32> to vector<1x32xf32>
    %151 = vector.broadcast %150 : vector<1x32xf32> to vector<14x32xf32>
    %152 = arith.addf %148, %151 : vector<14x32xf32>
    %153 = arith.addf %102, %152 : vector<14x32xf32>
    %c0_67 = arith.constant 0 : index
    %c0_68 = arith.constant 0 : index
    %154 = vector.load %arg30[%c0_67, %c0_68] : memref<14x32xf32, #tpu.memory_space<vmem>>, vector<14x32xf32>
    tpu.vector_store %arg30[%c0_67, %c0_68], %153 {strides = array<i32>} : memref<14x32xf32, #tpu.memory_space<vmem>>, vector<14x32xf32>,
    %c1_i32 = arith.constant 1 : i32
    %155 = arith.cmpi eq, %arg1, %c1_i32 : i32
    %156 = arith.extui %155 : i1 to i32
    %c0_i32_69 = arith.constant 0 : i32
    %157 = arith.cmpi ne, %156, %c0_i32_69 : i32
    scf.if %157 {
      %c0_70 = arith.constant 0 : index
      %c0_71 = arith.constant 0 : index
      %158 = vector.load %arg22[%c0_70, %c0_71] : memref<1x32xf32, #tpu.memory_space<vmem>>, vector<1x32xf32>
      %c0_72 = arith.constant 0 : index
      %c0_73 = arith.constant 0 : index
      %159 = vector.load %arg23[%c0_72, %c0_73] : memref<1x32xf32, #tpu.memory_space<vmem>>, vector<1x32xf32>
      %cst_74 = arith.constant dense<0.000000e+00> : vector<14xf32>
      %160 = vector.multi_reduction <add>, %153, %cst_74 [1] : vector<14x32xf32> to vector<14xf32>
      %161 = vector.shape_cast %160 : vector<14xf32> to vector<14x1xf32>
      %cst_75 = arith.constant 3.200000e+01 : f32
      %162 = vector.broadcast %cst_75 : f32 to vector<14x1xf32>
      %163 = arith.divf %161, %162 : vector<14x1xf32>
      %164 = vector.broadcast %163 : vector<14x1xf32> to vector<14x32xf32>
      %165 = arith.subf %153, %164 : vector<14x32xf32>
      %166 = arith.mulf %165, %165 : vector<14x32xf32>
      %cst_76 = arith.constant dense<0.000000e+00> : vector<14xf32>
      %167 = vector.multi_reduction <add>, %166, %cst_76 [1] : vector<14x32xf32> to vector<14xf32>
      %168 = vector.shape_cast %167 : vector<14xf32> to vector<14x1xf32>
      %cst_77 = arith.constant 3.200000e+01 : f32
      %169 = vector.broadcast %cst_77 : f32 to vector<14x1xf32>
      %170 = arith.divf %168, %169 : vector<14x1xf32>
      %171 = vector.broadcast %163 : vector<14x1xf32> to vector<14x32xf32>
      %172 = arith.subf %153, %171 : vector<14x32xf32>
      %cst_78 = arith.constant 9.99999996E-13 : f32
      %173 = vector.broadcast %cst_78 : f32 to vector<14x1xf32>
      %174 = arith.addf %170, %173 : vector<14x1xf32>
      %175 = math.rsqrt %174 : vector<14x1xf32>
      %176 = vector.broadcast %175 : vector<14x1xf32> to vector<14x32xf32>
      %177 = arith.mulf %172, %176 : vector<14x32xf32>
      %178 = vector.broadcast %158 : vector<1x32xf32> to vector<14x32xf32>
      %179 = arith.mulf %177, %178 : vector<14x32xf32>
      %180 = vector.broadcast %159 : vector<1x32xf32> to vector<14x32xf32>
      %181 = arith.addf %179, %180 : vector<14x32xf32>
      %c0_79 = arith.constant 0 : index
      %c0_80 = arith.constant 0 : index
      %c0_81 = arith.constant 0 : index
      %182 = vector.load %arg28[%c0_79, %c0_80, %c0_81] : memref<1x14x32xf32, #tpu.memory_space<vmem>>, vector<1x14x32xf32>
      %183 = vector.shape_cast %182 : vector<1x14x32xf32> to vector<14x32xf32>
      %184 = vector.shape_cast %181 : vector<14x32xf32> to vector<1x14x32xf32>
      tpu.vector_store %arg28[%c0_79, %c0_80, %c0_81], %184 {strides = array<i32>} : memref<1x14x32xf32, #tpu.memory_space<vmem>>, vector<1x14x32xf32>,
      %185 = vector.extract_strided_slice %181 {offsets = [0, 0], sizes = [1, 32], strides = [1, 1]} : vector<14x32xf32> to vector<1x32xf32>
      %c0_82 = arith.constant 0 : index
      %c0_83 = arith.constant 0 : index
      %186 = vector.load %arg24[%c0_82, %c0_83] : memref<32x32xf32, #tpu.memory_space<vmem>>, vector<32x32xf32>
      %cst_84 = arith.constant dense<0.000000e+00> : vector<1x32xf32>
      %187 = tpu.matmul %185, %186, %cst_84 {dimension_numbers = #tpu.dot_dimension_numbers<[1], [0], [0], [1], [0, 0, 1, 1], [], []>} : vector<1x32xf32>, vector<32x32xf32>, vector<1x32xf32> -> vector<1x32xf32>
      %c0_85 = arith.constant 0 : index
      %c0_86 = arith.constant 0 : index
      %188 = vector.load %arg25[%c0_85, %c0_86] : memref<1x32xf32, #tpu.memory_space<vmem>>, vector<1x32xf32>
      %189 = arith.addf %187, %188 : vector<1x32xf32>
      %190 = math.tanh %189 : vector<1x32xf32>
      %c0_87 = arith.constant 0 : index
      %c0_88 = arith.constant 0 : index
      %191 = vector.load %arg26[%c0_87, %c0_88] : memref<32x3xf32, #tpu.memory_space<vmem>>, vector<32x3xf32>
      %cst_89 = arith.constant dense<0.000000e+00> : vector<1x3xf32>
      %192 = tpu.matmul %190, %191, %cst_89 {dimension_numbers = #tpu.dot_dimension_numbers<[1], [0], [0], [1], [0, 0, 1, 1], [], []>} : vector<1x32xf32>, vector<32x3xf32>, vector<1x3xf32> -> vector<1x3xf32>
      %c0_90 = arith.constant 0 : index
      %c0_91 = arith.constant 0 : index
      %193 = vector.load %arg27[%c0_90, %c0_91] : memref<1x3xf32, #tpu.memory_space<vmem>>, vector<1x3xf32>
      %194 = arith.addf %192, %193 : vector<1x3xf32>
      %c0_92 = arith.constant 0 : index
      %c0_93 = arith.constant 0 : index
      %c0_94 = arith.constant 0 : index
      %195 = vector.load %arg29[%c0_92, %c0_93, %c0_94] : memref<1x1x3xf32, #tpu.memory_space<vmem>>, vector<1x1x3xf32>
      %196 = vector.shape_cast %195 : vector<1x1x3xf32> to vector<1x3xf32>
      %197 = vector.shape_cast %194 : vector<1x3xf32> to vector<1x1x3xf32>
      tpu.vector_store %arg29[%c0_92, %c0_93, %c0_94], %197 {strides = array<i32>} : memref<1x1x3xf32, #tpu.memory_space<vmem>>, vector<1x1x3xf32>,
    } else {
    }
    return
  }
  func.func @transform_0(%arg0: i32, %arg1: i32) -> (i32, i32, i32) {
    %c0_i32 = arith.constant 0 : i32
    %c0_i32_0 = arith.constant 0 : i32
    %c0_i32_1 = arith.constant 0 : i32
    return %arg0, %c0_i32, %c0_i32_0 : i32, i32, i32
  }
  func.func @transform_1(%arg0: i32, %arg1: i32) -> (i32, i32, i32) {
    %c0_i32 = arith.constant 0 : i32
    %c0_i32_0 = arith.constant 0 : i32
    %c0_i32_1 = arith.constant 0 : i32
    return %arg0, %c0_i32, %c0_i32_0 : i32, i32, i32
  }
  func.func @transform_2(%arg0: i32, %arg1: i32) -> (i32, i32) {
    %c0_i32 = arith.constant 0 : i32
    %c0_i32_0 = arith.constant 0 : i32
    %c0_i32_1 = arith.constant 0 : i32
    return %c0_i32, %c0_i32_0 : i32, i32
  }
  func.func @transform_3(%arg0: i32, %arg1: i32) -> (i32, i32) {
    %c0_i32 = arith.constant 0 : i32
    %c0_i32_0 = arith.constant 0 : i32
    %c0_i32_1 = arith.constant 0 : i32
    return %c0_i32, %c0_i32_0 : i32, i32
  }
  func.func @transform_4(%arg0: i32, %arg1: i32) -> (i32, i32) {
    %c0_i32 = arith.constant 0 : i32
    %c0_i32_0 = arith.constant 0 : i32
    %c0_i32_1 = arith.constant 0 : i32
    return %c0_i32, %c0_i32_0 : i32, i32
  }
  func.func @transform_5(%arg0: i32, %arg1: i32) -> (i32, i32) {
    %c0_i32 = arith.constant 0 : i32
    %c0_i32_0 = arith.constant 0 : i32
    %c0_i32_1 = arith.constant 0 : i32
    return %c0_i32, %c0_i32_0 : i32, i32
  }
  func.func @transform_6(%arg0: i32, %arg1: i32) -> (i32, i32) {
    %c0_i32 = arith.constant 0 : i32
    %c0_i32_0 = arith.constant 0 : i32
    %c0_i32_1 = arith.constant 0 : i32
    return %c0_i32, %c0_i32_0 : i32, i32
  }
  func.func @transform_7(%arg0: i32, %arg1: i32) -> (i32, i32, i32) {
    %c0_i32 = arith.constant 0 : i32
    %c0_i32_0 = arith.constant 0 : i32
    %c0_i32_1 = arith.constant 0 : i32
    return %arg0, %c0_i32, %c0_i32_0 : i32, i32, i32
  }
  func.func @transform_8(%arg0: i32, %arg1: i32) -> (i32, i32, i32) {
    %c0_i32 = arith.constant 0 : i32
    %c0_i32_0 = arith.constant 0 : i32
    %c0_i32_1 = arith.constant 0 : i32
    return %arg1, %c0_i32, %c0_i32_0 : i32, i32, i32
  }
  func.func @transform_9(%arg0: i32, %arg1: i32) -> (i32, i32, i32) {
    %c0_i32 = arith.constant 0 : i32
    %c0_i32_0 = arith.constant 0 : i32
    %c0_i32_1 = arith.constant 0 : i32
    return %arg1, %c0_i32, %c0_i32_0 : i32, i32, i32
  }
  func.func @transform_10(%arg0: i32, %arg1: i32) -> (i32, i32, i32) {
    %c0_i32 = arith.constant 0 : i32
    %c0_i32_0 = arith.constant 0 : i32
    %c0_i32_1 = arith.constant 0 : i32
    return %arg1, %c0_i32, %c0_i32_0 : i32, i32, i32
  }
  func.func @transform_11(%arg0: i32, %arg1: i32) -> (i32, i32, i32) {
    %c0_i32 = arith.constant 0 : i32
    %c0_i32_0 = arith.constant 0 : i32
    %c0_i32_1 = arith.constant 0 : i32
    return %arg1, %c0_i32, %c0_i32_0 : i32, i32, i32
  }
  func.func @transform_12(%arg0: i32, %arg1: i32) -> (i32, i32, i32) {
    %c0_i32 = arith.constant 0 : i32
    %c0_i32_0 = arith.constant 0 : i32
    %c0_i32_1 = arith.constant 0 : i32
    return %arg1, %c0_i32, %c0_i32_0 : i32, i32, i32
  }
  func.func @transform_13(%arg0: i32, %arg1: i32) -> (i32, i32, i32) {
    %c0_i32 = arith.constant 0 : i32
    %c0_i32_0 = arith.constant 0 : i32
    %c0_i32_1 = arith.constant 0 : i32
    return %arg1, %c0_i32, %c0_i32_0 : i32, i32, i32
  }
  func.func @transform_14(%arg0: i32, %arg1: i32) -> (i32, i32, i32) {
    %c0_i32 = arith.constant 0 : i32
    %c0_i32_0 = arith.constant 0 : i32
    %c0_i32_1 = arith.constant 0 : i32
    return %arg1, %c0_i32, %c0_i32_0 : i32, i32, i32
  }
  func.func @transform_15(%arg0: i32, %arg1: i32) -> (i32, i32, i32) {
    %c0_i32 = arith.constant 0 : i32
    %c0_i32_0 = arith.constant 0 : i32
    %c0_i32_1 = arith.constant 0 : i32
    return %arg1, %c0_i32, %c0_i32_0 : i32, i32, i32
  }
  func.func @transform_16(%arg0: i32, %arg1: i32) -> (i32, i32, i32) {
    %c0_i32 = arith.constant 0 : i32
    %c0_i32_0 = arith.constant 0 : i32
    %c0_i32_1 = arith.constant 0 : i32
    return %arg1, %c0_i32, %c0_i32_0 : i32, i32, i32
  }
  func.func @transform_17(%arg0: i32, %arg1: i32) -> (i32, i32, i32) {
    %c0_i32 = arith.constant 0 : i32
    %c0_i32_0 = arith.constant 0 : i32
    %c0_i32_1 = arith.constant 0 : i32
    return %arg1, %c0_i32, %c0_i32_0 : i32, i32, i32
  }
  func.func @transform_18(%arg0: i32, %arg1: i32) -> (i32, i32, i32) {
    %c0_i32 = arith.constant 0 : i32
    %c0_i32_0 = arith.constant 0 : i32
    %c0_i32_1 = arith.constant 0 : i32
    return %arg1, %c0_i32, %c0_i32_0 : i32, i32, i32
  }
  func.func @transform_19(%arg0: i32, %arg1: i32) -> (i32, i32, i32) {
    %c0_i32 = arith.constant 0 : i32
    %c0_i32_0 = arith.constant 0 : i32
    %c0_i32_1 = arith.constant 0 : i32
    return %arg1, %c0_i32, %c0_i32_0 : i32, i32, i32
  }
  func.func @transform_20(%arg0: i32, %arg1: i32) -> (i32, i32) {
    %c0_i32 = arith.constant 0 : i32
    %c0_i32_0 = arith.constant 0 : i32
    %c0_i32_1 = arith.constant 0 : i32
    return %c0_i32, %c0_i32_0 : i32, i32
  }
  func.func @transform_21(%arg0: i32, %arg1: i32) -> (i32, i32) {
    %c0_i32 = arith.constant 0 : i32
    %c0_i32_0 = arith.constant 0 : i32
    %c0_i32_1 = arith.constant 0 : i32
    return %c0_i32, %c0_i32_0 : i32, i32
  }
  func.func @transform_22(%arg0: i32, %arg1: i32) -> (i32, i32) {
    %c0_i32 = arith.constant 0 : i32
    %c0_i32_0 = arith.constant 0 : i32
    %c0_i32_1 = arith.constant 0 : i32
    return %c0_i32, %c0_i32_0 : i32, i32
  }
  func.func @transform_23(%arg0: i32, %arg1: i32) -> (i32, i32) {
    %c0_i32 = arith.constant 0 : i32
    %c0_i32_0 = arith.constant 0 : i32
    %c0_i32_1 = arith.constant 0 : i32
    return %c0_i32, %c0_i32_0 : i32, i32
  }
  func.func @transform_24(%arg0: i32, %arg1: i32) -> (i32, i32) {
    %c0_i32 = arith.constant 0 : i32
    %c0_i32_0 = arith.constant 0 : i32
    %c0_i32_1 = arith.constant 0 : i32
    return %c0_i32, %c0_i32_0 : i32, i32
  }
  func.func @transform_25(%arg0: i32, %arg1: i32) -> (i32, i32) {
    %c0_i32 = arith.constant 0 : i32
    %c0_i32_0 = arith.constant 0 : i32
    %c0_i32_1 = arith.constant 0 : i32
    return %c0_i32, %c0_i32_0 : i32, i32
  }
  func.func @transform_26(%arg0: i32, %arg1: i32) -> (i32, i32, i32) {
    %c0_i32 = arith.constant 0 : i32
    %c0_i32_0 = arith.constant 0 : i32
    %c0_i32_1 = arith.constant 0 : i32
    return %arg0, %c0_i32, %c0_i32_0 : i32, i32, i32
  }
  func.func @transform_27(%arg0: i32, %arg1: i32) -> (i32, i32, i32) {
    %c0_i32 = arith.constant 0 : i32
    %c0_i32_0 = arith.constant 0 : i32
    %c0_i32_1 = arith.constant 0 : i32
    return %arg0, %c0_i32, %c0_i32_0 : i32, i32, i32
  }
}

</mosaic_0001>

<llo_original>
// kernel: flava_forward.3
$region0: #{flava_forward.3}
  #allocation0 [shape = 'u32[]', space=smem, size = 0x4, offset = 0x4, fixed_abs, tag = 'smem constant byte address 0x4 - core index']
  #allocation1 [shape = 'u32[144,128]{1,0:T(1,128)}', space=vmem, size = 0x12000, scoped, tag = 'internal scratch']
  #allocation2 [shape = 'f32[8,32]{1,0:T(8,128)}', space=vmem, size = 0x1000, scoped, tag = 'scratch operand']
  %s0 = inlined_call_operand.vmem [shape: f32[2,8,32], index: 0, kind: input, shape index: {}]
  %s1 = inlined_call_operand.vmem [shape: f32[1,32], index: 1, kind: input, shape index: {}]
  %s2 = inlined_call_operand.vmem [shape: f32[1,32], index: 2, kind: input, shape index: {}]
  %s3 = inlined_call_operand.vmem [shape: f32[2,1,8], index: 3, kind: input, shape index: {}]
  %s4 = inlined_call_operand.vmem [shape: bf16[2,32,96], index: 4, kind: input, shape index: {}]
  %s5 = inlined_call_operand.vmem [shape: f32[2,1,96], index: 5, kind: input, shape index: {}]
  %s6 = inlined_call_operand.vmem [shape: bf16[2,32,32], index: 6, kind: input, shape index: {}]
  %s7 = inlined_call_operand.vmem [shape: f32[2,1,32], index: 7, kind: input, shape index: {}]
  %s8 = inlined_call_operand.vmem [shape: f32[2,1,32], index: 8, kind: input, shape index: {}]
  %s9 = inlined_call_operand.vmem [shape: f32[2,1,32], index: 9, kind: input, shape index: {}]
  %s10 = inlined_call_operand.vmem [shape: f32[2,1,32], index: 10, kind: input, shape index: {}]
  %s11 = inlined_call_operand.vmem [shape: f32[2,1,32], index: 11, kind: input, shape index: {}]
  %s12 = inlined_call_operand.vmem [shape: bf16[2,32,64], index: 12, kind: input, shape index: {}]
  %s13 = inlined_call_operand.vmem [shape: f32[2,1,64], index: 13, kind: input, shape index: {}]
  %s14 = inlined_call_operand.vmem [shape: bf16[2,64,32], index: 14, kind: input, shape index: {}]
  %s15 = inlined_call_operand.vmem [shape: f32[2,1,32], index: 15, kind: input, shape index: {}]
  %s16 = inlined_call_operand.vmem [shape: f32[1,32], index: 16, kind: input, shape index: {}]
  %s17 = inlined_call_operand.vmem [shape: f32[1,32], index: 17, kind: input, shape index: {}]
  %s18 = inlined_call_operand.vmem [shape: f32[32,32], index: 18, kind: input, shape index: {}]
  %s19 = inlined_call_operand.vmem [shape: f32[1,32], index: 19, kind: input, shape index: {}]
  %s20 = inlined_call_operand.vmem [shape: f32[32,3], index: 20, kind: input, shape index: {}]
  %s21 = inlined_call_operand.vmem [shape: f32[1,3], index: 21, kind: input, shape index: {}]
  %s22 = inlined_call_operand.vmem [shape: f32[2,8,32], index: 22, kind: output, shape index: {0}]
  %s23 = inlined_call_operand.hbm [shape: f32[2,1,3], index: 23, kind: output, shape index: {1}]
  %24 = xla_tuple %s22, %s23
  %s25 = sld [smem:[#allocation0]]
  $region137: #{flava_forward.3} parent=0
    _
  %s27 = ssub.s32 1, %s25
  %s28 = scalar_select 0, %s27, %s25
  $region1: #{flava_forward.3} parent=0
    #allocation3 [shape = 'u8[1024]{0}', space=vmem, size = 0x400, scoped, tag = 'output window, operand 1']
    #allocation4 [shape = 's32[2]{0}', space=sflag, size = 0x8, scoped, tag = 'scoped memory for flava_forward.3']
    %29 = vsyncpa [#allocation4], 0
    %s30 = scalar_lea.sflag [#allocation4], 1
    %31 = vsyncpa %s30, 0
    loop: start=0, step=1, limit=6
    $region2: #{flava_forward.3} parent=1 // loop_pre_header
      _
    $region3: #{flava_forward.3} parent=1 // loop_header
      %s33 = sphi 0, %s37
      %p34 = scmp.ge.s32.totalorder %s33, 6
      %s40 = sphi 0, %s52
      %s41 = sphi 0, %s48
      %s42 = sphi 0, %s40
      %s43 = sphi 0, %s41
      %s44 = sphi 0, %s42
      %s45 = sphi 0, %s43
      %s55 = sphi 0, %s57
      %s58 = sphi 0, %s55
      %s59 = sphi 0, %s58
      %s75 = sphi 0, %s59
      %s79 = sphi 0, %s79
      %s81 = sphi 0, %s79
      %s82 = sphi 0, %s81
      %s96 = sphi 0, %s82
      %s100 = sphi 0, %s100
      %s102 = sphi 0, %s100
      %s103 = sphi 0, %s102
      %s117 = sphi 0, %s103
      %s123 = sphi 0, %s125
      %s126 = sphi 0, %s123
      %s127 = sphi 0, %s126
      %s143 = sphi 0, %s127
      %s149 = sphi 0, %s151
      %s152 = sphi 0, %s149
      %s153 = sphi 0, %s152
      %s169 = sphi 0, %s153
      %s175 = sphi 0, %s177
      %s178 = sphi 0, %s175
      %s179 = sphi 0, %s178
      %s195 = sphi 0, %s179
      %s201 = sphi 0, %s203
      %s204 = sphi 0, %s201
      %s205 = sphi 0, %s204
      %s221 = sphi 0, %s205
      %s227 = sphi 0, %s229
      %s230 = sphi 0, %s227
      %s231 = sphi 0, %s230
      %s247 = sphi 0, %s231
      %s253 = sphi 0, %s255
      %s256 = sphi 0, %s253
      %s257 = sphi 0, %s256
      %s273 = sphi 0, %s257
      %s279 = sphi 0, %s281
      %s282 = sphi 0, %s279
      %s283 = sphi 0, %s282
      %s299 = sphi 0, %s283
      %s305 = sphi 0, %s307
      %s308 = sphi 0, %s305
      %s309 = sphi 0, %s308
      %s325 = sphi 0, %s309
      %s331 = sphi 0, %s333
      %s334 = sphi 0, %s331
      %s335 = sphi 0, %s334
      %s351 = sphi 0, %s335
      %s357 = sphi 0, %s359
      %s360 = sphi 0, %s357
      %s361 = sphi 0, %s360
      %s377 = sphi 0, %s361
      %s383 = sphi 0, %s385
      %s386 = sphi 0, %s383
      %s387 = sphi 0, %s386
      %s403 = sphi 0, %s387
      %s409 = sphi 0, %s411
      %s412 = sphi 0, %s409
      %s413 = sphi 0, %s412
      %s429 = sphi 0, %s413
      %s435 = sphi 0, %s437
      %s438 = sphi 0, %s435
      %s439 = sphi 0, %s438
      %s455 = sphi 0, %s439
      %s459 = sphi 0, %s459
      %s461 = sphi 0, %s459
      %s462 = sphi 0, %s461
      %s476 = sphi 0, %s462
      %s480 = sphi 0, %s480
      %s482 = sphi 0, %s480
      %s483 = sphi 0, %s482
      %s497 = sphi 0, %s483
      %s501 = sphi 0, %s501
      %s503 = sphi 0, %s501
      %s504 = sphi 0, %s503
      %s518 = sphi 0, %s504
      %s522 = sphi 0, %s522
      %s524 = sphi 0, %s522
      %s525 = sphi 0, %s524
      %s539 = sphi 0, %s525
      %s543 = sphi 0, %s543
      %s545 = sphi 0, %s543
      %s546 = sphi 0, %s545
      %s560 = sphi 0, %s546
      %s564 = sphi 0, %s564
      %s566 = sphi 0, %s564
      %s567 = sphi 0, %s566
      %s581 = sphi 0, %s567
      %s587 = sphi 0, %s589
      %s590 = sphi 0, %s587
      %s591 = sphi 0, %s590
      %s607 = sphi 0, %s591
      %s613 = sphi 0, %s615
      %s616 = sphi 0, %s613
      %s617 = sphi 0, %s616
      %s633 = sphi 0, %s617
    $region4: #{flava_forward.3} parent=1 // loop_header_branch
      %36 = sbr.rel (%p34) target = $region8
    $region5: #{flava_forward.3} parent=1 // loop_body
      %s38 = ssub.s32 %s33, 1
      %s39 = ssub.s32 %s33, 2
      %s46 = sadd.s32 1, %s41
      %p47 = scmp.ge.s32.totalorder %s46, 2
      %s48 = scalar_select %p47, 0, %s46
      %s49 = sadd.s32 1, %s40
      %s50 = scalar_select %p47, %s49, %s40
      %p51 = scmp.ge.s32.totalorder %s50, 2
      %s52 = scalar_select %p51, 0, %s50
      %s53 = ssub.s32 %s40, %s52
      %p54 = scmp.eq.s32.totalorder %s53, 0
      %s56 = sadd.s32 %s55, 1
      %s57 = scalar_select %p54, %s55, %s56
      %p60 = pneg %p54
      %p61 = scmp.eq.s32.totalorder %s33, 3
      %p62 = por %p60, %p61
      %p63 = scmp.ne.s32.totalorder %s55, %s58
      %p64 = scmp.eq.s32.totalorder %s33, 0
      %p65 = por %p63, %p64
      %p66 = scmp.ne.s32.totalorder %s55, %s58
      %p67 = scmp.eq.s32.totalorder %s38, 3
      %p68 = por %p66, %p67
      %p69 = scmp.ne.s32.totalorder %s58, %s59
      %p70 = scmp.eq.s32.totalorder %s38, 0
      %p71 = por %p69, %p70
      %p72 = scmp.ne.s32.totalorder %s58, %s59
      %p73 = scmp.eq.s32.totalorder %s39, 3
      %p74 = por %p72, %p73
      %p76 = scmp.ne.s32.totalorder %s59, %s75
      %p77 = scmp.eq.s32.totalorder %s39, 0
      %p78 = por %p76, %p77
      %s80 = sadd.s32 %s79, 1
      %p83 = scmp.eq.s32.totalorder %s33, 3
      %p84 = scmp.ne.s32.totalorder %s79, %s81
      %p85 = scmp.eq.s32.totalorder %s33, 0
      %p86 = por %p84, %p85
      %p87 = scmp.ne.s32.totalorder %s79, %s81
      %p88 = scmp.eq.s32.totalorder %s38, 3
      %p89 = por %p87, %p88
      %p90 = scmp.ne.s32.totalorder %s81, %s82
      %p91 = scmp.eq.s32.totalorder %s38, 0
      %p92 = por %p90, %p91
      %p93 = scmp.ne.s32.totalorder %s81, %s82
      %p94 = scmp.eq.s32.totalorder %s39, 3
      %p95 = por %p93, %p94
      %p97 = scmp.ne.s32.totalorder %s82, %s96
      %p98 = scmp.eq.s32.totalorder %s39, 0
      %p99 = por %p97, %p98
      %s101 = sadd.s32 %s100, 1
      %p104 = scmp.eq.s32.totalorder %s33, 3
      %p105 = scmp.ne.s32.totalorder %s100, %s102
      %p106 = scmp.eq.s32.totalorder %s33, 0
      %p107 = por %p105, %p106
      %p108 = scmp.ne.s32.totalorder %s100, %s102
      %p109 = scmp.eq.s32.totalorder %s38, 3
      %p110 = por %p108, %p109
      %p111 = scmp.ne.s32.totalorder %s102, %s103
      %p112 = scmp.eq.s32.totalorder %s38, 0
      %p113 = por %p111, %p112
      %p114 = scmp.ne.s32.totalorder %s102, %s103
      %p115 = scmp.eq.s32.totalorder %s39, 3
      %p116 = por %p114, %p115
      %p118 = scmp.ne.s32.totalorder %s103, %s117
      %p119 = scmp.eq.s32.totalorder %s39, 0
      %p120 = por %p118, %p119
      %s121 = ssub.s32 %s40, %s52
      %p122 = scmp.eq.s32.totalorder %s121, 0
      %s124 = sadd.s32 %s123, 1
      %s125 = scalar_select %p122, %s123, %s124
      %p128 = pneg %p122
      %p129 = scmp.eq.s32.totalorder %s33, 3
      %p130 = por %p128, %p129
      %p131 = scmp.ne.s32.totalorder %s123, %s126
      %p132 = scmp.eq.s32.totalorder %s33, 0
      %p133 = por %p131, %p132
      %p134 = scmp.ne.s32.totalorder %s123, %s126
      %p135 = scmp.eq.s32.totalorder %s38, 3
      %p136 = por %p134, %p135
      %p137 = scmp.ne.s32.totalorder %s126, %s127
      %p138 = scmp.eq.s32.totalorder %s38, 0
      %p139 = por %p137, %p138
      %p140 = scmp.ne.s32.totalorder %s126, %s127
      %p141 = scmp.eq.s32.totalorder %s39, 3
      %p142 = por %p140, %p141
      %p144 = scmp.ne.s32.totalorder %s127, %s143
      %p145 = scmp.eq.s32.totalorder %s39, 0
      %p146 = por %p144, %p145
      %s147 = ssub.s32 %s41, %s48
      %p148 = scmp.eq.s32.totalorder %s147, 0
      %s150 = sadd.s32 %s149, 1
      %s151 = scalar_select %p148, %s149, %s150
      %p154 = pneg %p148
      %p155 = scmp.eq.s32.totalorder %s33, 3
      %p156 = por %p154, %p155
      %p157 = scmp.ne.s32.totalorder %s149, %s152
      %p158 = scmp.eq.s32.totalorder %s33, 0
      %p159 = por %p157, %p158
      %p160 = scmp.ne.s32.totalorder %s149, %s152
      %p161 = scmp.eq.s32.totalorder %s38, 3
      %p162 = por %p160, %p161
      %p163 = scmp.ne.s32.totalorder %s152, %s153
      %p164 = scmp.eq.s32.totalorder %s38, 0
      %p165 = por %p163, %p164
      %p166 = scmp.ne.s32.totalorder %s152, %s153
      %p167 = scmp.eq.s32.totalorder %s39, 3
      %p168 = por %p166, %p167
      %p170 = scmp.ne.s32.totalorder %s153, %s169
      %p171 = scmp.eq.s32.totalorder %s39, 0
      %p172 = por %p170, %p171
      %s173 = ssub.s32 %s41, %s48
      %p174 = scmp.eq.s32.totalorder %s173, 0
      %s176 = sadd.s32 %s175, 1
      %s177 = scalar_select %p174, %s175, %s176
      %p180 = pneg %p174
      %p181 = scmp.eq.s32.totalorder %s33, 3
      %p182 = por %p180, %p181
      %p183 = scmp.ne.s32.totalorder %s175, %s178
      %p184 = scmp.eq.s32.totalorder %s33, 0
      %p185 = por %p183, %p184
      %p186 = scmp.ne.s32.totalorder %s175, %s178
      %p187 = scmp.eq.s32.totalorder %s38, 3
      %p188 = por %p186, %p187
      %p189 = scmp.ne.s32.totalorder %s178, %s179
      %p190 = scmp.eq.s32.totalorder %s38, 0
      %p191 = por %p189, %p190
      %p192 = scmp.ne.s32.totalorder %s178, %s179
      %p193 = scmp.eq.s32.totalorder %s39, 3
      %p194 = por %p192, %p193
      %p196 = scmp.ne.s32.totalorder %s179, %s195
      %p197 = scmp.eq.s32.totalorder %s39, 0
      %p198 = por %p196, %p197
      %s199 = ssub.s32 %s41, %s48
      %p200 = scmp.eq.s32.totalorder %s199, 0
      %s202 = sadd.s32 %s201, 1
      %s203 = scalar_select %p200, %s201, %s202
      %p206 = pneg %p200
      %p207 = scmp.eq.s32.totalorder %s33, 3
      %p208 = por %p206, %p207
      %p209 = scmp.ne.s32.totalorder %s201, %s204
      %p210 = scmp.eq.s32.totalorder %s33, 0
      %p211 = por %p209, %p210
      %p212 = scmp.ne.s32.totalorder %s201, %s204
      %p213 = scmp.eq.s32.totalorder %s38, 3
      %p214 = por %p212, %p213
      %p215 = scmp.ne.s32.totalorder %s204, %s205
      %p216 = scmp.eq.s32.totalorder %s38, 0
      %p217 = por %p215, %p216
      %p218 = scmp.ne.s32.totalorder %s204, %s205
      %p219 = scmp.eq.s32.totalorder %s39, 3
      %p220 = por %p218, %p219
      %p222 = scmp.ne.s32.totalorder %s205, %s221
      %p223 = scmp.eq.s32.totalorder %s39, 0
      %p224 = por %p222, %p223
      %s225 = ssub.s32 %s41, %s48
      %p226 = scmp.eq.s32.totalorder %s225, 0
      %s228 = sadd.s32 %s227, 1
      %s229 = scalar_select %p226, %s227, %s228
      %p232 = pneg %p226
      %p233 = scmp.eq.s32.totalorder %s33, 3
      %p234 = por %p232, %p233
      %p235 = scmp.ne.s32.totalorder %s227, %s230
      %p236 = scmp.eq.s32.totalorder %s33, 0
      %p237 = por %p235, %p236
      %p238 = scmp.ne.s32.totalorder %s227, %s230
      %p239 = scmp.eq.s32.totalorder %s38, 3
      %p240 = por %p238, %p239
      %p241 = scmp.ne.s32.totalorder %s230, %s231
      %p242 = scmp.eq.s32.totalorder %s38, 0
      %p243 = por %p241, %p242
      %p244 = scmp.ne.s32.totalorder %s230, %s231
      %p245 = scmp.eq.s32.totalorder %s39, 3
      %p246 = por %p244, %p245
      %p248 = scmp.ne.s32.totalorder %s231, %s247
      %p249 = scmp.eq.s32.totalorder %s39, 0
      %p250 = por %p248, %p249
      %s251 = ssub.s32 %s41, %s48
      %p252 = scmp.eq.s32.totalorder %s251, 0
      %s254 = sadd.s32 %s253, 1
      %s255 = scalar_select %p252, %s253, %s254
      %p258 = pneg %p252
      %p259 = scmp.eq.s32.totalorder %s33, 3
      %p260 = por %p258, %p259
      %p261 = scmp.ne.s32.totalorder %s253, %s256
      %p262 = scmp.eq.s32.totalorder %s33, 0
      %p263 = por %p261, %p262
      %p264 = scmp.ne.s32.totalorder %s253, %s256
      %p265 = scmp.eq.s32.totalorder %s38, 3
      %p266 = por %p264, %p265
      %p267 = scmp.ne.s32.totalorder %s256, %s257
      %p268 = scmp.eq.s32.totalorder %s38, 0
      %p269 = por %p267, %p268
      %p270 = scmp.ne.s32.totalorder %s256, %s257
      %p271 = scmp.eq.s32.totalorder %s39, 3
      %p272 = por %p270, %p271
      %p274 = scmp.ne.s32.totalorder %s257, %s273
      %p275 = scmp.eq.s32.totalorder %s39, 0
      %p276 = por %p274, %p275
      %s277 = ssub.s32 %s41, %s48
      %p278 = scmp.eq.s32.totalorder %s277, 0
      %s280 = sadd.s32 %s279, 1
      %s281 = scalar_select %p278, %s279, %s280
      %p284 = pneg %p278
      %p285 = scmp.eq.s32.totalorder %s33, 3
      %p286 = por %p284, %p285
      %p287 = scmp.ne.s32.totalorder %s279, %s282
      %p288 = scmp.eq.s32.totalorder %s33, 0
      %p289 = por %p287, %p288
      %p290 = scmp.ne.s32.totalorder %s279, %s282
      %p291 = scmp.eq.s32.totalorder %s38, 3
      %p292 = por %p290, %p291
      %p293 = scmp.ne.s32.totalorder %s282, %s283
      %p294 = scmp.eq.s32.totalorder %s38, 0
      %p295 = por %p293, %p294
      %p296 = scmp.ne.s32.totalorder %s282, %s283
      %p297 = scmp.eq.s32.totalorder %s39, 3
      %p298 = por %p296, %p297
      %p300 = scmp.ne.s32.totalorder %s283, %s299
      %p301 = scmp.eq.s32.totalorder %s39, 0
      %p302 = por %p300, %p301
      %s303 = ssub.s32 %s41, %s48
      %p304 = scmp.eq.s32.totalorder %s303, 0
      %s306 = sadd.s32 %s305, 1
      %s307 = scalar_select %p304, %s305, %s306
      %p310 = pneg %p304
      %p311 = scmp.eq.s32.totalorder %s33, 3
      %p312 = por %p310, %p311
      %p313 = scmp.ne.s32.totalorder %s305, %s308
      %p314 = scmp.eq.s32.totalorder %s33, 0
      %p315 = por %p313, %p314
      %p316 = scmp.ne.s32.totalorder %s305, %s308
      %p317 = scmp.eq.s32.totalorder %s38, 3
      %p318 = por %p316, %p317
      %p319 = scmp.ne.s32.totalorder %s308, %s309
      %p320 = scmp.eq.s32.totalorder %s38, 0
      %p321 = por %p319, %p320
      %p322 = scmp.ne.s32.totalorder %s308, %s309
      %p323 = scmp.eq.s32.totalorder %s39, 3
      %p324 = por %p322, %p323
      %p326 = scmp.ne.s32.totalorder %s309, %s325
      %p327 = scmp.eq.s32.totalorder %s39, 0
      %p328 = por %p326, %p327
      %s329 = ssub.s32 %s41, %s48
      %p330 = scmp.eq.s32.totalorder %s329, 0
      %s332 = sadd.s32 %s331, 1
      %s333 = scalar_select %p330, %s331, %s332
      %p336 = pneg %p330
      %p337 = scmp.eq.s32.totalorder %s33, 3
      %p338 = por %p336, %p337
      %p339 = scmp.ne.s32.totalorder %s331, %s334
      %p340 = scmp.eq.s32.totalorder %s33, 0
      %p341 = por %p339, %p340
      %p342 = scmp.ne.s32.totalorder %s331, %s334
      %p343 = scmp.eq.s32.totalorder %s38, 3
      %p344 = por %p342, %p343
      %p345 = scmp.ne.s32.totalorder %s334, %s335
      %p346 = scmp.eq.s32.totalorder %s38, 0
      %p347 = por %p345, %p346
      %p348 = scmp.ne.s32.totalorder %s334, %s335
      %p349 = scmp.eq.s32.totalorder %s39, 3
      %p350 = por %p348, %p349
      %p352 = scmp.ne.s32.totalorder %s335, %s351
      %p353 = scmp.eq.s32.totalorder %s39, 0
      %p354 = por %p352, %p353
      %s355 = ssub.s32 %s41, %s48
      %p356 = scmp.eq.s32.totalorder %s355, 0
      %s358 = sadd.s32 %s357, 1
      %s359 = scalar_select %p356, %s357, %s358
      %p362 = pneg %p356
      %p363 = scmp.eq.s32.totalorder %s33, 3
      %p364 = por %p362, %p363
      %p365 = scmp.ne.s32.totalorder %s357, %s360
      %p366 = scmp.eq.s32.totalorder %s33, 0
      %p367 = por %p365, %p366
      %p368 = scmp.ne.s32.totalorder %s357, %s360
      %p369 = scmp.eq.s32.totalorder %s38, 3
      %p370 = por %p368, %p369
      %p371 = scmp.ne.s32.totalorder %s360, %s361
      %p372 = scmp.eq.s32.totalorder %s38, 0
      %p373 = por %p371, %p372
      %p374 = scmp.ne.s32.totalorder %s360, %s361
      %p375 = scmp.eq.s32.totalorder %s39, 3
      %p376 = por %p374, %p375
      %p378 = scmp.ne.s32.totalorder %s361, %s377
      %p379 = scmp.eq.s32.totalorder %s39, 0
      %p380 = por %p378, %p379
      %s381 = ssub.s32 %s41, %s48
      %p382 = scmp.eq.s32.totalorder %s381, 0
      %s384 = sadd.s32 %s383, 1
      %s385 = scalar_select %p382, %s383, %s384
      %p388 = pneg %p382
      %p389 = scmp.eq.s32.totalorder %s33, 3
      %p390 = por %p388, %p389
      %p391 = scmp.ne.s32.totalorder %s383, %s386
      %p392 = scmp.eq.s32.totalorder %s33, 0
      %p393 = por %p391, %p392
      %p394 = scmp.ne.s32.totalorder %s383, %s386
      %p395 = scmp.eq.s32.totalorder %s38, 3
      %p396 = por %p394, %p395
      %p397 = scmp.ne.s32.totalorder %s386, %s387
      %p398 = scmp.eq.s32.totalorder %s38, 0
      %p399 = por %p397, %p398
      %p400 = scmp.ne.s32.totalorder %s386, %s387
      %p401 = scmp.eq.s32.totalorder %s39, 3
      %p402 = por %p400, %p401
      %p404 = scmp.ne.s32.totalorder %s387, %s403
      %p405 = scmp.eq.s32.totalorder %s39, 0
      %p406 = por %p404, %p405
      %s407 = ssub.s32 %s41, %s48
      %p408 = scmp.eq.s32.totalorder %s407, 0
      %s410 = sadd.s32 %s409, 1
      %s411 = scalar_select %p408, %s409, %s410
      %p414 = pneg %p408
      %p415 = scmp.eq.s32.totalorder %s33, 3
      %p416 = por %p414, %p415
      %p417 = scmp.ne.s32.totalorder %s409, %s412
      %p418 = scmp.eq.s32.totalorder %s33, 0
      %p419 = por %p417, %p418
      %p420 = scmp.ne.s32.totalorder %s409, %s412
      %p421 = scmp.eq.s32.totalorder %s38, 3
      %p422 = por %p420, %p421
      %p423 = scmp.ne.s32.totalorder %s412, %s413
      %p424 = scmp.eq.s32.totalorder %s38, 0
      %p425 = por %p423, %p424
      %p426 = scmp.ne.s32.totalorder %s412, %s413
      %p427 = scmp.eq.s32.totalorder %s39, 3
      %p428 = por %p426, %p427
      %p430 = scmp.ne.s32.totalorder %s413, %s429
      %p431 = scmp.eq.s32.totalorder %s39, 0
      %p432 = por %p430, %p431
      %s433 = ssub.s32 %s41, %s48
      %p434 = scmp.eq.s32.totalorder %s433, 0
      %s436 = sadd.s32 %s435, 1
      %s437 = scalar_select %p434, %s435, %s436
      %p440 = pneg %p434
      %p441 = scmp.eq.s32.totalorder %s33, 3
      %p442 = por %p440, %p441
      %p443 = scmp.ne.s32.totalorder %s435, %s438
      %p444 = scmp.eq.s32.totalorder %s33, 0
      %p445 = por %p443, %p444
      %p446 = scmp.ne.s32.totalorder %s435, %s438
      %p447 = scmp.eq.s32.totalorder %s38, 3
      %p448 = por %p446, %p447
      %p449 = scmp.ne.s32.totalorder %s438, %s439
      %p450 = scmp.eq.s32.totalorder %s38, 0
      %p451 = por %p449, %p450
      %p452 = scmp.ne.s32.totalorder %s438, %s439
      %p453 = scmp.eq.s32.totalorder %s39, 3
      %p454 = por %p452, %p453
      %p456 = scmp.ne.s32.totalorder %s439, %s455
      %p457 = scmp.eq.s32.totalorder %s39, 0
      %p458 = por %p456, %p457
      %s460 = sadd.s32 %s459, 1
      %p463 = scmp.eq.s32.totalorder %s33, 3
      %p464 = scmp.ne.s32.totalorder %s459, %s461
      %p465 = scmp.eq.s32.totalorder %s33, 0
      %p466 = por %p464, %p465
      %p467 = scmp.ne.s32.totalorder %s459, %s461
      %p468 = scmp.eq.s32.totalorder %s38, 3
      %p469 = por %p467, %p468
      %p470 = scmp.ne.s32.totalorder %s461, %s462
      %p471 = scmp.eq.s32.totalorder %s38, 0
      %p472 = por %p470, %p471
      %p473 = scmp.ne.s32.totalorder %s461, %s462
      %p474 = scmp.eq.s32.totalorder %s39, 3
      %p475 = por %p473, %p474
      %p477 = scmp.ne.s32.totalorder %s462, %s476
      %p478 = scmp.eq.s32.totalorder %s39, 0
      %p479 = por %p477, %p478
      %s481 = sadd.s32 %s480, 1
      %p484 = scmp.eq.s32.totalorder %s33, 3
      %p485 = scmp.ne.s32.totalorder %s480, %s482
      %p486 = scmp.eq.s32.totalorder %s33, 0
      %p487 = por %p485, %p486
      %p488 = scmp.ne.s32.totalorder %s480, %s482
      %p489 = scmp.eq.s32.totalorder %s38, 3
      %p490 = por %p488, %p489
      %p491 = scmp.ne.s32.totalorder %s482, %s483
      %p492 = scmp.eq.s32.totalorder %s38, 0
      %p493 = por %p491, %p492
      %p494 = scmp.ne.s32.totalorder %s482, %s483
      %p495 = scmp.eq.s32.totalorder %s39, 3
      %p496 = por %p494, %p495
      %p498 = scmp.ne.s32.totalorder %s483, %s497
      %p499 = scmp.eq.s32.totalorder %s39, 0
      %p500 = por %p498, %p499
      %s502 = sadd.s32 %s501, 1
      %p505 = scmp.eq.s32.totalorder %s33, 3
      %p506 = scmp.ne.s32.totalorder %s501, %s503
      %p507 = scmp.eq.s32.totalorder %s33, 0
      %p508 = por %p506, %p507
      %p509 = scmp.ne.s32.totalorder %s501, %s503
      %p510 = scmp.eq.s32.totalorder %s38, 3
      %p511 = por %p509, %p510
      %p512 = scmp.ne.s32.totalorder %s503, %s504
      %p513 = scmp.eq.s32.totalorder %s38, 0
      %p514 = por %p512, %p513
      %p515 = scmp.ne.s32.totalorder %s503, %s504
      %p516 = scmp.eq.s32.totalorder %s39, 3
      %p517 = por %p515, %p516
      %p519 = scmp.ne.s32.totalorder %s504, %s518
      %p520 = scmp.eq.s32.totalorder %s39, 0
      %p521 = por %p519, %p520
      %s523 = sadd.s32 %s522, 1
      %p526 = scmp.eq.s32.totalorder %s33, 3
      %p527 = scmp.ne.s32.totalorder %s522, %s524
      %p528 = scmp.eq.s32.totalorder %s33, 0
      %p529 = por %p527, %p528
      %p530 = scmp.ne.s32.totalorder %s522, %s524
      %p531 = scmp.eq.s32.totalorder %s38, 3
      %p532 = por %p530, %p531
      %p533 = scmp.ne.s32.totalorder %s524, %s525
      %p534 = scmp.eq.s32.totalorder %s38, 0
      %p535 = por %p533, %p534
      %p536 = scmp.ne.s32.totalorder %s524, %s525
      %p537 = scmp.eq.s32.totalorder %s39, 3
      %p538 = por %p536, %p537
      %p540 = scmp.ne.s32.totalorder %s525, %s539
      %p541 = scmp.eq.s32.totalorder %s39, 0
      %p542 = por %p540, %p541
      %s544 = sadd.s32 %s543, 1
      %p547 = scmp.eq.s32.totalorder %s33, 3
      %p548 = scmp.ne.s32.totalorder %s543, %s545
      %p549 = scmp.eq.s32.totalorder %s33, 0
      %p550 = por %p548, %p549
      %p551 = scmp.ne.s32.totalorder %s543, %s545
      %p552 = scmp.eq.s32.totalorder %s38, 3
      %p553 = por %p551, %p552
      %p554 = scmp.ne.s32.totalorder %s545, %s546
      %p555 = scmp.eq.s32.totalorder %s38, 0
      %p556 = por %p554, %p555
      %p557 = scmp.ne.s32.totalorder %s545, %s546
      %p558 = scmp.eq.s32.totalorder %s39, 3
      %p559 = por %p557, %p558
      %p561 = scmp.ne.s32.totalorder %s546, %s560
      %p562 = scmp.eq.s32.totalorder %s39, 0
      %p563 = por %p561, %p562
      %s565 = sadd.s32 %s564, 1
      %p568 = scmp.eq.s32.totalorder %s33, 3
      %p569 = scmp.ne.s32.totalorder %s564, %s566
      %p570 = scmp.eq.s32.totalorder %s33, 0
      %p571 = por %p569, %p570
      %p572 = scmp.ne.s32.totalorder %s564, %s566
      %p573 = scmp.eq.s32.totalorder %s38, 3
      %p574 = por %p572, %p573
      %p575 = scmp.ne.s32.totalorder %s566, %s567
      %p576 = scmp.eq.s32.totalorder %s38, 0
      %p577 = por %p575, %p576
      %p578 = scmp.ne.s32.totalorder %s566, %s567
      %p579 = scmp.eq.s32.totalorder %s39, 3
      %p580 = por %p578, %p579
      %p582 = scmp.ne.s32.totalorder %s567, %s581
      %p583 = scmp.eq.s32.totalorder %s39, 0
      %p584 = por %p582, %p583
      %s585 = ssub.s32 %s40, %s52
      %p586 = scmp.eq.s32.totalorder %s585, 0
      %s588 = sadd.s32 %s587, 1
      %s589 = scalar_select %p586, %s587, %s588
      %p592 = pneg %p586
      %p593 = scmp.eq.s32.totalorder %s33, 3
      %p594 = por %p592, %p593
      %p595 = scmp.ne.s32.totalorder %s587, %s590
      %p596 = scmp.eq.s32.totalorder %s33, 0
      %p597 = por %p595, %p596
      %p598 = scmp.ne.s32.totalorder %s587, %s590
      %p599 = scmp.eq.s32.totalorder %s38, 3
      %p600 = por %p598, %p599
      %p601 = scmp.ne.s32.totalorder %s590, %s591
      %p602 = scmp.eq.s32.totalorder %s38, 0
      %p603 = por %p601, %p602
      %p604 = scmp.ne.s32.totalorder %s590, %s591
      %p605 = scmp.eq.s32.totalorder %s39, 3
      %p606 = por %p604, %p605
      %p608 = scmp.ne.s32.totalorder %s591, %s607
      %p609 = scmp.eq.s32.totalorder %s39, 0
      %p610 = por %p608, %p609
      %s611 = ssub.s32 %s40, %s52
      %p612 = scmp.eq.s32.totalorder %s611, 0
      %s614 = sadd.s32 %s613, 1
      %s615 = scalar_select %p612, %s613, %s614
      %p618 = pneg %p612
      %p619 = scmp.eq.s32.totalorder %s33, 3
      %p620 = por %p618, %p619
      %p621 = scmp.ne.s32.totalorder %s613, %s616
      %p622 = scmp.eq.s32.totalorder %s33, 0
      %p623 = por %p621, %p622
      %p624 = scmp.ne.s32.totalorder %s613, %s616
      %p625 = scmp.eq.s32.totalorder %s38, 3
      %p626 = por %p624, %p625
      %p627 = scmp.ne.s32.totalorder %s616, %s617
      %p628 = scmp.eq.s32.totalorder %s38, 0
      %p629 = por %p627, %p628
      %p630 = scmp.ne.s32.totalorder %s616, %s617
      %p631 = scmp.eq.s32.totalorder %s39, 3
      %p632 = por %p630, %p631
      %p634 = scmp.ne.s32.totalorder %s617, %s633
      %p635 = scmp.eq.s32.totalorder %s39, 0
      %p636 = por %p634, %p635
      %p637 = scmp.le.s32.totalorder 1, %s33
      %p638 = scmp.lt.s32.totalorder %s33, 5
      %p639 = pnand %p637, %p638
      %p640 = pneg %p639
      // Predicated region
      $region9: #{flava_forward.3} parent=5 // pred_check
        _
      $region10: #{flava_forward.3} parent=5 // pred_check_branch
        %642 = sbr.rel (%p639) target = $region12
      $region11: #{flava_forward.3} parent=5 // pred_region
        %s643 = ssub.s32 %s33, 1
        // Predicated region
        $region13: #{flava_forward.3} parent=11 // pred_check
          %p644 = pneg %p92
        $region14: #{flava_forward.3} parent=11 // pred_check_branch
          %646 = sbr.rel (%p644) target = $region16
        $region15: #{flava_forward.3} parent=11 // pred_region
          _
        $region16: #{flava_forward.3} parent=11 // pred_fallthru
          _
        // Predicated region
        $region17: #{flava_forward.3} parent=11 // pred_check
          %p647 = pneg %p113
        $region18: #{flava_forward.3} parent=11 // pred_check_branch
          %649 = sbr.rel (%p647) target = $region20
        $region19: #{flava_forward.3} parent=11 // pred_region
          _
        $region20: #{flava_forward.3} parent=11 // pred_fallthru
          _
        // Predicated region
        $region21: #{flava_forward.3} parent=11 // pred_check
          %p650 = pneg %p472
        $region22: #{flava_forward.3} parent=11 // pred_check_branch
          %652 = sbr.rel (%p650) target = $region24
        $region23: #{flava_forward.3} parent=11 // pred_region
          _
        $region24: #{flava_forward.3} parent=11 // pred_fallthru
          _
        // Predicated region
        $region25: #{flava_forward.3} parent=11 // pred_check
          %p653 = pneg %p493
        $region26: #{flava_forward.3} parent=11 // pred_check_branch
          %655 = sbr.rel (%p653) target = $region28
        $region27: #{flava_forward.3} parent=11 // pred_region
          _
        $region28: #{flava_forward.3} parent=11 // pred_fallthru
          _
        // Predicated region
        $region29: #{flava_forward.3} parent=11 // pred_check
          %p656 = pneg %p514
        $region30: #{flava_forward.3} parent=11 // pred_check_branch
          %658 = sbr.rel (%p656) target = $region32
        $region31: #{flava_forward.3} parent=11 // pred_region
          _
        $region32: #{flava_forward.3} parent=11 // pred_fallthru
          _
        // Predicated region
        $region33: #{flava_forward.3} parent=11 // pred_check
          %p659 = pneg %p535
        $region34: #{flava_forward.3} parent=11 // pred_check_branch
          %661 = sbr.rel (%p659) target = $region36
        $region35: #{flava_forward.3} parent=11 // pred_region
          _
        $region36: #{flava_forward.3} parent=11 // pred_fallthru
          _
        // Predicated region
        $region37: #{flava_forward.3} parent=11 // pred_check
          %p662 = pneg %p556
        $region38: #{flava_forward.3} parent=11 // pred_check_branch
          %664 = sbr.rel (%p662) target = $region40
        $region39: #{flava_forward.3} parent=11 // pred_region
          _
        $region40: #{flava_forward.3} parent=11 // pred_fallthru
          _
        // Predicated region
        $region41: #{flava_forward.3} parent=11 // pred_check
          %p665 = pneg %p577
        $region42: #{flava_forward.3} parent=11 // pred_check_branch
          %667 = sbr.rel (%p665) target = $region44
        $region43: #{flava_forward.3} parent=11 // pred_region
          _
        $region44: #{flava_forward.3} parent=11 // pred_fallthru
          _
      $region12: #{flava_forward.3} parent=5 // pred_fallthru
        _
      %p668 = scmp.lt.s32.totalorder %s33, 4
      // Predicated region
      $region45: #{flava_forward.3} parent=5 // pred_check
        %p669 = pneg %p668
      $region46: #{flava_forward.3} parent=5 // pred_check_branch
        %671 = sbr.rel (%p669) target = $region48
      $region47: #{flava_forward.3} parent=5 // pred_region
        // Predicated region
        $region49: #{flava_forward.3} parent=47 // pred_check
          %p672 = pneg %p65
        $region50: #{flava_forward.3} parent=47 // pred_check_branch
          %674 = sbr.rel (%p672) target = $region52
        $region51: #{flava_forward.3} parent=47 // pred_region
          %p675 = scmp.lt.s32.totalorder %s40, 1
          %s676 = scalar_select %p675, %s40, 1
          %s677 = smul.addr %s676, 8
          %s678 = scalar_lea.vmem %s0, %s677
        $region52: #{flava_forward.3} parent=47 // pred_fallthru
          _
        // Predicated region
        $region53: #{flava_forward.3} parent=47 // pred_check
          %p679 = pneg %p133
        $region54: #{flava_forward.3} parent=47 // pred_check_branch
          %681 = sbr.rel (%p679) target = $region56
        $region55: #{flava_forward.3} parent=47 // pred_region
          %p682 = scmp.lt.s32.totalorder %s40, 1
          %s683 = scalar_select %p682, %s40, 1
          %s684 = scalar_lea.vmem %s3, %s683
        $region56: #{flava_forward.3} parent=47 // pred_fallthru
          _
        // Predicated region
        $region57: #{flava_forward.3} parent=47 // pred_check
          %p685 = pneg %p159
        $region58: #{flava_forward.3} parent=47 // pred_check_branch
          %687 = sbr.rel (%p685) target = $region60
        $region59: #{flava_forward.3} parent=47 // pred_region
          %p688 = scmp.lt.s32.totalorder %s41, 1
          %s689 = scalar_select %p688, %s41, 1
          %s690 = smul.addr %s689, 4
          %s691 = smul.addr %s690, 4
          %s692 = scalar_lea.vmem %s4, %s691
        $region60: #{flava_forward.3} parent=47 // pred_fallthru
          _
        // Predicated region
        $region61: #{flava_forward.3} parent=47 // pred_check
          %p693 = pneg %p185
        $region62: #{flava_forward.3} parent=47 // pred_check_branch
          %695 = sbr.rel (%p693) target = $region64
        $region63: #{flava_forward.3} parent=47 // pred_region
          %p696 = scmp.lt.s32.totalorder %s41, 1
          %s697 = scalar_select %p696, %s41, 1
          %s698 = scalar_lea.vmem %s5, %s697
        $region64: #{flava_forward.3} parent=47 // pred_fallthru
          _
        // Predicated region
        $region65: #{flava_forward.3} parent=47 // pred_check
          %p699 = pneg %p211
        $region66: #{flava_forward.3} parent=47 // pred_check_branch
          %701 = sbr.rel (%p699) target = $region68
        $region67: #{flava_forward.3} parent=47 // pred_region
          %p702 = scmp.lt.s32.totalorder %s41, 1
          %s703 = scalar_select %p702, %s41, 1
          %s704 = smul.addr %s703, 4
          %s705 = smul.addr %s704, 4
          %s706 = scalar_lea.vmem %s6, %s705
        $region68: #{flava_forward.3} parent=47 // pred_fallthru
          _
        // Predicated region
        $region69: #{flava_forward.3} parent=47 // pred_check
          %p707 = pneg %p237
        $region70: #{flava_forward.3} parent=47 // pred_check_branch
          %709 = sbr.rel (%p707) target = $region72
        $region71: #{flava_forward.3} parent=47 // pred_region
          %p710 = scmp.lt.s32.totalorder %s41, 1
          %s711 = scalar_select %p710, %s41, 1
          %s712 = scalar_lea.vmem %s7, %s711
        $region72: #{flava_forward.3} parent=47 // pred_fallthru
          _
        // Predicated region
        $region73: #{flava_forward.3} parent=47 // pred_check
          %p713 = pneg %p263
        $region74: #{flava_forward.3} parent=47 // pred_check_branch
          %715 = sbr.rel (%p713) target = $region76
        $region75: #{flava_forward.3} parent=47 // pred_region
          %p716 = scmp.lt.s32.totalorder %s41, 1
          %s717 = scalar_select %p716, %s41, 1
          %s718 = scalar_lea.vmem %s8, %s717
        $region76: #{flava_forward.3} parent=47 // pred_fallthru
          _
        // Predicated region
        $region77: #{flava_forward.3} parent=47 // pred_check
          %p719 = pneg %p289
        $region78: #{flava_forward.3} parent=47 // pred_check_branch
          %721 = sbr.rel (%p719) target = $region80
        $region79: #{flava_forward.3} parent=47 // pred_region
          %p722 = scmp.lt.s32.totalorder %s41, 1
          %s723 = scalar_select %p722, %s41, 1
          %s724 = scalar_lea.vmem %s9, %s723
        $region80: #{flava_forward.3} parent=47 // pred_fallthru
          _
        // Predicated region
        $region81: #{flava_forward.3} parent=47 // pred_check
          %p725 = pneg %p315
        $region82: #{flava_forward.3} parent=47 // pred_check_branch
          %727 = sbr.rel (%p725) target = $region84
        $region83: #{flava_forward.3} parent=47 // pred_region
          %p728 = scmp.lt.s32.totalorder %s41, 1
          %s729 = scalar_select %p728, %s41, 1
          %s730 = scalar_lea.vmem %s10, %s729
        $region84: #{flava_forward.3} parent=47 // pred_fallthru
          _
        // Predicated region
        $region85: #{flava_forward.3} parent=47 // pred_check
          %p731 = pneg %p341
        $region86: #{flava_forward.3} parent=47 // pred_check_branch
          %733 = sbr.rel (%p731) target = $region88
        $region87: #{flava_forward.3} parent=47 // pred_region
          %p734 = scmp.lt.s32.totalorder %s41, 1
          %s735 = scalar_select %p734, %s41, 1
          %s736 = scalar_lea.vmem %s11, %s735
        $region88: #{flava_forward.3} parent=47 // pred_fallthru
          _
        // Predicated region
        $region89: #{flava_forward.3} parent=47 // pred_check
          %p737 = pneg %p367
        $region90: #{flava_forward.3} parent=47 // pred_check_branch
          %739 = sbr.rel (%p737) target = $region92
        $region91: #{flava_forward.3} parent=47 // pred_region
          %p740 = scmp.lt.s32.totalorder %s41, 1
          %s741 = scalar_select %p740, %s41, 1
          %s742 = smul.addr %s741, 4
          %s743 = smul.addr %s742, 4
          %s744 = scalar_lea.vmem %s12, %s743
        $region92: #{flava_forward.3} parent=47 // pred_fallthru
          _
        // Predicated region
        $region93: #{flava_forward.3} parent=47 // pred_check
          %p745 = pneg %p393
        $region94: #{flava_forward.3} parent=47 // pred_check_branch
          %747 = sbr.rel (%p745) target = $region96
        $region95: #{flava_forward.3} parent=47 // pred_region
          %p748 = scmp.lt.s32.totalorder %s41, 1
          %s749 = scalar_select %p748, %s41, 1
          %s750 = scalar_lea.vmem %s13, %s749
        $region96: #{flava_forward.3} parent=47 // pred_fallthru
          _
        // Predicated region
        $region97: #{flava_forward.3} parent=47 // pred_check
          %p751 = pneg %p419
        $region98: #{flava_forward.3} parent=47 // pred_check_branch
          %753 = sbr.rel (%p751) target = $region100
        $region99: #{flava_forward.3} parent=47 // pred_region
          %p754 = scmp.lt.s32.totalorder %s41, 1
          %s755 = scalar_select %p754, %s41, 1
          %s756 = smul.addr %s755, 8
          %s757 = smul.addr %s756, 4
          %s758 = scalar_lea.vmem %s14, %s757
        $region100: #{flava_forward.3} parent=47 // pred_fallthru
          _
        // Predicated region
        $region101: #{flava_forward.3} parent=47 // pred_check
          %p759 = pneg %p445
        $region102: #{flava_forward.3} parent=47 // pred_check_branch
          %761 = sbr.rel (%p759) target = $region104
        $region103: #{flava_forward.3} parent=47 // pred_region
          %p762 = scmp.lt.s32.totalorder %s41, 1
          %s763 = scalar_select %p762, %s41, 1
          %s764 = scalar_lea.vmem %s15, %s763
        $region104: #{flava_forward.3} parent=47 // pred_fallthru
          _
      $region48: #{flava_forward.3} parent=5 // pred_fallthru
        _
      %p765 = scmp.le.s32.totalorder 1, %s33
      %p766 = scmp.lt.s32.totalorder %s33, 5
      %p767 = pnand %p765, %p766
      %p768 = pneg %p767
      // Predicated region
      $region105: #{flava_forward.3} parent=5 // pred_check
        _
      $region106: #{flava_forward.3} parent=5 // pred_check_branch
        %770 = sbr.rel (%p767) target = $region108
      $region107: #{flava_forward.3} parent=5 // pred_region
        %s771 = ssub.s32 %s33, 1
        %p772 = scmp.lt.s32.totalorder %s42, 1
        %s773 = scalar_select %p772, %s42, 1
        %s774 = smul.addr %s773, 8
        %s775 = scalar_lea.vmem %s0, %s774
        %p776 = pneg %p71
        %p777 = pneg %p68
        %p778 = pneg %p92
        %p779 = pneg %p89
        %p780 = pneg %p113
        %p781 = pneg %p110
        %p782 = scmp.lt.s32.totalorder %s42, 1
        %s783 = scalar_select %p782, %s42, 1
        %s784 = scalar_lea.vmem %s3, %s783
        %p785 = pneg %p139
        %p786 = pneg %p136
        %p787 = scmp.lt.s32.totalorder %s43, 1
        %s788 = scalar_select %p787, %s43, 1
        %s789 = smul.addr %s788, 4
        %s790 = smul.addr %s789, 4
        %s791 = scalar_lea.vmem %s4, %s790
        %p792 = pneg %p165
        %p793 = pneg %p162
        %p794 = scmp.lt.s32.totalorder %s43, 1
        %s795 = scalar_select %p794, %s43, 1
        %s796 = scalar_lea.vmem %s5, %s795
        %p797 = pneg %p191
        %p798 = pneg %p188
        %p799 = scmp.lt.s32.totalorder %s43, 1
        %s800 = scalar_select %p799, %s43, 1
        %s801 = smul.addr %s800, 4
        %s802 = smul.addr %s801, 4
        %s803 = scalar_lea.vmem %s6, %s802
        %p804 = pneg %p217
        %p805 = pneg %p214
        %p806 = scmp.lt.s32.totalorder %s43, 1
        %s807 = scalar_select %p806, %s43, 1
        %s808 = scalar_lea.vmem %s7, %s807
        %p809 = pneg %p243
        %p810 = pneg %p240
        %p811 = scmp.lt.s32.totalorder %s43, 1
        %s812 = scalar_select %p811, %s43, 1
        %s813 = scalar_lea.vmem %s8, %s812
        %p814 = pneg %p269
        %p815 = pneg %p266
        %p816 = scmp.lt.s32.totalorder %s43, 1
        %s817 = scalar_select %p816, %s43, 1
        %s818 = scalar_lea.vmem %s9, %s817
        %p819 = pneg %p295
        %p820 = pneg %p292
        %p821 = scmp.lt.s32.totalorder %s43, 1
        %s822 = scalar_select %p821, %s43, 1
        %s823 = scalar_lea.vmem %s10, %s822
        %p824 = pneg %p321
        %p825 = pneg %p318
        %p826 = scmp.lt.s32.totalorder %s43, 1
        %s827 = scalar_select %p826, %s43, 1
        %s828 = scalar_lea.vmem %s11, %s827
        %p829 = pneg %p347
        %p830 = pneg %p344
        %p831 = scmp.lt.s32.totalorder %s43, 1
        %s832 = scalar_select %p831, %s43, 1
        %s833 = smul.addr %s832, 4
        %s834 = smul.addr %s833, 4
        %s835 = scalar_lea.vmem %s12, %s834
        %p836 = pneg %p373
        %p837 = pneg %p370
        %p838 = scmp.lt.s32.totalorder %s43, 1
        %s839 = scalar_select %p838, %s43, 1
        %s840 = scalar_lea.vmem %s13, %s839
        %p841 = pneg %p399
        %p842 = pneg %p396
        %p843 = scmp.lt.s32.totalorder %s43, 1
        %s844 = scalar_select %p843, %s43, 1
        %s845 = smul.addr %s844, 8
        %s846 = smul.addr %s845, 4
        %s847 = scalar_lea.vmem %s14, %s846
        %p848 = pneg %p425
        %p849 = pneg %p422
        %p850 = scmp.lt.s32.totalorder %s43, 1
        %s851 = scalar_select %p850, %s43, 1
        %s852 = scalar_lea.vmem %s15, %s851
        %p853 = pneg %p451
        %p854 = pneg %p448
        %p855 = pneg %p472
        %p856 = pneg %p469
        %p857 = pneg %p493
        %p858 = pneg %p490
        %p859 = pneg %p514
        %p860 = pneg %p511
        %p861 = pneg %p535
        %p862 = pneg %p532
        %p863 = pneg %p556
        %p864 = pneg %p553
        %p865 = pneg %p577
        %p866 = pneg %p574
        %p867 = pneg %p603
        %p868 = pneg %p600
        %p869 = scmp.lt.s32.totalorder %s42, 1
        %s870 = scalar_select %p869, %s42, 1
        %s871 = smul.addr %s870, 8
        %s872 = scalar_lea.vmem %s22, %s871
        %p873 = pneg %p629
        %p874 = pneg %p626
        %s875 = sand.u32 %s616, 1
        %s876 = scalar_lea.sflag [#allocation4], %s875
        %s877 = sand.u32 %s616, 1
        %s878 = scalar_lea.vmem [#allocation3], %s877
        %p879 = scmp.lt.s32.totalorder %s42, 1
        %s880 = scalar_select %p879, %s42, 1
        %s881 = smul.addr %s880, 8
        %s882 = scalar_lea.vmem %s0, %s881
        %p883 = scmp.lt.s32.totalorder %s42, 1
        %s884 = scalar_select %p883, %s42, 1
        %s885 = scalar_lea.vmem %s3, %s884
        %p886 = scmp.lt.s32.totalorder %s43, 1
        %s887 = scalar_select %p886, %s43, 1
        %s888 = smul.addr %s887, 4
        %s889 = smul.addr %s888, 4
        %s890 = scalar_lea.vmem %s4, %s889
        %p891 = scmp.lt.s32.totalorder %s43, 1
        %s892 = scalar_select %p891, %s43, 1
        %s893 = scalar_lea.vmem %s5, %s892
        %p894 = scmp.lt.s32.totalorder %s43, 1
        %s895 = scalar_select %p894, %s43, 1
        %s896 = smul.addr %s895, 4
        %s897 = smul.addr %s896, 4
        %s898 = scalar_lea.vmem %s6, %s897
        %p899 = scmp.lt.s32.totalorder %s43, 1
        %s900 = scalar_select %p899, %s43, 1
        %s901 = scalar_lea.vmem %s7, %s900
        %p902 = scmp.lt.s32.totalorder %s43, 1
        %s903 = scalar_select %p902, %s43, 1
        %s904 = scalar_lea.vmem %s8, %s903
        %p905 = scmp.lt.s32.totalorder %s43, 1
        %s906 = scalar_select %p905, %s43, 1
        %s907 = scalar_lea.vmem %s9, %s906
        %p908 = scmp.lt.s32.totalorder %s43, 1
        %s909 = scalar_select %p908, %s43, 1
        %s910 = scalar_lea.vmem %s10, %s909
        %p911 = scmp.lt.s32.totalorder %s43, 1
        %s912 = scalar_select %p911, %s43, 1
        %s913 = scalar_lea.vmem %s11, %s912
        %p914 = scmp.lt.s32.totalorder %s43, 1
        %s915 = scalar_select %p914, %s43, 1
        %s916 = smul.addr %s915, 4
        %s917 = smul.addr %s916, 4
        %s918 = scalar_lea.vmem %s12, %s917
        %p919 = scmp.lt.s32.totalorder %s43, 1
        %s920 = scalar_select %p919, %s43, 1
        %s921 = scalar_lea.vmem %s13, %s920
        %p922 = scmp.lt.s32.totalorder %s43, 1
        %s923 = scalar_select %p922, %s43, 1
        %s924 = smul.addr %s923, 8
        %s925 = smul.addr %s924, 4
        %s926 = scalar_lea.vmem %s14, %s925
        %p927 = scmp.lt.s32.totalorder %s43, 1
        %s928 = scalar_select %p927, %s43, 1
        %s929 = scalar_lea.vmem %s15, %s928
        %p930 = scmp.lt.s32.totalorder %s42, 1
        %s931 = scalar_select %p930, %s42, 1
        %s932 = smul.addr %s931, 8
        %s933 = scalar_lea.vmem %s22, %s932
        %p935 = scmp.eq.s32.totalorder %s43, 0
        // Predicated region
        $region109: #{flava_forward.3} parent=107 // pred_check
          %p936 = pneg %p935
        $region110: #{flava_forward.3} parent=107 // pred_check_branch
          %938 = sbr.rel (%p936) target = $region112
        $region111: #{flava_forward.3} parent=107 // pred_region
          %v939 = vld [vmem:[%s882] sm:$0xff]
          %v940 = vld [vmem:[%s1] sm:$0x1]
          %v941 = vld [vmem:[%s2] sm:$0x1]
          %vm942 = vcmask 261120
          %v943 = vsel %vm942, %v939, 0.0
          %944 = vadd.xlane.f32.xlu0 %v943
          %v945 = vpop.xlane.xlu0 %944
          %v946 = vrcp.pop 32.0
          %v947 = vmul.f32 %v945, %v946
          %v948 = vsub.f32 %v939, %v947
          %v949 = vmul.f32 %v948, %v948
          %v950 = vsel %vm942, %v949, 0.0
          %951 = vadd.xlane.f32.xlu0 %v950
          %v952 = vpop.xlane.xlu0 %951
          %v953 = vmul.f32 %v952, %v946
          %v954 = vadd.f32 %v953, 1e-12
          %v955 = vrsqrt.pop %v954
          %v956 = vmul.f32 %v948, %v955
          %v958 = vlaneseq
          %v959 = vshrl.u32 %v958, 7
          %v960 = vsub.s32 0, %v959
          %v961 = vrot.slane %v940, %v960
          %v963 = vmul.f32 %v956, %v961
          %v965 = vlaneseq
          %v966 = vshrl.u32 %v965, 7
          %v967 = vsub.s32 0, %v966
          %v968 = vrot.slane %v941, %v967
          %v970 = vadd.f32 %v963, %v968
          %971 = vst.msk [vmem:[#allocation2] sm:$0xff] %vm942, %v970
        $region112: #{flava_forward.3} parent=107 // pred_fallthru
          _
        %v972 = vld [vmem:[#allocation2] sm:$0xff]
        %v973 = vld [vmem:[%s904] sm:$0x1]
        %v974 = vld [vmem:[%s907] sm:$0x1]
        %vm975 = vcmask 261120
        %v976 = vsel %vm975, %v972, 0.0
        %977 = vadd.xlane.f32.xlu0 %v976
        %v978 = vpop.xlane.xlu0 %977
        %v979 = vrcp.pop 32.0
        %v980 = vmul.f32 %v978, %v979
        %v981 = vsub.f32 %v972, %v980
        %v982 = vmul.f32 %v981, %v981
        %v983 = vsel %vm975, %v982, 0.0
        %984 = vadd.xlane.f32.xlu0 %v983
        %v985 = vpop.xlane.xlu0 %984
        %v986 = vmul.f32 %v985, %v979
        %v987 = vadd.f32 %v986, 1e-12
        %v988 = vrsqrt.pop %v987
        %v989 = vmul.f32 %v981, %v988
        %v991 = vlaneseq
        %v992 = vshrl.u32 %v991, 7
        %v993 = vsub.s32 0, %v992
        %v994 = vrot.slane %v973, %v993
        %v996 = vmul.f32 %v989, %v994
        %v998 = vlaneseq
        %v999 = vshrl.u32 %v998, 7
        %v1000 = vsub.s32 0, %v999
        %v1001 = vrot.slane %v974, %v1000
        %v1003 = vadd.f32 %v996, %v1001
        %v1004 = vpack.c.bf16 %v1003, %v1003
        %v1005 = vld [vmem:[%s890] sm:$0xf]
        %v1006 = vld [vmem:[%s890 + $0x4] sm:$0xf]
        %v1007 = vld [vmem:[%s890 + $0x8] sm:$0xf]
        %v1008 = vld [vmem:[%s890 + $0xc] sm:$0xf]
        %v1009 = vld [vmem:[%s893] sm:$0x1]
        %v1011 = vlaneseq
        %v1012 = vshrl.u32 %v1011, 7
        %v1013 = vsub.s32 0, %v1012
        %v1014 = vrot.slane %v1009, %v1013
        %v1020 = vunpack.c.l.b16 %v1005
        %v1021 = vunpack.c.l.b16 %v1006
        %v1022 = vunpack.c.l.b16 %v1007
        %v1023 = vunpack.c.l.b16 %v1008
        %v1024 = vpack.c.b16 %v1021, %v1020
        %v1025 = vpack.c.b16 %v1023, %v1022
        %v1029 = vsel %vm975, %v1004, 0
        %1031 = vmatprep.subr.bf16.mxu0 0
        %1032 = vmatpush1.bf16.msra.mxu0 0
        %1033 = vmatprep.subr.bf16.mxu0 0
        %1034 = vmatpush1.bf16.msra.mxu0 0
        %1035 = vmatprep.subr.bf16.mxu0 0
        %1036 = vmatpush1.bf16.msra.mxu0 0
        %1037 = vmatprep.subr.bf16.mxu0 0
        %1038 = vmatpush1.bf16.msra.mxu0 0
        %1039 = vmatprep.subr.bf16.mxu0 0
        %1040 = vmatpush1.bf16.msra.mxu0 0
        %1041 = vmatprep.subr.bf16.mxu0 0
        %1042 = vmatpush1.bf16.msra.mxu0 0
        %1043 = vmatprep.subr.bf16.mxu0 0
        %1044 = vmatpush1.bf16.msra.mxu0 %v1025
        %1045 = vmatprep.subr.bf16.mxu0 0
        %1046 = vmatpush1.bf16.msra.mxu0 %v1024
        %1047 = vmatprep.subr.bf16.mxu0 0
        %1048 = vmatpush2.bf16.msra.mxu0 0
        %1049 = vmatprep.subr.bf16.mxu0 0
        %1050 = vmatpush2.bf16.msra.mxu0 0
        %1051 = vmatprep.subr.bf16.mxu0 0
        %1052 = vmatpush2.bf16.msra.mxu0 0
        %1053 = vmatprep.subr.bf16.mxu0 0
        %1054 = vmatpush2.bf16.msra.mxu0 0
        %1055 = vmatprep.subr.bf16.mxu0 0
        %1056 = vmatpush2.bf16.msra.mxu0 0
        %1057 = vmatprep.subr.bf16.mxu0 0
        %1058 = vmatpush2.bf16.msra.mxu0 0
        %1059 = vmatprep.subr.bf16.mxu0 0
        %1060 = vmatpush2.bf16.msra.mxu0 0
        %1061 = vmatprep.subr.bf16.mxu0 0
        %1062 = vmatpush2.bf16.msra.mxu0 0
        %1063 = vmatprep.mubr.bf16.mxu0 0
        %1064 = vmatmul.mubr.bf16.gmra.mxu0 %v1029
        %v1065 = vpop.f32.mrf.mxu0
        %v1066 = vadd.f32 %v1014, %v1065
        %v1067 = vpop.f32.mrf.mxu0
        %v1068 = vpop.f32.mrf.mxu0
        %v1069 = vpop.f32.mrf.mxu0
        %1070 = vdwg.mxu0
        %v1071 = vld [vmem:[%s885] sm:$0x1]
        %v1072 = vpack.c.bf16 %v1066, %v1066
        %1074 = vrot.lane.b32.xlu0 %v1072, 96
        %v1075 = vpop.permute.xlu0 %1074
        %vm1076 = vcmask 64512
        %v1078 = vsel %vm1076, %v1072, 0
        %v1081 = vsel %vm1076, %v1075, 0
        %1083 = vmatprep.subr.bf16.mxu0 0
        %1084 = vmatpush1.bf16.xpose.msra.mxu0 0
        %1085 = vmatprep.subr.bf16.mxu0 0
        %1086 = vmatpush1.bf16.xpose.msra.mxu0 0
        %1087 = vmatprep.subr.bf16.mxu0 0
        %1088 = vmatpush1.bf16.xpose.msra.mxu0 0
        %1089 = vmatprep.subr.bf16.mxu0 0
        %1090 = vmatpush1.bf16.xpose.msra.mxu0 0
        %1091 = vmatprep.subr.bf16.mxu0 0
        %1092 = vmatpush1.bf16.xpose.msra.mxu0 0
        %1093 = vmatprep.subr.bf16.mxu0 0
        %1094 = vmatpush1.bf16.xpose.msra.mxu0 0
        %1095 = vmatprep.subr.bf16.mxu0 0
        %1096 = vmatpush1.bf16.xpose.msra.mxu0 0
        %1097 = vmatprep.subr.bf16.mxu0 0
        %1098 = vmatpush1.bf16.xpose.msra.mxu0 %v1081
        %1099 = vmatprep.subr.bf16.mxu0 0
        %1100 = vmatpush2.bf16.xpose.msra.mxu0 0
        %1101 = vmatprep.subr.bf16.mxu0 0
        %1102 = vmatpush2.bf16.xpose.msra.mxu0 0
        %1103 = vmatprep.subr.bf16.mxu0 0
        %1104 = vmatpush2.bf16.xpose.msra.mxu0 0
        %1105 = vmatprep.subr.bf16.mxu0 0
        %1106 = vmatpush2.bf16.xpose.msra.mxu0 0
        %1107 = vmatprep.subr.bf16.mxu0 0
        %1108 = vmatpush2.bf16.xpose.msra.mxu0 0
        %1109 = vmatprep.subr.bf16.mxu0 0
        %1110 = vmatpush2.bf16.xpose.msra.mxu0 0
        %1111 = vmatprep.subr.bf16.mxu0 0
        %1112 = vmatpush2.bf16.xpose.msra.mxu0 0
        %1113 = vmatprep.subr.bf16.mxu0 0
        %1114 = vmatpush2.bf16.xpose.msra.mxu0 0
        %1115 = vmatprep.mubr.bf16.mxu0 0
        %1116 = vmatmul.mubr.bf16.gmra.mxu0 %v1078
        %v1117 = vpop.f32.mrf.mxu0
        %v1118 = vadd.f32 0.0, %v1117
        %v1119 = vpop.f32.mrf.mxu0
        %v1120 = vpop.f32.mrf.mxu0
        %v1121 = vpop.f32.mrf.mxu0
        %1122 = vdwg.mxu0
        %1123 = vrot.lane.b32.xlu0 %v1072, 120
        %v1124 = vpop.permute.xlu0 %1123
        %1125 = vrot.lane.b32.xlu0 %v1072, 88
        %v1126 = vpop.permute.xlu0 %1125
        %v1128 = vsel %vm1076, %v1124, 0
        %v1131 = vsel %vm1076, %v1126, 0
        %1133 = vmatprep.subr.bf16.mxu0 0
        %1134 = vmatpush1.bf16.xpose.msra.mxu0 0
        %1135 = vmatprep.subr.bf16.mxu0 0
        %1136 = vmatpush1.bf16.xpose.msra.mxu0 0
        %1137 = vmatprep.subr.bf16.mxu0 0
        %1138 = vmatpush1.bf16.xpose.msra.mxu0 0
        %1139 = vmatprep.subr.bf16.mxu0 0
        %1140 = vmatpush1.bf16.xpose.msra.mxu0 0
        %1141 = vmatprep.subr.bf16.mxu0 0
        %1142 = vmatpush1.bf16.xpose.msra.mxu0 0
        %1143 = vmatprep.subr.bf16.mxu0 0
        %1144 = vmatpush1.bf16.xpose.msra.mxu0 0
        %1145 = vmatprep.subr.bf16.mxu0 0
        %1146 = vmatpush1.bf16.xpose.msra.mxu0 0
        %1147 = vmatprep.subr.bf16.mxu0 0
        %1148 = vmatpush1.bf16.xpose.msra.mxu0 %v1131
        %1149 = vmatprep.subr.bf16.mxu0 0
        %1150 = vmatpush2.bf16.xpose.msra.mxu0 0
        %1151 = vmatprep.subr.bf16.mxu0 0
        %1152 = vmatpush2.bf16.xpose.msra.mxu0 0
        %1153 = vmatprep.subr.bf16.mxu0 0
        %1154 = vmatpush2.bf16.xpose.msra.mxu0 0
        %1155 = vmatprep.subr.bf16.mxu0 0
        %1156 = vmatpush2.bf16.xpose.msra.mxu0 0
        %1157 = vmatprep.subr.bf16.mxu0 0
        %1158 = vmatpush2.bf16.xpose.msra.mxu0 0
        %1159 = vmatprep.subr.bf16.mxu0 0
        %1160 = vmatpush2.bf16.xpose.msra.mxu0 0
        %1161 = vmatprep.subr.bf16.mxu0 0
        %1162 = vmatpush2.bf16.xpose.msra.mxu0 0
        %1163 = vmatprep.subr.bf16.mxu0 0
        %1164 = vmatpush2.bf16.xpose.msra.mxu0 0
        %1165 = vmatprep.mubr.bf16.mxu0 0
        %1166 = vmatmul.mubr.bf16.gmra.mxu0 %v1128
        %v1167 = vpop.f32.mrf.mxu0
        %v1168 = vadd.f32 0.0, %v1167
        %v1169 = vpop.f32.mrf.mxu0
        %v1170 = vpop.f32.mrf.mxu0
        %v1171 = vpop.f32.mrf.mxu0
        %1172 = vdwg.mxu0
        %1173 = vrot.lane.b32.xlu0 %v1072, 112
        %v1174 = vpop.permute.xlu0 %1173
        %1175 = vrot.lane.b32.xlu0 %v1072, 80
        %v1176 = vpop.permute.xlu0 %1175
        %v1178 = vsel %vm1076, %v1174, 0
        %v1181 = vsel %vm1076, %v1176, 0
        %1183 = vmatprep.subr.bf16.mxu0 0
        %1184 = vmatpush1.bf16.xpose.msra.mxu0 0
        %1185 = vmatprep.subr.bf16.mxu0 0
        %1186 = vmatpush1.bf16.xpose.msra.mxu0 0
        %1187 = vmatprep.subr.bf16.mxu0 0
        %1188 = vmatpush1.bf16.xpose.msra.mxu0 0
        %1189 = vmatprep.subr.bf16.mxu0 0
        %1190 = vmatpush1.bf16.xpose.msra.mxu0 0
        %1191 = vmatprep.subr.bf16.mxu0 0
        %1192 = vmatpush1.bf16.xpose.msra.mxu0 0
        %1193 = vmatprep.subr.bf16.mxu0 0
        %1194 = vmatpush1.bf16.xpose.msra.mxu0 0
        %1195 = vmatprep.subr.bf16.mxu0 0
        %1196 = vmatpush1.bf16.xpose.msra.mxu0 0
        %1197 = vmatprep.subr.bf16.mxu0 0
        %1198 = vmatpush1.bf16.xpose.msra.mxu0 %v1181
        %1199 = vmatprep.subr.bf16.mxu0 0
        %1200 = vmatpush2.bf16.xpose.msra.mxu0 0
        %1201 = vmatprep.subr.bf16.mxu0 0
        %1202 = vmatpush2.bf16.xpose.msra.mxu0 0
        %1203 = vmatprep.subr.bf16.mxu0 0
        %1204 = vmatpush2.bf16.xpose.msra.mxu0 0
        %1205 = vmatprep.subr.bf16.mxu0 0
        %1206 = vmatpush2.bf16.xpose.msra.mxu0 0
        %1207 = vmatprep.subr.bf16.mxu0 0
        %1208 = vmatpush2.bf16.xpose.msra.mxu0 0
        %1209 = vmatprep.subr.bf16.mxu0 0
        %1210 = vmatpush2.bf16.xpose.msra.mxu0 0
        %1211 = vmatprep.subr.bf16.mxu0 0
        %1212 = vmatpush2.bf16.xpose.msra.mxu0 0
        %1213 = vmatprep.subr.bf16.mxu0 0
        %1214 = vmatpush2.bf16.xpose.msra.mxu0 0
        %1215 = vmatprep.mubr.bf16.mxu0 0
        %1216 = vmatmul.mubr.bf16.gmra.mxu0 %v1178
        %v1217 = vpop.f32.mrf.mxu0
        %v1218 = vadd.f32 0.0, %v1217
        %v1219 = vpop.f32.mrf.mxu0
        %v1220 = vpop.f32.mrf.mxu0
        %v1221 = vpop.f32.mrf.mxu0
        %1222 = vdwg.mxu0
        %1223 = vrot.lane.b32.xlu0 %v1072, 104
        %v1224 = vpop.permute.xlu0 %1223
        %1225 = vrot.lane.b32.xlu0 %v1072, 72
        %v1226 = vpop.permute.xlu0 %1225
        %v1228 = vsel %vm1076, %v1224, 0
        %v1231 = vsel %vm1076, %v1226, 0
        %1233 = vmatprep.subr.bf16.mxu0 0
        %1234 = vmatpush1.bf16.xpose.msra.mxu0 0
        %1235 = vmatprep.subr.bf16.mxu0 0
        %1236 = vmatpush1.bf16.xpose.msra.mxu0 0
        %1237 = vmatprep.subr.bf16.mxu0 0
        %1238 = vmatpush1.bf16.xpose.msra.mxu0 0
        %1239 = vmatprep.subr.bf16.mxu0 0
        %1240 = vmatpush1.bf16.xpose.msra.mxu0 0
        %1241 = vmatprep.subr.bf16.mxu0 0
        %1242 = vmatpush1.bf16.xpose.msra.mxu0 0
        %1243 = vmatprep.subr.bf16.mxu0 0
        %1244 = vmatpush1.bf16.xpose.msra.mxu0 0
        %1245 = vmatprep.subr.bf16.mxu0 0
        %1246 = vmatpush1.bf16.xpose.msra.mxu0 0
        %1247 = vmatprep.subr.bf16.mxu0 0
        %1248 = vmatpush1.bf16.xpose.msra.mxu0 %v1231
        %1249 = vmatprep.subr.bf16.mxu0 0
        %1250 = vmatpush2.bf16.xpose.msra.mxu0 0
        %1251 = vmatprep.subr.bf16.mxu0 0
        %1252 = vmatpush2.bf16.xpose.msra.mxu0 0
        %1253 = vmatprep.subr.bf16.mxu0 0
        %1254 = vmatpush2.bf16.xpose.msra.mxu0 0
        %1255 = vmatprep.subr.bf16.mxu0 0
        %1256 = vmatpush2.bf16.xpose.msra.mxu0 0
        %1257 = vmatprep.subr.bf16.mxu0 0
        %1258 = vmatpush2.bf16.xpose.msra.mxu0 0
        %1259 = vmatprep.subr.bf16.mxu0 0
        %1260 = vmatpush2.bf16.xpose.msra.mxu0 0
        %1261 = vmatprep.subr.bf16.mxu0 0
        %1262 = vmatpush2.bf16.xpose.msra.mxu0 0
        %1263 = vmatprep.subr.bf16.mxu0 0
        %1264 = vmatpush2.bf16.xpose.msra.mxu0 0
        %1265 = vmatprep.mubr.bf16.mxu0 0
        %1266 = vmatmul.mubr.bf16.gmra.mxu0 %v1228
        %v1267 = vpop.f32.mrf.mxu0
        %v1268 = vadd.f32 0.0, %v1267
        %v1269 = vpop.f32.mrf.mxu0
        %v1270 = vpop.f32.mrf.mxu0
        %v1271 = vpop.f32.mrf.mxu0
        %1272 = vdwg.mxu0
        %v1274 = vlaneseq
        %v1275 = vshrl.u32 %v1274, 7
        %v1276 = vsub.s32 0, %v1275
        %v1277 = vrot.slane %v1071, %v1276
        %v1279 = vadd.f32 %v1118, %v1277
        %v1280 = vadd.f32 %v1168, %v1277
        %v1281 = vadd.f32 %v1218, %v1277
        %v1282 = vadd.f32 %v1268, %v1277
        %v1283 = vsel %vm1076, %v1279, -inf
        %1284 = vmax.xlane.f32.xlu0 %v1283
        %v1285 = vpop.xlane.xlu0 %1284
        %v1286 = vsel %vm1076, %v1280, -inf
        %1287 = vmax.xlane.f32.xlu0 %v1286
        %v1288 = vpop.xlane.xlu0 %1287
        %v1289 = vsel %vm1076, %v1281, -inf
        %1290 = vmax.xlane.f32.xlu0 %v1289
        %v1291 = vpop.xlane.xlu0 %1290
        %v1292 = vsel %vm1076, %v1282, -inf
        %1293 = vmax.xlane.f32.xlu0 %v1292
        %v1294 = vpop.xlane.xlu0 %1293
        %v1295 = vsub.f32 %v1279, %v1285
        %v1296 = vsub.f32 %v1280, %v1288
        %v1297 = vsub.f32 %v1281, %v1291
        %v1298 = vsub.f32 %v1282, %v1294
        %v1299 = vmul.f32 %v1295, 1.442695
        %v1300 = vpow.pop %v1299
        %v1301 = vmul.f32 %v1296, 1.442695
        %v1302 = vpow.pop %v1301
        %v1303 = vmul.f32 %v1297, 1.442695
        %v1304 = vpow.pop %v1303
        %v1305 = vmul.f32 %v1298, 1.442695
        %v1306 = vpow.pop %v1305
        %v1307 = vsel %vm1076, %v1300, 0.0
        %1308 = vadd.xlane.f32.xlu0 %v1307
        %v1309 = vpop.xlane.xlu0 %1308
        %v1310 = vsel %vm1076, %v1302, 0.0
        %1311 = vadd.xlane.f32.xlu0 %v1310
        %v1312 = vpop.xlane.xlu0 %1311
        %v1313 = vsel %vm1076, %v1304, 0.0
        %1314 = vadd.xlane.f32.xlu0 %v1313
        %v1315 = vpop.xlane.xlu0 %1314
        %v1316 = vsel %vm1076, %v1306, 0.0
        %1317 = vadd.xlane.f32.xlu0 %v1316
        %v1318 = vpop.xlane.xlu0 %1317
        %v1319 = vrcp.pop %v1309
        %v1320 = vrcp.pop %v1312
        %v1321 = vrcp.pop %v1315
        %v1322 = vrcp.pop %v1318
        %v1323 = vmul.f32 %v1300, %v1319
        %v1324 = vmul.f32 %v1302, %v1320
        %v1325 = vmul.f32 %v1304, %v1321
        %v1326 = vmul.f32 %v1306, %v1322
        %v1327 = vpack.c.bf16 %v1323, %v1323
        %1328 = vrot.lane.b32.xlu0 %v1072, 64
        %v1329 = vpop.permute.xlu0 %1328
        %v1331 = vsel %vm1076, %v1327, 0
        %vm1333 = vcmask 1043456
        %v1335 = vsel %vm1333, %v1329, 0
        %1337 = vmatprep.subr.bf16.mxu0 0
        %1338 = vmatpush1.bf16.msra.mxu0 0
        %1339 = vmatprep.subr.bf16.mxu0 0
        %1340 = vmatpush1.bf16.msra.mxu0 0
        %1341 = vmatprep.subr.bf16.mxu0 0
        %1342 = vmatpush1.bf16.msra.mxu0 0
        %1343 = vmatprep.subr.bf16.mxu0 0
        %1344 = vmatpush1.bf16.msra.mxu0 0
        %1345 = vmatprep.subr.bf16.mxu0 0
        %1346 = vmatpush1.bf16.msra.mxu0 0
        %1347 = vmatprep.subr.bf16.mxu0 0
        %1348 = vmatpush1.bf16.msra.mxu0 0
        %1349 = vmatprep.subr.bf16.mxu0 0
        %1350 = vmatpush1.bf16.msra.mxu0 0
        %1351 = vmatprep.subr.bf16.mxu0 0
        %1352 = vmatpush1.bf16.msra.mxu0 %v1335
        %1353 = vmatprep.subr.bf16.mxu0 0
        %1354 = vmatpush2.bf16.msra.mxu0 0
        %1355 = vmatprep.subr.bf16.mxu0 0
        %1356 = vmatpush2.bf16.msra.mxu0 0
        %1357 = vmatprep.subr.bf16.mxu0 0
        %1358 = vmatpush2.bf16.msra.mxu0 0
        %1359 = vmatprep.subr.bf16.mxu0 0
        %1360 = vmatpush2.bf16.msra.mxu0 0
        %1361 = vmatprep.subr.bf16.mxu0 0
        %1362 = vmatpush2.bf16.msra.mxu0 0
        %1363 = vmatprep.subr.bf16.mxu0 0
        %1364 = vmatpush2.bf16.msra.mxu0 0
        %1365 = vmatprep.subr.bf16.mxu0 0
        %1366 = vmatpush2.bf16.msra.mxu0 0
        %1367 = vmatprep.subr.bf16.mxu0 0
        %1368 = vmatpush2.bf16.msra.mxu0 0
        %1369 = vmatprep.mubr.bf16.mxu0 0
        %1370 = vmatmul.mubr.bf16.gmra.mxu0 %v1331
        %v1371 = vpop.f32.mrf.mxu0
        %v1372 = vadd.f32 0.0, %v1371
        %v1373 = vpop.f32.mrf.mxu0
        %v1374 = vpop.f32.mrf.mxu0
        %v1375 = vpop.f32.mrf.mxu0
        %1376 = vdwg.mxu0
        %v1377 = vpack.c.bf16 %v1324, %v1324
        %1378 = vrot.lane.b32.xlu0 %v1072, 56
        %v1379 = vpop.permute.xlu0 %1378
        %v1381 = vsel %vm1076, %v1377, 0
        %v1384 = vsel %vm1333, %v1379, 0
        %1386 = vmatprep.subr.bf16.mxu0 0
        %1387 = vmatpush1.bf16.msra.mxu0 0
        %1388 = vmatprep.subr.bf16.mxu0 0
        %1389 = vmatpush1.bf16.msra.mxu0 0
        %1390 = vmatprep.subr.bf16.mxu0 0
        %1391 = vmatpush1.bf16.msra.mxu0 0
        %1392 = vmatprep.subr.bf16.mxu0 0
        %1393 = vmatpush1.bf16.msra.mxu0 0
        %1394 = vmatprep.subr.bf16.mxu0 0
        %1395 = vmatpush1.bf16.msra.mxu0 0
        %1396 = vmatprep.subr.bf16.mxu0 0
        %1397 = vmatpush1.bf16.msra.mxu0 0
        %1398 = vmatprep.subr.bf16.mxu0 0
        %1399 = vmatpush1.bf16.msra.mxu0 0
        %1400 = vmatprep.subr.bf16.mxu0 0
        %1401 = vmatpush1.bf16.msra.mxu0 %v1384
        %1402 = vmatprep.subr.bf16.mxu0 0
        %1403 = vmatpush2.bf16.msra.mxu0 0
        %1404 = vmatprep.subr.bf16.mxu0 0
        %1405 = vmatpush2.bf16.msra.mxu0 0
        %1406 = vmatprep.subr.bf16.mxu0 0
        %1407 = vmatpush2.bf16.msra.mxu0 0
        %1408 = vmatprep.subr.bf16.mxu0 0
        %1409 = vmatpush2.bf16.msra.mxu0 0
        %1410 = vmatprep.subr.bf16.mxu0 0
        %1411 = vmatpush2.bf16.msra.mxu0 0
        %1412 = vmatprep.subr.bf16.mxu0 0
        %1413 = vmatpush2.bf16.msra.mxu0 0
        %1414 = vmatprep.subr.bf16.mxu0 0
        %1415 = vmatpush2.bf16.msra.mxu0 0
        %1416 = vmatprep.subr.bf16.mxu0 0
        %1417 = vmatpush2.bf16.msra.mxu0 0
        %1418 = vmatprep.mubr.bf16.mxu0 0
        %1419 = vmatmul.mubr.bf16.gmra.mxu0 %v1381
        %v1420 = vpop.f32.mrf.mxu0
        %v1421 = vadd.f32 0.0, %v1420
        %v1422 = vpop.f32.mrf.mxu0
        %v1423 = vpop.f32.mrf.mxu0
        %v1424 = vpop.f32.mrf.mxu0
        %1425 = vdwg.mxu0
        %v1426 = vpack.c.bf16 %v1325, %v1325
        %1427 = vrot.lane.b32.xlu0 %v1072, 48
        %v1428 = vpop.permute.xlu0 %1427
        %v1430 = vsel %vm1076, %v1426, 0
        %v1433 = vsel %vm1333, %v1428, 0
        %1435 = vmatprep.subr.bf16.mxu0 0
        %1436 = vmatpush1.bf16.msra.mxu0 0
        %1437 = vmatprep.subr.bf16.mxu0 0
        %1438 = vmatpush1.bf16.msra.mxu0 0
        %1439 = vmatprep.subr.bf16.mxu0 0
        %1440 = vmatpush1.bf16.msra.mxu0 0
        %1441 = vmatprep.subr.bf16.mxu0 0
        %1442 = vmatpush1.bf16.msra.mxu0 0
        %1443 = vmatprep.subr.bf16.mxu0 0
        %1444 = vmatpush1.bf16.msra.mxu0 0
        %1445 = vmatprep.subr.bf16.mxu0 0
        %1446 = vmatpush1.bf16.msra.mxu0 0
        %1447 = vmatprep.subr.bf16.mxu0 0
        %1448 = vmatpush1.bf16.msra.mxu0 0
        %1449 = vmatprep.subr.bf16.mxu0 0
        %1450 = vmatpush1.bf16.msra.mxu0 %v1433
        %1451 = vmatprep.subr.bf16.mxu0 0
        %1452 = vmatpush2.bf16.msra.mxu0 0
        %1453 = vmatprep.subr.bf16.mxu0 0
        %1454 = vmatpush2.bf16.msra.mxu0 0
        %1455 = vmatprep.subr.bf16.mxu0 0
        %1456 = vmatpush2.bf16.msra.mxu0 0
        %1457 = vmatprep.subr.bf16.mxu0 0
        %1458 = vmatpush2.bf16.msra.mxu0 0
        %1459 = vmatprep.subr.bf16.mxu0 0
        %1460 = vmatpush2.bf16.msra.mxu0 0
        %1461 = vmatprep.subr.bf16.mxu0 0
        %1462 = vmatpush2.bf16.msra.mxu0 0
        %1463 = vmatprep.subr.bf16.mxu0 0
        %1464 = vmatpush2.bf16.msra.mxu0 0
        %1465 = vmatprep.subr.bf16.mxu0 0
        %1466 = vmatpush2.bf16.msra.mxu0 0
        %1467 = vmatprep.mubr.bf16.mxu0 0
        %1468 = vmatmul.mubr.bf16.gmra.mxu0 %v1430
        %v1469 = vpop.f32.mrf.mxu0
        %v1470 = vadd.f32 0.0, %v1469
        %v1471 = vpop.f32.mrf.mxu0
        %v1472 = vpop.f32.mrf.mxu0
        %v1473 = vpop.f32.mrf.mxu0
        %1474 = vdwg.mxu0
        %v1475 = vpack.c.bf16 %v1326, %v1326
        %1476 = vrot.lane.b32.xlu0 %v1072, 40
        %v1477 = vpop.permute.xlu0 %1476
        %v1479 = vsel %vm1076, %v1475, 0
        %v1482 = vsel %vm1333, %v1477, 0
        %1484 = vmatprep.subr.bf16.mxu0 0
        %1485 = vmatpush1.bf16.msra.mxu0 0
        %1486 = vmatprep.subr.bf16.mxu0 0
        %1487 = vmatpush1.bf16.msra.mxu0 0
        %1488 = vmatprep.subr.bf16.mxu0 0
        %1489 = vmatpush1.bf16.msra.mxu0 0
        %1490 = vmatprep.subr.bf16.mxu0 0
        %1491 = vmatpush1.bf16.msra.mxu0 0
        %1492 = vmatprep.subr.bf16.mxu0 0
        %1493 = vmatpush1.bf16.msra.mxu0 0
        %1494 = vmatprep.subr.bf16.mxu0 0
        %1495 = vmatpush1.bf16.msra.mxu0 0
        %1496 = vmatprep.subr.bf16.mxu0 0
        %1497 = vmatpush1.bf16.msra.mxu0 0
        %1498 = vmatprep.subr.bf16.mxu0 0
        %1499 = vmatpush1.bf16.msra.mxu0 %v1482
        %1500 = vmatprep.subr.bf16.mxu0 0
        %1501 = vmatpush2.bf16.msra.mxu0 0
        %1502 = vmatprep.subr.bf16.mxu0 0
        %1503 = vmatpush2.bf16.msra.mxu0 0
        %1504 = vmatprep.subr.bf16.mxu0 0
        %1505 = vmatpush2.bf16.msra.mxu0 0
        %1506 = vmatprep.subr.bf16.mxu0 0
        %1507 = vmatpush2.bf16.msra.mxu0 0
        %1508 = vmatprep.subr.bf16.mxu0 0
        %1509 = vmatpush2.bf16.msra.mxu0 0
        %1510 = vmatprep.subr.bf16.mxu0 0
        %1511 = vmatpush2.bf16.msra.mxu0 0
        %1512 = vmatprep.subr.bf16.mxu0 0
        %1513 = vmatpush2.bf16.msra.mxu0 0
        %1514 = vmatprep.subr.bf16.mxu0 0
        %1515 = vmatpush2.bf16.msra.mxu0 0
        %1516 = vmatprep.mubr.bf16.mxu0 0
        %1517 = vmatmul.mubr.bf16.gmra.mxu0 %v1479
        %v1518 = vpop.f32.mrf.mxu0
        %v1519 = vadd.f32 0.0, %v1518
        %v1520 = vpop.f32.mrf.mxu0
        %v1521 = vpop.f32.mrf.mxu0
        %v1522 = vpop.f32.mrf.mxu0
        %1523 = vdwg.mxu0
        %1525 = vrot.lane.b32.xlu0 %v1421, 8
        %v1526 = vpop.permute.xlu0 %1525
        %1529 = vrot.lane.b32.xlu0 %v1470, 16
        %v1530 = vpop.permute.xlu0 %1529
        %1533 = vrot.lane.b32.xlu0 %v1519, 24
        %v1534 = vpop.permute.xlu0 %1533
        %v1536 = vsel %vm1076, %v1372, %v1526
        %vm1537 = vcmask 130048
        %v1538 = vsel %vm1537, %v1536, %v1530
        %vm1539 = vcmask 195584
        %v1540 = vsel %vm1539, %v1538, %v1534
        %v1541 = vpack.c.bf16 %v1540, %v1540
        %v1542 = vld [vmem:[%s898] sm:$0xf]
        %v1543 = vld [vmem:[%s898 + $0x4] sm:$0xf]
        %v1544 = vld [vmem:[%s898 + $0x8] sm:$0xf]
        %v1545 = vld [vmem:[%s898 + $0xc] sm:$0xf]
        %v1546 = vld [vmem:[%s901] sm:$0x1]
        %v1548 = vlaneseq
        %v1549 = vshrl.u32 %v1548, 7
        %v1550 = vsub.s32 0, %v1549
        %v1551 = vrot.slane %v1546, %v1550
        %v1557 = vunpack.c.l.b16 %v1542
        %v1558 = vunpack.c.l.b16 %v1543
        %v1559 = vunpack.c.l.b16 %v1544
        %v1560 = vunpack.c.l.b16 %v1545
        %v1561 = vpack.c.b16 %v1558, %v1557
        %v1562 = vpack.c.b16 %v1560, %v1559
        %v1566 = vsel %vm975, %v1541, 0
        %1568 = vmatprep.subr.bf16.mxu0 0
        %1569 = vmatpush1.bf16.msra.mxu0 0
        %1570 = vmatprep.subr.bf16.mxu0 0
        %1571 = vmatpush1.bf16.msra.mxu0 0
        %1572 = vmatprep.subr.bf16.mxu0 0
        %1573 = vmatpush1.bf16.msra.mxu0 0
        %1574 = vmatprep.subr.bf16.mxu0 0
        %1575 = vmatpush1.bf16.msra.mxu0 0
        %1576 = vmatprep.subr.bf16.mxu0 0
        %1577 = vmatpush1.bf16.msra.mxu0 0
        %1578 = vmatprep.subr.bf16.mxu0 0
        %1579 = vmatpush1.bf16.msra.mxu0 0
        %1580 = vmatprep.subr.bf16.mxu0 0
        %1581 = vmatpush1.bf16.msra.mxu0 %v1562
        %1582 = vmatprep.subr.bf16.mxu0 0
        %1583 = vmatpush1.bf16.msra.mxu0 %v1561
        %1584 = vmatprep.subr.bf16.mxu0 0
        %1585 = vmatpush2.bf16.msra.mxu0 0
        %1586 = vmatprep.subr.bf16.mxu0 0
        %1587 = vmatpush2.bf16.msra.mxu0 0
        %1588 = vmatprep.subr.bf16.mxu0 0
        %1589 = vmatpush2.bf16.msra.mxu0 0
        %1590 = vmatprep.subr.bf16.mxu0 0
        %1591 = vmatpush2.bf16.msra.mxu0 0
        %1592 = vmatprep.subr.bf16.mxu0 0
        %1593 = vmatpush2.bf16.msra.mxu0 0
        %1594 = vmatprep.subr.bf16.mxu0 0
        %1595 = vmatpush2.bf16.msra.mxu0 0
        %1596 = vmatprep.subr.bf16.mxu0 0
        %1597 = vmatpush2.bf16.msra.mxu0 0
        %1598 = vmatprep.subr.bf16.mxu0 0
        %1599 = vmatpush2.bf16.msra.mxu0 0
        %1600 = vmatprep.mubr.bf16.mxu0 0
        %1601 = vmatmul.mubr.bf16.gmra.mxu0 %v1566
        %v1602 = vpop.f32.mrf.mxu0
        %v1603 = vadd.f32 %v1551, %v1602
        %v1604 = vpop.f32.mrf.mxu0
        %v1605 = vpop.f32.mrf.mxu0
        %v1606 = vpop.f32.mrf.mxu0
        %1607 = vdwg.mxu0
        %v1608 = vadd.f32 %v972, %v1603
        %v1609 = vld [vmem:[%s910] sm:$0x1]
        %v1610 = vld [vmem:[%s913] sm:$0x1]
        %v1611 = vsel %vm975, %v1608, 0.0
        %1612 = vadd.xlane.f32.xlu0 %v1611
        %v1613 = vpop.xlane.xlu0 %1612
        %v1614 = vmul.f32 %v1613, %v979
        %v1615 = vsub.f32 %v1608, %v1614
        %v1616 = vmul.f32 %v1615, %v1615
        %v1617 = vsel %vm975, %v1616, 0.0
        %1618 = vadd.xlane.f32.xlu0 %v1617
        %v1619 = vpop.xlane.xlu0 %1618
        %v1620 = vmul.f32 %v1619, %v979
        %v1621 = vadd.f32 %v1620, 1e-12
        %v1622 = vrsqrt.pop %v1621
        %v1623 = vmul.f32 %v1615, %v1622
        %v1625 = vlaneseq
        %v1626 = vshrl.u32 %v1625, 7
        %v1627 = vsub.s32 0, %v1626
        %v1628 = vrot.slane %v1609, %v1627
        %v1630 = vmul.f32 %v1623, %v1628
        %v1632 = vlaneseq
        %v1633 = vshrl.u32 %v1632, 7
        %v1634 = vsub.s32 0, %v1633
        %v1635 = vrot.slane %v1610, %v1634
        %v1637 = vadd.f32 %v1630, %v1635
        %v1638 = vpack.c.bf16 %v1637, %v1637
        %v1639 = vld [vmem:[%s918] sm:$0xf]
        %v1640 = vld [vmem:[%s918 + $0x4] sm:$0xf]
        %v1641 = vld [vmem:[%s918 + $0x8] sm:$0xf]
        %v1642 = vld [vmem:[%s918 + $0xc] sm:$0xf]
        %v1643 = vld [vmem:[%s921] sm:$0x1]
        %v1645 = vlaneseq
        %v1646 = vshrl.u32 %v1645, 7
        %v1647 = vsub.s32 0, %v1646
        %v1648 = vrot.slane %v1643, %v1647
        %v1654 = vunpack.c.l.b16 %v1639
        %v1655 = vunpack.c.l.b16 %v1640
        %v1656 = vunpack.c.l.b16 %v1641
        %v1657 = vunpack.c.l.b16 %v1642
        %v1658 = vpack.c.b16 %v1655, %v1654
        %v1659 = vpack.c.b16 %v1657, %v1656
        %v1663 = vsel %vm975, %v1638, 0
        %1665 = vmatprep.subr.bf16.mxu0 0
        %1666 = vmatpush1.bf16.msra.mxu0 0
        %1667 = vmatprep.subr.bf16.mxu0 0
        %1668 = vmatpush1.bf16.msra.mxu0 0
        %1669 = vmatprep.subr.bf16.mxu0 0
        %1670 = vmatpush1.bf16.msra.mxu0 0
        %1671 = vmatprep.subr.bf16.mxu0 0
        %1672 = vmatpush1.bf16.msra.mxu0 0
        %1673 = vmatprep.subr.bf16.mxu0 0
        %1674 = vmatpush1.bf16.msra.mxu0 0
        %1675 = vmatprep.subr.bf16.mxu0 0
        %1676 = vmatpush1.bf16.msra.mxu0 0
        %1677 = vmatprep.subr.bf16.mxu0 0
        %1678 = vmatpush1.bf16.msra.mxu0 %v1659
        %1679 = vmatprep.subr.bf16.mxu0 0
        %1680 = vmatpush1.bf16.msra.mxu0 %v1658
        %1681 = vmatprep.subr.bf16.mxu0 0
        %1682 = vmatpush2.bf16.msra.mxu0 0
        %1683 = vmatprep.subr.bf16.mxu0 0
        %1684 = vmatpush2.bf16.msra.mxu0 0
        %1685 = vmatprep.subr.bf16.mxu0 0
        %1686 = vmatpush2.bf16.msra.mxu0 0
        %1687 = vmatprep.subr.bf16.mxu0 0
        %1688 = vmatpush2.bf16.msra.mxu0 0
        %1689 = vmatprep.subr.bf16.mxu0 0
        %1690 = vmatpush2.bf16.msra.mxu0 0
        %1691 = vmatprep.subr.bf16.mxu0 0
        %1692 = vmatpush2.bf16.msra.mxu0 0
        %1693 = vmatprep.subr.bf16.mxu0 0
        %1694 = vmatpush2.bf16.msra.mxu0 0
        %1695 = vmatprep.subr.bf16.mxu0 0
        %1696 = vmatpush2.bf16.msra.mxu0 0
        %1697 = vmatprep.mubr.bf16.mxu0 0
        %1698 = vmatmul.mubr.bf16.gmra.mxu0 %v1663
        %v1699 = vpop.f32.mrf.mxu0
        %v1700 = vadd.f32 %v1648, %v1699
        %v1701 = vpop.f32.mrf.mxu0
        %v1702 = vpop.f32.mrf.mxu0
        %v1703 = vpop.f32.mrf.mxu0
        %1704 = vdwg.mxu0
        %v1705 = vmul.f32 %v1700, 0.5
        %v1706 = vmul.f32 %v1700, 0.70710677
        %v1707 = verf.f32.pop %v1706
        %v1708 = vadd.f32 %v1707, 1.0
        %v1709 = vmul.f32 %v1705, %v1708
        %v1710 = vpack.c.bf16 %v1709, %v1709
        %v1711 = vld [vmem:[%s926] sm:$0xf]
        %v1712 = vld [vmem:[%s926 + $0x4] sm:$0xf]
        %v1713 = vld [vmem:[%s926 + $0x8] sm:$0xf]
        %v1714 = vld [vmem:[%s926 + $0xc] sm:$0xf]
        %v1715 = vld [vmem:[%s926 + $0x10] sm:$0xf]
        %v1716 = vld [vmem:[%s926 + $0x14] sm:$0xf]
        %v1717 = vld [vmem:[%s926 + $0x18] sm:$0xf]
        %v1718 = vld [vmem:[%s926 + $0x1c] sm:$0xf]
        %v1719 = vld [vmem:[%s929] sm:$0x1]
        %v1721 = vlaneseq
        %v1722 = vshrl.u32 %v1721, 7
        %v1723 = vsub.s32 0, %v1722
        %v1724 = vrot.slane %v1719, %v1723
        %v1734 = vunpack.c.l.b16 %v1711
        %v1735 = vunpack.c.l.b16 %v1712
        %v1736 = vunpack.c.l.b16 %v1713
        %v1737 = vunpack.c.l.b16 %v1714
        %v1738 = vunpack.c.l.b16 %v1715
        %v1739 = vunpack.c.l.b16 %v1716
        %v1740 = vunpack.c.l.b16 %v1717
        %v1741 = vunpack.c.l.b16 %v1718
        %v1742 = vpack.c.b16 %v1735, %v1734
        %v1743 = vpack.c.b16 %v1737, %v1736
        %v1744 = vpack.c.b16 %v1739, %v1738
        %v1745 = vpack.c.b16 %v1741, %v1740
        %vm1750 = vcmask 523264
        %v1752 = vsel %vm1750, %v1710, 0
        %1754 = vmatprep.subr.bf16.mxu0 0
        %1755 = vmatpush1.bf16.msra.mxu0 0
        %1756 = vmatprep.subr.bf16.mxu0 0
        %1757 = vmatpush1.bf16.msra.mxu0 0
        %1758 = vmatprep.subr.bf16.mxu0 0
        %1759 = vmatpush1.bf16.msra.mxu0 0
        %1760 = vmatprep.subr.bf16.mxu0 0
        %1761 = vmatpush1.bf16.msra.mxu0 0
        %1762 = vmatprep.subr.bf16.mxu0 0
        %1763 = vmatpush1.bf16.msra.mxu0 %v1745
        %1764 = vmatprep.subr.bf16.mxu0 0
        %1765 = vmatpush1.bf16.msra.mxu0 %v1744
        %1766 = vmatprep.subr.bf16.mxu0 0
        %1767 = vmatpush1.bf16.msra.mxu0 %v1743
        %1768 = vmatprep.subr.bf16.mxu0 0
        %1769 = vmatpush1.bf16.msra.mxu0 %v1742
        %1770 = vmatprep.subr.bf16.mxu0 0
        %1771 = vmatpush2.bf16.msra.mxu0 0
        %1772 = vmatprep.subr.bf16.mxu0 0
        %1773 = vmatpush2.bf16.msra.mxu0 0
        %1774 = vmatprep.subr.bf16.mxu0 0
        %1775 = vmatpush2.bf16.msra.mxu0 0
        %1776 = vmatprep.subr.bf16.mxu0 0
        %1777 = vmatpush2.bf16.msra.mxu0 0
        %1778 = vmatprep.subr.bf16.mxu0 0
        %1779 = vmatpush2.bf16.msra.mxu0 0
        %1780 = vmatprep.subr.bf16.mxu0 0
        %1781 = vmatpush2.bf16.msra.mxu0 0
        %1782 = vmatprep.subr.bf16.mxu0 0
        %1783 = vmatpush2.bf16.msra.mxu0 0
        %1784 = vmatprep.subr.bf16.mxu0 0
        %1785 = vmatpush2.bf16.msra.mxu0 0
        %1786 = vmatprep.mubr.bf16.mxu0 0
        %1787 = vmatmul.mubr.bf16.gmra.mxu0 %v1752
        %v1788 = vpop.f32.mrf.mxu0
        %v1789 = vadd.f32 %v1724, %v1788
        %v1790 = vpop.f32.mrf.mxu0
        %v1791 = vpop.f32.mrf.mxu0
        %v1792 = vpop.f32.mrf.mxu0
        %1793 = vdwg.mxu0
        %v1794 = vadd.f32 %v1608, %v1789
        %1795 = vst.msk [vmem:[#allocation2] sm:$0xff] %vm975, %v1794
        %p1796 = scmp.eq.s32.totalorder %s43, 1
        // Predicated region
        $region113: #{flava_forward.3} parent=107 // pred_check
          %p1797 = pneg %p1796
        $region114: #{flava_forward.3} parent=107 // pred_check_branch
          %1799 = sbr.rel (%p1797) target = $region116
        $region115: #{flava_forward.3} parent=107 // pred_region
          %v1800 = vld [vmem:[%s16] sm:$0x1]
          %v1801 = vld [vmem:[%s17] sm:$0x1]
          %v1802 = vsel %vm975, %v1794, 0.0
          %1803 = vadd.xlane.f32.xlu0 %v1802
          %v1804 = vpop.xlane.xlu0 %1803
          %v1805 = vmul.f32 %v1804, %v979
          %v1806 = vsub.f32 %v1794, %v1805
          %v1807 = vmul.f32 %v1806, %v1806
          %v1808 = vsel %vm975, %v1807, 0.0
          %1809 = vadd.xlane.f32.xlu0 %v1808
          %v1810 = vpop.xlane.xlu0 %1809
          %v1811 = vmul.f32 %v1810, %v979
          %v1812 = vadd.f32 %v1811, 1e-12
          %v1813 = vrsqrt.pop %v1812
          %v1814 = vmul.f32 %v1806, %v1813
          %v1816 = vlaneseq
          %v1817 = vshrl.u32 %v1816, 7
          %v1818 = vsub.s32 0, %v1817
          %v1819 = vrot.slane %v1800, %v1818
          %v1821 = vmul.f32 %v1814, %v1819
          %v1823 = vlaneseq
          %v1824 = vshrl.u32 %v1823, 7
          %v1825 = vsub.s32 0, %v1824
          %v1826 = vrot.slane %v1801, %v1825
          %v1828 = vadd.f32 %v1821, %v1826
          %1829 = vst.msk [vmem:[%s933] sm:$0xff] %vm975, %v1828
          %v1830 = vld [vmem:[%s18] sm:$0xff]
          %v1831 = vld [vmem:[%s18 + $0x8] sm:$0xff]
          %v1832 = vld [vmem:[%s18 + $0x10] sm:$0xff]
          %v1833 = vld [vmem:[%s18 + $0x18] sm:$0xff]
          %v1834 = vld [vmem:[%s19] sm:$0x1]
          %v1836 = vsel %vm975, %v1828, 0
          %1838 = vmatprep.subr.mxu0 0.0
          %1839 = vmatpush1.msra.mxu0 0.0
          %1840 = vmatprep.subr.mxu0 0.0
          %1841 = vmatpush1.msra.mxu0 0.0
          %1842 = vmatprep.subr.mxu0 0.0
          %1843 = vmatpush1.msra.mxu0 0.0
          %1844 = vmatprep.subr.mxu0 0.0
          %1845 = vmatpush1.msra.mxu0 0.0
          %1846 = vmatprep.subr.mxu0 0.0
          %1847 = vmatpush1.msra.mxu0 0.0
          %1848 = vmatprep.subr.mxu0 0.0
          %1849 = vmatpush1.msra.mxu0 0.0
          %1850 = vmatprep.subr.mxu0 0.0
          %1851 = vmatpush1.msra.mxu0 0.0
          %1852 = vmatprep.subr.mxu0 0.0
          %1853 = vmatpush1.msra.mxu0 0.0
          %1854 = vmatprep.subr.mxu0 0.0
          %1855 = vmatpush1.msra.mxu0 0.0
          %1856 = vmatprep.subr.mxu0 0.0
          %1857 = vmatpush1.msra.mxu0 0.0
          %1858 = vmatprep.subr.mxu0 0.0
          %1859 = vmatpush1.msra.mxu0 0.0
          %1860 = vmatprep.subr.mxu0 0.0
          %1861 = vmatpush1.msra.mxu0 0.0
          %1862 = vmatprep.subr.mxu0 0.0
          %1863 = vmatpush1.msra.mxu0 %v1833
          %1864 = vmatprep.subr.mxu0 0.0
          %1865 = vmatpush1.msra.mxu0 %v1832
          %1866 = vmatprep.subr.mxu0 0.0
          %1867 = vmatpush1.msra.mxu0 %v1831
          %1868 = vmatprep.subr.mxu0 0.0
          %1869 = vmatpush1.msra.mxu0 %v1830
          %1870 = vmatprep.subr.mxu0 0.0
          %1871 = vmatpush2.msra.mxu0 0.0
          %1872 = vmatprep.subr.mxu0 0.0
          %1873 = vmatpush2.msra.mxu0 0.0
          %1874 = vmatprep.subr.mxu0 0.0
          %1875 = vmatpush2.msra.mxu0 0.0
          %1876 = vmatprep.subr.mxu0 0.0
          %1877 = vmatpush2.msra.mxu0 0.0
          %1878 = vmatprep.subr.mxu0 0.0
          %1879 = vmatpush2.msra.mxu0 0.0
          %1880 = vmatprep.subr.mxu0 0.0
          %1881 = vmatpush2.msra.mxu0 0.0
          %1882 = vmatprep.subr.mxu0 0.0
          %1883 = vmatpush2.msra.mxu0 0.0
          %1884 = vmatprep.subr.mxu0 0.0
          %1885 = vmatpush2.msra.mxu0 0.0
          %1886 = vmatprep.subr.mxu0 0.0
          %1887 = vmatpush2.msra.mxu0 0.0
          %1888 = vmatprep.subr.mxu0 0.0
          %1889 = vmatpush2.msra.mxu0 0.0
          %1890 = vmatprep.subr.mxu0 0.0
          %1891 = vmatpush2.msra.mxu0 0.0
          %1892 = vmatprep.subr.mxu0 0.0
          %1893 = vmatpush2.msra.mxu0 0.0
          %1894 = vmatprep.subr.mxu0 0.0
          %1895 = vmatpush2.msra.mxu0 0.0
          %1896 = vmatprep.subr.mxu0 0.0
          %1897 = vmatpush2.msra.mxu0 0.0
          %1898 = vmatprep.subr.mxu0 0.0
          %1899 = vmatpush2.msra.mxu0 0.0
          %1900 = vmatprep.subr.mxu0 0.0
          %1901 = vmatpush2.msra.mxu0 0.0
          %1902 = vmatprep.mubr.f32.mxu0 0.0
          %1903 = vmatmul.mubr.f32.gmra.mxu0 %v1836
          %v1904 = vpop.f32.mrf.mxu0
          %v1905 = vadd.f32 %v1834, %v1904
          %v1906 = vpop.f32.mrf.mxu0
          %1907 = vdwg.mxu0
          %v1908 = vtanh.pop %v1905
          %v1909 = vld [vmem:[%s20] sm:$0xff]
          %v1910 = vld [vmem:[%s20 + $0x8] sm:$0xff]
          %v1911 = vld [vmem:[%s20 + $0x10] sm:$0xff]
          %v1912 = vld [vmem:[%s20 + $0x18] sm:$0xff]
          %v1913 = vld [vmem:[%s21] sm:$0x1]
          %v1915 = vsel %vm975, %v1908, 0
          %1917 = vmatprep.subr.mxu0 0.0
          %1918 = vmatpush1.msra.mxu0 0.0
          %1919 = vmatprep.subr.mxu0 0.0
          %1920 = vmatpush1.msra.mxu0 0.0
          %1921 = vmatprep.subr.mxu0 0.0
          %1922 = vmatpush1.msra.mxu0 0.0
          %1923 = vmatprep.subr.mxu0 0.0
          %1924 = vmatpush1.msra.mxu0 0.0
          %1925 = vmatprep.subr.mxu0 0.0
          %1926 = vmatpush1.msra.mxu0 0.0
          %1927 = vmatprep.subr.mxu0 0.0
          %1928 = vmatpush1.msra.mxu0 0.0
          %1929 = vmatprep.subr.mxu0 0.0
          %1930 = vmatpush1.msra.mxu0 0.0
          %1931 = vmatprep.subr.mxu0 0.0
          %1932 = vmatpush1.msra.mxu0 0.0
          %1933 = vmatprep.subr.mxu0 0.0
          %1934 = vmatpush1.msra.mxu0 0.0
          %1935 = vmatprep.subr.mxu0 0.0
          %1936 = vmatpush1.msra.mxu0 0.0
          %1937 = vmatprep.subr.mxu0 0.0
          %1938 = vmatpush1.msra.mxu0 0.0
          %1939 = vmatprep.subr.mxu0 0.0
          %1940 = vmatpush1.msra.mxu0 0.0
          %1941 = vmatprep.subr.mxu0 0.0
          %1942 = vmatpush1.msra.mxu0 %v1912
          %1943 = vmatprep.subr.mxu0 0.0
          %1944 = vmatpush1.msra.mxu0 %v1911
          %1945 = vmatprep.subr.mxu0 0.0
          %1946 = vmatpush1.msra.mxu0 %v1910
          %1947 = vmatprep.subr.mxu0 0.0
          %1948 = vmatpush1.msra.mxu0 %v1909
          %1949 = vmatprep.subr.mxu0 0.0
          %1950 = vmatpush2.msra.mxu0 0.0
          %1951 = vmatprep.subr.mxu0 0.0
          %1952 = vmatpush2.msra.mxu0 0.0
          %1953 = vmatprep.subr.mxu0 0.0
          %1954 = vmatpush2.msra.mxu0 0.0
          %1955 = vmatprep.subr.mxu0 0.0
          %1956 = vmatpush2.msra.mxu0 0.0
          %1957 = vmatprep.subr.mxu0 0.0
          %1958 = vmatpush2.msra.mxu0 0.0
          %1959 = vmatprep.subr.mxu0 0.0
          %1960 = vmatpush2.msra.mxu0 0.0
          %1961 = vmatprep.subr.mxu0 0.0
          %1962 = vmatpush2.msra.mxu0 0.0
          %1963 = vmatprep.subr.mxu0 0.0
          %1964 = vmatpush2.msra.mxu0 0.0
          %1965 = vmatprep.subr.mxu0 0.0
          %1966 = vmatpush2.msra.mxu0 0.0
          %1967 = vmatprep.subr.mxu0 0.0
          %1968 = vmatpush2.msra.mxu0 0.0
          %1969 = vmatprep.subr.mxu0 0.0
          %1970 = vmatpush2.msra.mxu0 0.0
          %1971 = vmatprep.subr.mxu0 0.0
          %1972 = vmatpush2.msra.mxu0 0.0
          %1973 = vmatprep.subr.mxu0 0.0
          %1974 = vmatpush2.msra.mxu0 0.0
          %1975 = vmatprep.subr.mxu0 0.0
          %1976 = vmatpush2.msra.mxu0 0.0
          %1977 = vmatprep.subr.mxu0 0.0
          %1978 = vmatpush2.msra.mxu0 0.0
          %1979 = vmatprep.subr.mxu0 0.0
          %1980 = vmatpush2.msra.mxu0 0.0
          %1981 = vmatprep.mubr.f32.mxu0 0.0
          %1982 = vmatmul.mubr.f32.gmra.mxu0 %v1915
          %v1983 = vpop.f32.mrf.mxu0
          %v1984 = vadd.f32 %v1913, %v1983
          %v1985 = vpop.f32.mrf.mxu0
          %1986 = vdwg.mxu0
          %vm1987 = vcmask 16384
          %1988 = vst.msk [vmem:[%s878] sm:$0x1] %vm1987, %v1984
        $region116: #{flava_forward.3} parent=107 // pred_fallthru
          _
        %p1989 = scmp.lt.s32.totalorder %s42, 1
        %s1990 = scalar_select %p1989, %s42, 1
        %s1991 = smul.addr %s1990, 8
        %s1992 = scalar_lea.vmem %s22, %s1991
        %s1993 = sand.u32 %s616, 1
        %s1994 = scalar_lea.sflag [#allocation4], %s1993
        %s1995 = sand.u32 %s616, 1
        %s1996 = scalar_lea.vmem [#allocation3], %s1995
        // Predicated region
        $region117: #{flava_forward.3} parent=107 // pred_check
          %p1997 = pneg %p600
        $region118: #{flava_forward.3} parent=107 // pred_check_branch
          %1999 = sbr.rel (%p1997) target = $region120
        $region119: #{flava_forward.3} parent=107 // pred_region
          _
        $region120: #{flava_forward.3} parent=107 // pred_fallthru
          _
        // Predicated region
        $region121: #{flava_forward.3} parent=107 // pred_check
          %p2000 = pneg %p626
        $region122: #{flava_forward.3} parent=107 // pred_check_branch
          %2002 = sbr.rel (%p2000) target = $region124
        $region123: #{flava_forward.3} parent=107 // pred_region
          %s2004 = ssub.s32 16, 16
          %2005 = vsyncadd %s1994, %s2004
          %s2006 = smul.addr %s42, 16
          %s2007 = scalar_lea.hbm %s23, %s2006
          %s2009 = sshll.u32 %s1996, 4
          %s2010 = int_to_ptr.vmem [resolvable:$true] %s2009
          %2012 = dma.vmem_to_hbm [thread:$0]  %s2010, 16, %s2007, %s1994
        $region124: #{flava_forward.3} parent=107 // pred_fallthru
          _
      $region108: #{flava_forward.3} parent=5 // pred_fallthru
        _
      %p2013 = scmp.le.s32.totalorder 2, %s33
      // Predicated region
      $region125: #{flava_forward.3} parent=5 // pred_check
        %p2014 = pneg %p2013
      $region126: #{flava_forward.3} parent=5 // pred_check_branch
        %2016 = sbr.rel (%p2014) target = $region128
      $region127: #{flava_forward.3} parent=5 // pred_region
        %s2017 = ssub.s32 %s33, 2
        // Predicated region
        $region129: #{flava_forward.3} parent=127 // pred_check
          %p2018 = pneg %p606
        $region130: #{flava_forward.3} parent=127 // pred_check_branch
          %2020 = sbr.rel (%p2018) target = $region132
        $region131: #{flava_forward.3} parent=127 // pred_region
          %p2021 = scmp.lt.s32.totalorder %s44, 1
          %s2022 = scalar_select %p2021, %s44, 1
          %s2023 = smul.addr %s2022, 8
          %s2024 = scalar_lea.vmem %s22, %s2023
        $region132: #{flava_forward.3} parent=127 // pred_fallthru
          _
        // Predicated region
        $region133: #{flava_forward.3} parent=127 // pred_check
          %p2025 = pneg %p632
        $region134: #{flava_forward.3} parent=127 // pred_check_branch
          %2027 = sbr.rel (%p2025) target = $region136
        $region135: #{flava_forward.3} parent=127 // pred_region
          %s2028 = sand.u32 %s617, 1
          %s2029 = scalar_lea.sflag [#allocation4], %s2028
          %s2030 = sand.u32 %s617, 1
          %s2031 = scalar_lea.vmem [#allocation3], %s2030
          %2032 = dma.done %s2029, 16
        $region136: #{flava_forward.3} parent=127 // pred_fallthru
          _
      $region128: #{flava_forward.3} parent=5 // pred_fallthru
        _
    $region6: #{flava_forward.3} parent=1 // loop_footer
      %s37 = sadd.s32 1, %s33
    $region7: #{flava_forward.3} parent=1 // loop_footer_branch
      %32 = sbr.rel target = $region3
    $region8: #{flava_forward.3} parent=1 // loop_exit
      _
    %2033 = vsyncpa [#allocation4], 1
    %s2034 = scalar_lea.sflag [#allocation4], 1
    %2035 = vsyncpa %s2034, 1

// kernel: flava_forward.4
$region0: #{flava_forward.4}
  #allocation0 [shape = 'u32[]', space=smem, size = 0x4, offset = 0x4, fixed_abs, tag = 'smem constant byte address 0x4 - core index']
  #allocation1 [shape = 'u32[144,128]{1,0:T(1,128)}', space=vmem, size = 0x12000, scoped, tag = 'internal scratch']
  #allocation2 [shape = 'f32[5,32]{1,0:T(8,128)}', space=vmem, size = 0x1000, scoped, tag = 'scratch operand']
  %s0 = inlined_call_operand.vmem [shape: f32[2,4,192], index: 0, kind: input, shape index: {}]
  %s1 = inlined_call_operand.vmem [shape: bf16[192,32], index: 1, kind: input, shape index: {}]
  %s2 = inlined_call_operand.vmem [shape: f32[1,32], index: 2, kind: input, shape index: {}]
  %s3 = inlined_call_operand.vmem [shape: f32[1,32], index: 3, kind: input, shape index: {}]
  %s4 = inlined_call_operand.vmem [shape: f32[5,32], index: 4, kind: input, shape index: {}]
  %s5 = inlined_call_operand.vmem [shape: f32[2,1,5], index: 5, kind: input, shape index: {}]
  %s6 = inlined_call_operand.vmem [shape: bf16[2,32,96], index: 6, kind: input, shape index: {}]
  %s7 = inlined_call_operand.vmem [shape: f32[2,1,96], index: 7, kind: input, shape index: {}]
  %s8 = inlined_call_operand.vmem [shape: bf16[2,32,32], index: 8, kind: input, shape index: {}]
  %s9 = inlined_call_operand.vmem [shape: f32[2,1,32], index: 9, kind: input, shape index: {}]
  %s10 = inlined_call_operand.vmem [shape: f32[2,1,32], index: 10, kind: input, shape index: {}]
  %s11 = inlined_call_operand.vmem [shape: f32[2,1,32], index: 11, kind: input, shape index: {}]
  %s12 = inlined_call_operand.vmem [shape: f32[2,1,32], index: 12, kind: input, shape index: {}]
  %s13 = inlined_call_operand.vmem [shape: f32[2,1,32], index: 13, kind: input, shape index: {}]
  %s14 = inlined_call_operand.vmem [shape: bf16[2,32,64], index: 14, kind: input, shape index: {}]
  %s15 = inlined_call_operand.vmem [shape: f32[2,1,64], index: 15, kind: input, shape index: {}]
  %s16 = inlined_call_operand.vmem [shape: bf16[2,64,32], index: 16, kind: input, shape index: {}]
  %s17 = inlined_call_operand.vmem [shape: f32[2,1,32], index: 17, kind: input, shape index: {}]
  %s18 = inlined_call_operand.vmem [shape: f32[1,32], index: 18, kind: input, shape index: {}]
  %s19 = inlined_call_operand.vmem [shape: f32[1,32], index: 19, kind: input, shape index: {}]
  %s20 = inlined_call_operand.vmem [shape: f32[32,32], index: 20, kind: input, shape index: {}]
  %s21 = inlined_call_operand.vmem [shape: f32[1,32], index: 21, kind: input, shape index: {}]
  %s22 = inlined_call_operand.vmem [shape: f32[32,3], index: 22, kind: input, shape index: {}]
  %s23 = inlined_call_operand.vmem [shape: f32[1,3], index: 23, kind: input, shape index: {}]
  %s24 = inlined_call_operand.vmem [shape: f32[2,5,32], index: 24, kind: output, shape index: {0}]
  %s25 = inlined_call_operand.hbm [shape: f32[2,1,3], index: 25, kind: output, shape index: {1}]
  %26 = xla_tuple %s24, %s25
  %s27 = sld [smem:[#allocation0]]
  $region145: #{flava_forward.4} parent=0
    _
  %s29 = ssub.s32 1, %s27
  %s30 = scalar_select 0, %s29, %s27
  $region1: #{flava_forward.4} parent=0
    #allocation3 [shape = 'u8[1024]{0}', space=vmem, size = 0x400, scoped, tag = 'output window, operand 1']
    #allocation4 [shape = 's32[2]{0}', space=sflag, size = 0x8, scoped, tag = 'scoped memory for flava_forward.4']
    %31 = vsyncpa [#allocation4], 0
    %s32 = scalar_lea.sflag [#allocation4], 1
    %33 = vsyncpa %s32, 0
    loop: start=0, step=1, limit=6
    $region2: #{flava_forward.4} parent=1 // loop_pre_header
      _
    $region3: #{flava_forward.4} parent=1 // loop_header
      %s35 = sphi 0, %s39
      %p36 = scmp.ge.s32.totalorder %s35, 6
      %s42 = sphi 0, %s54
      %s43 = sphi 0, %s50
      %s44 = sphi 0, %s42
      %s45 = sphi 0, %s43
      %s46 = sphi 0, %s44
      %s47 = sphi 0, %s45
      %s57 = sphi 0, %s59
      %s60 = sphi 0, %s57
      %s61 = sphi 0, %s60
      %s77 = sphi 0, %s61
      %s81 = sphi 0, %s81
      %s83 = sphi 0, %s81
      %s84 = sphi 0, %s83
      %s98 = sphi 0, %s84
      %s102 = sphi 0, %s102
      %s104 = sphi 0, %s102
      %s105 = sphi 0, %s104
      %s119 = sphi 0, %s105
      %s123 = sphi 0, %s123
      %s125 = sphi 0, %s123
      %s126 = sphi 0, %s125
      %s140 = sphi 0, %s126
      %s144 = sphi 0, %s144
      %s146 = sphi 0, %s144
      %s147 = sphi 0, %s146
      %s161 = sphi 0, %s147
      %s167 = sphi 0, %s169
      %s170 = sphi 0, %s167
      %s171 = sphi 0, %s170
      %s187 = sphi 0, %s171
      %s193 = sphi 0, %s195
      %s196 = sphi 0, %s193
      %s197 = sphi 0, %s196
      %s213 = sphi 0, %s197
      %s219 = sphi 0, %s221
      %s222 = sphi 0, %s219
      %s223 = sphi 0, %s222
      %s239 = sphi 0, %s223
      %s245 = sphi 0, %s247
      %s248 = sphi 0, %s245
      %s249 = sphi 0, %s248
      %s265 = sphi 0, %s249
      %s271 = sphi 0, %s273
      %s274 = sphi 0, %s271
      %s275 = sphi 0, %s274
      %s291 = sphi 0, %s275
      %s297 = sphi 0, %s299
      %s300 = sphi 0, %s297
      %s301 = sphi 0, %s300
      %s317 = sphi 0, %s301
      %s323 = sphi 0, %s325
      %s326 = sphi 0, %s323
      %s327 = sphi 0, %s326
      %s343 = sphi 0, %s327
      %s349 = sphi 0, %s351
      %s352 = sphi 0, %s349
      %s353 = sphi 0, %s352
      %s369 = sphi 0, %s353
      %s375 = sphi 0, %s377
      %s378 = sphi 0, %s375
      %s379 = sphi 0, %s378
      %s395 = sphi 0, %s379
      %s401 = sphi 0, %s403
      %s404 = sphi 0, %s401
      %s405 = sphi 0, %s404
      %s421 = sphi 0, %s405
      %s427 = sphi 0, %s429
      %s430 = sphi 0, %s427
      %s431 = sphi 0, %s430
      %s447 = sphi 0, %s431
      %s453 = sphi 0, %s455
      %s456 = sphi 0, %s453
      %s457 = sphi 0, %s456
      %s473 = sphi 0, %s457
      %s479 = sphi 0, %s481
      %s482 = sphi 0, %s479
      %s483 = sphi 0, %s482
      %s499 = sphi 0, %s483
      %s503 = sphi 0, %s503
      %s505 = sphi 0, %s503
      %s506 = sphi 0, %s505
      %s520 = sphi 0, %s506
      %s524 = sphi 0, %s524
      %s526 = sphi 0, %s524
      %s527 = sphi 0, %s526
      %s541 = sphi 0, %s527
      %s545 = sphi 0, %s545
      %s547 = sphi 0, %s545
      %s548 = sphi 0, %s547
      %s562 = sphi 0, %s548
      %s566 = sphi 0, %s566
      %s568 = sphi 0, %s566
      %s569 = sphi 0, %s568
      %s583 = sphi 0, %s569
      %s587 = sphi 0, %s587
      %s589 = sphi 0, %s587
      %s590 = sphi 0, %s589
      %s604 = sphi 0, %s590
      %s608 = sphi 0, %s608
      %s610 = sphi 0, %s608
      %s611 = sphi 0, %s610
      %s625 = sphi 0, %s611
      %s631 = sphi 0, %s633
      %s634 = sphi 0, %s631
      %s635 = sphi 0, %s634
      %s651 = sphi 0, %s635
      %s657 = sphi 0, %s659
      %s660 = sphi 0, %s657
      %s661 = sphi 0, %s660
      %s677 = sphi 0, %s661
    $region4: #{flava_forward.4} parent=1 // loop_header_branch
      %38 = sbr.rel (%p36) target = $region8
    $region5: #{flava_forward.4} parent=1 // loop_body
      %s40 = ssub.s32 %s35, 1
      %s41 = ssub.s32 %s35, 2
      %s48 = sadd.s32 1, %s43
      %p49 = scmp.ge.s32.totalorder %s48, 2
      %s50 = scalar_select %p49, 0, %s48
      %s51 = sadd.s32 1, %s42
      %s52 = scalar_select %p49, %s51, %s42
      %p53 = scmp.ge.s32.totalorder %s52, 2
      %s54 = scalar_select %p53, 0, %s52
      %s55 = ssub.s32 %s42, %s54
      %p56 = scmp.eq.s32.totalorder %s55, 0
      %s58 = sadd.s32 %s57, 1
      %s59 = scalar_select %p56, %s57, %s58
      %p62 = pneg %p56
      %p63 = scmp.eq.s32.totalorder %s35, 3
      %p64 = por %p62, %p63
      %p65 = scmp.ne.s32.totalorder %s57, %s60
      %p66 = scmp.eq.s32.totalorder %s35, 0
      %p67 = por %p65, %p66
      %p68 = scmp.ne.s32.totalorder %s57, %s60
      %p69 = scmp.eq.s32.totalorder %s40, 3
      %p70 = por %p68, %p69
      %p71 = scmp.ne.s32.totalorder %s60, %s61
      %p72 = scmp.eq.s32.totalorder %s40, 0
      %p73 = por %p71, %p72
      %p74 = scmp.ne.s32.totalorder %s60, %s61
      %p75 = scmp.eq.s32.totalorder %s41, 3
      %p76 = por %p74, %p75
      %p78 = scmp.ne.s32.totalorder %s61, %s77
      %p79 = scmp.eq.s32.totalorder %s41, 0
      %p80 = por %p78, %p79
      %s82 = sadd.s32 %s81, 1
      %p85 = scmp.eq.s32.totalorder %s35, 3
      %p86 = scmp.ne.s32.totalorder %s81, %s83
      %p87 = scmp.eq.s32.totalorder %s35, 0
      %p88 = por %p86, %p87
      %p89 = scmp.ne.s32.totalorder %s81, %s83
      %p90 = scmp.eq.s32.totalorder %s40, 3
      %p91 = por %p89, %p90
      %p92 = scmp.ne.s32.totalorder %s83, %s84
      %p93 = scmp.eq.s32.totalorder %s40, 0
      %p94 = por %p92, %p93
      %p95 = scmp.ne.s32.totalorder %s83, %s84
      %p96 = scmp.eq.s32.totalorder %s41, 3
      %p97 = por %p95, %p96
      %p99 = scmp.ne.s32.totalorder %s84, %s98
      %p100 = scmp.eq.s32.totalorder %s41, 0
      %p101 = por %p99, %p100
      %s103 = sadd.s32 %s102, 1
      %p106 = scmp.eq.s32.totalorder %s35, 3
      %p107 = scmp.ne.s32.totalorder %s102, %s104
      %p108 = scmp.eq.s32.totalorder %s35, 0
      %p109 = por %p107, %p108
      %p110 = scmp.ne.s32.totalorder %s102, %s104
      %p111 = scmp.eq.s32.totalorder %s40, 3
      %p112 = por %p110, %p111
      %p113 = scmp.ne.s32.totalorder %s104, %s105
      %p114 = scmp.eq.s32.totalorder %s40, 0
      %p115 = por %p113, %p114
      %p116 = scmp.ne.s32.totalorder %s104, %s105
      %p117 = scmp.eq.s32.totalorder %s41, 3
      %p118 = por %p116, %p117
      %p120 = scmp.ne.s32.totalorder %s105, %s119
      %p121 = scmp.eq.s32.totalorder %s41, 0
      %p122 = por %p120, %p121
      %s124 = sadd.s32 %s123, 1
      %p127 = scmp.eq.s32.totalorder %s35, 3
      %p128 = scmp.ne.s32.totalorder %s123, %s125
      %p129 = scmp.eq.s32.totalorder %s35, 0
      %p130 = por %p128, %p129
      %p131 = scmp.ne.s32.totalorder %s123, %s125
      %p132 = scmp.eq.s32.totalorder %s40, 3
      %p133 = por %p131, %p132
      %p134 = scmp.ne.s32.totalorder %s125, %s126
      %p135 = scmp.eq.s32.totalorder %s40, 0
      %p136 = por %p134, %p135
      %p137 = scmp.ne.s32.totalorder %s125, %s126
      %p138 = scmp.eq.s32.totalorder %s41, 3
      %p139 = por %p137, %p138
      %p141 = scmp.ne.s32.totalorder %s126, %s140
      %p142 = scmp.eq.s32.totalorder %s41, 0
      %p143 = por %p141, %p142
      %s145 = sadd.s32 %s144, 1
      %p148 = scmp.eq.s32.totalorder %s35, 3
      %p149 = scmp.ne.s32.totalorder %s144, %s146
      %p150 = scmp.eq.s32.totalorder %s35, 0
      %p151 = por %p149, %p150
      %p152 = scmp.ne.s32.totalorder %s144, %s146
      %p153 = scmp.eq.s32.totalorder %s40, 3
      %p154 = por %p152, %p153
      %p155 = scmp.ne.s32.totalorder %s146, %s147
      %p156 = scmp.eq.s32.totalorder %s40, 0
      %p157 = por %p155, %p156
      %p158 = scmp.ne.s32.totalorder %s146, %s147
      %p159 = scmp.eq.s32.totalorder %s41, 3
      %p160 = por %p158, %p159
      %p162 = scmp.ne.s32.totalorder %s147, %s161
      %p163 = scmp.eq.s32.totalorder %s41, 0
      %p164 = por %p162, %p163
      %s165 = ssub.s32 %s42, %s54
      %p166 = scmp.eq.s32.totalorder %s165, 0
      %s168 = sadd.s32 %s167, 1
      %s169 = scalar_select %p166, %s167, %s168
      %p172 = pneg %p166
      %p173 = scmp.eq.s32.totalorder %s35, 3
      %p174 = por %p172, %p173
      %p175 = scmp.ne.s32.totalorder %s167, %s170
      %p176 = scmp.eq.s32.totalorder %s35, 0
      %p177 = por %p175, %p176
      %p178 = scmp.ne.s32.totalorder %s167, %s170
      %p179 = scmp.eq.s32.totalorder %s40, 3
      %p180 = por %p178, %p179
      %p181 = scmp.ne.s32.totalorder %s170, %s171
      %p182 = scmp.eq.s32.totalorder %s40, 0
      %p183 = por %p181, %p182
      %p184 = scmp.ne.s32.totalorder %s170, %s171
      %p185 = scmp.eq.s32.totalorder %s41, 3
      %p186 = por %p184, %p185
      %p188 = scmp.ne.s32.totalorder %s171, %s187
      %p189 = scmp.eq.s32.totalorder %s41, 0
      %p190 = por %p188, %p189
      %s191 = ssub.s32 %s43, %s50
      %p192 = scmp.eq.s32.totalorder %s191, 0
      %s194 = sadd.s32 %s193, 1
      %s195 = scalar_select %p192, %s193, %s194
      %p198 = pneg %p192
      %p199 = scmp.eq.s32.totalorder %s35, 3
      %p200 = por %p198, %p199
      %p201 = scmp.ne.s32.totalorder %s193, %s196
      %p202 = scmp.eq.s32.totalorder %s35, 0
      %p203 = por %p201, %p202
      %p204 = scmp.ne.s32.totalorder %s193, %s196
      %p205 = scmp.eq.s32.totalorder %s40, 3
      %p206 = por %p204, %p205
      %p207 = scmp.ne.s32.totalorder %s196, %s197
      %p208 = scmp.eq.s32.totalorder %s40, 0
      %p209 = por %p207, %p208
      %p210 = scmp.ne.s32.totalorder %s196, %s197
      %p211 = scmp.eq.s32.totalorder %s41, 3
      %p212 = por %p210, %p211
      %p214 = scmp.ne.s32.totalorder %s197, %s213
      %p215 = scmp.eq.s32.totalorder %s41, 0
      %p216 = por %p214, %p215
      %s217 = ssub.s32 %s43, %s50
      %p218 = scmp.eq.s32.totalorder %s217, 0
      %s220 = sadd.s32 %s219, 1
      %s221 = scalar_select %p218, %s219, %s220
      %p224 = pneg %p218
      %p225 = scmp.eq.s32.totalorder %s35, 3
      %p226 = por %p224, %p225
      %p227 = scmp.ne.s32.totalorder %s219, %s222
      %p228 = scmp.eq.s32.totalorder %s35, 0
      %p229 = por %p227, %p228
      %p230 = scmp.ne.s32.totalorder %s219, %s222
      %p231 = scmp.eq.s32.totalorder %s40, 3
      %p232 = por %p230, %p231
      %p233 = scmp.ne.s32.totalorder %s222, %s223
      %p234 = scmp.eq.s32.totalorder %s40, 0
      %p235 = por %p233, %p234
      %p236 = scmp.ne.s32.totalorder %s222, %s223
      %p237 = scmp.eq.s32.totalorder %s41, 3
      %p238 = por %p236, %p237
      %p240 = scmp.ne.s32.totalorder %s223, %s239
      %p241 = scmp.eq.s32.totalorder %s41, 0
      %p242 = por %p240, %p241
      %s243 = ssub.s32 %s43, %s50
      %p244 = scmp.eq.s32.totalorder %s243, 0
      %s246 = sadd.s32 %s245, 1
      %s247 = scalar_select %p244, %s245, %s246
      %p250 = pneg %p244
      %p251 = scmp.eq.s32.totalorder %s35, 3
      %p252 = por %p250, %p251
      %p253 = scmp.ne.s32.totalorder %s245, %s248
      %p254 = scmp.eq.s32.totalorder %s35, 0
      %p255 = por %p253, %p254
      %p256 = scmp.ne.s32.totalorder %s245, %s248
      %p257 = scmp.eq.s32.totalorder %s40, 3
      %p258 = por %p256, %p257
      %p259 = scmp.ne.s32.totalorder %s248, %s249
      %p260 = scmp.eq.s32.totalorder %s40, 0
      %p261 = por %p259, %p260
      %p262 = scmp.ne.s32.totalorder %s248, %s249
      %p263 = scmp.eq.s32.totalorder %s41, 3
      %p264 = por %p262, %p263
      %p266 = scmp.ne.s32.totalorder %s249, %s265
      %p267 = scmp.eq.s32.totalorder %s41, 0
      %p268 = por %p266, %p267
      %s269 = ssub.s32 %s43, %s50
      %p270 = scmp.eq.s32.totalorder %s269, 0
      %s272 = sadd.s32 %s271, 1
      %s273 = scalar_select %p270, %s271, %s272
      %p276 = pneg %p270
      %p277 = scmp.eq.s32.totalorder %s35, 3
      %p278 = por %p276, %p277
      %p279 = scmp.ne.s32.totalorder %s271, %s274
      %p280 = scmp.eq.s32.totalorder %s35, 0
      %p281 = por %p279, %p280
      %p282 = scmp.ne.s32.totalorder %s271, %s274
      %p283 = scmp.eq.s32.totalorder %s40, 3
      %p284 = por %p282, %p283
      %p285 = scmp.ne.s32.totalorder %s274, %s275
      %p286 = scmp.eq.s32.totalorder %s40, 0
      %p287 = por %p285, %p286
      %p288 = scmp.ne.s32.totalorder %s274, %s275
      %p289 = scmp.eq.s32.totalorder %s41, 3
      %p290 = por %p288, %p289
      %p292 = scmp.ne.s32.totalorder %s275, %s291
      %p293 = scmp.eq.s32.totalorder %s41, 0
      %p294 = por %p292, %p293
      %s295 = ssub.s32 %s43, %s50
      %p296 = scmp.eq.s32.totalorder %s295, 0
      %s298 = sadd.s32 %s297, 1
      %s299 = scalar_select %p296, %s297, %s298
      %p302 = pneg %p296
      %p303 = scmp.eq.s32.totalorder %s35, 3
      %p304 = por %p302, %p303
      %p305 = scmp.ne.s32.totalorder %s297, %s300
      %p306 = scmp.eq.s32.totalorder %s35, 0
      %p307 = por %p305, %p306
      %p308 = scmp.ne.s32.totalorder %s297, %s300
      %p309 = scmp.eq.s32.totalorder %s40, 3
      %p310 = por %p308, %p309
      %p311 = scmp.ne.s32.totalorder %s300, %s301
      %p312 = scmp.eq.s32.totalorder %s40, 0
      %p313 = por %p311, %p312
      %p314 = scmp.ne.s32.totalorder %s300, %s301
      %p315 = scmp.eq.s32.totalorder %s41, 3
      %p316 = por %p314, %p315
      %p318 = scmp.ne.s32.totalorder %s301, %s317
      %p319 = scmp.eq.s32.totalorder %s41, 0
      %p320 = por %p318, %p319
      %s321 = ssub.s32 %s43, %s50
      %p322 = scmp.eq.s32.totalorder %s321, 0
      %s324 = sadd.s32 %s323, 1
      %s325 = scalar_select %p322, %s323, %s324
      %p328 = pneg %p322
      %p329 = scmp.eq.s32.totalorder %s35, 3
      %p330 = por %p328, %p329
      %p331 = scmp.ne.s32.totalorder %s323, %s326
      %p332 = scmp.eq.s32.totalorder %s35, 0
      %p333 = por %p331, %p332
      %p334 = scmp.ne.s32.totalorder %s323, %s326
      %p335 = scmp.eq.s32.totalorder %s40, 3
      %p336 = por %p334, %p335
      %p337 = scmp.ne.s32.totalorder %s326, %s327
      %p338 = scmp.eq.s32.totalorder %s40, 0
      %p339 = por %p337, %p338
      %p340 = scmp.ne.s32.totalorder %s326, %s327
      %p341 = scmp.eq.s32.totalorder %s41, 3
      %p342 = por %p340, %p341
      %p344 = scmp.ne.s32.totalorder %s327, %s343
      %p345 = scmp.eq.s32.totalorder %s41, 0
      %p346 = por %p344, %p345
      %s347 = ssub.s32 %s43, %s50
      %p348 = scmp.eq.s32.totalorder %s347, 0
      %s350 = sadd.s32 %s349, 1
      %s351 = scalar_select %p348, %s349, %s350
      %p354 = pneg %p348
      %p355 = scmp.eq.s32.totalorder %s35, 3
      %p356 = por %p354, %p355
      %p357 = scmp.ne.s32.totalorder %s349, %s352
      %p358 = scmp.eq.s32.totalorder %s35, 0
      %p359 = por %p357, %p358
      %p360 = scmp.ne.s32.totalorder %s349, %s352
      %p361 = scmp.eq.s32.totalorder %s40, 3
      %p362 = por %p360, %p361
      %p363 = scmp.ne.s32.totalorder %s352, %s353
      %p364 = scmp.eq.s32.totalorder %s40, 0
      %p365 = por %p363, %p364
      %p366 = scmp.ne.s32.totalorder %s352, %s353
      %p367 = scmp.eq.s32.totalorder %s41, 3
      %p368 = por %p366, %p367
      %p370 = scmp.ne.s32.totalorder %s353, %s369
      %p371 = scmp.eq.s32.totalorder %s41, 0
      %p372 = por %p370, %p371
      %s373 = ssub.s32 %s43, %s50
      %p374 = scmp.eq.s32.totalorder %s373, 0
      %s376 = sadd.s32 %s375, 1
      %s377 = scalar_select %p374, %s375, %s376
      %p380 = pneg %p374
      %p381 = scmp.eq.s32.totalorder %s35, 3
      %p382 = por %p380, %p381
      %p383 = scmp.ne.s32.totalorder %s375, %s378
      %p384 = scmp.eq.s32.totalorder %s35, 0
      %p385 = por %p383, %p384
      %p386 = scmp.ne.s32.totalorder %s375, %s378
      %p387 = scmp.eq.s32.totalorder %s40, 3
      %p388 = por %p386, %p387
      %p389 = scmp.ne.s32.totalorder %s378, %s379
      %p390 = scmp.eq.s32.totalorder %s40, 0
      %p391 = por %p389, %p390
      %p392 = scmp.ne.s32.totalorder %s378, %s379
      %p393 = scmp.eq.s32.totalorder %s41, 3
      %p394 = por %p392, %p393
      %p396 = scmp.ne.s32.totalorder %s379, %s395
      %p397 = scmp.eq.s32.totalorder %s41, 0
      %p398 = por %p396, %p397
      %s399 = ssub.s32 %s43, %s50
      %p400 = scmp.eq.s32.totalorder %s399, 0
      %s402 = sadd.s32 %s401, 1
      %s403 = scalar_select %p400, %s401, %s402
      %p406 = pneg %p400
      %p407 = scmp.eq.s32.totalorder %s35, 3
      %p408 = por %p406, %p407
      %p409 = scmp.ne.s32.totalorder %s401, %s404
      %p410 = scmp.eq.s32.totalorder %s35, 0
      %p411 = por %p409, %p410
      %p412 = scmp.ne.s32.totalorder %s401, %s404
      %p413 = scmp.eq.s32.totalorder %s40, 3
      %p414 = por %p412, %p413
      %p415 = scmp.ne.s32.totalorder %s404, %s405
      %p416 = scmp.eq.s32.totalorder %s40, 0
      %p417 = por %p415, %p416
      %p418 = scmp.ne.s32.totalorder %s404, %s405
      %p419 = scmp.eq.s32.totalorder %s41, 3
      %p420 = por %p418, %p419
      %p422 = scmp.ne.s32.totalorder %s405, %s421
      %p423 = scmp.eq.s32.totalorder %s41, 0
      %p424 = por %p422, %p423
      %s425 = ssub.s32 %s43, %s50
      %p426 = scmp.eq.s32.totalorder %s425, 0
      %s428 = sadd.s32 %s427, 1
      %s429 = scalar_select %p426, %s427, %s428
      %p432 = pneg %p426
      %p433 = scmp.eq.s32.totalorder %s35, 3
      %p434 = por %p432, %p433
      %p435 = scmp.ne.s32.totalorder %s427, %s430
      %p436 = scmp.eq.s32.totalorder %s35, 0
      %p437 = por %p435, %p436
      %p438 = scmp.ne.s32.totalorder %s427, %s430
      %p439 = scmp.eq.s32.totalorder %s40, 3
      %p440 = por %p438, %p439
      %p441 = scmp.ne.s32.totalorder %s430, %s431
      %p442 = scmp.eq.s32.totalorder %s40, 0
      %p443 = por %p441, %p442
      %p444 = scmp.ne.s32.totalorder %s430, %s431
      %p445 = scmp.eq.s32.totalorder %s41, 3
      %p446 = por %p444, %p445
      %p448 = scmp.ne.s32.totalorder %s431, %s447
      %p449 = scmp.eq.s32.totalorder %s41, 0
      %p450 = por %p448, %p449
      %s451 = ssub.s32 %s43, %s50
      %p452 = scmp.eq.s32.totalorder %s451, 0
      %s454 = sadd.s32 %s453, 1
      %s455 = scalar_select %p452, %s453, %s454
      %p458 = pneg %p452
      %p459 = scmp.eq.s32.totalorder %s35, 3
      %p460 = por %p458, %p459
      %p461 = scmp.ne.s32.totalorder %s453, %s456
      %p462 = scmp.eq.s32.totalorder %s35, 0
      %p463 = por %p461, %p462
      %p464 = scmp.ne.s32.totalorder %s453, %s456
      %p465 = scmp.eq.s32.totalorder %s40, 3
      %p466 = por %p464, %p465
      %p467 = scmp.ne.s32.totalorder %s456, %s457
      %p468 = scmp.eq.s32.totalorder %s40, 0
      %p469 = por %p467, %p468
      %p470 = scmp.ne.s32.totalorder %s456, %s457
      %p471 = scmp.eq.s32.totalorder %s41, 3
      %p472 = por %p470, %p471
      %p474 = scmp.ne.s32.totalorder %s457, %s473
      %p475 = scmp.eq.s32.totalorder %s41, 0
      %p476 = por %p474, %p475
      %s477 = ssub.s32 %s43, %s50
      %p478 = scmp.eq.s32.totalorder %s477, 0
      %s480 = sadd.s32 %s479, 1
      %s481 = scalar_select %p478, %s479, %s480
      %p484 = pneg %p478
      %p485 = scmp.eq.s32.totalorder %s35, 3
      %p486 = por %p484, %p485
      %p487 = scmp.ne.s32.totalorder %s479, %s482
      %p488 = scmp.eq.s32.totalorder %s35, 0
      %p489 = por %p487, %p488
      %p490 = scmp.ne.s32.totalorder %s479, %s482
      %p491 = scmp.eq.s32.totalorder %s40, 3
      %p492 = por %p490, %p491
      %p493 = scmp.ne.s32.totalorder %s482, %s483
      %p494 = scmp.eq.s32.totalorder %s40, 0
      %p495 = por %p493, %p494
      %p496 = scmp.ne.s32.totalorder %s482, %s483
      %p497 = scmp.eq.s32.totalorder %s41, 3
      %p498 = por %p496, %p497
      %p500 = scmp.ne.s32.totalorder %s483, %s499
      %p501 = scmp.eq.s32.totalorder %s41, 0
      %p502 = por %p500, %p501
      %s504 = sadd.s32 %s503, 1
      %p507 = scmp.eq.s32.totalorder %s35, 3
      %p508 = scmp.ne.s32.totalorder %s503, %s505
      %p509 = scmp.eq.s32.totalorder %s35, 0
      %p510 = por %p508, %p509
      %p511 = scmp.ne.s32.totalorder %s503, %s505
      %p512 = scmp.eq.s32.totalorder %s40, 3
      %p513 = por %p511, %p512
      %p514 = scmp.ne.s32.totalorder %s505, %s506
      %p515 = scmp.eq.s32.totalorder %s40, 0
      %p516 = por %p514, %p515
      %p517 = scmp.ne.s32.totalorder %s505, %s506
      %p518 = scmp.eq.s32.totalorder %s41, 3
      %p519 = por %p517, %p518
      %p521 = scmp.ne.s32.totalorder %s506, %s520
      %p522 = scmp.eq.s32.totalorder %s41, 0
      %p523 = por %p521, %p522
      %s525 = sadd.s32 %s524, 1
      %p528 = scmp.eq.s32.totalorder %s35, 3
      %p529 = scmp.ne.s32.totalorder %s524, %s526
      %p530 = scmp.eq.s32.totalorder %s35, 0
      %p531 = por %p529, %p530
      %p532 = scmp.ne.s32.totalorder %s524, %s526
      %p533 = scmp.eq.s32.totalorder %s40, 3
      %p534 = por %p532, %p533
      %p535 = scmp.ne.s32.totalorder %s526, %s527
      %p536 = scmp.eq.s32.totalorder %s40, 0
      %p537 = por %p535, %p536
      %p538 = scmp.ne.s32.totalorder %s526, %s527
      %p539 = scmp.eq.s32.totalorder %s41, 3
      %p540 = por %p538, %p539
      %p542 = scmp.ne.s32.totalorder %s527, %s541
      %p543 = scmp.eq.s32.totalorder %s41, 0
      %p544 = por %p542, %p543
      %s546 = sadd.s32 %s545, 1
      %p549 = scmp.eq.s32.totalorder %s35, 3
      %p550 = scmp.ne.s32.totalorder %s545, %s547
      %p551 = scmp.eq.s32.totalorder %s35, 0
      %p552 = por %p550, %p551
      %p553 = scmp.ne.s32.totalorder %s545, %s547
      %p554 = scmp.eq.s32.totalorder %s40, 3
      %p555 = por %p553, %p554
      %p556 = scmp.ne.s32.totalorder %s547, %s548
      %p557 = scmp.eq.s32.totalorder %s40, 0
      %p558 = por %p556, %p557
      %p559 = scmp.ne.s32.totalorder %s547, %s548
      %p560 = scmp.eq.s32.totalorder %s41, 3
      %p561 = por %p559, %p560
      %p563 = scmp.ne.s32.totalorder %s548, %s562
      %p564 = scmp.eq.s32.totalorder %s41, 0
      %p565 = por %p563, %p564
      %s567 = sadd.s32 %s566, 1
      %p570 = scmp.eq.s32.totalorder %s35, 3
      %p571 = scmp.ne.s32.totalorder %s566, %s568
      %p572 = scmp.eq.s32.totalorder %s35, 0
      %p573 = por %p571, %p572
      %p574 = scmp.ne.s32.totalorder %s566, %s568
      %p575 = scmp.eq.s32.totalorder %s40, 3
      %p576 = por %p574, %p575
      %p577 = scmp.ne.s32.totalorder %s568, %s569
      %p578 = scmp.eq.s32.totalorder %s40, 0
      %p579 = por %p577, %p578
      %p580 = scmp.ne.s32.totalorder %s568, %s569
      %p581 = scmp.eq.s32.totalorder %s41, 3
      %p582 = por %p580, %p581
      %p584 = scmp.ne.s32.totalorder %s569, %s583
      %p585 = scmp.eq.s32.totalorder %s41, 0
      %p586 = por %p584, %p585
      %s588 = sadd.s32 %s587, 1
      %p591 = scmp.eq.s32.totalorder %s35, 3
      %p592 = scmp.ne.s32.totalorder %s587, %s589
      %p593 = scmp.eq.s32.totalorder %s35, 0
      %p594 = por %p592, %p593
      %p595 = scmp.ne.s32.totalorder %s587, %s589
      %p596 = scmp.eq.s32.totalorder %s40, 3
      %p597 = por %p595, %p596
      %p598 = scmp.ne.s32.totalorder %s589, %s590
      %p599 = scmp.eq.s32.totalorder %s40, 0
      %p600 = por %p598, %p599
      %p601 = scmp.ne.s32.totalorder %s589, %s590
      %p602 = scmp.eq.s32.totalorder %s41, 3
      %p603 = por %p601, %p602
      %p605 = scmp.ne.s32.totalorder %s590, %s604
      %p606 = scmp.eq.s32.totalorder %s41, 0
      %p607 = por %p605, %p606
      %s609 = sadd.s32 %s608, 1
      %p612 = scmp.eq.s32.totalorder %s35, 3
      %p613 = scmp.ne.s32.totalorder %s608, %s610
      %p614 = scmp.eq.s32.totalorder %s35, 0
      %p615 = por %p613, %p614
      %p616 = scmp.ne.s32.totalorder %s608, %s610
      %p617 = scmp.eq.s32.totalorder %s40, 3
      %p618 = por %p616, %p617
      %p619 = scmp.ne.s32.totalorder %s610, %s611
      %p620 = scmp.eq.s32.totalorder %s40, 0
      %p621 = por %p619, %p620
      %p622 = scmp.ne.s32.totalorder %s610, %s611
      %p623 = scmp.eq.s32.totalorder %s41, 3
      %p624 = por %p622, %p623
      %p626 = scmp.ne.s32.totalorder %s611, %s625
      %p627 = scmp.eq.s32.totalorder %s41, 0
      %p628 = por %p626, %p627
      %s629 = ssub.s32 %s42, %s54
      %p630 = scmp.eq.s32.totalorder %s629, 0
      %s632 = sadd.s32 %s631, 1
      %s633 = scalar_select %p630, %s631, %s632
      %p636 = pneg %p630
      %p637 = scmp.eq.s32.totalorder %s35, 3
      %p638 = por %p636, %p637
      %p639 = scmp.ne.s32.totalorder %s631, %s634
      %p640 = scmp.eq.s32.totalorder %s35, 0
      %p641 = por %p639, %p640
      %p642 = scmp.ne.s32.totalorder %s631, %s634
      %p643 = scmp.eq.s32.totalorder %s40, 3
      %p644 = por %p642, %p643
      %p645 = scmp.ne.s32.totalorder %s634, %s635
      %p646 = scmp.eq.s32.totalorder %s40, 0
      %p647 = por %p645, %p646
      %p648 = scmp.ne.s32.totalorder %s634, %s635
      %p649 = scmp.eq.s32.totalorder %s41, 3
      %p650 = por %p648, %p649
      %p652 = scmp.ne.s32.totalorder %s635, %s651
      %p653 = scmp.eq.s32.totalorder %s41, 0
      %p654 = por %p652, %p653
      %s655 = ssub.s32 %s42, %s54
      %p656 = scmp.eq.s32.totalorder %s655, 0
      %s658 = sadd.s32 %s657, 1
      %s659 = scalar_select %p656, %s657, %s658
      %p662 = pneg %p656
      %p663 = scmp.eq.s32.totalorder %s35, 3
      %p664 = por %p662, %p663
      %p665 = scmp.ne.s32.totalorder %s657, %s660
      %p666 = scmp.eq.s32.totalorder %s35, 0
      %p667 = por %p665, %p666
      %p668 = scmp.ne.s32.totalorder %s657, %s660
      %p669 = scmp.eq.s32.totalorder %s40, 3
      %p670 = por %p668, %p669
      %p671 = scmp.ne.s32.totalorder %s660, %s661
      %p672 = scmp.eq.s32.totalorder %s40, 0
      %p673 = por %p671, %p672
      %p674 = scmp.ne.s32.totalorder %s660, %s661
      %p675 = scmp.eq.s32.totalorder %s41, 3
      %p676 = por %p674, %p675
      %p678 = scmp.ne.s32.totalorder %s661, %s677
      %p679 = scmp.eq.s32.totalorder %s41, 0
      %p680 = por %p678, %p679
      %p681 = scmp.le.s32.totalorder 1, %s35
      %p682 = scmp.lt.s32.totalorder %s35, 5
      %p683 = pnand %p681, %p682
      %p684 = pneg %p683
      // Predicated region
      $region9: #{flava_forward.4} parent=5 // pred_check
        _
      $region10: #{flava_forward.4} parent=5 // pred_check_branch
        %686 = sbr.rel (%p683) target = $region12
      $region11: #{flava_forward.4} parent=5 // pred_region
        %s687 = ssub.s32 %s35, 1
        // Predicated region
        $region13: #{flava_forward.4} parent=11 // pred_check
          %p688 = pneg %p94
        $region14: #{flava_forward.4} parent=11 // pred_check_branch
          %690 = sbr.rel (%p688) target = $region16
        $region15: #{flava_forward.4} parent=11 // pred_region
          _
        $region16: #{flava_forward.4} parent=11 // pred_fallthru
          _
        // Predicated region
        $region17: #{flava_forward.4} parent=11 // pred_check
          %p691 = pneg %p115
        $region18: #{flava_forward.4} parent=11 // pred_check_branch
          %693 = sbr.rel (%p691) target = $region20
        $region19: #{flava_forward.4} parent=11 // pred_region
          _
        $region20: #{flava_forward.4} parent=11 // pred_fallthru
          _
        // Predicated region
        $region21: #{flava_forward.4} parent=11 // pred_check
          %p694 = pneg %p136
        $region22: #{flava_forward.4} parent=11 // pred_check_branch
          %696 = sbr.rel (%p694) target = $region24
        $region23: #{flava_forward.4} parent=11 // pred_region
          _
        $region24: #{flava_forward.4} parent=11 // pred_fallthru
          _
        // Predicated region
        $region25: #{flava_forward.4} parent=11 // pred_check
          %p697 = pneg %p157
        $region26: #{flava_forward.4} parent=11 // pred_check_branch
          %699 = sbr.rel (%p697) target = $region28
        $region27: #{flava_forward.4} parent=11 // pred_region
          _
        $region28: #{flava_forward.4} parent=11 // pred_fallthru
          _
        // Predicated region
        $region29: #{flava_forward.4} parent=11 // pred_check
          %p700 = pneg %p516
        $region30: #{flava_forward.4} parent=11 // pred_check_branch
          %702 = sbr.rel (%p700) target = $region32
        $region31: #{flava_forward.4} parent=11 // pred_region
          _
        $region32: #{flava_forward.4} parent=11 // pred_fallthru
          _
        // Predicated region
        $region33: #{flava_forward.4} parent=11 // pred_check
          %p703 = pneg %p537
        $region34: #{flava_forward.4} parent=11 // pred_check_branch
          %705 = sbr.rel (%p703) target = $region36
        $region35: #{flava_forward.4} parent=11 // pred_region
          _
        $region36: #{flava_forward.4} parent=11 // pred_fallthru
          _
        // Predicated region
        $region37: #{flava_forward.4} parent=11 // pred_check
          %p706 = pneg %p558
        $region38: #{flava_forward.4} parent=11 // pred_check_branch
          %708 = sbr.rel (%p706) target = $region40
        $region39: #{flava_forward.4} parent=11 // pred_region
          _
        $region40: #{flava_forward.4} parent=11 // pred_fallthru
          _
        // Predicated region
        $region41: #{flava_forward.4} parent=11 // pred_check
          %p709 = pneg %p579
        $region42: #{flava_forward.4} parent=11 // pred_check_branch
          %711 = sbr.rel (%p709) target = $region44
        $region43: #{flava_forward.4} parent=11 // pred_region
          _
        $region44: #{flava_forward.4} parent=11 // pred_fallthru
          _
        // Predicated region
        $region45: #{flava_forward.4} parent=11 // pred_check
          %p712 = pneg %p600
        $region46: #{flava_forward.4} parent=11 // pred_check_branch
          %714 = sbr.rel (%p712) target = $region48
        $region47: #{flava_forward.4} parent=11 // pred_region
          _
        $region48: #{flava_forward.4} parent=11 // pred_fallthru
          _
        // Predicated region
        $region49: #{flava_forward.4} parent=11 // pred_check
          %p715 = pneg %p621
        $region50: #{flava_forward.4} parent=11 // pred_check_branch
          %717 = sbr.rel (%p715) target = $region52
        $region51: #{flava_forward.4} parent=11 // pred_region
          _
        $region52: #{flava_forward.4} parent=11 // pred_fallthru
          _
      $region12: #{flava_forward.4} parent=5 // pred_fallthru
        _
      %p718 = scmp.lt.s32.totalorder %s35, 4
      // Predicated region
      $region53: #{flava_forward.4} parent=5 // pred_check
        %p719 = pneg %p718
      $region54: #{flava_forward.4} parent=5 // pred_check_branch
        %721 = sbr.rel (%p719) target = $region56
      $region55: #{flava_forward.4} parent=5 // pred_region
        // Predicated region
        $region57: #{flava_forward.4} parent=55 // pred_check
          %p722 = pneg %p67
        $region58: #{flava_forward.4} parent=55 // pred_check_branch
          %724 = sbr.rel (%p722) target = $region60
        $region59: #{flava_forward.4} parent=55 // pred_region
          %p725 = scmp.lt.s32.totalorder %s42, 1
          %s726 = scalar_select %p725, %s42, 1
          %s727 = smul.addr %s726, 2
          %s728 = smul.addr %s727, 4
          %s729 = scalar_lea.vmem %s0, %s728
        $region60: #{flava_forward.4} parent=55 // pred_fallthru
          _
        // Predicated region
        $region61: #{flava_forward.4} parent=55 // pred_check
          %p730 = pneg %p177
        $region62: #{flava_forward.4} parent=55 // pred_check_branch
          %732 = sbr.rel (%p730) target = $region64
        $region63: #{flava_forward.4} parent=55 // pred_region
          %p733 = scmp.lt.s32.totalorder %s42, 1
          %s734 = scalar_select %p733, %s42, 1
          %s735 = scalar_lea.vmem %s5, %s734
        $region64: #{flava_forward.4} parent=55 // pred_fallthru
          _
        // Predicated region
        $region65: #{flava_forward.4} parent=55 // pred_check
          %p736 = pneg %p203
        $region66: #{flava_forward.4} parent=55 // pred_check_branch
          %738 = sbr.rel (%p736) target = $region68
        $region67: #{flava_forward.4} parent=55 // pred_region
          %p739 = scmp.lt.s32.totalorder %s43, 1
          %s740 = scalar_select %p739, %s43, 1
          %s741 = smul.addr %s740, 4
          %s742 = smul.addr %s741, 4
          %s743 = scalar_lea.vmem %s6, %s742
        $region68: #{flava_forward.4} parent=55 // pred_fallthru
          _
        // Predicated region
        $region69: #{flava_forward.4} parent=55 // pred_check
          %p744 = pneg %p229
        $region70: #{flava_forward.4} parent=55 // pred_check_branch
          %746 = sbr.rel (%p744) target = $region72
        $region71: #{flava_forward.4} parent=55 // pred_region
          %p747 = scmp.lt.s32.totalorder %s43, 1
          %s748 = scalar_select %p747, %s43, 1
          %s749 = scalar_lea.vmem %s7, %s748
        $region72: #{flava_forward.4} parent=55 // pred_fallthru
          _
        // Predicated region
        $region73: #{flava_forward.4} parent=55 // pred_check
          %p750 = pneg %p255
        $region74: #{flava_forward.4} parent=55 // pred_check_branch
          %752 = sbr.rel (%p750) target = $region76
        $region75: #{flava_forward.4} parent=55 // pred_region
          %p753 = scmp.lt.s32.totalorder %s43, 1
          %s754 = scalar_select %p753, %s43, 1
          %s755 = smul.addr %s754, 4
          %s756 = smul.addr %s755, 4
          %s757 = scalar_lea.vmem %s8, %s756
        $region76: #{flava_forward.4} parent=55 // pred_fallthru
          _
        // Predicated region
        $region77: #{flava_forward.4} parent=55 // pred_check
          %p758 = pneg %p281
        $region78: #{flava_forward.4} parent=55 // pred_check_branch
          %760 = sbr.rel (%p758) target = $region80
        $region79: #{flava_forward.4} parent=55 // pred_region
          %p761 = scmp.lt.s32.totalorder %s43, 1
          %s762 = scalar_select %p761, %s43, 1
          %s763 = scalar_lea.vmem %s9, %s762
        $region80: #{flava_forward.4} parent=55 // pred_fallthru
          _
        // Predicated region
        $region81: #{flava_forward.4} parent=55 // pred_check
          %p764 = pneg %p307
        $region82: #{flava_forward.4} parent=55 // pred_check_branch
          %766 = sbr.rel (%p764) target = $region84
        $region83: #{flava_forward.4} parent=55 // pred_region
          %p767 = scmp.lt.s32.totalorder %s43, 1
          %s768 = scalar_select %p767, %s43, 1
          %s769 = scalar_lea.vmem %s10, %s768
        $region84: #{flava_forward.4} parent=55 // pred_fallthru
          _
        // Predicated region
        $region85: #{flava_forward.4} parent=55 // pred_check
          %p770 = pneg %p333
        $region86: #{flava_forward.4} parent=55 // pred_check_branch
          %772 = sbr.rel (%p770) target = $region88
        $region87: #{flava_forward.4} parent=55 // pred_region
          %p773 = scmp.lt.s32.totalorder %s43, 1
          %s774 = scalar_select %p773, %s43, 1
          %s775 = scalar_lea.vmem %s11, %s774
        $region88: #{flava_forward.4} parent=55 // pred_fallthru
          _
        // Predicated region
        $region89: #{flava_forward.4} parent=55 // pred_check
          %p776 = pneg %p359
        $region90: #{flava_forward.4} parent=55 // pred_check_branch
          %778 = sbr.rel (%p776) target = $region92
        $region91: #{flava_forward.4} parent=55 // pred_region
          %p779 = scmp.lt.s32.totalorder %s43, 1
          %s780 = scalar_select %p779, %s43, 1
          %s781 = scalar_lea.vmem %s12, %s780
        $region92: #{flava_forward.4} parent=55 // pred_fallthru
          _
        // Predicated region
        $region93: #{flava_forward.4} parent=55 // pred_check
          %p782 = pneg %p385
        $region94: #{flava_forward.4} parent=55 // pred_check_branch
          %784 = sbr.rel (%p782) target = $region96
        $region95: #{flava_forward.4} parent=55 // pred_region
          %p785 = scmp.lt.s32.totalorder %s43, 1
          %s786 = scalar_select %p785, %s43, 1
          %s787 = scalar_lea.vmem %s13, %s786
        $region96: #{flava_forward.4} parent=55 // pred_fallthru
          _
        // Predicated region
        $region97: #{flava_forward.4} parent=55 // pred_check
          %p788 = pneg %p411
        $region98: #{flava_forward.4} parent=55 // pred_check_branch
          %790 = sbr.rel (%p788) target = $region100
        $region99: #{flava_forward.4} parent=55 // pred_region
          %p791 = scmp.lt.s32.totalorder %s43, 1
          %s792 = scalar_select %p791, %s43, 1
          %s793 = smul.addr %s792, 4
          %s794 = smul.addr %s793, 4
          %s795 = scalar_lea.vmem %s14, %s794
        $region100: #{flava_forward.4} parent=55 // pred_fallthru
          _
        // Predicated region
        $region101: #{flava_forward.4} parent=55 // pred_check
          %p796 = pneg %p437
        $region102: #{flava_forward.4} parent=55 // pred_check_branch
          %798 = sbr.rel (%p796) target = $region104
        $region103: #{flava_forward.4} parent=55 // pred_region
          %p799 = scmp.lt.s32.totalorder %s43, 1
          %s800 = scalar_select %p799, %s43, 1
          %s801 = scalar_lea.vmem %s15, %s800
        $region104: #{flava_forward.4} parent=55 // pred_fallthru
          _
        // Predicated region
        $region105: #{flava_forward.4} parent=55 // pred_check
          %p802 = pneg %p463
        $region106: #{flava_forward.4} parent=55 // pred_check_branch
          %804 = sbr.rel (%p802) target = $region108
        $region107: #{flava_forward.4} parent=55 // pred_region
          %p805 = scmp.lt.s32.totalorder %s43, 1
          %s806 = scalar_select %p805, %s43, 1
          %s807 = smul.addr %s806, 8
          %s808 = smul.addr %s807, 4
          %s809 = scalar_lea.vmem %s16, %s808
        $region108: #{flava_forward.4} parent=55 // pred_fallthru
          _
        // Predicated region
        $region109: #{flava_forward.4} parent=55 // pred_check
          %p810 = pneg %p489
        $region110: #{flava_forward.4} parent=55 // pred_check_branch
          %812 = sbr.rel (%p810) target = $region112
        $region111: #{flava_forward.4} parent=55 // pred_region
          %p813 = scmp.lt.s32.totalorder %s43, 1
          %s814 = scalar_select %p813, %s43, 1
          %s815 = scalar_lea.vmem %s17, %s814
        $region112: #{flava_forward.4} parent=55 // pred_fallthru
          _
      $region56: #{flava_forward.4} parent=5 // pred_fallthru
        _
      %p816 = scmp.le.s32.totalorder 1, %s35
      %p817 = scmp.lt.s32.totalorder %s35, 5
      %p818 = pnand %p816, %p817
      %p819 = pneg %p818
      // Predicated region
      $region113: #{flava_forward.4} parent=5 // pred_check
        _
      $region114: #{flava_forward.4} parent=5 // pred_check_branch
        %821 = sbr.rel (%p818) target = $region116
      $region115: #{flava_forward.4} parent=5 // pred_region
        %s822 = ssub.s32 %s35, 1
        %p823 = scmp.lt.s32.totalorder %s44, 1
        %s824 = scalar_select %p823, %s44, 1
        %s825 = smul.addr %s824, 2
        %s826 = smul.addr %s825, 4
        %s827 = scalar_lea.vmem %s0, %s826
        %p828 = pneg %p73
        %p829 = pneg %p70
        %p830 = pneg %p94
        %p831 = pneg %p91
        %p832 = pneg %p115
        %p833 = pneg %p112
        %p834 = pneg %p136
        %p835 = pneg %p133
        %p836 = pneg %p157
        %p837 = pneg %p154
        %p838 = scmp.lt.s32.totalorder %s44, 1
        %s839 = scalar_select %p838, %s44, 1
        %s840 = scalar_lea.vmem %s5, %s839
        %p841 = pneg %p183
        %p842 = pneg %p180
        %p843 = scmp.lt.s32.totalorder %s45, 1
        %s844 = scalar_select %p843, %s45, 1
        %s845 = smul.addr %s844, 4
        %s846 = smul.addr %s845, 4
        %s847 = scalar_lea.vmem %s6, %s846
        %p848 = pneg %p209
        %p849 = pneg %p206
        %p850 = scmp.lt.s32.totalorder %s45, 1
        %s851 = scalar_select %p850, %s45, 1
        %s852 = scalar_lea.vmem %s7, %s851
        %p853 = pneg %p235
        %p854 = pneg %p232
        %p855 = scmp.lt.s32.totalorder %s45, 1
        %s856 = scalar_select %p855, %s45, 1
        %s857 = smul.addr %s856, 4
        %s858 = smul.addr %s857, 4
        %s859 = scalar_lea.vmem %s8, %s858
        %p860 = pneg %p261
        %p861 = pneg %p258
        %p862 = scmp.lt.s32.totalorder %s45, 1
        %s863 = scalar_select %p862, %s45, 1
        %s864 = scalar_lea.vmem %s9, %s863
        %p865 = pneg %p287
        %p866 = pneg %p284
        %p867 = scmp.lt.s32.totalorder %s45, 1
        %s868 = scalar_select %p867, %s45, 1
        %s869 = scalar_lea.vmem %s10, %s868
        %p870 = pneg %p313
        %p871 = pneg %p310
        %p872 = scmp.lt.s32.totalorder %s45, 1
        %s873 = scalar_select %p872, %s45, 1
        %s874 = scalar_lea.vmem %s11, %s873
        %p875 = pneg %p339
        %p876 = pneg %p336
        %p877 = scmp.lt.s32.totalorder %s45, 1
        %s878 = scalar_select %p877, %s45, 1
        %s879 = scalar_lea.vmem %s12, %s878
        %p880 = pneg %p365
        %p881 = pneg %p362
        %p882 = scmp.lt.s32.totalorder %s45, 1
        %s883 = scalar_select %p882, %s45, 1
        %s884 = scalar_lea.vmem %s13, %s883
        %p885 = pneg %p391
        %p886 = pneg %p388
        %p887 = scmp.lt.s32.totalorder %s45, 1
        %s888 = scalar_select %p887, %s45, 1
        %s889 = smul.addr %s888, 4
        %s890 = smul.addr %s889, 4
        %s891 = scalar_lea.vmem %s14, %s890
        %p892 = pneg %p417
        %p893 = pneg %p414
        %p894 = scmp.lt.s32.totalorder %s45, 1
        %s895 = scalar_select %p894, %s45, 1
        %s896 = scalar_lea.vmem %s15, %s895
        %p897 = pneg %p443
        %p898 = pneg %p440
        %p899 = scmp.lt.s32.totalorder %s45, 1
        %s900 = scalar_select %p899, %s45, 1
        %s901 = smul.addr %s900, 8
        %s902 = smul.addr %s901, 4
        %s903 = scalar_lea.vmem %s16, %s902
        %p904 = pneg %p469
        %p905 = pneg %p466
        %p906 = scmp.lt.s32.totalorder %s45, 1
        %s907 = scalar_select %p906, %s45, 1
        %s908 = scalar_lea.vmem %s17, %s907
        %p909 = pneg %p495
        %p910 = pneg %p492
        %p911 = pneg %p516
        %p912 = pneg %p513
        %p913 = pneg %p537
        %p914 = pneg %p534
        %p915 = pneg %p558
        %p916 = pneg %p555
        %p917 = pneg %p579
        %p918 = pneg %p576
        %p919 = pneg %p600
        %p920 = pneg %p597
        %p921 = pneg %p621
        %p922 = pneg %p618
        %p923 = pneg %p647
        %p924 = pneg %p644
        %p925 = scmp.lt.s32.totalorder %s44, 1
        %s926 = scalar_select %p925, %s44, 1
        %s927 = smul.addr %s926, 8
        %s928 = scalar_lea.vmem %s24, %s927
        %p929 = pneg %p673
        %p930 = pneg %p670
        %s931 = sand.u32 %s660, 1
        %s932 = scalar_lea.sflag [#allocation4], %s931
        %s933 = sand.u32 %s660, 1
        %s934 = scalar_lea.vmem [#allocation3], %s933
        %p935 = scmp.lt.s32.totalorder %s44, 1
        %s936 = scalar_select %p935, %s44, 1
        %s937 = smul.addr %s936, 2
        %s938 = smul.addr %s937, 4
        %s939 = scalar_lea.vmem %s0, %s938
        %p940 = scmp.lt.s32.totalorder %s44, 1
        %s941 = scalar_select %p940, %s44, 1
        %s942 = scalar_lea.vmem %s5, %s941
        %p943 = scmp.lt.s32.totalorder %s45, 1
        %s944 = scalar_select %p943, %s45, 1
        %s945 = smul.addr %s944, 4
        %s946 = smul.addr %s945, 4
        %s947 = scalar_lea.vmem %s6, %s946
        %p948 = scmp.lt.s32.totalorder %s45, 1
        %s949 = scalar_select %p948, %s45, 1
        %s950 = scalar_lea.vmem %s7, %s949
        %p951 = scmp.lt.s32.totalorder %s45, 1
        %s952 = scalar_select %p951, %s45, 1
        %s953 = smul.addr %s952, 4
        %s954 = smul.addr %s953, 4
        %s955 = scalar_lea.vmem %s8, %s954
        %p956 = scmp.lt.s32.totalorder %s45, 1
        %s957 = scalar_select %p956, %s45, 1
        %s958 = scalar_lea.vmem %s9, %s957
        %p959 = scmp.lt.s32.totalorder %s45, 1
        %s960 = scalar_select %p959, %s45, 1
        %s961 = scalar_lea.vmem %s10, %s960
        %p962 = scmp.lt.s32.totalorder %s45, 1
        %s963 = scalar_select %p962, %s45, 1
        %s964 = scalar_lea.vmem %s11, %s963
        %p965 = scmp.lt.s32.totalorder %s45, 1
        %s966 = scalar_select %p965, %s45, 1
        %s967 = scalar_lea.vmem %s12, %s966
        %p968 = scmp.lt.s32.totalorder %s45, 1
        %s969 = scalar_select %p968, %s45, 1
        %s970 = scalar_lea.vmem %s13, %s969
        %p971 = scmp.lt.s32.totalorder %s45, 1
        %s972 = scalar_select %p971, %s45, 1
        %s973 = smul.addr %s972, 4
        %s974 = smul.addr %s973, 4
        %s975 = scalar_lea.vmem %s14, %s974
        %p976 = scmp.lt.s32.totalorder %s45, 1
        %s977 = scalar_select %p976, %s45, 1
        %s978 = scalar_lea.vmem %s15, %s977
        %p979 = scmp.lt.s32.totalorder %s45, 1
        %s980 = scalar_select %p979, %s45, 1
        %s981 = smul.addr %s980, 8
        %s982 = smul.addr %s981, 4
        %s983 = scalar_lea.vmem %s16, %s982
        %p984 = scmp.lt.s32.totalorder %s45, 1
        %s985 = scalar_select %p984, %s45, 1
        %s986 = scalar_lea.vmem %s17, %s985
        %p987 = scmp.lt.s32.totalorder %s44, 1
        %s988 = scalar_select %p987, %s44, 1
        %s989 = smul.addr %s988, 8
        %s990 = scalar_lea.vmem %s24, %s989
        %p992 = scmp.eq.s32.totalorder %s45, 0
        // Predicated region
        $region117: #{flava_forward.4} parent=115 // pred_check
          %p993 = pneg %p992
        $region118: #{flava_forward.4} parent=115 // pred_check_branch
          %995 = sbr.rel (%p993) target = $region120
        $region119: #{flava_forward.4} parent=115 // pred_region
          %v996 = vld [vmem:[%s939] sm:$0xff]
          %v998 = vcombine.high %v996, %v996
          %v1000 = vpack.c.bf16 %v996, %v996
          %v1001 = vpack.c.bf16 %v998, %v998
          %v1002 = vld [vmem:[%s1] sm:$0xf]
          %v1003 = vld [vmem:[%s1 + $0x4] sm:$0xf]
          %v1004 = vld [vmem:[%s1 + $0x8] sm:$0xf]
          %v1005 = vld [vmem:[%s1 + $0xc] sm:$0xf]
          %v1006 = vld [vmem:[%s1 + $0x10] sm:$0xf]
          %v1007 = vld [vmem:[%s1 + $0x14] sm:$0xf]
          %v1008 = vld [vmem:[%s1 + $0x18] sm:$0xf]
          %v1009 = vld [vmem:[%s1 + $0x1c] sm:$0xf]
          %v1010 = vld [vmem:[%s1 + $0x20] sm:$0xf]
          %v1011 = vld [vmem:[%s1 + $0x24] sm:$0xf]
          %v1012 = vld [vmem:[%s1 + $0x28] sm:$0xf]
          %v1013 = vld [vmem:[%s1 + $0x2c] sm:$0xf]
          %v1014 = vld [vmem:[%s1 + $0x30] sm:$0xf]
          %v1015 = vld [vmem:[%s1 + $0x34] sm:$0xf]
          %v1016 = vld [vmem:[%s1 + $0x38] sm:$0xf]
          %v1017 = vld [vmem:[%s1 + $0x3c] sm:$0xf]
          %v1018 = vld [vmem:[%s1 + $0x40] sm:$0xf]
          %v1019 = vld [vmem:[%s1 + $0x44] sm:$0xf]
          %v1020 = vld [vmem:[%s1 + $0x48] sm:$0xf]
          %v1021 = vld [vmem:[%s1 + $0x4c] sm:$0xf]
          %v1022 = vld [vmem:[%s1 + $0x50] sm:$0xf]
          %v1023 = vld [vmem:[%s1 + $0x54] sm:$0xf]
          %v1024 = vld [vmem:[%s1 + $0x58] sm:$0xf]
          %v1025 = vld [vmem:[%s1 + $0x5c] sm:$0xf]
          %v1026 = vld [vmem:[%s2] sm:$0x1]
          %v1028 = vlaneseq
          %v1029 = vshrl.u32 %v1028, 7
          %v1030 = vsub.s32 0, %v1029
          %v1031 = vrot.slane %v1026, %v1030
          %v1057 = vunpack.c.l.b16 %v1002
          %v1058 = vunpack.c.l.b16 %v1003
          %v1059 = vunpack.c.l.b16 %v1004
          %v1060 = vunpack.c.l.b16 %v1005
          %v1061 = vunpack.c.l.b16 %v1006
          %v1062 = vunpack.c.l.b16 %v1007
          %v1063 = vunpack.c.l.b16 %v1008
          %v1064 = vunpack.c.l.b16 %v1009
          %v1065 = vunpack.c.l.b16 %v1010
          %v1066 = vunpack.c.l.b16 %v1011
          %v1067 = vunpack.c.l.b16 %v1012
          %v1068 = vunpack.c.l.b16 %v1013
          %v1069 = vunpack.c.l.b16 %v1014
          %v1070 = vunpack.c.l.b16 %v1015
          %v1071 = vunpack.c.l.b16 %v1016
          %v1072 = vunpack.c.l.b16 %v1017
          %v1073 = vunpack.c.l.b16 %v1018
          %v1074 = vunpack.c.l.b16 %v1019
          %v1075 = vunpack.c.l.b16 %v1020
          %v1076 = vunpack.c.l.b16 %v1021
          %v1077 = vunpack.c.l.b16 %v1022
          %v1078 = vunpack.c.l.b16 %v1023
          %v1079 = vunpack.c.l.b16 %v1024
          %v1080 = vunpack.c.l.b16 %v1025
          %v1081 = vpack.c.b16 %v1058, %v1057
          %v1082 = vpack.c.b16 %v1060, %v1059
          %v1083 = vpack.c.b16 %v1062, %v1061
          %v1084 = vpack.c.b16 %v1064, %v1063
          %v1085 = vpack.c.b16 %v1066, %v1065
          %v1086 = vpack.c.b16 %v1068, %v1067
          %v1087 = vpack.c.b16 %v1070, %v1069
          %v1088 = vpack.c.b16 %v1072, %v1071
          %v1089 = vpack.c.b16 %v1074, %v1073
          %v1090 = vpack.c.b16 %v1076, %v1075
          %v1091 = vpack.c.b16 %v1078, %v1077
          %v1092 = vpack.c.b16 %v1080, %v1079
          %vm1105 = vcmask 523264
          %v1107 = vsel %vm1105, %v1001, 0
          %1109 = vmatprep.subr.bf16.mxu0 0
          %1110 = vmatpush1.bf16.msra.mxu0 %v1088
          %1111 = vmatprep.subr.bf16.mxu0 0
          %1112 = vmatpush1.bf16.msra.mxu0 %v1087
          %1113 = vmatprep.subr.bf16.mxu0 0
          %1114 = vmatpush1.bf16.msra.mxu0 %v1086
          %1115 = vmatprep.subr.bf16.mxu0 0
          %1116 = vmatpush1.bf16.msra.mxu0 %v1085
          %1117 = vmatprep.subr.bf16.mxu0 0
          %1118 = vmatpush1.bf16.msra.mxu0 %v1084
          %1119 = vmatprep.subr.bf16.mxu0 0
          %1120 = vmatpush1.bf16.msra.mxu0 %v1083
          %1121 = vmatprep.subr.bf16.mxu0 0
          %1122 = vmatpush1.bf16.msra.mxu0 %v1082
          %1123 = vmatprep.subr.bf16.mxu0 0
          %1124 = vmatpush1.bf16.msra.mxu0 %v1081
          %1125 = vmatprep.subr.bf16.mxu0 0
          %1126 = vmatpush2.bf16.msra.mxu0 0
          %1127 = vmatprep.subr.bf16.mxu0 0
          %1128 = vmatpush2.bf16.msra.mxu0 0
          %1129 = vmatprep.subr.bf16.mxu0 0
          %1130 = vmatpush2.bf16.msra.mxu0 0
          %1131 = vmatprep.subr.bf16.mxu0 0
          %1132 = vmatpush2.bf16.msra.mxu0 0
          %1133 = vmatprep.subr.bf16.mxu0 0
          %1134 = vmatpush2.bf16.msra.mxu0 %v1092
          %1135 = vmatprep.subr.bf16.mxu0 0
          %1136 = vmatpush2.bf16.msra.mxu0 %v1091
          %1137 = vmatprep.subr.bf16.mxu0 0
          %1138 = vmatpush2.bf16.msra.mxu0 %v1090
          %1139 = vmatprep.subr.bf16.mxu0 0
          %1140 = vmatpush2.bf16.msra.mxu0 %v1089
          %1141 = vmatprep.mubr.bf16.mxu0 %v1107
          %1142 = vmatmul.mubr.bf16.gmra.mxu0 %v1000
          %v1143 = vpop.f32.mrf.mxu0
          %v1144 = vadd.f32 %v1031, %v1143
          %v1145 = vpop.f32.mrf.mxu0
          %v1146 = vpop.f32.mrf.mxu0
          %v1147 = vpop.f32.mrf.mxu0
          %1148 = vdwg.mxu0
          %v1149 = vld [vmem:[%s4] sm:$0x1f]
          %v1150 = vld [vmem:[%s3] sm:$0x1]
          %v1151 = vadd.f32 %v1150, %v1149
          %v1153 = vrot.slane %v1149, 1
          %v1155 = vadd.f32 %v1144, %v1153
          %v1157 = vrot.slane %v1155, 7
          %vm1159 = vcmask 1040384
          %v1160 = vsel %vm1159, %v1151, %v1157
          %vm1161 = vcmask 258048
          %1162 = vst.msk [vmem:[#allocation2] sm:$0x1f] %vm1161, %v1160
        $region120: #{flava_forward.4} parent=115 // pred_fallthru
          _
        %v1163 = vld [vmem:[#allocation2] sm:$0x1f]
        %v1164 = vld [vmem:[%s961] sm:$0x1]
        %v1165 = vld [vmem:[%s964] sm:$0x1]
        %vm1166 = vcmask 258048
        %v1167 = vsel %vm1166, %v1163, 0.0
        %1168 = vadd.xlane.f32.xlu0 %v1167
        %v1169 = vpop.xlane.xlu0 %1168
        %v1170 = vrcp.pop 32.0
        %v1171 = vmul.f32 %v1169, %v1170
        %v1172 = vsub.f32 %v1163, %v1171
        %v1173 = vmul.f32 %v1172, %v1172
        %v1174 = vsel %vm1166, %v1173, 0.0
        %1175 = vadd.xlane.f32.xlu0 %v1174
        %v1176 = vpop.xlane.xlu0 %1175
        %v1177 = vmul.f32 %v1176, %v1170
        %v1178 = vadd.f32 %v1177, 1e-12
        %v1179 = vrsqrt.pop %v1178
        %v1180 = vmul.f32 %v1172, %v1179
        %v1182 = vlaneseq
        %v1183 = vshrl.u32 %v1182, 7
        %v1184 = vsub.s32 0, %v1183
        %v1185 = vrot.slane %v1164, %v1184
        %v1187 = vmul.f32 %v1180, %v1185
        %v1189 = vlaneseq
        %v1190 = vshrl.u32 %v1189, 7
        %v1191 = vsub.s32 0, %v1190
        %v1192 = vrot.slane %v1165, %v1191
        %v1194 = vadd.f32 %v1187, %v1192
        %v1195 = vpack.c.bf16 %v1194, %v1194
        %v1196 = vld [vmem:[%s947] sm:$0xf]
        %v1197 = vld [vmem:[%s947 + $0x4] sm:$0xf]
        %v1198 = vld [vmem:[%s947 + $0x8] sm:$0xf]
        %v1199 = vld [vmem:[%s947 + $0xc] sm:$0xf]
        %v1200 = vld [vmem:[%s950] sm:$0x1]
        %v1202 = vlaneseq
        %v1203 = vshrl.u32 %v1202, 7
        %v1204 = vsub.s32 0, %v1203
        %v1205 = vrot.slane %v1200, %v1204
        %v1211 = vunpack.c.l.b16 %v1196
        %v1212 = vunpack.c.l.b16 %v1197
        %v1213 = vunpack.c.l.b16 %v1198
        %v1214 = vunpack.c.l.b16 %v1199
        %v1215 = vpack.c.b16 %v1212, %v1211
        %v1216 = vpack.c.b16 %v1214, %v1213
        %vm1219 = vcmask 261120
        %v1221 = vsel %vm1219, %v1195, 0
        %1223 = vmatprep.subr.bf16.mxu0 0
        %1224 = vmatpush1.bf16.msra.mxu0 0
        %1225 = vmatprep.subr.bf16.mxu0 0
        %1226 = vmatpush1.bf16.msra.mxu0 0
        %1227 = vmatprep.subr.bf16.mxu0 0
        %1228 = vmatpush1.bf16.msra.mxu0 0
        %1229 = vmatprep.subr.bf16.mxu0 0
        %1230 = vmatpush1.bf16.msra.mxu0 0
        %1231 = vmatprep.subr.bf16.mxu0 0
        %1232 = vmatpush1.bf16.msra.mxu0 0
        %1233 = vmatprep.subr.bf16.mxu0 0
        %1234 = vmatpush1.bf16.msra.mxu0 0
        %1235 = vmatprep.subr.bf16.mxu0 0
        %1236 = vmatpush1.bf16.msra.mxu0 %v1216
        %1237 = vmatprep.subr.bf16.mxu0 0
        %1238 = vmatpush1.bf16.msra.mxu0 %v1215
        %1239 = vmatprep.subr.bf16.mxu0 0
        %1240 = vmatpush2.bf16.msra.mxu0 0
        %1241 = vmatprep.subr.bf16.mxu0 0
        %1242 = vmatpush2.bf16.msra.mxu0 0
        %1243 = vmatprep.subr.bf16.mxu0 0
        %1244 = vmatpush2.bf16.msra.mxu0 0
        %1245 = vmatprep.subr.bf16.mxu0 0
        %1246 = vmatpush2.bf16.msra.mxu0 0
        %1247 = vmatprep.subr.bf16.mxu0 0
        %1248 = vmatpush2.bf16.msra.mxu0 0
        %1249 = vmatprep.subr.bf16.mxu0 0
        %1250 = vmatpush2.bf16.msra.mxu0 0
        %1251 = vmatprep.subr.bf16.mxu0 0
        %1252 = vmatpush2.bf16.msra.mxu0 0
        %1253 = vmatprep.subr.bf16.mxu0 0
        %1254 = vmatpush2.bf16.msra.mxu0 0
        %1255 = vmatprep.mubr.bf16.mxu0 0
        %1256 = vmatmul.mubr.bf16.gmra.mxu0 %v1221
        %v1257 = vpop.f32.mrf.mxu0
        %v1258 = vadd.f32 %v1205, %v1257
        %v1259 = vpop.f32.mrf.mxu0
        %v1260 = vpop.f32.mrf.mxu0
        %v1261 = vpop.f32.mrf.mxu0
        %1262 = vdwg.mxu0
        %v1263 = vld [vmem:[%s942] sm:$0x1]
        %v1264 = vpack.c.bf16 %v1258, %v1258
        %1266 = vrot.lane.b32.xlu0 %v1264, 96
        %v1267 = vpop.permute.xlu0 %1266
        %vm1268 = vcmask 64512
        %v1270 = vsel %vm1268, %v1264, 0
        %v1273 = vsel %vm1268, %v1267, 0
        %1275 = vmatprep.subr.bf16.mxu0 0
        %1276 = vmatpush1.bf16.xpose.msra.mxu0 0
        %1277 = vmatprep.subr.bf16.mxu0 0
        %1278 = vmatpush1.bf16.xpose.msra.mxu0 0
        %1279 = vmatprep.subr.bf16.mxu0 0
        %1280 = vmatpush1.bf16.xpose.msra.mxu0 0
        %1281 = vmatprep.subr.bf16.mxu0 0
        %1282 = vmatpush1.bf16.xpose.msra.mxu0 0
        %1283 = vmatprep.subr.bf16.mxu0 0
        %1284 = vmatpush1.bf16.xpose.msra.mxu0 0
        %1285 = vmatprep.subr.bf16.mxu0 0
        %1286 = vmatpush1.bf16.xpose.msra.mxu0 0
        %1287 = vmatprep.subr.bf16.mxu0 0
        %1288 = vmatpush1.bf16.xpose.msra.mxu0 0
        %1289 = vmatprep.subr.bf16.mxu0 0
        %1290 = vmatpush1.bf16.xpose.msra.mxu0 %v1273
        %1291 = vmatprep.subr.bf16.mxu0 0
        %1292 = vmatpush2.bf16.xpose.msra.mxu0 0
        %1293 = vmatprep.subr.bf16.mxu0 0
        %1294 = vmatpush2.bf16.xpose.msra.mxu0 0
        %1295 = vmatprep.subr.bf16.mxu0 0
        %1296 = vmatpush2.bf16.xpose.msra.mxu0 0
        %1297 = vmatprep.subr.bf16.mxu0 0
        %1298 = vmatpush2.bf16.xpose.msra.mxu0 0
        %1299 = vmatprep.subr.bf16.mxu0 0
        %1300 = vmatpush2.bf16.xpose.msra.mxu0 0
        %1301 = vmatprep.subr.bf16.mxu0 0
        %1302 = vmatpush2.bf16.xpose.msra.mxu0 0
        %1303 = vmatprep.subr.bf16.mxu0 0
        %1304 = vmatpush2.bf16.xpose.msra.mxu0 0
        %1305 = vmatprep.subr.bf16.mxu0 0
        %1306 = vmatpush2.bf16.xpose.msra.mxu0 0
        %1307 = vmatprep.mubr.bf16.mxu0 0
        %1308 = vmatmul.mubr.bf16.gmra.mxu0 %v1270
        %v1309 = vpop.f32.mrf.mxu0
        %v1310 = vadd.f32 0.0, %v1309
        %v1311 = vpop.f32.mrf.mxu0
        %v1312 = vpop.f32.mrf.mxu0
        %v1313 = vpop.f32.mrf.mxu0
        %1314 = vdwg.mxu0
        %1315 = vrot.lane.b32.xlu0 %v1264, 120
        %v1316 = vpop.permute.xlu0 %1315
        %1317 = vrot.lane.b32.xlu0 %v1264, 88
        %v1318 = vpop.permute.xlu0 %1317
        %v1320 = vsel %vm1268, %v1316, 0
        %v1323 = vsel %vm1268, %v1318, 0
        %1325 = vmatprep.subr.bf16.mxu0 0
        %1326 = vmatpush1.bf16.xpose.msra.mxu0 0
        %1327 = vmatprep.subr.bf16.mxu0 0
        %1328 = vmatpush1.bf16.xpose.msra.mxu0 0
        %1329 = vmatprep.subr.bf16.mxu0 0
        %1330 = vmatpush1.bf16.xpose.msra.mxu0 0
        %1331 = vmatprep.subr.bf16.mxu0 0
        %1332 = vmatpush1.bf16.xpose.msra.mxu0 0
        %1333 = vmatprep.subr.bf16.mxu0 0
        %1334 = vmatpush1.bf16.xpose.msra.mxu0 0
        %1335 = vmatprep.subr.bf16.mxu0 0
        %1336 = vmatpush1.bf16.xpose.msra.mxu0 0
        %1337 = vmatprep.subr.bf16.mxu0 0
        %1338 = vmatpush1.bf16.xpose.msra.mxu0 0
        %1339 = vmatprep.subr.bf16.mxu0 0
        %1340 = vmatpush1.bf16.xpose.msra.mxu0 %v1323
        %1341 = vmatprep.subr.bf16.mxu0 0
        %1342 = vmatpush2.bf16.xpose.msra.mxu0 0
        %1343 = vmatprep.subr.bf16.mxu0 0
        %1344 = vmatpush2.bf16.xpose.msra.mxu0 0
        %1345 = vmatprep.subr.bf16.mxu0 0
        %1346 = vmatpush2.bf16.xpose.msra.mxu0 0
        %1347 = vmatprep.subr.bf16.mxu0 0
        %1348 = vmatpush2.bf16.xpose.msra.mxu0 0
        %1349 = vmatprep.subr.bf16.mxu0 0
        %1350 = vmatpush2.bf16.xpose.msra.mxu0 0
        %1351 = vmatprep.subr.bf16.mxu0 0
        %1352 = vmatpush2.bf16.xpose.msra.mxu0 0
        %1353 = vmatprep.subr.bf16.mxu0 0
        %1354 = vmatpush2.bf16.xpose.msra.mxu0 0
        %1355 = vmatprep.subr.bf16.mxu0 0
        %1356 = vmatpush2.bf16.xpose.msra.mxu0 0
        %1357 = vmatprep.mubr.bf16.mxu0 0
        %1358 = vmatmul.mubr.bf16.gmra.mxu0 %v1320
        %v1359 = vpop.f32.mrf.mxu0
        %v1360 = vadd.f32 0.0, %v1359
        %v1361 = vpop.f32.mrf.mxu0
        %v1362 = vpop.f32.mrf.mxu0
        %v1363 = vpop.f32.mrf.mxu0
        %1364 = vdwg.mxu0
        %1365 = vrot.lane.b32.xlu0 %v1264, 112
        %v1366 = vpop.permute.xlu0 %1365
        %1367 = vrot.lane.b32.xlu0 %v1264, 80
        %v1368 = vpop.permute.xlu0 %1367
        %v1370 = vsel %vm1268, %v1366, 0
        %v1373 = vsel %vm1268, %v1368, 0
        %1375 = vmatprep.subr.bf16.mxu0 0
        %1376 = vmatpush1.bf16.xpose.msra.mxu0 0
        %1377 = vmatprep.subr.bf16.mxu0 0
        %1378 = vmatpush1.bf16.xpose.msra.mxu0 0
        %1379 = vmatprep.subr.bf16.mxu0 0
        %1380 = vmatpush1.bf16.xpose.msra.mxu0 0
        %1381 = vmatprep.subr.bf16.mxu0 0
        %1382 = vmatpush1.bf16.xpose.msra.mxu0 0
        %1383 = vmatprep.subr.bf16.mxu0 0
        %1384 = vmatpush1.bf16.xpose.msra.mxu0 0
        %1385 = vmatprep.subr.bf16.mxu0 0
        %1386 = vmatpush1.bf16.xpose.msra.mxu0 0
        %1387 = vmatprep.subr.bf16.mxu0 0
        %1388 = vmatpush1.bf16.xpose.msra.mxu0 0
        %1389 = vmatprep.subr.bf16.mxu0 0
        %1390 = vmatpush1.bf16.xpose.msra.mxu0 %v1373
        %1391 = vmatprep.subr.bf16.mxu0 0
        %1392 = vmatpush2.bf16.xpose.msra.mxu0 0
        %1393 = vmatprep.subr.bf16.mxu0 0
        %1394 = vmatpush2.bf16.xpose.msra.mxu0 0
        %1395 = vmatprep.subr.bf16.mxu0 0
        %1396 = vmatpush2.bf16.xpose.msra.mxu0 0
        %1397 = vmatprep.subr.bf16.mxu0 0
        %1398 = vmatpush2.bf16.xpose.msra.mxu0 0
        %1399 = vmatprep.subr.bf16.mxu0 0
        %1400 = vmatpush2.bf16.xpose.msra.mxu0 0
        %1401 = vmatprep.subr.bf16.mxu0 0
        %1402 = vmatpush2.bf16.xpose.msra.mxu0 0
        %1403 = vmatprep.subr.bf16.mxu0 0
        %1404 = vmatpush2.bf16.xpose.msra.mxu0 0
        %1405 = vmatprep.subr.bf16.mxu0 0
        %1406 = vmatpush2.bf16.xpose.msra.mxu0 0
        %1407 = vmatprep.mubr.bf16.mxu0 0
        %1408 = vmatmul.mubr.bf16.gmra.mxu0 %v1370
        %v1409 = vpop.f32.mrf.mxu0
        %v1410 = vadd.f32 0.0, %v1409
        %v1411 = vpop.f32.mrf.mxu0
        %v1412 = vpop.f32.mrf.mxu0
        %v1413 = vpop.f32.mrf.mxu0
        %1414 = vdwg.mxu0
        %1415 = vrot.lane.b32.xlu0 %v1264, 104
        %v1416 = vpop.permute.xlu0 %1415
        %1417 = vrot.lane.b32.xlu0 %v1264, 72
        %v1418 = vpop.permute.xlu0 %1417
        %v1420 = vsel %vm1268, %v1416, 0
        %v1423 = vsel %vm1268, %v1418, 0
        %1425 = vmatprep.subr.bf16.mxu0 0
        %1426 = vmatpush1.bf16.xpose.msra.mxu0 0
        %1427 = vmatprep.subr.bf16.mxu0 0
        %1428 = vmatpush1.bf16.xpose.msra.mxu0 0
        %1429 = vmatprep.subr.bf16.mxu0 0
        %1430 = vmatpush1.bf16.xpose.msra.mxu0 0
        %1431 = vmatprep.subr.bf16.mxu0 0
        %1432 = vmatpush1.bf16.xpose.msra.mxu0 0
        %1433 = vmatprep.subr.bf16.mxu0 0
        %1434 = vmatpush1.bf16.xpose.msra.mxu0 0
        %1435 = vmatprep.subr.bf16.mxu0 0
        %1436 = vmatpush1.bf16.xpose.msra.mxu0 0
        %1437 = vmatprep.subr.bf16.mxu0 0
        %1438 = vmatpush1.bf16.xpose.msra.mxu0 0
        %1439 = vmatprep.subr.bf16.mxu0 0
        %1440 = vmatpush1.bf16.xpose.msra.mxu0 %v1423
        %1441 = vmatprep.subr.bf16.mxu0 0
        %1442 = vmatpush2.bf16.xpose.msra.mxu0 0
        %1443 = vmatprep.subr.bf16.mxu0 0
        %1444 = vmatpush2.bf16.xpose.msra.mxu0 0
        %1445 = vmatprep.subr.bf16.mxu0 0
        %1446 = vmatpush2.bf16.xpose.msra.mxu0 0
        %1447 = vmatprep.subr.bf16.mxu0 0
        %1448 = vmatpush2.bf16.xpose.msra.mxu0 0
        %1449 = vmatprep.subr.bf16.mxu0 0
        %1450 = vmatpush2.bf16.xpose.msra.mxu0 0
        %1451 = vmatprep.subr.bf16.mxu0 0
        %1452 = vmatpush2.bf16.xpose.msra.mxu0 0
        %1453 = vmatprep.subr.bf16.mxu0 0
        %1454 = vmatpush2.bf16.xpose.msra.mxu0 0
        %1455 = vmatprep.subr.bf16.mxu0 0
        %1456 = vmatpush2.bf16.xpose.msra.mxu0 0
        %1457 = vmatprep.mubr.bf16.mxu0 0
        %1458 = vmatmul.mubr.bf16.gmra.mxu0 %v1420
        %v1459 = vpop.f32.mrf.mxu0
        %v1460 = vadd.f32 0.0, %v1459
        %v1461 = vpop.f32.mrf.mxu0
        %v1462 = vpop.f32.mrf.mxu0
        %v1463 = vpop.f32.mrf.mxu0
        %1464 = vdwg.mxu0
        %v1466 = vrot.slane %v1360, 3
        %v1469 = vrot.slane %v1410, 6
        %v1472 = vrot.slane %v1460, 1
        %vm1474 = vcmask 1044480
        %v1475 = vsel %vm1474, %v1310, %v1466
        %vm1476 = vcmask 1041408
        %v1477 = vsel %vm1476, %v1466, %v1469
        %vm1478 = vcmask 1046528
        %v1479 = vsel %vm1478, %v1477, %v1472
        %v1481 = vlaneseq
        %v1482 = vshrl.u32 %v1481, 7
        %v1483 = vsub.s32 0, %v1482
        %v1484 = vrot.slane %v1263, %v1483
        %v1486 = vadd.f32 %v1475, %v1484
        %v1487 = vadd.f32 %v1479, %v1484
        %v1488 = vadd.f32 %v1472, %v1484
        %vm1489 = vcmask 39936
        %v1490 = vsel %vm1489, %v1486, -inf
        %1491 = vmax.xlane.f32.xlu0 %v1490
        %v1492 = vpop.xlane.xlu0 %1491
        %v1493 = vsel %vm1489, %v1487, -inf
        %1494 = vmax.xlane.f32.xlu0 %v1493
        %v1495 = vpop.xlane.xlu0 %1494
        %vm1496 = vcmask 35840
        %v1497 = vsel %vm1496, %v1488, -inf
        %1498 = vmax.xlane.f32.xlu0 %v1497
        %v1499 = vpop.xlane.xlu0 %1498
        %v1500 = vsub.f32 %v1486, %v1492
        %v1501 = vsub.f32 %v1487, %v1495
        %v1502 = vsub.f32 %v1488, %v1499
        %v1503 = vmul.f32 %v1500, 1.442695
        %v1504 = vpow.pop %v1503
        %v1505 = vmul.f32 %v1501, 1.442695
        %v1506 = vpow.pop %v1505
        %v1507 = vmul.f32 %v1502, 1.442695
        %v1508 = vpow.pop %v1507
        %v1509 = vsel %vm1489, %v1504, 0.0
        %1510 = vadd.xlane.f32.xlu0 %v1509
        %v1511 = vpop.xlane.xlu0 %1510
        %v1512 = vsel %vm1489, %v1506, 0.0
        %1513 = vadd.xlane.f32.xlu0 %v1512
        %v1514 = vpop.xlane.xlu0 %1513
        %v1515 = vsel %vm1496, %v1508, 0.0
        %1516 = vadd.xlane.f32.xlu0 %v1515
        %v1517 = vpop.xlane.xlu0 %1516
        %v1518 = vrcp.pop %v1511
        %v1519 = vrcp.pop %v1514
        %v1520 = vrcp.pop %v1517
        %v1521 = vmul.f32 %v1504, %v1518
        %v1522 = vmul.f32 %v1506, %v1519
        %v1523 = vmul.f32 %v1508, %v1520
        %v1524 = vpack.c.bf16 %v1521, %v1521
        %1525 = vrot.lane.b32.xlu0 %v1264, 64
        %v1526 = vpop.permute.xlu0 %1525
        %v1528 = vsel %vm1489, %v1524, 0
        %vm1530 = vcmask 1042432
        %v1531 = vsel %vm1476, 4294967295, 65535
        %v1532 = vsel %vm1530, %v1531, 0
        %v1534 = vand.u32 %v1526, %v1532
        %1536 = vmatprep.subr.bf16.mxu0 0
        %1537 = vmatpush1.bf16.msra.mxu0 0
        %1538 = vmatprep.subr.bf16.mxu0 0
        %1539 = vmatpush1.bf16.msra.mxu0 0
        %1540 = vmatprep.subr.bf16.mxu0 0
        %1541 = vmatpush1.bf16.msra.mxu0 0
        %1542 = vmatprep.subr.bf16.mxu0 0
        %1543 = vmatpush1.bf16.msra.mxu0 0
        %1544 = vmatprep.subr.bf16.mxu0 0
        %1545 = vmatpush1.bf16.msra.mxu0 0
        %1546 = vmatprep.subr.bf16.mxu0 0
        %1547 = vmatpush1.bf16.msra.mxu0 0
        %1548 = vmatprep.subr.bf16.mxu0 0
        %1549 = vmatpush1.bf16.msra.mxu0 0
        %1550 = vmatprep.subr.bf16.mxu0 0
        %1551 = vmatpush1.bf16.msra.mxu0 %v1534
        %1552 = vmatprep.subr.bf16.mxu0 0
        %1553 = vmatpush2.bf16.msra.mxu0 0
        %1554 = vmatprep.subr.bf16.mxu0 0
        %1555 = vmatpush2.bf16.msra.mxu0 0
        %1556 = vmatprep.subr.bf16.mxu0 0
        %1557 = vmatpush2.bf16.msra.mxu0 0
        %1558 = vmatprep.subr.bf16.mxu0 0
        %1559 = vmatpush2.bf16.msra.mxu0 0
        %1560 = vmatprep.subr.bf16.mxu0 0
        %1561 = vmatpush2.bf16.msra.mxu0 0
        %1562 = vmatprep.subr.bf16.mxu0 0
        %1563 = vmatpush2.bf16.msra.mxu0 0
        %1564 = vmatprep.subr.bf16.mxu0 0
        %1565 = vmatpush2.bf16.msra.mxu0 0
        %1566 = vmatprep.subr.bf16.mxu0 0
        %1567 = vmatpush2.bf16.msra.mxu0 0
        %1568 = vmatprep.mubr.bf16.mxu0 0
        %1569 = vmatmul.mubr.bf16.gmra.mxu0 %v1528
        %v1570 = vpop.f32.mrf.mxu0
        %v1571 = vadd.f32 0.0, %v1570
        %v1572 = vpop.f32.mrf.mxu0
        %v1573 = vpop.f32.mrf.mxu0
        %v1574 = vpop.f32.mrf.mxu0
        %1575 = vdwg.mxu0
        %v1576 = vpack.c.bf16 %v1522, %v1521
        %v1578 = vshrl.u32 %v1576, 16
        %v1580 = vrot.slane %v1578, 2
        %v1581 = vshll.u32 %v1576, 16
        %v1583 = vrot.slane %v1581, 3
        %v1584 = vor.u32 %v1580, %v1583
        %1585 = vrot.lane.b32.xlu0 %v1264, 56
        %v1586 = vpop.permute.xlu0 %1585
        %v1588 = vsel %vm1489, %v1584, 0
        %v1591 = vand.u32 %v1586, %v1532
        %1593 = vmatprep.subr.bf16.mxu0 0
        %1594 = vmatpush1.bf16.msra.mxu0 0
        %1595 = vmatprep.subr.bf16.mxu0 0
        %1596 = vmatpush1.bf16.msra.mxu0 0
        %1597 = vmatprep.subr.bf16.mxu0 0
        %1598 = vmatpush1.bf16.msra.mxu0 0
        %1599 = vmatprep.subr.bf16.mxu0 0
        %1600 = vmatpush1.bf16.msra.mxu0 0
        %1601 = vmatprep.subr.bf16.mxu0 0
        %1602 = vmatpush1.bf16.msra.mxu0 0
        %1603 = vmatprep.subr.bf16.mxu0 0
        %1604 = vmatpush1.bf16.msra.mxu0 0
        %1605 = vmatprep.subr.bf16.mxu0 0
        %1606 = vmatpush1.bf16.msra.mxu0 0
        %1607 = vmatprep.subr.bf16.mxu0 0
        %1608 = vmatpush1.bf16.msra.mxu0 %v1591
        %1609 = vmatprep.subr.bf16.mxu0 0
        %1610 = vmatpush2.bf16.msra.mxu0 0
        %1611 = vmatprep.subr.bf16.mxu0 0
        %1612 = vmatpush2.bf16.msra.mxu0 0
        %1613 = vmatprep.subr.bf16.mxu0 0
        %1614 = vmatpush2.bf16.msra.mxu0 0
        %1615 = vmatprep.subr.bf16.mxu0 0
        %1616 = vmatpush2.bf16.msra.mxu0 0
        %1617 = vmatprep.subr.bf16.mxu0 0
        %1618 = vmatpush2.bf16.msra.mxu0 0
        %1619 = vmatprep.subr.bf16.mxu0 0
        %1620 = vmatpush2.bf16.msra.mxu0 0
        %1621 = vmatprep.subr.bf16.mxu0 0
        %1622 = vmatpush2.bf16.msra.mxu0 0
        %1623 = vmatprep.subr.bf16.mxu0 0
        %1624 = vmatpush2.bf16.msra.mxu0 0
        %1625 = vmatprep.mubr.bf16.mxu0 0
        %1626 = vmatmul.mubr.bf16.gmra.mxu0 %v1588
        %v1627 = vpop.f32.mrf.mxu0
        %v1628 = vadd.f32 0.0, %v1627
        %v1629 = vpop.f32.mrf.mxu0
        %v1630 = vpop.f32.mrf.mxu0
        %v1631 = vpop.f32.mrf.mxu0
        %1632 = vdwg.mxu0
        %v1633 = vpack.c.bf16 %v1522, %v1522
        %v1635 = vrot.slane %v1633, 1
        %1636 = vrot.lane.b32.xlu0 %v1264, 48
        %v1637 = vpop.permute.xlu0 %1636
        %v1639 = vsel %vm1489, %v1635, 0
        %v1642 = vand.u32 %v1637, %v1532
        %1644 = vmatprep.subr.bf16.mxu0 0
        %1645 = vmatpush1.bf16.msra.mxu0 0
        %1646 = vmatprep.subr.bf16.mxu0 0
        %1647 = vmatpush1.bf16.msra.mxu0 0
        %1648 = vmatprep.subr.bf16.mxu0 0
        %1649 = vmatpush1.bf16.msra.mxu0 0
        %1650 = vmatprep.subr.bf16.mxu0 0
        %1651 = vmatpush1.bf16.msra.mxu0 0
        %1652 = vmatprep.subr.bf16.mxu0 0
        %1653 = vmatpush1.bf16.msra.mxu0 0
        %1654 = vmatprep.subr.bf16.mxu0 0
        %1655 = vmatpush1.bf16.msra.mxu0 0
        %1656 = vmatprep.subr.bf16.mxu0 0
        %1657 = vmatpush1.bf16.msra.mxu0 0
        %1658 = vmatprep.subr.bf16.mxu0 0
        %1659 = vmatpush1.bf16.msra.mxu0 %v1642
        %1660 = vmatprep.subr.bf16.mxu0 0
        %1661 = vmatpush2.bf16.msra.mxu0 0
        %1662 = vmatprep.subr.bf16.mxu0 0
        %1663 = vmatpush2.bf16.msra.mxu0 0
        %1664 = vmatprep.subr.bf16.mxu0 0
        %1665 = vmatpush2.bf16.msra.mxu0 0
        %1666 = vmatprep.subr.bf16.mxu0 0
        %1667 = vmatpush2.bf16.msra.mxu0 0
        %1668 = vmatprep.subr.bf16.mxu0 0
        %1669 = vmatpush2.bf16.msra.mxu0 0
        %1670 = vmatprep.subr.bf16.mxu0 0
        %1671 = vmatpush2.bf16.msra.mxu0 0
        %1672 = vmatprep.subr.bf16.mxu0 0
        %1673 = vmatpush2.bf16.msra.mxu0 0
        %1674 = vmatprep.subr.bf16.mxu0 0
        %1675 = vmatpush2.bf16.msra.mxu0 0
        %1676 = vmatprep.mubr.bf16.mxu0 0
        %1677 = vmatmul.mubr.bf16.gmra.mxu0 %v1639
        %v1678 = vpop.f32.mrf.mxu0
        %v1679 = vadd.f32 0.0, %v1678
        %v1680 = vpop.f32.mrf.mxu0
        %v1681 = vpop.f32.mrf.mxu0
        %v1682 = vpop.f32.mrf.mxu0
        %1683 = vdwg.mxu0
        %v1684 = vpack.c.bf16 %v1523, %v1522
        %v1686 = vshrl.u32 %v1684, 16
        %v1688 = vrot.slane %v1686, 3
        %v1689 = vshll.u32 %v1684, 16
        %v1691 = vrot.slane %v1689, 4
        %v1692 = vor.u32 %v1688, %v1691
        %1693 = vrot.lane.b32.xlu0 %v1264, 40
        %v1694 = vpop.permute.xlu0 %1693
        %v1696 = vsel %vm1489, %v1692, 0
        %v1699 = vand.u32 %v1694, %v1532
        %1701 = vmatprep.subr.bf16.mxu0 0
        %1702 = vmatpush1.bf16.msra.mxu0 0
        %1703 = vmatprep.subr.bf16.mxu0 0
        %1704 = vmatpush1.bf16.msra.mxu0 0
        %1705 = vmatprep.subr.bf16.mxu0 0
        %1706 = vmatpush1.bf16.msra.mxu0 0
        %1707 = vmatprep.subr.bf16.mxu0 0
        %1708 = vmatpush1.bf16.msra.mxu0 0
        %1709 = vmatprep.subr.bf16.mxu0 0
        %1710 = vmatpush1.bf16.msra.mxu0 0
        %1711 = vmatprep.subr.bf16.mxu0 0
        %1712 = vmatpush1.bf16.msra.mxu0 0
        %1713 = vmatprep.subr.bf16.mxu0 0
        %1714 = vmatpush1.bf16.msra.mxu0 0
        %1715 = vmatprep.subr.bf16.mxu0 0
        %1716 = vmatpush1.bf16.msra.mxu0 %v1699
        %1717 = vmatprep.subr.bf16.mxu0 0
        %1718 = vmatpush2.bf16.msra.mxu0 0
        %1719 = vmatprep.subr.bf16.mxu0 0
        %1720 = vmatpush2.bf16.msra.mxu0 0
        %1721 = vmatprep.subr.bf16.mxu0 0
        %1722 = vmatpush2.bf16.msra.mxu0 0
        %1723 = vmatprep.subr.bf16.mxu0 0
        %1724 = vmatpush2.bf16.msra.mxu0 0
        %1725 = vmatprep.subr.bf16.mxu0 0
        %1726 = vmatpush2.bf16.msra.mxu0 0
        %1727 = vmatprep.subr.bf16.mxu0 0
        %1728 = vmatpush2.bf16.msra.mxu0 0
        %1729 = vmatprep.subr.bf16.mxu0 0
        %1730 = vmatpush2.bf16.msra.mxu0 0
        %1731 = vmatprep.subr.bf16.mxu0 0
        %1732 = vmatpush2.bf16.msra.mxu0 0
        %1733 = vmatprep.mubr.bf16.mxu0 0
        %1734 = vmatmul.mubr.bf16.gmra.mxu0 %v1696
        %v1735 = vpop.f32.mrf.mxu0
        %v1736 = vadd.f32 0.0, %v1735
        %v1737 = vpop.f32.mrf.mxu0
        %v1738 = vpop.f32.mrf.mxu0
        %v1739 = vpop.f32.mrf.mxu0
        %1740 = vdwg.mxu0
        %1742 = vrot.lane.b32.xlu0 %v1628, 8
        %v1743 = vpop.permute.xlu0 %1742
        %1746 = vrot.lane.b32.xlu0 %v1679, 16
        %v1747 = vpop.permute.xlu0 %1746
        %1750 = vrot.lane.b32.xlu0 %v1736, 24
        %v1751 = vpop.permute.xlu0 %1750
        %v1753 = vsel %vm1268, %v1571, %v1743
        %vm1754 = vcmask 130048
        %v1755 = vsel %vm1754, %v1753, %v1747
        %vm1756 = vcmask 195584
        %v1757 = vsel %vm1756, %v1755, %v1751
        %v1758 = vpack.c.bf16 %v1757, %v1757
        %v1759 = vld [vmem:[%s955] sm:$0xf]
        %v1760 = vld [vmem:[%s955 + $0x4] sm:$0xf]
        %v1761 = vld [vmem:[%s955 + $0x8] sm:$0xf]
        %v1762 = vld [vmem:[%s955 + $0xc] sm:$0xf]
        %v1763 = vld [vmem:[%s958] sm:$0x1]
        %v1765 = vlaneseq
        %v1766 = vshrl.u32 %v1765, 7
        %v1767 = vsub.s32 0, %v1766
        %v1768 = vrot.slane %v1763, %v1767
        %v1774 = vunpack.c.l.b16 %v1759
        %v1775 = vunpack.c.l.b16 %v1760
        %v1776 = vunpack.c.l.b16 %v1761
        %v1777 = vunpack.c.l.b16 %v1762
        %v1778 = vpack.c.b16 %v1775, %v1774
        %v1779 = vpack.c.b16 %v1777, %v1776
        %v1783 = vsel %vm1219, %v1758, 0
        %1785 = vmatprep.subr.bf16.mxu0 0
        %1786 = vmatpush1.bf16.msra.mxu0 0
        %1787 = vmatprep.subr.bf16.mxu0 0
        %1788 = vmatpush1.bf16.msra.mxu0 0
        %1789 = vmatprep.subr.bf16.mxu0 0
        %1790 = vmatpush1.bf16.msra.mxu0 0
        %1791 = vmatprep.subr.bf16.mxu0 0
        %1792 = vmatpush1.bf16.msra.mxu0 0
        %1793 = vmatprep.subr.bf16.mxu0 0
        %1794 = vmatpush1.bf16.msra.mxu0 0
        %1795 = vmatprep.subr.bf16.mxu0 0
        %1796 = vmatpush1.bf16.msra.mxu0 0
        %1797 = vmatprep.subr.bf16.mxu0 0
        %1798 = vmatpush1.bf16.msra.mxu0 %v1779
        %1799 = vmatprep.subr.bf16.mxu0 0
        %1800 = vmatpush1.bf16.msra.mxu0 %v1778
        %1801 = vmatprep.subr.bf16.mxu0 0
        %1802 = vmatpush2.bf16.msra.mxu0 0
        %1803 = vmatprep.subr.bf16.mxu0 0
        %1804 = vmatpush2.bf16.msra.mxu0 0
        %1805 = vmatprep.subr.bf16.mxu0 0
        %1806 = vmatpush2.bf16.msra.mxu0 0
        %1807 = vmatprep.subr.bf16.mxu0 0
        %1808 = vmatpush2.bf16.msra.mxu0 0
        %1809 = vmatprep.subr.bf16.mxu0 0
        %1810 = vmatpush2.bf16.msra.mxu0 0
        %1811 = vmatprep.subr.bf16.mxu0 0
        %1812 = vmatpush2.bf16.msra.mxu0 0
        %1813 = vmatprep.subr.bf16.mxu0 0
        %1814 = vmatpush2.bf16.msra.mxu0 0
        %1815 = vmatprep.subr.bf16.mxu0 0
        %1816 = vmatpush2.bf16.msra.mxu0 0
        %1817 = vmatprep.mubr.bf16.mxu0 0
        %1818 = vmatmul.mubr.bf16.gmra.mxu0 %v1783
        %v1819 = vpop.f32.mrf.mxu0
        %v1820 = vadd.f32 %v1768, %v1819
        %v1821 = vpop.f32.mrf.mxu0
        %v1822 = vpop.f32.mrf.mxu0
        %v1823 = vpop.f32.mrf.mxu0
        %1824 = vdwg.mxu0
        %v1825 = vadd.f32 %v1163, %v1820
        %v1826 = vld [vmem:[%s967] sm:$0x1]
        %v1827 = vld [vmem:[%s970] sm:$0x1]
        %v1828 = vsel %vm1166, %v1825, 0.0
        %1829 = vadd.xlane.f32.xlu0 %v1828
        %v1830 = vpop.xlane.xlu0 %1829
        %v1831 = vmul.f32 %v1830, %v1170
        %v1832 = vsub.f32 %v1825, %v1831
        %v1833 = vmul.f32 %v1832, %v1832
        %v1834 = vsel %vm1166, %v1833, 0.0
        %1835 = vadd.xlane.f32.xlu0 %v1834
        %v1836 = vpop.xlane.xlu0 %1835
        %v1837 = vmul.f32 %v1836, %v1170
        %v1838 = vadd.f32 %v1837, 1e-12
        %v1839 = vrsqrt.pop %v1838
        %v1840 = vmul.f32 %v1832, %v1839
        %v1842 = vlaneseq
        %v1843 = vshrl.u32 %v1842, 7
        %v1844 = vsub.s32 0, %v1843
        %v1845 = vrot.slane %v1826, %v1844
        %v1847 = vmul.f32 %v1840, %v1845
        %v1849 = vlaneseq
        %v1850 = vshrl.u32 %v1849, 7
        %v1851 = vsub.s32 0, %v1850
        %v1852 = vrot.slane %v1827, %v1851
        %v1854 = vadd.f32 %v1847, %v1852
        %v1855 = vpack.c.bf16 %v1854, %v1854
        %v1856 = vld [vmem:[%s975] sm:$0xf]
        %v1857 = vld [vmem:[%s975 + $0x4] sm:$0xf]
        %v1858 = vld [vmem:[%s975 + $0x8] sm:$0xf]
        %v1859 = vld [vmem:[%s975 + $0xc] sm:$0xf]
        %v1860 = vld [vmem:[%s978] sm:$0x1]
        %v1862 = vlaneseq
        %v1863 = vshrl.u32 %v1862, 7
        %v1864 = vsub.s32 0, %v1863
        %v1865 = vrot.slane %v1860, %v1864
        %v1871 = vunpack.c.l.b16 %v1856
        %v1872 = vunpack.c.l.b16 %v1857
        %v1873 = vunpack.c.l.b16 %v1858
        %v1874 = vunpack.c.l.b16 %v1859
        %v1875 = vpack.c.b16 %v1872, %v1871
        %v1876 = vpack.c.b16 %v1874, %v1873
        %v1880 = vsel %vm1219, %v1855, 0
        %1882 = vmatprep.subr.bf16.mxu0 0
        %1883 = vmatpush1.bf16.msra.mxu0 0
        %1884 = vmatprep.subr.bf16.mxu0 0
        %1885 = vmatpush1.bf16.msra.mxu0 0
        %1886 = vmatprep.subr.bf16.mxu0 0
        %1887 = vmatpush1.bf16.msra.mxu0 0
        %1888 = vmatprep.subr.bf16.mxu0 0
        %1889 = vmatpush1.bf16.msra.mxu0 0
        %1890 = vmatprep.subr.bf16.mxu0 0
        %1891 = vmatpush1.bf16.msra.mxu0 0
        %1892 = vmatprep.subr.bf16.mxu0 0
        %1893 = vmatpush1.bf16.msra.mxu0 0
        %1894 = vmatprep.subr.bf16.mxu0 0
        %1895 = vmatpush1.bf16.msra.mxu0 %v1876
        %1896 = vmatprep.subr.bf16.mxu0 0
        %1897 = vmatpush1.bf16.msra.mxu0 %v1875
        %1898 = vmatprep.subr.bf16.mxu0 0
        %1899 = vmatpush2.bf16.msra.mxu0 0
        %1900 = vmatprep.subr.bf16.mxu0 0
        %1901 = vmatpush2.bf16.msra.mxu0 0
        %1902 = vmatprep.subr.bf16.mxu0 0
        %1903 = vmatpush2.bf16.msra.mxu0 0
        %1904 = vmatprep.subr.bf16.mxu0 0
        %1905 = vmatpush2.bf16.msra.mxu0 0
        %1906 = vmatprep.subr.bf16.mxu0 0
        %1907 = vmatpush2.bf16.msra.mxu0 0
        %1908 = vmatprep.subr.bf16.mxu0 0
        %1909 = vmatpush2.bf16.msra.mxu0 0
        %1910 = vmatprep.subr.bf16.mxu0 0
        %1911 = vmatpush2.bf16.msra.mxu0 0
        %1912 = vmatprep.subr.bf16.mxu0 0
        %1913 = vmatpush2.bf16.msra.mxu0 0
        %1914 = vmatprep.mubr.bf16.mxu0 0
        %1915 = vmatmul.mubr.bf16.gmra.mxu0 %v1880
        %v1916 = vpop.f32.mrf.mxu0
        %v1917 = vadd.f32 %v1865, %v1916
        %v1918 = vpop.f32.mrf.mxu0
        %v1919 = vpop.f32.mrf.mxu0
        %v1920 = vpop.f32.mrf.mxu0
        %1921 = vdwg.mxu0
        %v1922 = vmul.f32 %v1917, 0.5
        %v1923 = vmul.f32 %v1917, 0.70710677
        %v1924 = verf.f32.pop %v1923
        %v1925 = vadd.f32 %v1924, 1.0
        %v1926 = vmul.f32 %v1922, %v1925
        %v1927 = vpack.c.bf16 %v1926, %v1926
        %v1928 = vld [vmem:[%s983] sm:$0xf]
        %v1929 = vld [vmem:[%s983 + $0x4] sm:$0xf]
        %v1930 = vld [vmem:[%s983 + $0x8] sm:$0xf]
        %v1931 = vld [vmem:[%s983 + $0xc] sm:$0xf]
        %v1932 = vld [vmem:[%s983 + $0x10] sm:$0xf]
        %v1933 = vld [vmem:[%s983 + $0x14] sm:$0xf]
        %v1934 = vld [vmem:[%s983 + $0x18] sm:$0xf]
        %v1935 = vld [vmem:[%s983 + $0x1c] sm:$0xf]
        %v1936 = vld [vmem:[%s986] sm:$0x1]
        %v1938 = vlaneseq
        %v1939 = vshrl.u32 %v1938, 7
        %v1940 = vsub.s32 0, %v1939
        %v1941 = vrot.slane %v1936, %v1940
        %v1951 = vunpack.c.l.b16 %v1928
        %v1952 = vunpack.c.l.b16 %v1929
        %v1953 = vunpack.c.l.b16 %v1930
        %v1954 = vunpack.c.l.b16 %v1931
        %v1955 = vunpack.c.l.b16 %v1932
        %v1956 = vunpack.c.l.b16 %v1933
        %v1957 = vunpack.c.l.b16 %v1934
        %v1958 = vunpack.c.l.b16 %v1935
        %v1959 = vpack.c.b16 %v1952, %v1951
        %v1960 = vpack.c.b16 %v1954, %v1953
        %v1961 = vpack.c.b16 %v1956, %v1955
        %v1962 = vpack.c.b16 %v1958, %v1957
        %vm1967 = vcmask 523264
        %v1969 = vsel %vm1967, %v1927, 0
        %1971 = vmatprep.subr.bf16.mxu0 0
        %1972 = vmatpush1.bf16.msra.mxu0 0
        %1973 = vmatprep.subr.bf16.mxu0 0
        %1974 = vmatpush1.bf16.msra.mxu0 0
        %1975 = vmatprep.subr.bf16.mxu0 0
        %1976 = vmatpush1.bf16.msra.mxu0 0
        %1977 = vmatprep.subr.bf16.mxu0 0
        %1978 = vmatpush1.bf16.msra.mxu0 0
        %1979 = vmatprep.subr.bf16.mxu0 0
        %1980 = vmatpush1.bf16.msra.mxu0 %v1962
        %1981 = vmatprep.subr.bf16.mxu0 0
        %1982 = vmatpush1.bf16.msra.mxu0 %v1961
        %1983 = vmatprep.subr.bf16.mxu0 0
        %1984 = vmatpush1.bf16.msra.mxu0 %v1960
        %1985 = vmatprep.subr.bf16.mxu0 0
        %1986 = vmatpush1.bf16.msra.mxu0 %v1959
        %1987 = vmatprep.subr.bf16.mxu0 0
        %1988 = vmatpush2.bf16.msra.mxu0 0
        %1989 = vmatprep.subr.bf16.mxu0 0
        %1990 = vmatpush2.bf16.msra.mxu0 0
        %1991 = vmatprep.subr.bf16.mxu0 0
        %1992 = vmatpush2.bf16.msra.mxu0 0
        %1993 = vmatprep.subr.bf16.mxu0 0
        %1994 = vmatpush2.bf16.msra.mxu0 0
        %1995 = vmatprep.subr.bf16.mxu0 0
        %1996 = vmatpush2.bf16.msra.mxu0 0
        %1997 = vmatprep.subr.bf16.mxu0 0
        %1998 = vmatpush2.bf16.msra.mxu0 0
        %1999 = vmatprep.subr.bf16.mxu0 0
        %2000 = vmatpush2.bf16.msra.mxu0 0
        %2001 = vmatprep.subr.bf16.mxu0 0
        %2002 = vmatpush2.bf16.msra.mxu0 0
        %2003 = vmatprep.mubr.bf16.mxu0 0
        %2004 = vmatmul.mubr.bf16.gmra.mxu0 %v1969
        %v2005 = vpop.f32.mrf.mxu0
        %v2006 = vadd.f32 %v1941, %v2005
        %v2007 = vpop.f32.mrf.mxu0
        %v2008 = vpop.f32.mrf.mxu0
        %v2009 = vpop.f32.mrf.mxu0
        %2010 = vdwg.mxu0
        %v2011 = vadd.f32 %v1825, %v2006
        %2012 = vst.msk [vmem:[#allocation2] sm:$0x1f] %vm1166, %v2011
        %p2013 = scmp.eq.s32.totalorder %s45, 1
        // Predicated region
        $region121: #{flava_forward.4} parent=115 // pred_check
          %p2014 = pneg %p2013
        $region122: #{flava_forward.4} parent=115 // pred_check_branch
          %2016 = sbr.rel (%p2014) target = $region124
        $region123: #{flava_forward.4} parent=115 // pred_region
          %v2017 = vld [vmem:[%s18] sm:$0x1]
          %v2018 = vld [vmem:[%s19] sm:$0x1]
          %v2019 = vsel %vm1166, %v2011, 0.0
          %2020 = vadd.xlane.f32.xlu0 %v2019
          %v2021 = vpop.xlane.xlu0 %2020
          %v2022 = vmul.f32 %v2021, %v1170
          %v2023 = vsub.f32 %v2011, %v2022
          %v2024 = vmul.f32 %v2023, %v2023
          %v2025 = vsel %vm1166, %v2024, 0.0
          %2026 = vadd.xlane.f32.xlu0 %v2025
          %v2027 = vpop.xlane.xlu0 %2026
          %v2028 = vmul.f32 %v2027, %v1170
          %v2029 = vadd.f32 %v2028, 1e-12
          %v2030 = vrsqrt.pop %v2029
          %v2031 = vmul.f32 %v2023, %v2030
          %v2033 = vlaneseq
          %v2034 = vshrl.u32 %v2033, 7
          %v2035 = vsub.s32 0, %v2034
          %v2036 = vrot.slane %v2017, %v2035
          %v2038 = vmul.f32 %v2031, %v2036
          %v2040 = vlaneseq
          %v2041 = vshrl.u32 %v2040, 7
          %v2042 = vsub.s32 0, %v2041
          %v2043 = vrot.slane %v2018, %v2042
          %v2045 = vadd.f32 %v2038, %v2043
          %2046 = vst.msk [vmem:[%s990] sm:$0x1f] %vm1166, %v2045
          %v2047 = vld [vmem:[%s20] sm:$0xff]
          %v2048 = vld [vmem:[%s20 + $0x8] sm:$0xff]
          %v2049 = vld [vmem:[%s20 + $0x10] sm:$0xff]
          %v2050 = vld [vmem:[%s20 + $0x18] sm:$0xff]
          %v2051 = vld [vmem:[%s21] sm:$0x1]
          %v2053 = vsel %vm1219, %v2045, 0
          %2055 = vmatprep.subr.mxu0 0.0
          %2056 = vmatpush1.msra.mxu0 0.0
          %2057 = vmatprep.subr.mxu0 0.0
          %2058 = vmatpush1.msra.mxu0 0.0
          %2059 = vmatprep.subr.mxu0 0.0
          %2060 = vmatpush1.msra.mxu0 0.0
          %2061 = vmatprep.subr.mxu0 0.0
          %2062 = vmatpush1.msra.mxu0 0.0
          %2063 = vmatprep.subr.mxu0 0.0
          %2064 = vmatpush1.msra.mxu0 0.0
          %2065 = vmatprep.subr.mxu0 0.0
          %2066 = vmatpush1.msra.mxu0 0.0
          %2067 = vmatprep.subr.mxu0 0.0
          %2068 = vmatpush1.msra.mxu0 0.0
          %2069 = vmatprep.subr.mxu0 0.0
          %2070 = vmatpush1.msra.mxu0 0.0
          %2071 = vmatprep.subr.mxu0 0.0
          %2072 = vmatpush1.msra.mxu0 0.0
          %2073 = vmatprep.subr.mxu0 0.0
          %2074 = vmatpush1.msra.mxu0 0.0
          %2075 = vmatprep.subr.mxu0 0.0
          %2076 = vmatpush1.msra.mxu0 0.0
          %2077 = vmatprep.subr.mxu0 0.0
          %2078 = vmatpush1.msra.mxu0 0.0
          %2079 = vmatprep.subr.mxu0 0.0
          %2080 = vmatpush1.msra.mxu0 %v2050
          %2081 = vmatprep.subr.mxu0 0.0
          %2082 = vmatpush1.msra.mxu0 %v2049
          %2083 = vmatprep.subr.mxu0 0.0
          %2084 = vmatpush1.msra.mxu0 %v2048
          %2085 = vmatprep.subr.mxu0 0.0
          %2086 = vmatpush1.msra.mxu0 %v2047
          %2087 = vmatprep.subr.mxu0 0.0
          %2088 = vmatpush2.msra.mxu0 0.0
          %2089 = vmatprep.subr.mxu0 0.0
          %2090 = vmatpush2.msra.mxu0 0.0
          %2091 = vmatprep.subr.mxu0 0.0
          %2092 = vmatpush2.msra.mxu0 0.0
          %2093 = vmatprep.subr.mxu0 0.0
          %2094 = vmatpush2.msra.mxu0 0.0
          %2095 = vmatprep.subr.mxu0 0.0
          %2096 = vmatpush2.msra.mxu0 0.0
          %2097 = vmatprep.subr.mxu0 0.0
          %2098 = vmatpush2.msra.mxu0 0.0
          %2099 = vmatprep.subr.mxu0 0.0
          %2100 = vmatpush2.msra.mxu0 0.0
          %2101 = vmatprep.subr.mxu0 0.0
          %2102 = vmatpush2.msra.mxu0 0.0
          %2103 = vmatprep.subr.mxu0 0.0
          %2104 = vmatpush2.msra.mxu0 0.0
          %2105 = vmatprep.subr.mxu0 0.0
          %2106 = vmatpush2.msra.mxu0 0.0
          %2107 = vmatprep.subr.mxu0 0.0
          %2108 = vmatpush2.msra.mxu0 0.0
          %2109 = vmatprep.subr.mxu0 0.0
          %2110 = vmatpush2.msra.mxu0 0.0
          %2111 = vmatprep.subr.mxu0 0.0
          %2112 = vmatpush2.msra.mxu0 0.0
          %2113 = vmatprep.subr.mxu0 0.0
          %2114 = vmatpush2.msra.mxu0 0.0
          %2115 = vmatprep.subr.mxu0 0.0
          %2116 = vmatpush2.msra.mxu0 0.0
          %2117 = vmatprep.subr.mxu0 0.0
          %2118 = vmatpush2.msra.mxu0 0.0
          %2119 = vmatprep.mubr.f32.mxu0 0.0
          %2120 = vmatmul.mubr.f32.gmra.mxu0 %v2053
          %v2121 = vpop.f32.mrf.mxu0
          %v2122 = vadd.f32 %v2051, %v2121
          %v2123 = vpop.f32.mrf.mxu0
          %2124 = vdwg.mxu0
          %v2125 = vtanh.pop %v2122
          %v2126 = vld [vmem:[%s22] sm:$0xff]
          %v2127 = vld [vmem:[%s22 + $0x8] sm:$0xff]
          %v2128 = vld [vmem:[%s22 + $0x10] sm:$0xff]
          %v2129 = vld [vmem:[%s22 + $0x18] sm:$0xff]
          %v2130 = vld [vmem:[%s23] sm:$0x1]
          %v2132 = vsel %vm1219, %v2125, 0
          %2134 = vmatprep.subr.mxu0 0.0
          %2135 = vmatpush1.msra.mxu0 0.0
          %2136 = vmatprep.subr.mxu0 0.0
          %2137 = vmatpush1.msra.mxu0 0.0
          %2138 = vmatprep.subr.mxu0 0.0
          %2139 = vmatpush1.msra.mxu0 0.0
          %2140 = vmatprep.subr.mxu0 0.0
          %2141 = vmatpush1.msra.mxu0 0.0
          %2142 = vmatprep.subr.mxu0 0.0
          %2143 = vmatpush1.msra.mxu0 0.0
          %2144 = vmatprep.subr.mxu0 0.0
          %2145 = vmatpush1.msra.mxu0 0.0
          %2146 = vmatprep.subr.mxu0 0.0
          %2147 = vmatpush1.msra.mxu0 0.0
          %2148 = vmatprep.subr.mxu0 0.0
          %2149 = vmatpush1.msra.mxu0 0.0
          %2150 = vmatprep.subr.mxu0 0.0
          %2151 = vmatpush1.msra.mxu0 0.0
          %2152 = vmatprep.subr.mxu0 0.0
          %2153 = vmatpush1.msra.mxu0 0.0
          %2154 = vmatprep.subr.mxu0 0.0
          %2155 = vmatpush1.msra.mxu0 0.0
          %2156 = vmatprep.subr.mxu0 0.0
          %2157 = vmatpush1.msra.mxu0 0.0
          %2158 = vmatprep.subr.mxu0 0.0
          %2159 = vmatpush1.msra.mxu0 %v2129
          %2160 = vmatprep.subr.mxu0 0.0
          %2161 = vmatpush1.msra.mxu0 %v2128
          %2162 = vmatprep.subr.mxu0 0.0
          %2163 = vmatpush1.msra.mxu0 %v2127
          %2164 = vmatprep.subr.mxu0 0.0
          %2165 = vmatpush1.msra.mxu0 %v2126
          %2166 = vmatprep.subr.mxu0 0.0
          %2167 = vmatpush2.msra.mxu0 0.0
          %2168 = vmatprep.subr.mxu0 0.0
          %2169 = vmatpush2.msra.mxu0 0.0
          %2170 = vmatprep.subr.mxu0 0.0
          %2171 = vmatpush2.msra.mxu0 0.0
          %2172 = vmatprep.subr.mxu0 0.0
          %2173 = vmatpush2.msra.mxu0 0.0
          %2174 = vmatprep.subr.mxu0 0.0
          %2175 = vmatpush2.msra.mxu0 0.0
          %2176 = vmatprep.subr.mxu0 0.0
          %2177 = vmatpush2.msra.mxu0 0.0
          %2178 = vmatprep.subr.mxu0 0.0
          %2179 = vmatpush2.msra.mxu0 0.0
          %2180 = vmatprep.subr.mxu0 0.0
          %2181 = vmatpush2.msra.mxu0 0.0
          %2182 = vmatprep.subr.mxu0 0.0
          %2183 = vmatpush2.msra.mxu0 0.0
          %2184 = vmatprep.subr.mxu0 0.0
          %2185 = vmatpush2.msra.mxu0 0.0
          %2186 = vmatprep.subr.mxu0 0.0
          %2187 = vmatpush2.msra.mxu0 0.0
          %2188 = vmatprep.subr.mxu0 0.0
          %2189 = vmatpush2.msra.mxu0 0.0
          %2190 = vmatprep.subr.mxu0 0.0
          %2191 = vmatpush2.msra.mxu0 0.0
          %2192 = vmatprep.subr.mxu0 0.0
          %2193 = vmatpush2.msra.mxu0 0.0
          %2194 = vmatprep.subr.mxu0 0.0
          %2195 = vmatpush2.msra.mxu0 0.0
          %2196 = vmatprep.subr.mxu0 0.0
          %2197 = vmatpush2.msra.mxu0 0.0
          %2198 = vmatprep.mubr.f32.mxu0 0.0
          %2199 = vmatmul.mubr.f32.gmra.mxu0 %v2132
          %v2200 = vpop.f32.mrf.mxu0
          %v2201 = vadd.f32 %v2130, %v2200
          %v2202 = vpop.f32.mrf.mxu0
          %2203 = vdwg.mxu0
          %vm2204 = vcmask 16384
          %2205 = vst.msk [vmem:[%s934] sm:$0x1] %vm2204, %v2201
        $region124: #{flava_forward.4} parent=115 // pred_fallthru
          _
        %p2206 = scmp.lt.s32.totalorder %s44, 1
        %s2207 = scalar_select %p2206, %s44, 1
        %s2208 = smul.addr %s2207, 8
        %s2209 = scalar_lea.vmem %s24, %s2208
        %s2210 = sand.u32 %s660, 1
        %s2211 = scalar_lea.sflag [#allocation4], %s2210
        %s2212 = sand.u32 %s660, 1
        %s2213 = scalar_lea.vmem [#allocation3], %s2212
        // Predicated region
        $region125: #{flava_forward.4} parent=115 // pred_check
          %p2214 = pneg %p644
        $region126: #{flava_forward.4} parent=115 // pred_check_branch
          %2216 = sbr.rel (%p2214) target = $region128
        $region127: #{flava_forward.4} parent=115 // pred_region
          _
        $region128: #{flava_forward.4} parent=115 // pred_fallthru
          _
        // Predicated region
        $region129: #{flava_forward.4} parent=115 // pred_check
          %p2217 = pneg %p670
        $region130: #{flava_forward.4} parent=115 // pred_check_branch
          %2219 = sbr.rel (%p2217) target = $region132
        $region131: #{flava_forward.4} parent=115 // pred_region
          %s2221 = ssub.s32 16, 16
          %2222 = vsyncadd %s2211, %s2221
          %s2223 = smul.addr %s44, 16
          %s2224 = scalar_lea.hbm %s25, %s2223
          %s2226 = sshll.u32 %s2213, 4
          %s2227 = int_to_ptr.vmem [resolvable:$true] %s2226
          %2229 = dma.vmem_to_hbm [thread:$0]  %s2227, 16, %s2224, %s2211
        $region132: #{flava_forward.4} parent=115 // pred_fallthru
          _
      $region116: #{flava_forward.4} parent=5 // pred_fallthru
        _
      %p2230 = scmp.le.s32.totalorder 2, %s35
      // Predicated region
      $region133: #{flava_forward.4} parent=5 // pred_check
        %p2231 = pneg %p2230
      $region134: #{flava_forward.4} parent=5 // pred_check_branch
        %2233 = sbr.rel (%p2231) target = $region136
      $region135: #{flava_forward.4} parent=5 // pred_region
        %s2234 = ssub.s32 %s35, 2
        // Predicated region
        $region137: #{flava_forward.4} parent=135 // pred_check
          %p2235 = pneg %p650
        $region138: #{flava_forward.4} parent=135 // pred_check_branch
          %2237 = sbr.rel (%p2235) target = $region140
        $region139: #{flava_forward.4} parent=135 // pred_region
          %p2238 = scmp.lt.s32.totalorder %s46, 1
          %s2239 = scalar_select %p2238, %s46, 1
          %s2240 = smul.addr %s2239, 8
          %s2241 = scalar_lea.vmem %s24, %s2240
        $region140: #{flava_forward.4} parent=135 // pred_fallthru
          _
        // Predicated region
        $region141: #{flava_forward.4} parent=135 // pred_check
          %p2242 = pneg %p676
        $region142: #{flava_forward.4} parent=135 // pred_check_branch
          %2244 = sbr.rel (%p2242) target = $region144
        $region143: #{flava_forward.4} parent=135 // pred_region
          %s2245 = sand.u32 %s661, 1
          %s2246 = scalar_lea.sflag [#allocation4], %s2245
          %s2247 = sand.u32 %s661, 1
          %s2248 = scalar_lea.vmem [#allocation3], %s2247
          %2249 = dma.done %s2246, 16
        $region144: #{flava_forward.4} parent=135 // pred_fallthru
          _
      $region136: #{flava_forward.4} parent=5 // pred_fallthru
        _
    $region6: #{flava_forward.4} parent=1 // loop_footer
      %s39 = sadd.s32 1, %s35
    $region7: #{flava_forward.4} parent=1 // loop_footer_branch
      %34 = sbr.rel target = $region3
    $region8: #{flava_forward.4} parent=1 // loop_exit
      _
    %2250 = vsyncpa [#allocation4], 1
    %s2251 = scalar_lea.sflag [#allocation4], 1
    %2252 = vsyncpa %s2251, 1

// kernel: flava_forward.5
$region0: #{flava_forward.5}
  #allocation0 [shape = 'u32[]', space=smem, size = 0x4, offset = 0x4, fixed_abs, tag = 'smem constant byte address 0x4 - core index']
  #allocation1 [shape = 'u32[144,128]{1,0:T(1,128)}', space=vmem, size = 0x12000, scoped, tag = 'internal scratch']
  #allocation2 [shape = 'f32[14,32]{1,0:T(8,128)}', space=vmem, size = 0x2000, scoped, tag = 'scratch operand']
  %s0 = inlined_call_operand.vmem [shape: f32[2,5,32], index: 0, kind: input, shape index: {}]
  %s1 = inlined_call_operand.vmem [shape: f32[2,8,32], index: 1, kind: input, shape index: {}]
  %s2 = inlined_call_operand.vmem [shape: bf16[32,32], index: 2, kind: input, shape index: {}]
  %s3 = inlined_call_operand.vmem [shape: f32[1,32], index: 3, kind: input, shape index: {}]
  %s4 = inlined_call_operand.vmem [shape: bf16[32,32], index: 4, kind: input, shape index: {}]
  %s5 = inlined_call_operand.vmem [shape: f32[1,32], index: 5, kind: input, shape index: {}]
  %s6 = inlined_call_operand.vmem [shape: f32[1,32], index: 6, kind: input, shape index: {}]
  %s7 = inlined_call_operand.vmem [shape: f32[2,1,14], index: 7, kind: input, shape index: {}]
  %s8 = inlined_call_operand.vmem [shape: bf16[2,32,96], index: 8, kind: input, shape index: {}]
  %s9 = inlined_call_operand.vmem [shape: f32[2,1,96], index: 9, kind: input, shape index: {}]
  %s10 = inlined_call_operand.vmem [shape: bf16[2,32,32], index: 10, kind: input, shape index: {}]
  %s11 = inlined_call_operand.vmem [shape: f32[2,1,32], index: 11, kind: input, shape index: {}]
  %s12 = inlined_call_operand.vmem [shape: f32[2,1,32], index: 12, kind: input, shape index: {}]
  %s13 = inlined_call_operand.vmem [shape: f32[2,1,32], index: 13, kind: input, shape index: {}]
  %s14 = inlined_call_operand.vmem [shape: f32[2,1,32], index: 14, kind: input, shape index: {}]
  %s15 = inlined_call_operand.vmem [shape: f32[2,1,32], index: 15, kind: input, shape index: {}]
  %s16 = inlined_call_operand.vmem [shape: bf16[2,32,64], index: 16, kind: input, shape index: {}]
  %s17 = inlined_call_operand.vmem [shape: f32[2,1,64], index: 17, kind: input, shape index: {}]
  %s18 = inlined_call_operand.vmem [shape: bf16[2,64,32], index: 18, kind: input, shape index: {}]
  %s19 = inlined_call_operand.vmem [shape: f32[2,1,32], index: 19, kind: input, shape index: {}]
  %s20 = inlined_call_operand.vmem [shape: f32[1,32], index: 20, kind: input, shape index: {}]
  %s21 = inlined_call_operand.vmem [shape: f32[1,32], index: 21, kind: input, shape index: {}]
  %s22 = inlined_call_operand.vmem [shape: f32[32,32], index: 22, kind: input, shape index: {}]
  %s23 = inlined_call_operand.vmem [shape: f32[1,32], index: 23, kind: input, shape index: {}]
  %s24 = inlined_call_operand.vmem [shape: f32[32,3], index: 24, kind: input, shape index: {}]
  %s25 = inlined_call_operand.hbm [shape: f32[1,3], index: 25, kind: input, shape index: {}]
  %s26 = inlined_call_operand.hbm [shape: f32[2,14,32], index: 26, kind: output, shape index: {0}]
  %s27 = inlined_call_operand.hbm [shape: f32[2,1,3], index: 27, kind: output, shape index: {1}]
  %28 = xla_tuple %s26, %s27
  %s29 = sld [smem:[#allocation0]]
  $region157: #{flava_forward.5} parent=0
    _
  %s31 = ssub.s32 1, %s29
  %s32 = scalar_select 0, %s31, %s29
  $region1: #{flava_forward.5} parent=0
    #allocation3 [shape = 'u8[512]{0}', space=vmem, size = 0x400, scoped, tag = 'input window, operand 25, single buffered']
    #allocation4 [shape = 's32[2]{0}', space=sflag, size = 0x8, scoped, tag = 'scoped memory for flava_forward.5']
    #allocation5 [shape = 's32[2]{0}', space=sflag, size = 0x8, scoped, tag = 'scoped memory for flava_forward.5']
    #allocation6 [shape = 'u8[16384]{0}', space=vmem, size = 0x4000, scoped, tag = 'output window, operand 0']
    #allocation7 [shape = 'u8[1024]{0}', space=vmem, size = 0x400, scoped, tag = 'output window, operand 1']
    #allocation8 [shape = 's32[2]{0}', space=sflag, size = 0x8, scoped, tag = 'scoped memory for flava_forward.5']
    %33 = vsyncpa [#allocation4], 0
    %34 = vsyncpa [#allocation5], 0
    %s35 = scalar_lea.sflag [#allocation5], 1
    %36 = vsyncpa %s35, 0
    %37 = vsyncpa [#allocation8], 0
    %s38 = scalar_lea.sflag [#allocation8], 1
    %39 = vsyncpa %s38, 0
    loop: start=0, step=1, limit=6
    $region2: #{flava_forward.5} parent=1 // loop_pre_header
      _
    $region3: #{flava_forward.5} parent=1 // loop_header
      %s41 = sphi 0, %s45
      %p42 = scmp.ge.s32.totalorder %s41, 6
      %s48 = sphi 0, %s60
      %s49 = sphi 0, %s56
      %s50 = sphi 0, %s48
      %s51 = sphi 0, %s49
      %s52 = sphi 0, %s50
      %s53 = sphi 0, %s51
      %s63 = sphi 0, %s65
      %s66 = sphi 0, %s63
      %s67 = sphi 0, %s66
      %s83 = sphi 0, %s67
      %s89 = sphi 0, %s91
      %s92 = sphi 0, %s89
      %s93 = sphi 0, %s92
      %s109 = sphi 0, %s93
      %s113 = sphi 0, %s113
      %s115 = sphi 0, %s113
      %s116 = sphi 0, %s115
      %s130 = sphi 0, %s116
      %s134 = sphi 0, %s134
      %s136 = sphi 0, %s134
      %s137 = sphi 0, %s136
      %s151 = sphi 0, %s137
      %s155 = sphi 0, %s155
      %s157 = sphi 0, %s155
      %s158 = sphi 0, %s157
      %s172 = sphi 0, %s158
      %s176 = sphi 0, %s176
      %s178 = sphi 0, %s176
      %s179 = sphi 0, %s178
      %s193 = sphi 0, %s179
      %s197 = sphi 0, %s197
      %s199 = sphi 0, %s197
      %s200 = sphi 0, %s199
      %s214 = sphi 0, %s200
      %s220 = sphi 0, %s222
      %s223 = sphi 0, %s220
      %s224 = sphi 0, %s223
      %s240 = sphi 0, %s224
      %s246 = sphi 0, %s248
      %s249 = sphi 0, %s246
      %s250 = sphi 0, %s249
      %s266 = sphi 0, %s250
      %s272 = sphi 0, %s274
      %s275 = sphi 0, %s272
      %s276 = sphi 0, %s275
      %s292 = sphi 0, %s276
      %s298 = sphi 0, %s300
      %s301 = sphi 0, %s298
      %s302 = sphi 0, %s301
      %s318 = sphi 0, %s302
      %s324 = sphi 0, %s326
      %s327 = sphi 0, %s324
      %s328 = sphi 0, %s327
      %s344 = sphi 0, %s328
      %s350 = sphi 0, %s352
      %s353 = sphi 0, %s350
      %s354 = sphi 0, %s353
      %s370 = sphi 0, %s354
      %s376 = sphi 0, %s378
      %s379 = sphi 0, %s376
      %s380 = sphi 0, %s379
      %s396 = sphi 0, %s380
      %s402 = sphi 0, %s404
      %s405 = sphi 0, %s402
      %s406 = sphi 0, %s405
      %s422 = sphi 0, %s406
      %s428 = sphi 0, %s430
      %s431 = sphi 0, %s428
      %s432 = sphi 0, %s431
      %s448 = sphi 0, %s432
      %s454 = sphi 0, %s456
      %s457 = sphi 0, %s454
      %s458 = sphi 0, %s457
      %s474 = sphi 0, %s458
      %s480 = sphi 0, %s482
      %s483 = sphi 0, %s480
      %s484 = sphi 0, %s483
      %s500 = sphi 0, %s484
      %s506 = sphi 0, %s508
      %s509 = sphi 0, %s506
      %s510 = sphi 0, %s509
      %s526 = sphi 0, %s510
      %s532 = sphi 0, %s534
      %s535 = sphi 0, %s532
      %s536 = sphi 0, %s535
      %s552 = sphi 0, %s536
      %s556 = sphi 0, %s556
      %s558 = sphi 0, %s556
      %s559 = sphi 0, %s558
      %s573 = sphi 0, %s559
      %s577 = sphi 0, %s577
      %s579 = sphi 0, %s577
      %s580 = sphi 0, %s579
      %s594 = sphi 0, %s580
      %s598 = sphi 0, %s598
      %s600 = sphi 0, %s598
      %s601 = sphi 0, %s600
      %s615 = sphi 0, %s601
      %s619 = sphi 0, %s619
      %s621 = sphi 0, %s619
      %s622 = sphi 0, %s621
      %s636 = sphi 0, %s622
      %s640 = sphi 0, %s640
      %s642 = sphi 0, %s640
      %s643 = sphi 0, %s642
      %s657 = sphi 0, %s643
      %s661 = sphi 0, %s661
      %s663 = sphi 0, %s661
      %s664 = sphi 0, %s663
      %s678 = sphi 0, %s664
      %s684 = sphi 0, %s686
      %s687 = sphi 0, %s684
      %s688 = sphi 0, %s687
      %s704 = sphi 0, %s688
      %s710 = sphi 0, %s712
      %s713 = sphi 0, %s710
      %s714 = sphi 0, %s713
      %s730 = sphi 0, %s714
    $region4: #{flava_forward.5} parent=1 // loop_header_branch
      %44 = sbr.rel (%p42) target = $region8
    $region5: #{flava_forward.5} parent=1 // loop_body
      %s46 = ssub.s32 %s41, 1
      %s47 = ssub.s32 %s41, 2
      %s54 = sadd.s32 1, %s49
      %p55 = scmp.ge.s32.totalorder %s54, 2
      %s56 = scalar_select %p55, 0, %s54
      %s57 = sadd.s32 1, %s48
      %s58 = scalar_select %p55, %s57, %s48
      %p59 = scmp.ge.s32.totalorder %s58, 2
      %s60 = scalar_select %p59, 0, %s58
      %s61 = ssub.s32 %s48, %s60
      %p62 = scmp.eq.s32.totalorder %s61, 0
      %s64 = sadd.s32 %s63, 1
      %s65 = scalar_select %p62, %s63, %s64
      %p68 = pneg %p62
      %p69 = scmp.eq.s32.totalorder %s41, 3
      %p70 = por %p68, %p69
      %p71 = scmp.ne.s32.totalorder %s63, %s66
      %p72 = scmp.eq.s32.totalorder %s41, 0
      %p73 = por %p71, %p72
      %p74 = scmp.ne.s32.totalorder %s63, %s66
      %p75 = scmp.eq.s32.totalorder %s46, 3
      %p76 = por %p74, %p75
      %p77 = scmp.ne.s32.totalorder %s66, %s67
      %p78 = scmp.eq.s32.totalorder %s46, 0
      %p79 = por %p77, %p78
      %p80 = scmp.ne.s32.totalorder %s66, %s67
      %p81 = scmp.eq.s32.totalorder %s47, 3
      %p82 = por %p80, %p81
      %p84 = scmp.ne.s32.totalorder %s67, %s83
      %p85 = scmp.eq.s32.totalorder %s47, 0
      %p86 = por %p84, %p85
      %s87 = ssub.s32 %s48, %s60
      %p88 = scmp.eq.s32.totalorder %s87, 0
      %s90 = sadd.s32 %s89, 1
      %s91 = scalar_select %p88, %s89, %s90
      %p94 = pneg %p88
      %p95 = scmp.eq.s32.totalorder %s41, 3
      %p96 = por %p94, %p95
      %p97 = scmp.ne.s32.totalorder %s89, %s92
      %p98 = scmp.eq.s32.totalorder %s41, 0
      %p99 = por %p97, %p98
      %p100 = scmp.ne.s32.totalorder %s89, %s92
      %p101 = scmp.eq.s32.totalorder %s46, 3
      %p102 = por %p100, %p101
      %p103 = scmp.ne.s32.totalorder %s92, %s93
      %p104 = scmp.eq.s32.totalorder %s46, 0
      %p105 = por %p103, %p104
      %p106 = scmp.ne.s32.totalorder %s92, %s93
      %p107 = scmp.eq.s32.totalorder %s47, 3
      %p108 = por %p106, %p107
      %p110 = scmp.ne.s32.totalorder %s93, %s109
      %p111 = scmp.eq.s32.totalorder %s47, 0
      %p112 = por %p110, %p111
      %s114 = sadd.s32 %s113, 1
      %p117 = scmp.eq.s32.totalorder %s41, 3
      %p118 = scmp.ne.s32.totalorder %s113, %s115
      %p119 = scmp.eq.s32.totalorder %s41, 0
      %p120 = por %p118, %p119
      %p121 = scmp.ne.s32.totalorder %s113, %s115
      %p122 = scmp.eq.s32.totalorder %s46, 3
      %p123 = por %p121, %p122
      %p124 = scmp.ne.s32.totalorder %s115, %s116
      %p125 = scmp.eq.s32.totalorder %s46, 0
      %p126 = por %p124, %p125
      %p127 = scmp.ne.s32.totalorder %s115, %s116
      %p128 = scmp.eq.s32.totalorder %s47, 3
      %p129 = por %p127, %p128
      %p131 = scmp.ne.s32.totalorder %s116, %s130
      %p132 = scmp.eq.s32.totalorder %s47, 0
      %p133 = por %p131, %p132
      %s135 = sadd.s32 %s134, 1
      %p138 = scmp.eq.s32.totalorder %s41, 3
      %p139 = scmp.ne.s32.totalorder %s134, %s136
      %p140 = scmp.eq.s32.totalorder %s41, 0
      %p141 = por %p139, %p140
      %p142 = scmp.ne.s32.totalorder %s134, %s136
      %p143 = scmp.eq.s32.totalorder %s46, 3
      %p144 = por %p142, %p143
      %p145 = scmp.ne.s32.totalorder %s136, %s137
      %p146 = scmp.eq.s32.totalorder %s46, 0
      %p147 = por %p145, %p146
      %p148 = scmp.ne.s32.totalorder %s136, %s137
      %p149 = scmp.eq.s32.totalorder %s47, 3
      %p150 = por %p148, %p149
      %p152 = scmp.ne.s32.totalorder %s137, %s151
      %p153 = scmp.eq.s32.totalorder %s47, 0
      %p154 = por %p152, %p153
      %s156 = sadd.s32 %s155, 1
      %p159 = scmp.eq.s32.totalorder %s41, 3
      %p160 = scmp.ne.s32.totalorder %s155, %s157
      %p161 = scmp.eq.s32.totalorder %s41, 0
      %p162 = por %p160, %p161
      %p163 = scmp.ne.s32.totalorder %s155, %s157
      %p164 = scmp.eq.s32.totalorder %s46, 3
      %p165 = por %p163, %p164
      %p166 = scmp.ne.s32.totalorder %s157, %s158
      %p167 = scmp.eq.s32.totalorder %s46, 0
      %p168 = por %p166, %p167
      %p169 = scmp.ne.s32.totalorder %s157, %s158
      %p170 = scmp.eq.s32.totalorder %s47, 3
      %p171 = por %p169, %p170
      %p173 = scmp.ne.s32.totalorder %s158, %s172
      %p174 = scmp.eq.s32.totalorder %s47, 0
      %p175 = por %p173, %p174
      %s177 = sadd.s32 %s176, 1
      %p180 = scmp.eq.s32.totalorder %s41, 3
      %p181 = scmp.ne.s32.totalorder %s176, %s178
      %p182 = scmp.eq.s32.totalorder %s41, 0
      %p183 = por %p181, %p182
      %p184 = scmp.ne.s32.totalorder %s176, %s178
      %p185 = scmp.eq.s32.totalorder %s46, 3
      %p186 = por %p184, %p185
      %p187 = scmp.ne.s32.totalorder %s178, %s179
      %p188 = scmp.eq.s32.totalorder %s46, 0
      %p189 = por %p187, %p188
      %p190 = scmp.ne.s32.totalorder %s178, %s179
      %p191 = scmp.eq.s32.totalorder %s47, 3
      %p192 = por %p190, %p191
      %p194 = scmp.ne.s32.totalorder %s179, %s193
      %p195 = scmp.eq.s32.totalorder %s47, 0
      %p196 = por %p194, %p195
      %s198 = sadd.s32 %s197, 1
      %p201 = scmp.eq.s32.totalorder %s41, 3
      %p202 = scmp.ne.s32.totalorder %s197, %s199
      %p203 = scmp.eq.s32.totalorder %s41, 0
      %p204 = por %p202, %p203
      %p205 = scmp.ne.s32.totalorder %s197, %s199
      %p206 = scmp.eq.s32.totalorder %s46, 3
      %p207 = por %p205, %p206
      %p208 = scmp.ne.s32.totalorder %s199, %s200
      %p209 = scmp.eq.s32.totalorder %s46, 0
      %p210 = por %p208, %p209
      %p211 = scmp.ne.s32.totalorder %s199, %s200
      %p212 = scmp.eq.s32.totalorder %s47, 3
      %p213 = por %p211, %p212
      %p215 = scmp.ne.s32.totalorder %s200, %s214
      %p216 = scmp.eq.s32.totalorder %s47, 0
      %p217 = por %p215, %p216
      %s218 = ssub.s32 %s48, %s60
      %p219 = scmp.eq.s32.totalorder %s218, 0
      %s221 = sadd.s32 %s220, 1
      %s222 = scalar_select %p219, %s220, %s221
      %p225 = pneg %p219
      %p226 = scmp.eq.s32.totalorder %s41, 3
      %p227 = por %p225, %p226
      %p228 = scmp.ne.s32.totalorder %s220, %s223
      %p229 = scmp.eq.s32.totalorder %s41, 0
      %p230 = por %p228, %p229
      %p231 = scmp.ne.s32.totalorder %s220, %s223
      %p232 = scmp.eq.s32.totalorder %s46, 3
      %p233 = por %p231, %p232
      %p234 = scmp.ne.s32.totalorder %s223, %s224
      %p235 = scmp.eq.s32.totalorder %s46, 0
      %p236 = por %p234, %p235
      %p237 = scmp.ne.s32.totalorder %s223, %s224
      %p238 = scmp.eq.s32.totalorder %s47, 3
      %p239 = por %p237, %p238
      %p241 = scmp.ne.s32.totalorder %s224, %s240
      %p242 = scmp.eq.s32.totalorder %s47, 0
      %p243 = por %p241, %p242
      %s244 = ssub.s32 %s49, %s56
      %p245 = scmp.eq.s32.totalorder %s244, 0
      %s247 = sadd.s32 %s246, 1
      %s248 = scalar_select %p245, %s246, %s247
      %p251 = pneg %p245
      %p252 = scmp.eq.s32.totalorder %s41, 3
      %p253 = por %p251, %p252
      %p254 = scmp.ne.s32.totalorder %s246, %s249
      %p255 = scmp.eq.s32.totalorder %s41, 0
      %p256 = por %p254, %p255
      %p257 = scmp.ne.s32.totalorder %s246, %s249
      %p258 = scmp.eq.s32.totalorder %s46, 3
      %p259 = por %p257, %p258
      %p260 = scmp.ne.s32.totalorder %s249, %s250
      %p261 = scmp.eq.s32.totalorder %s46, 0
      %p262 = por %p260, %p261
      %p263 = scmp.ne.s32.totalorder %s249, %s250
      %p264 = scmp.eq.s32.totalorder %s47, 3
      %p265 = por %p263, %p264
      %p267 = scmp.ne.s32.totalorder %s250, %s266
      %p268 = scmp.eq.s32.totalorder %s47, 0
      %p269 = por %p267, %p268
      %s270 = ssub.s32 %s49, %s56
      %p271 = scmp.eq.s32.totalorder %s270, 0
      %s273 = sadd.s32 %s272, 1
      %s274 = scalar_select %p271, %s272, %s273
      %p277 = pneg %p271
      %p278 = scmp.eq.s32.totalorder %s41, 3
      %p279 = por %p277, %p278
      %p280 = scmp.ne.s32.totalorder %s272, %s275
      %p281 = scmp.eq.s32.totalorder %s41, 0
      %p282 = por %p280, %p281
      %p283 = scmp.ne.s32.totalorder %s272, %s275
      %p284 = scmp.eq.s32.totalorder %s46, 3
      %p285 = por %p283, %p284
      %p286 = scmp.ne.s32.totalorder %s275, %s276
      %p287 = scmp.eq.s32.totalorder %s46, 0
      %p288 = por %p286, %p287
      %p289 = scmp.ne.s32.totalorder %s275, %s276
      %p290 = scmp.eq.s32.totalorder %s47, 3
      %p291 = por %p289, %p290
      %p293 = scmp.ne.s32.totalorder %s276, %s292
      %p294 = scmp.eq.s32.totalorder %s47, 0
      %p295 = por %p293, %p294
      %s296 = ssub.s32 %s49, %s56
      %p297 = scmp.eq.s32.totalorder %s296, 0
      %s299 = sadd.s32 %s298, 1
      %s300 = scalar_select %p297, %s298, %s299
      %p303 = pneg %p297
      %p304 = scmp.eq.s32.totalorder %s41, 3
      %p305 = por %p303, %p304
      %p306 = scmp.ne.s32.totalorder %s298, %s301
      %p307 = scmp.eq.s32.totalorder %s41, 0
      %p308 = por %p306, %p307
      %p309 = scmp.ne.s32.totalorder %s298, %s301
      %p310 = scmp.eq.s32.totalorder %s46, 3
      %p311 = por %p309, %p310
      %p312 = scmp.ne.s32.totalorder %s301, %s302
      %p313 = scmp.eq.s32.totalorder %s46, 0
      %p314 = por %p312, %p313
      %p315 = scmp.ne.s32.totalorder %s301, %s302
      %p316 = scmp.eq.s32.totalorder %s47, 3
      %p317 = por %p315, %p316
      %p319 = scmp.ne.s32.totalorder %s302, %s318
      %p320 = scmp.eq.s32.totalorder %s47, 0
      %p321 = por %p319, %p320
      %s322 = ssub.s32 %s49, %s56
      %p323 = scmp.eq.s32.totalorder %s322, 0
      %s325 = sadd.s32 %s324, 1
      %s326 = scalar_select %p323, %s324, %s325
      %p329 = pneg %p323
      %p330 = scmp.eq.s32.totalorder %s41, 3
      %p331 = por %p329, %p330
      %p332 = scmp.ne.s32.totalorder %s324, %s327
      %p333 = scmp.eq.s32.totalorder %s41, 0
      %p334 = por %p332, %p333
      %p335 = scmp.ne.s32.totalorder %s324, %s327
      %p336 = scmp.eq.s32.totalorder %s46, 3
      %p337 = por %p335, %p336
      %p338 = scmp.ne.s32.totalorder %s327, %s328
      %p339 = scmp.eq.s32.totalorder %s46, 0
      %p340 = por %p338, %p339
      %p341 = scmp.ne.s32.totalorder %s327, %s328
      %p342 = scmp.eq.s32.totalorder %s47, 3
      %p343 = por %p341, %p342
      %p345 = scmp.ne.s32.totalorder %s328, %s344
      %p346 = scmp.eq.s32.totalorder %s47, 0
      %p347 = por %p345, %p346
      %s348 = ssub.s32 %s49, %s56
      %p349 = scmp.eq.s32.totalorder %s348, 0
      %s351 = sadd.s32 %s350, 1
      %s352 = scalar_select %p349, %s350, %s351
      %p355 = pneg %p349
      %p356 = scmp.eq.s32.totalorder %s41, 3
      %p357 = por %p355, %p356
      %p358 = scmp.ne.s32.totalorder %s350, %s353
      %p359 = scmp.eq.s32.totalorder %s41, 0
      %p360 = por %p358, %p359
      %p361 = scmp.ne.s32.totalorder %s350, %s353
      %p362 = scmp.eq.s32.totalorder %s46, 3
      %p363 = por %p361, %p362
      %p364 = scmp.ne.s32.totalorder %s353, %s354
      %p365 = scmp.eq.s32.totalorder %s46, 0
      %p366 = por %p364, %p365
      %p367 = scmp.ne.s32.totalorder %s353, %s354
      %p368 = scmp.eq.s32.totalorder %s47, 3
      %p369 = por %p367, %p368
      %p371 = scmp.ne.s32.totalorder %s354, %s370
      %p372 = scmp.eq.s32.totalorder %s47, 0
      %p373 = por %p371, %p372
      %s374 = ssub.s32 %s49, %s56
      %p375 = scmp.eq.s32.totalorder %s374, 0
      %s377 = sadd.s32 %s376, 1
      %s378 = scalar_select %p375, %s376, %s377
      %p381 = pneg %p375
      %p382 = scmp.eq.s32.totalorder %s41, 3
      %p383 = por %p381, %p382
      %p384 = scmp.ne.s32.totalorder %s376, %s379
      %p385 = scmp.eq.s32.totalorder %s41, 0
      %p386 = por %p384, %p385
      %p387 = scmp.ne.s32.totalorder %s376, %s379
      %p388 = scmp.eq.s32.totalorder %s46, 3
      %p389 = por %p387, %p388
      %p390 = scmp.ne.s32.totalorder %s379, %s380
      %p391 = scmp.eq.s32.totalorder %s46, 0
      %p392 = por %p390, %p391
      %p393 = scmp.ne.s32.totalorder %s379, %s380
      %p394 = scmp.eq.s32.totalorder %s47, 3
      %p395 = por %p393, %p394
      %p397 = scmp.ne.s32.totalorder %s380, %s396
      %p398 = scmp.eq.s32.totalorder %s47, 0
      %p399 = por %p397, %p398
      %s400 = ssub.s32 %s49, %s56
      %p401 = scmp.eq.s32.totalorder %s400, 0
      %s403 = sadd.s32 %s402, 1
      %s404 = scalar_select %p401, %s402, %s403
      %p407 = pneg %p401
      %p408 = scmp.eq.s32.totalorder %s41, 3
      %p409 = por %p407, %p408
      %p410 = scmp.ne.s32.totalorder %s402, %s405
      %p411 = scmp.eq.s32.totalorder %s41, 0
      %p412 = por %p410, %p411
      %p413 = scmp.ne.s32.totalorder %s402, %s405
      %p414 = scmp.eq.s32.totalorder %s46, 3
      %p415 = por %p413, %p414
      %p416 = scmp.ne.s32.totalorder %s405, %s406
      %p417 = scmp.eq.s32.totalorder %s46, 0
      %p418 = por %p416, %p417
      %p419 = scmp.ne.s32.totalorder %s405, %s406
      %p420 = scmp.eq.s32.totalorder %s47, 3
      %p421 = por %p419, %p420
      %p423 = scmp.ne.s32.totalorder %s406, %s422
      %p424 = scmp.eq.s32.totalorder %s47, 0
      %p425 = por %p423, %p424
      %s426 = ssub.s32 %s49, %s56
      %p427 = scmp.eq.s32.totalorder %s426, 0
      %s429 = sadd.s32 %s428, 1
      %s430 = scalar_select %p427, %s428, %s429
      %p433 = pneg %p427
      %p434 = scmp.eq.s32.totalorder %s41, 3
      %p435 = por %p433, %p434
      %p436 = scmp.ne.s32.totalorder %s428, %s431
      %p437 = scmp.eq.s32.totalorder %s41, 0
      %p438 = por %p436, %p437
      %p439 = scmp.ne.s32.totalorder %s428, %s431
      %p440 = scmp.eq.s32.totalorder %s46, 3
      %p441 = por %p439, %p440
      %p442 = scmp.ne.s32.totalorder %s431, %s432
      %p443 = scmp.eq.s32.totalorder %s46, 0
      %p444 = por %p442, %p443
      %p445 = scmp.ne.s32.totalorder %s431, %s432
      %p446 = scmp.eq.s32.totalorder %s47, 3
      %p447 = por %p445, %p446
      %p449 = scmp.ne.s32.totalorder %s432, %s448
      %p450 = scmp.eq.s32.totalorder %s47, 0
      %p451 = por %p449, %p450
      %s452 = ssub.s32 %s49, %s56
      %p453 = scmp.eq.s32.totalorder %s452, 0
      %s455 = sadd.s32 %s454, 1
      %s456 = scalar_select %p453, %s454, %s455
      %p459 = pneg %p453
      %p460 = scmp.eq.s32.totalorder %s41, 3
      %p461 = por %p459, %p460
      %p462 = scmp.ne.s32.totalorder %s454, %s457
      %p463 = scmp.eq.s32.totalorder %s41, 0
      %p464 = por %p462, %p463
      %p465 = scmp.ne.s32.totalorder %s454, %s457
      %p466 = scmp.eq.s32.totalorder %s46, 3
      %p467 = por %p465, %p466
      %p468 = scmp.ne.s32.totalorder %s457, %s458
      %p469 = scmp.eq.s32.totalorder %s46, 0
      %p470 = por %p468, %p469
      %p471 = scmp.ne.s32.totalorder %s457, %s458
      %p472 = scmp.eq.s32.totalorder %s47, 3
      %p473 = por %p471, %p472
      %p475 = scmp.ne.s32.totalorder %s458, %s474
      %p476 = scmp.eq.s32.totalorder %s47, 0
      %p477 = por %p475, %p476
      %s478 = ssub.s32 %s49, %s56
      %p479 = scmp.eq.s32.totalorder %s478, 0
      %s481 = sadd.s32 %s480, 1
      %s482 = scalar_select %p479, %s480, %s481
      %p485 = pneg %p479
      %p486 = scmp.eq.s32.totalorder %s41, 3
      %p487 = por %p485, %p486
      %p488 = scmp.ne.s32.totalorder %s480, %s483
      %p489 = scmp.eq.s32.totalorder %s41, 0
      %p490 = por %p488, %p489
      %p491 = scmp.ne.s32.totalorder %s480, %s483
      %p492 = scmp.eq.s32.totalorder %s46, 3
      %p493 = por %p491, %p492
      %p494 = scmp.ne.s32.totalorder %s483, %s484
      %p495 = scmp.eq.s32.totalorder %s46, 0
      %p496 = por %p494, %p495
      %p497 = scmp.ne.s32.totalorder %s483, %s484
      %p498 = scmp.eq.s32.totalorder %s47, 3
      %p499 = por %p497, %p498
      %p501 = scmp.ne.s32.totalorder %s484, %s500
      %p502 = scmp.eq.s32.totalorder %s47, 0
      %p503 = por %p501, %p502
      %s504 = ssub.s32 %s49, %s56
      %p505 = scmp.eq.s32.totalorder %s504, 0
      %s507 = sadd.s32 %s506, 1
      %s508 = scalar_select %p505, %s506, %s507
      %p511 = pneg %p505
      %p512 = scmp.eq.s32.totalorder %s41, 3
      %p513 = por %p511, %p512
      %p514 = scmp.ne.s32.totalorder %s506, %s509
      %p515 = scmp.eq.s32.totalorder %s41, 0
      %p516 = por %p514, %p515
      %p517 = scmp.ne.s32.totalorder %s506, %s509
      %p518 = scmp.eq.s32.totalorder %s46, 3
      %p519 = por %p517, %p518
      %p520 = scmp.ne.s32.totalorder %s509, %s510
      %p521 = scmp.eq.s32.totalorder %s46, 0
      %p522 = por %p520, %p521
      %p523 = scmp.ne.s32.totalorder %s509, %s510
      %p524 = scmp.eq.s32.totalorder %s47, 3
      %p525 = por %p523, %p524
      %p527 = scmp.ne.s32.totalorder %s510, %s526
      %p528 = scmp.eq.s32.totalorder %s47, 0
      %p529 = por %p527, %p528
      %s530 = ssub.s32 %s49, %s56
      %p531 = scmp.eq.s32.totalorder %s530, 0
      %s533 = sadd.s32 %s532, 1
      %s534 = scalar_select %p531, %s532, %s533
      %p537 = pneg %p531
      %p538 = scmp.eq.s32.totalorder %s41, 3
      %p539 = por %p537, %p538
      %p540 = scmp.ne.s32.totalorder %s532, %s535
      %p541 = scmp.eq.s32.totalorder %s41, 0
      %p542 = por %p540, %p541
      %p543 = scmp.ne.s32.totalorder %s532, %s535
      %p544 = scmp.eq.s32.totalorder %s46, 3
      %p545 = por %p543, %p544
      %p546 = scmp.ne.s32.totalorder %s535, %s536
      %p547 = scmp.eq.s32.totalorder %s46, 0
      %p548 = por %p546, %p547
      %p549 = scmp.ne.s32.totalorder %s535, %s536
      %p550 = scmp.eq.s32.totalorder %s47, 3
      %p551 = por %p549, %p550
      %p553 = scmp.ne.s32.totalorder %s536, %s552
      %p554 = scmp.eq.s32.totalorder %s47, 0
      %p555 = por %p553, %p554
      %s557 = sadd.s32 %s556, 1
      %p560 = scmp.eq.s32.totalorder %s41, 3
      %p561 = scmp.ne.s32.totalorder %s556, %s558
      %p562 = scmp.eq.s32.totalorder %s41, 0
      %p563 = por %p561, %p562
      %p564 = scmp.ne.s32.totalorder %s556, %s558
      %p565 = scmp.eq.s32.totalorder %s46, 3
      %p566 = por %p564, %p565
      %p567 = scmp.ne.s32.totalorder %s558, %s559
      %p568 = scmp.eq.s32.totalorder %s46, 0
      %p569 = por %p567, %p568
      %p570 = scmp.ne.s32.totalorder %s558, %s559
      %p571 = scmp.eq.s32.totalorder %s47, 3
      %p572 = por %p570, %p571
      %p574 = scmp.ne.s32.totalorder %s559, %s573
      %p575 = scmp.eq.s32.totalorder %s47, 0
      %p576 = por %p574, %p575
      %s578 = sadd.s32 %s577, 1
      %p581 = scmp.eq.s32.totalorder %s41, 3
      %p582 = scmp.ne.s32.totalorder %s577, %s579
      %p583 = scmp.eq.s32.totalorder %s41, 0
      %p584 = por %p582, %p583
      %p585 = scmp.ne.s32.totalorder %s577, %s579
      %p586 = scmp.eq.s32.totalorder %s46, 3
      %p587 = por %p585, %p586
      %p588 = scmp.ne.s32.totalorder %s579, %s580
      %p589 = scmp.eq.s32.totalorder %s46, 0
      %p590 = por %p588, %p589
      %p591 = scmp.ne.s32.totalorder %s579, %s580
      %p592 = scmp.eq.s32.totalorder %s47, 3
      %p593 = por %p591, %p592
      %p595 = scmp.ne.s32.totalorder %s580, %s594
      %p596 = scmp.eq.s32.totalorder %s47, 0
      %p597 = por %p595, %p596
      %s599 = sadd.s32 %s598, 1
      %p602 = scmp.eq.s32.totalorder %s41, 3
      %p603 = scmp.ne.s32.totalorder %s598, %s600
      %p604 = scmp.eq.s32.totalorder %s41, 0
      %p605 = por %p603, %p604
      %p606 = scmp.ne.s32.totalorder %s598, %s600
      %p607 = scmp.eq.s32.totalorder %s46, 3
      %p608 = por %p606, %p607
      %p609 = scmp.ne.s32.totalorder %s600, %s601
      %p610 = scmp.eq.s32.totalorder %s46, 0
      %p611 = por %p609, %p610
      %p612 = scmp.ne.s32.totalorder %s600, %s601
      %p613 = scmp.eq.s32.totalorder %s47, 3
      %p614 = por %p612, %p613
      %p616 = scmp.ne.s32.totalorder %s601, %s615
      %p617 = scmp.eq.s32.totalorder %s47, 0
      %p618 = por %p616, %p617
      %s620 = sadd.s32 %s619, 1
      %p623 = scmp.eq.s32.totalorder %s41, 3
      %p624 = scmp.ne.s32.totalorder %s619, %s621
      %p625 = scmp.eq.s32.totalorder %s41, 0
      %p626 = por %p624, %p625
      %p627 = scmp.ne.s32.totalorder %s619, %s621
      %p628 = scmp.eq.s32.totalorder %s46, 3
      %p629 = por %p627, %p628
      %p630 = scmp.ne.s32.totalorder %s621, %s622
      %p631 = scmp.eq.s32.totalorder %s46, 0
      %p632 = por %p630, %p631
      %p633 = scmp.ne.s32.totalorder %s621, %s622
      %p634 = scmp.eq.s32.totalorder %s47, 3
      %p635 = por %p633, %p634
      %p637 = scmp.ne.s32.totalorder %s622, %s636
      %p638 = scmp.eq.s32.totalorder %s47, 0
      %p639 = por %p637, %p638
      %s641 = sadd.s32 %s640, 1
      %p644 = scmp.eq.s32.totalorder %s41, 3
      %p645 = scmp.ne.s32.totalorder %s640, %s642
      %p646 = scmp.eq.s32.totalorder %s41, 0
      %p647 = por %p645, %p646
      %p648 = scmp.ne.s32.totalorder %s640, %s642
      %p649 = scmp.eq.s32.totalorder %s46, 3
      %p650 = por %p648, %p649
      %p651 = scmp.ne.s32.totalorder %s642, %s643
      %p652 = scmp.eq.s32.totalorder %s46, 0
      %p653 = por %p651, %p652
      %p654 = scmp.ne.s32.totalorder %s642, %s643
      %p655 = scmp.eq.s32.totalorder %s47, 3
      %p656 = por %p654, %p655
      %p658 = scmp.ne.s32.totalorder %s643, %s657
      %p659 = scmp.eq.s32.totalorder %s47, 0
      %p660 = por %p658, %p659
      %s662 = sadd.s32 %s661, 1
      %p665 = scmp.eq.s32.totalorder %s41, 3
      %p666 = scmp.ne.s32.totalorder %s661, %s663
      %p667 = scmp.eq.s32.totalorder %s41, 0
      %p668 = por %p666, %p667
      %p669 = scmp.ne.s32.totalorder %s661, %s663
      %p670 = scmp.eq.s32.totalorder %s46, 3
      %p671 = por %p669, %p670
      %p672 = scmp.ne.s32.totalorder %s663, %s664
      %p673 = scmp.eq.s32.totalorder %s46, 0
      %p674 = por %p672, %p673
      %p675 = scmp.ne.s32.totalorder %s663, %s664
      %p676 = scmp.eq.s32.totalorder %s47, 3
      %p677 = por %p675, %p676
      %p679 = scmp.ne.s32.totalorder %s664, %s678
      %p680 = scmp.eq.s32.totalorder %s47, 0
      %p681 = por %p679, %p680
      %s682 = ssub.s32 %s48, %s60
      %p683 = scmp.eq.s32.totalorder %s682, 0
      %s685 = sadd.s32 %s684, 1
      %s686 = scalar_select %p683, %s684, %s685
      %p689 = pneg %p683
      %p690 = scmp.eq.s32.totalorder %s41, 3
      %p691 = por %p689, %p690
      %p692 = scmp.ne.s32.totalorder %s684, %s687
      %p693 = scmp.eq.s32.totalorder %s41, 0
      %p694 = por %p692, %p693
      %p695 = scmp.ne.s32.totalorder %s684, %s687
      %p696 = scmp.eq.s32.totalorder %s46, 3
      %p697 = por %p695, %p696
      %p698 = scmp.ne.s32.totalorder %s687, %s688
      %p699 = scmp.eq.s32.totalorder %s46, 0
      %p700 = por %p698, %p699
      %p701 = scmp.ne.s32.totalorder %s687, %s688
      %p702 = scmp.eq.s32.totalorder %s47, 3
      %p703 = por %p701, %p702
      %p705 = scmp.ne.s32.totalorder %s688, %s704
      %p706 = scmp.eq.s32.totalorder %s47, 0
      %p707 = por %p705, %p706
      %s708 = ssub.s32 %s48, %s60
      %p709 = scmp.eq.s32.totalorder %s708, 0
      %s711 = sadd.s32 %s710, 1
      %s712 = scalar_select %p709, %s710, %s711
      %p715 = pneg %p709
      %p716 = scmp.eq.s32.totalorder %s41, 3
      %p717 = por %p715, %p716
      %p718 = scmp.ne.s32.totalorder %s710, %s713
      %p719 = scmp.eq.s32.totalorder %s41, 0
      %p720 = por %p718, %p719
      %p721 = scmp.ne.s32.totalorder %s710, %s713
      %p722 = scmp.eq.s32.totalorder %s46, 3
      %p723 = por %p721, %p722
      %p724 = scmp.ne.s32.totalorder %s713, %s714
      %p725 = scmp.eq.s32.totalorder %s46, 0
      %p726 = por %p724, %p725
      %p727 = scmp.ne.s32.totalorder %s713, %s714
      %p728 = scmp.eq.s32.totalorder %s47, 3
      %p729 = por %p727, %p728
      %p731 = scmp.ne.s32.totalorder %s714, %s730
      %p732 = scmp.eq.s32.totalorder %s47, 0
      %p733 = por %p731, %p732
      %p734 = scmp.le.s32.totalorder 1, %s41
      %p735 = scmp.lt.s32.totalorder %s41, 5
      %p736 = pnand %p734, %p735
      %p737 = pneg %p736
      // Predicated region
      $region9: #{flava_forward.5} parent=5 // pred_check
        _
      $region10: #{flava_forward.5} parent=5 // pred_check_branch
        %739 = sbr.rel (%p736) target = $region12
      $region11: #{flava_forward.5} parent=5 // pred_region
        %s740 = ssub.s32 %s41, 1
        // Predicated region
        $region13: #{flava_forward.5} parent=11 // pred_check
          %p741 = pneg %p126
        $region14: #{flava_forward.5} parent=11 // pred_check_branch
          %743 = sbr.rel (%p741) target = $region16
        $region15: #{flava_forward.5} parent=11 // pred_region
          _
        $region16: #{flava_forward.5} parent=11 // pred_fallthru
          _
        // Predicated region
        $region17: #{flava_forward.5} parent=11 // pred_check
          %p744 = pneg %p147
        $region18: #{flava_forward.5} parent=11 // pred_check_branch
          %746 = sbr.rel (%p744) target = $region20
        $region19: #{flava_forward.5} parent=11 // pred_region
          _
        $region20: #{flava_forward.5} parent=11 // pred_fallthru
          _
        // Predicated region
        $region21: #{flava_forward.5} parent=11 // pred_check
          %p747 = pneg %p168
        $region22: #{flava_forward.5} parent=11 // pred_check_branch
          %749 = sbr.rel (%p747) target = $region24
        $region23: #{flava_forward.5} parent=11 // pred_region
          _
        $region24: #{flava_forward.5} parent=11 // pred_fallthru
          _
        // Predicated region
        $region25: #{flava_forward.5} parent=11 // pred_check
          %p750 = pneg %p189
        $region26: #{flava_forward.5} parent=11 // pred_check_branch
          %752 = sbr.rel (%p750) target = $region28
        $region27: #{flava_forward.5} parent=11 // pred_region
          _
        $region28: #{flava_forward.5} parent=11 // pred_fallthru
          _
        // Predicated region
        $region29: #{flava_forward.5} parent=11 // pred_check
          %p753 = pneg %p210
        $region30: #{flava_forward.5} parent=11 // pred_check_branch
          %755 = sbr.rel (%p753) target = $region32
        $region31: #{flava_forward.5} parent=11 // pred_region
          _
        $region32: #{flava_forward.5} parent=11 // pred_fallthru
          _
        // Predicated region
        $region33: #{flava_forward.5} parent=11 // pred_check
          %p756 = pneg %p569
        $region34: #{flava_forward.5} parent=11 // pred_check_branch
          %758 = sbr.rel (%p756) target = $region36
        $region35: #{flava_forward.5} parent=11 // pred_region
          _
        $region36: #{flava_forward.5} parent=11 // pred_fallthru
          _
        // Predicated region
        $region37: #{flava_forward.5} parent=11 // pred_check
          %p759 = pneg %p590
        $region38: #{flava_forward.5} parent=11 // pred_check_branch
          %761 = sbr.rel (%p759) target = $region40
        $region39: #{flava_forward.5} parent=11 // pred_region
          _
        $region40: #{flava_forward.5} parent=11 // pred_fallthru
          _
        // Predicated region
        $region41: #{flava_forward.5} parent=11 // pred_check
          %p762 = pneg %p611
        $region42: #{flava_forward.5} parent=11 // pred_check_branch
          %764 = sbr.rel (%p762) target = $region44
        $region43: #{flava_forward.5} parent=11 // pred_region
          _
        $region44: #{flava_forward.5} parent=11 // pred_fallthru
          _
        // Predicated region
        $region45: #{flava_forward.5} parent=11 // pred_check
          %p765 = pneg %p632
        $region46: #{flava_forward.5} parent=11 // pred_check_branch
          %767 = sbr.rel (%p765) target = $region48
        $region47: #{flava_forward.5} parent=11 // pred_region
          _
        $region48: #{flava_forward.5} parent=11 // pred_fallthru
          _
        // Predicated region
        $region49: #{flava_forward.5} parent=11 // pred_check
          %p768 = pneg %p653
        $region50: #{flava_forward.5} parent=11 // pred_check_branch
          %770 = sbr.rel (%p768) target = $region52
        $region51: #{flava_forward.5} parent=11 // pred_region
          _
        $region52: #{flava_forward.5} parent=11 // pred_fallthru
          _
        // Predicated region
        $region53: #{flava_forward.5} parent=11 // pred_check
          %p771 = pneg %p674
        $region54: #{flava_forward.5} parent=11 // pred_check_branch
          %773 = sbr.rel (%p771) target = $region56
        $region55: #{flava_forward.5} parent=11 // pred_region
          %s775 = ssub.s32 16, 16
          %776 = vsyncadd [#allocation4], %s775
          %s778 = sshll.u32 [#allocation3], 4
          %s779 = int_to_ptr.vmem [resolvable:$true] %s778
          %781 = dma.hbm_to_vmem [thread:$0]  %s25, 16, %s779, [#allocation4]
        $region56: #{flava_forward.5} parent=11 // pred_fallthru
          _
      $region12: #{flava_forward.5} parent=5 // pred_fallthru
        _
      %p782 = scmp.lt.s32.totalorder %s41, 4
      // Predicated region
      $region57: #{flava_forward.5} parent=5 // pred_check
        %p783 = pneg %p782
      $region58: #{flava_forward.5} parent=5 // pred_check_branch
        %785 = sbr.rel (%p783) target = $region60
      $region59: #{flava_forward.5} parent=5 // pred_region
        // Predicated region
        $region61: #{flava_forward.5} parent=59 // pred_check
          %p786 = pneg %p73
        $region62: #{flava_forward.5} parent=59 // pred_check_branch
          %788 = sbr.rel (%p786) target = $region64
        $region63: #{flava_forward.5} parent=59 // pred_region
          %p789 = scmp.lt.s32.totalorder %s48, 1
          %s790 = scalar_select %p789, %s48, 1
          %s791 = smul.addr %s790, 8
          %s792 = scalar_lea.vmem %s0, %s791
        $region64: #{flava_forward.5} parent=59 // pred_fallthru
          _
        // Predicated region
        $region65: #{flava_forward.5} parent=59 // pred_check
          %p793 = pneg %p99
        $region66: #{flava_forward.5} parent=59 // pred_check_branch
          %795 = sbr.rel (%p793) target = $region68
        $region67: #{flava_forward.5} parent=59 // pred_region
          %p796 = scmp.lt.s32.totalorder %s48, 1
          %s797 = scalar_select %p796, %s48, 1
          %s798 = smul.addr %s797, 8
          %s799 = scalar_lea.vmem %s1, %s798
        $region68: #{flava_forward.5} parent=59 // pred_fallthru
          _
        // Predicated region
        $region69: #{flava_forward.5} parent=59 // pred_check
          %p800 = pneg %p230
        $region70: #{flava_forward.5} parent=59 // pred_check_branch
          %802 = sbr.rel (%p800) target = $region72
        $region71: #{flava_forward.5} parent=59 // pred_region
          %p803 = scmp.lt.s32.totalorder %s48, 1
          %s804 = scalar_select %p803, %s48, 1
          %s805 = scalar_lea.vmem %s7, %s804
        $region72: #{flava_forward.5} parent=59 // pred_fallthru
          _
        // Predicated region
        $region73: #{flava_forward.5} parent=59 // pred_check
          %p806 = pneg %p256
        $region74: #{flava_forward.5} parent=59 // pred_check_branch
          %808 = sbr.rel (%p806) target = $region76
        $region75: #{flava_forward.5} parent=59 // pred_region
          %p809 = scmp.lt.s32.totalorder %s49, 1
          %s810 = scalar_select %p809, %s49, 1
          %s811 = smul.addr %s810, 4
          %s812 = smul.addr %s811, 4
          %s813 = scalar_lea.vmem %s8, %s812
        $region76: #{flava_forward.5} parent=59 // pred_fallthru
          _
        // Predicated region
        $region77: #{flava_forward.5} parent=59 // pred_check
          %p814 = pneg %p282
        $region78: #{flava_forward.5} parent=59 // pred_check_branch
          %816 = sbr.rel (%p814) target = $region80
        $region79: #{flava_forward.5} parent=59 // pred_region
          %p817 = scmp.lt.s32.totalorder %s49, 1
          %s818 = scalar_select %p817, %s49, 1
          %s819 = scalar_lea.vmem %s9, %s818
        $region80: #{flava_forward.5} parent=59 // pred_fallthru
          _
        // Predicated region
        $region81: #{flava_forward.5} parent=59 // pred_check
          %p820 = pneg %p308
        $region82: #{flava_forward.5} parent=59 // pred_check_branch
          %822 = sbr.rel (%p820) target = $region84
        $region83: #{flava_forward.5} parent=59 // pred_region
          %p823 = scmp.lt.s32.totalorder %s49, 1
          %s824 = scalar_select %p823, %s49, 1
          %s825 = smul.addr %s824, 4
          %s826 = smul.addr %s825, 4
          %s827 = scalar_lea.vmem %s10, %s826
        $region84: #{flava_forward.5} parent=59 // pred_fallthru
          _
        // Predicated region
        $region85: #{flava_forward.5} parent=59 // pred_check
          %p828 = pneg %p334
        $region86: #{flava_forward.5} parent=59 // pred_check_branch
          %830 = sbr.rel (%p828) target = $region88
        $region87: #{flava_forward.5} parent=59 // pred_region
          %p831 = scmp.lt.s32.totalorder %s49, 1
          %s832 = scalar_select %p831, %s49, 1
          %s833 = scalar_lea.vmem %s11, %s832
        $region88: #{flava_forward.5} parent=59 // pred_fallthru
          _
        // Predicated region
        $region89: #{flava_forward.5} parent=59 // pred_check
          %p834 = pneg %p360
        $region90: #{flava_forward.5} parent=59 // pred_check_branch
          %836 = sbr.rel (%p834) target = $region92
        $region91: #{flava_forward.5} parent=59 // pred_region
          %p837 = scmp.lt.s32.totalorder %s49, 1
          %s838 = scalar_select %p837, %s49, 1
          %s839 = scalar_lea.vmem %s12, %s838
        $region92: #{flava_forward.5} parent=59 // pred_fallthru
          _
        // Predicated region
        $region93: #{flava_forward.5} parent=59 // pred_check
          %p840 = pneg %p386
        $region94: #{flava_forward.5} parent=59 // pred_check_branch
          %842 = sbr.rel (%p840) target = $region96
        $region95: #{flava_forward.5} parent=59 // pred_region
          %p843 = scmp.lt.s32.totalorder %s49, 1
          %s844 = scalar_select %p843, %s49, 1
          %s845 = scalar_lea.vmem %s13, %s844
        $region96: #{flava_forward.5} parent=59 // pred_fallthru
          _
        // Predicated region
        $region97: #{flava_forward.5} parent=59 // pred_check
          %p846 = pneg %p412
        $region98: #{flava_forward.5} parent=59 // pred_check_branch
          %848 = sbr.rel (%p846) target = $region100
        $region99: #{flava_forward.5} parent=59 // pred_region
          %p849 = scmp.lt.s32.totalorder %s49, 1
          %s850 = scalar_select %p849, %s49, 1
          %s851 = scalar_lea.vmem %s14, %s850
        $region100: #{flava_forward.5} parent=59 // pred_fallthru
          _
        // Predicated region
        $region101: #{flava_forward.5} parent=59 // pred_check
          %p852 = pneg %p438
        $region102: #{flava_forward.5} parent=59 // pred_check_branch
          %854 = sbr.rel (%p852) target = $region104
        $region103: #{flava_forward.5} parent=59 // pred_region
          %p855 = scmp.lt.s32.totalorder %s49, 1
          %s856 = scalar_select %p855, %s49, 1
          %s857 = scalar_lea.vmem %s15, %s856
        $region104: #{flava_forward.5} parent=59 // pred_fallthru
          _
        // Predicated region
        $region105: #{flava_forward.5} parent=59 // pred_check
          %p858 = pneg %p464
        $region106: #{flava_forward.5} parent=59 // pred_check_branch
          %860 = sbr.rel (%p858) target = $region108
        $region107: #{flava_forward.5} parent=59 // pred_region
          %p861 = scmp.lt.s32.totalorder %s49, 1
          %s862 = scalar_select %p861, %s49, 1
          %s863 = smul.addr %s862, 4
          %s864 = smul.addr %s863, 4
          %s865 = scalar_lea.vmem %s16, %s864
        $region108: #{flava_forward.5} parent=59 // pred_fallthru
          _
        // Predicated region
        $region109: #{flava_forward.5} parent=59 // pred_check
          %p866 = pneg %p490
        $region110: #{flava_forward.5} parent=59 // pred_check_branch
          %868 = sbr.rel (%p866) target = $region112
        $region111: #{flava_forward.5} parent=59 // pred_region
          %p869 = scmp.lt.s32.totalorder %s49, 1
          %s870 = scalar_select %p869, %s49, 1
          %s871 = scalar_lea.vmem %s17, %s870
        $region112: #{flava_forward.5} parent=59 // pred_fallthru
          _
        // Predicated region
        $region113: #{flava_forward.5} parent=59 // pred_check
          %p872 = pneg %p516
        $region114: #{flava_forward.5} parent=59 // pred_check_branch
          %874 = sbr.rel (%p872) target = $region116
        $region115: #{flava_forward.5} parent=59 // pred_region
          %p875 = scmp.lt.s32.totalorder %s49, 1
          %s876 = scalar_select %p875, %s49, 1
          %s877 = smul.addr %s876, 8
          %s878 = smul.addr %s877, 4
          %s879 = scalar_lea.vmem %s18, %s878
        $region116: #{flava_forward.5} parent=59 // pred_fallthru
          _
        // Predicated region
        $region117: #{flava_forward.5} parent=59 // pred_check
          %p880 = pneg %p542
        $region118: #{flava_forward.5} parent=59 // pred_check_branch
          %882 = sbr.rel (%p880) target = $region120
        $region119: #{flava_forward.5} parent=59 // pred_region
          %p883 = scmp.lt.s32.totalorder %s49, 1
          %s884 = scalar_select %p883, %s49, 1
          %s885 = scalar_lea.vmem %s19, %s884
        $region120: #{flava_forward.5} parent=59 // pred_fallthru
          _
      $region60: #{flava_forward.5} parent=5 // pred_fallthru
        _
      %p886 = scmp.le.s32.totalorder 1, %s41
      %p887 = scmp.lt.s32.totalorder %s41, 5
      %p888 = pnand %p886, %p887
      %p889 = pneg %p888
      // Predicated region
      $region121: #{flava_forward.5} parent=5 // pred_check
        _
      $region122: #{flava_forward.5} parent=5 // pred_check_branch
        %891 = sbr.rel (%p888) target = $region124
      $region123: #{flava_forward.5} parent=5 // pred_region
        %s892 = ssub.s32 %s41, 1
        // Predicated region
        $region125: #{flava_forward.5} parent=123 // pred_check
          %p893 = pneg %p674
        $region126: #{flava_forward.5} parent=123 // pred_check_branch
          %895 = sbr.rel (%p893) target = $region128
        $region127: #{flava_forward.5} parent=123 // pred_region
          %896 = dma.done [#allocation4], 16
        $region128: #{flava_forward.5} parent=123 // pred_fallthru
          _
        %p897 = scmp.lt.s32.totalorder %s50, 1
        %s898 = scalar_select %p897, %s50, 1
        %s899 = smul.addr %s898, 8
        %s900 = scalar_lea.vmem %s0, %s899
        %p901 = pneg %p79
        %p902 = pneg %p76
        %p903 = scmp.lt.s32.totalorder %s50, 1
        %s904 = scalar_select %p903, %s50, 1
        %s905 = smul.addr %s904, 8
        %s906 = scalar_lea.vmem %s1, %s905
        %p907 = pneg %p105
        %p908 = pneg %p102
        %p909 = pneg %p126
        %p910 = pneg %p123
        %p911 = pneg %p147
        %p912 = pneg %p144
        %p913 = pneg %p168
        %p914 = pneg %p165
        %p915 = pneg %p189
        %p916 = pneg %p186
        %p917 = pneg %p210
        %p918 = pneg %p207
        %p919 = scmp.lt.s32.totalorder %s50, 1
        %s920 = scalar_select %p919, %s50, 1
        %s921 = scalar_lea.vmem %s7, %s920
        %p922 = pneg %p236
        %p923 = pneg %p233
        %p924 = scmp.lt.s32.totalorder %s51, 1
        %s925 = scalar_select %p924, %s51, 1
        %s926 = smul.addr %s925, 4
        %s927 = smul.addr %s926, 4
        %s928 = scalar_lea.vmem %s8, %s927
        %p929 = pneg %p262
        %p930 = pneg %p259
        %p931 = scmp.lt.s32.totalorder %s51, 1
        %s932 = scalar_select %p931, %s51, 1
        %s933 = scalar_lea.vmem %s9, %s932
        %p934 = pneg %p288
        %p935 = pneg %p285
        %p936 = scmp.lt.s32.totalorder %s51, 1
        %s937 = scalar_select %p936, %s51, 1
        %s938 = smul.addr %s937, 4
        %s939 = smul.addr %s938, 4
        %s940 = scalar_lea.vmem %s10, %s939
        %p941 = pneg %p314
        %p942 = pneg %p311
        %p943 = scmp.lt.s32.totalorder %s51, 1
        %s944 = scalar_select %p943, %s51, 1
        %s945 = scalar_lea.vmem %s11, %s944
        %p946 = pneg %p340
        %p947 = pneg %p337
        %p948 = scmp.lt.s32.totalorder %s51, 1
        %s949 = scalar_select %p948, %s51, 1
        %s950 = scalar_lea.vmem %s12, %s949
        %p951 = pneg %p366
        %p952 = pneg %p363
        %p953 = scmp.lt.s32.totalorder %s51, 1
        %s954 = scalar_select %p953, %s51, 1
        %s955 = scalar_lea.vmem %s13, %s954
        %p956 = pneg %p392
        %p957 = pneg %p389
        %p958 = scmp.lt.s32.totalorder %s51, 1
        %s959 = scalar_select %p958, %s51, 1
        %s960 = scalar_lea.vmem %s14, %s959
        %p961 = pneg %p418
        %p962 = pneg %p415
        %p963 = scmp.lt.s32.totalorder %s51, 1
        %s964 = scalar_select %p963, %s51, 1
        %s965 = scalar_lea.vmem %s15, %s964
        %p966 = pneg %p444
        %p967 = pneg %p441
        %p968 = scmp.lt.s32.totalorder %s51, 1
        %s969 = scalar_select %p968, %s51, 1
        %s970 = smul.addr %s969, 4
        %s971 = smul.addr %s970, 4
        %s972 = scalar_lea.vmem %s16, %s971
        %p973 = pneg %p470
        %p974 = pneg %p467
        %p975 = scmp.lt.s32.totalorder %s51, 1
        %s976 = scalar_select %p975, %s51, 1
        %s977 = scalar_lea.vmem %s17, %s976
        %p978 = pneg %p496
        %p979 = pneg %p493
        %p980 = scmp.lt.s32.totalorder %s51, 1
        %s981 = scalar_select %p980, %s51, 1
        %s982 = smul.addr %s981, 8
        %s983 = smul.addr %s982, 4
        %s984 = scalar_lea.vmem %s18, %s983
        %p985 = pneg %p522
        %p986 = pneg %p519
        %p987 = scmp.lt.s32.totalorder %s51, 1
        %s988 = scalar_select %p987, %s51, 1
        %s989 = scalar_lea.vmem %s19, %s988
        %p990 = pneg %p548
        %p991 = pneg %p545
        %p992 = pneg %p569
        %p993 = pneg %p566
        %p994 = pneg %p590
        %p995 = pneg %p587
        %p996 = pneg %p611
        %p997 = pneg %p608
        %p998 = pneg %p632
        %p999 = pneg %p629
        %p1000 = pneg %p653
        %p1001 = pneg %p650
        %p1002 = pneg %p674
        %p1003 = pneg %p671
        %p1004 = pneg %p700
        %p1005 = pneg %p697
        %s1006 = sand.u32 %s687, 1
        %s1007 = scalar_lea.sflag [#allocation5], %s1006
        %s1008 = sand.u32 %s687, 1
        %s1009 = smul.addr %s1008, 16
        %s1010 = scalar_lea.vmem [#allocation6], %s1009
        %p1011 = pneg %p726
        %p1012 = pneg %p723
        %s1013 = sand.u32 %s713, 1
        %s1014 = scalar_lea.sflag [#allocation8], %s1013
        %s1015 = sand.u32 %s713, 1
        %s1016 = scalar_lea.vmem [#allocation7], %s1015
        %p1017 = scmp.lt.s32.totalorder %s50, 1
        %s1018 = scalar_select %p1017, %s50, 1
        %s1019 = smul.addr %s1018, 8
        %s1020 = scalar_lea.vmem %s0, %s1019
        %p1021 = scmp.lt.s32.totalorder %s50, 1
        %s1022 = scalar_select %p1021, %s50, 1
        %s1023 = smul.addr %s1022, 8
        %s1024 = scalar_lea.vmem %s1, %s1023
        %p1025 = scmp.lt.s32.totalorder %s50, 1
        %s1026 = scalar_select %p1025, %s50, 1
        %s1027 = scalar_lea.vmem %s7, %s1026
        %p1028 = scmp.lt.s32.totalorder %s51, 1
        %s1029 = scalar_select %p1028, %s51, 1
        %s1030 = smul.addr %s1029, 4
        %s1031 = smul.addr %s1030, 4
        %s1032 = scalar_lea.vmem %s8, %s1031
        %p1033 = scmp.lt.s32.totalorder %s51, 1
        %s1034 = scalar_select %p1033, %s51, 1
        %s1035 = scalar_lea.vmem %s9, %s1034
        %p1036 = scmp.lt.s32.totalorder %s51, 1
        %s1037 = scalar_select %p1036, %s51, 1
        %s1038 = smul.addr %s1037, 4
        %s1039 = smul.addr %s1038, 4
        %s1040 = scalar_lea.vmem %s10, %s1039
        %p1041 = scmp.lt.s32.totalorder %s51, 1
        %s1042 = scalar_select %p1041, %s51, 1
        %s1043 = scalar_lea.vmem %s11, %s1042
        %p1044 = scmp.lt.s32.totalorder %s51, 1
        %s1045 = scalar_select %p1044, %s51, 1
        %s1046 = scalar_lea.vmem %s12, %s1045
        %p1047 = scmp.lt.s32.totalorder %s51, 1
        %s1048 = scalar_select %p1047, %s51, 1
        %s1049 = scalar_lea.vmem %s13, %s1048
        %p1050 = scmp.lt.s32.totalorder %s51, 1
        %s1051 = scalar_select %p1050, %s51, 1
        %s1052 = scalar_lea.vmem %s14, %s1051
        %p1053 = scmp.lt.s32.totalorder %s51, 1
        %s1054 = scalar_select %p1053, %s51, 1
        %s1055 = scalar_lea.vmem %s15, %s1054
        %p1056 = scmp.lt.s32.totalorder %s51, 1
        %s1057 = scalar_select %p1056, %s51, 1
        %s1058 = smul.addr %s1057, 4
        %s1059 = smul.addr %s1058, 4
        %s1060 = scalar_lea.vmem %s16, %s1059
        %p1061 = scmp.lt.s32.totalorder %s51, 1
        %s1062 = scalar_select %p1061, %s51, 1
        %s1063 = scalar_lea.vmem %s17, %s1062
        %p1064 = scmp.lt.s32.totalorder %s51, 1
        %s1065 = scalar_select %p1064, %s51, 1
        %s1066 = smul.addr %s1065, 8
        %s1067 = smul.addr %s1066, 4
        %s1068 = scalar_lea.vmem %s18, %s1067
        %p1069 = scmp.lt.s32.totalorder %s51, 1
        %s1070 = scalar_select %p1069, %s51, 1
        %s1071 = scalar_lea.vmem %s19, %s1070
        %p1073 = scmp.eq.s32.totalorder %s51, 0
        // Predicated region
        $region129: #{flava_forward.5} parent=123 // pred_check
          %p1074 = pneg %p1073
        $region130: #{flava_forward.5} parent=123 // pred_check_branch
          %1076 = sbr.rel (%p1074) target = $region132
        $region131: #{flava_forward.5} parent=123 // pred_region
          %v1077 = vld [vmem:[%s1020] sm:$0x1f]
          %v1078 = vpack.c.bf16 %v1077, %v1077
          %v1079 = vld [vmem:[%s2] sm:$0xf]
          %v1080 = vld [vmem:[%s2 + $0x4] sm:$0xf]
          %v1081 = vld [vmem:[%s2 + $0x8] sm:$0xf]
          %v1082 = vld [vmem:[%s2 + $0xc] sm:$0xf]
          %v1083 = vld [vmem:[%s3] sm:$0x1]
          %v1085 = vlaneseq
          %v1086 = vshrl.u32 %v1085, 7
          %v1087 = vsub.s32 0, %v1086
          %v1088 = vrot.slane %v1083, %v1087
          %v1094 = vunpack.c.l.b16 %v1079
          %v1095 = vunpack.c.l.b16 %v1080
          %v1096 = vunpack.c.l.b16 %v1081
          %v1097 = vunpack.c.l.b16 %v1082
          %v1098 = vpack.c.b16 %v1095, %v1094
          %v1099 = vpack.c.b16 %v1097, %v1096
          %vm1102 = vcmask 261120
          %v1104 = vsel %vm1102, %v1078, 0
          %1106 = vmatprep.subr.bf16.mxu0 0
          %1107 = vmatpush1.bf16.msra.mxu0 0
          %1108 = vmatprep.subr.bf16.mxu0 0
          %1109 = vmatpush1.bf16.msra.mxu0 0
          %1110 = vmatprep.subr.bf16.mxu0 0
          %1111 = vmatpush1.bf16.msra.mxu0 0
          %1112 = vmatprep.subr.bf16.mxu0 0
          %1113 = vmatpush1.bf16.msra.mxu0 0
          %1114 = vmatprep.subr.bf16.mxu0 0
          %1115 = vmatpush1.bf16.msra.mxu0 0
          %1116 = vmatprep.subr.bf16.mxu0 0
          %1117 = vmatpush1.bf16.msra.mxu0 0
          %1118 = vmatprep.subr.bf16.mxu0 0
          %1119 = vmatpush1.bf16.msra.mxu0 %v1099
          %1120 = vmatprep.subr.bf16.mxu0 0
          %1121 = vmatpush1.bf16.msra.mxu0 %v1098
          %1122 = vmatprep.subr.bf16.mxu0 0
          %1123 = vmatpush2.bf16.msra.mxu0 0
          %1124 = vmatprep.subr.bf16.mxu0 0
          %1125 = vmatpush2.bf16.msra.mxu0 0
          %1126 = vmatprep.subr.bf16.mxu0 0
          %1127 = vmatpush2.bf16.msra.mxu0 0
          %1128 = vmatprep.subr.bf16.mxu0 0
          %1129 = vmatpush2.bf16.msra.mxu0 0
          %1130 = vmatprep.subr.bf16.mxu0 0
          %1131 = vmatpush2.bf16.msra.mxu0 0
          %1132 = vmatprep.subr.bf16.mxu0 0
          %1133 = vmatpush2.bf16.msra.mxu0 0
          %1134 = vmatprep.subr.bf16.mxu0 0
          %1135 = vmatpush2.bf16.msra.mxu0 0
          %1136 = vmatprep.subr.bf16.mxu0 0
          %1137 = vmatpush2.bf16.msra.mxu0 0
          %1138 = vmatprep.mubr.bf16.mxu0 0
          %1139 = vmatmul.mubr.bf16.gmra.mxu0 %v1104
          %v1140 = vpop.f32.mrf.mxu0
          %v1141 = vadd.f32 %v1088, %v1140
          %v1142 = vpop.f32.mrf.mxu0
          %v1143 = vpop.f32.mrf.mxu0
          %v1144 = vpop.f32.mrf.mxu0
          %1145 = vdwg.mxu0
          %v1146 = vld [vmem:[%s1024] sm:$0xff]
          %v1147 = vpack.c.bf16 %v1146, %v1146
          %v1148 = vld [vmem:[%s4] sm:$0xf]
          %v1149 = vld [vmem:[%s4 + $0x4] sm:$0xf]
          %v1150 = vld [vmem:[%s4 + $0x8] sm:$0xf]
          %v1151 = vld [vmem:[%s4 + $0xc] sm:$0xf]
          %v1152 = vld [vmem:[%s5] sm:$0x1]
          %v1154 = vlaneseq
          %v1155 = vshrl.u32 %v1154, 7
          %v1156 = vsub.s32 0, %v1155
          %v1157 = vrot.slane %v1152, %v1156
          %v1163 = vunpack.c.l.b16 %v1148
          %v1164 = vunpack.c.l.b16 %v1149
          %v1165 = vunpack.c.l.b16 %v1150
          %v1166 = vunpack.c.l.b16 %v1151
          %v1167 = vpack.c.b16 %v1164, %v1163
          %v1168 = vpack.c.b16 %v1166, %v1165
          %v1172 = vsel %vm1102, %v1147, 0
          %1174 = vmatprep.subr.bf16.mxu0 0
          %1175 = vmatpush1.bf16.msra.mxu0 0
          %1176 = vmatprep.subr.bf16.mxu0 0
          %1177 = vmatpush1.bf16.msra.mxu0 0
          %1178 = vmatprep.subr.bf16.mxu0 0
          %1179 = vmatpush1.bf16.msra.mxu0 0
          %1180 = vmatprep.subr.bf16.mxu0 0
          %1181 = vmatpush1.bf16.msra.mxu0 0
          %1182 = vmatprep.subr.bf16.mxu0 0
          %1183 = vmatpush1.bf16.msra.mxu0 0
          %1184 = vmatprep.subr.bf16.mxu0 0
          %1185 = vmatpush1.bf16.msra.mxu0 0
          %1186 = vmatprep.subr.bf16.mxu0 0
          %1187 = vmatpush1.bf16.msra.mxu0 %v1168
          %1188 = vmatprep.subr.bf16.mxu0 0
          %1189 = vmatpush1.bf16.msra.mxu0 %v1167
          %1190 = vmatprep.subr.bf16.mxu0 0
          %1191 = vmatpush2.bf16.msra.mxu0 0
          %1192 = vmatprep.subr.bf16.mxu0 0
          %1193 = vmatpush2.bf16.msra.mxu0 0
          %1194 = vmatprep.subr.bf16.mxu0 0
          %1195 = vmatpush2.bf16.msra.mxu0 0
          %1196 = vmatprep.subr.bf16.mxu0 0
          %1197 = vmatpush2.bf16.msra.mxu0 0
          %1198 = vmatprep.subr.bf16.mxu0 0
          %1199 = vmatpush2.bf16.msra.mxu0 0
          %1200 = vmatprep.subr.bf16.mxu0 0
          %1201 = vmatpush2.bf16.msra.mxu0 0
          %1202 = vmatprep.subr.bf16.mxu0 0
          %1203 = vmatpush2.bf16.msra.mxu0 0
          %1204 = vmatprep.subr.bf16.mxu0 0
          %1205 = vmatpush2.bf16.msra.mxu0 0
          %1206 = vmatprep.mubr.bf16.mxu0 0
          %1207 = vmatmul.mubr.bf16.gmra.mxu0 %v1172
          %v1208 = vpop.f32.mrf.mxu0
          %v1209 = vadd.f32 %v1157, %v1208
          %v1210 = vpop.f32.mrf.mxu0
          %v1211 = vpop.f32.mrf.mxu0
          %v1212 = vpop.f32.mrf.mxu0
          %1213 = vdwg.mxu0
          %v1214 = vld [vmem:[%s6] sm:$0x1]
          %v1216 = vrot.slane %v1141, 7
          %v1219 = vrot.slane %v1209, 2
          %vm1221 = vcmask 1040384
          %v1222 = vsel %vm1221, %v1214, %v1216
          %vm1223 = vcmask 1045504
          %v1224 = vsel %vm1223, %v1222, %v1219
          %1225 = vst.msk [vmem:[#allocation2] sm:$0xff] %vm1102, %v1224
          %vm1226 = vcmask 259072
          %1227 = vst.msk [vmem:[#allocation2 + $0x8] sm:$0x3f] %vm1226, %v1219
        $region132: #{flava_forward.5} parent=123 // pred_fallthru
          _
        %v1228 = vld [vmem:[#allocation2] sm:$0xff]
        %v1229 = vld [vmem:[#allocation2 + $0x8] sm:$0x3f]
        %v1230 = vld [vmem:[%s1046] sm:$0x1]
        %v1231 = vld [vmem:[%s1049] sm:$0x1]
        %vm1232 = vcmask 261120
        %v1233 = vsel %vm1232, %v1228, 0.0
        %1234 = vadd.xlane.f32.xlu0 %v1233
        %v1235 = vpop.xlane.xlu0 %1234
        %vm1236 = vcmask 259072
        %v1237 = vsel %vm1236, %v1229, 0.0
        %1238 = vadd.xlane.f32.xlu0 %v1237
        %v1239 = vpop.xlane.xlu0 %1238
        %v1240 = vrcp.pop 32.0
        %v1241 = vmul.f32 %v1235, %v1240
        %v1242 = vmul.f32 %v1239, %v1240
        %v1243 = vsub.f32 %v1228, %v1241
        %v1244 = vsub.f32 %v1229, %v1242
        %v1245 = vmul.f32 %v1243, %v1243
        %v1246 = vmul.f32 %v1244, %v1244
        %v1247 = vsel %vm1232, %v1245, 0.0
        %1248 = vadd.xlane.f32.xlu0 %v1247
        %v1249 = vpop.xlane.xlu0 %1248
        %v1250 = vsel %vm1236, %v1246, 0.0
        %1251 = vadd.xlane.f32.xlu0 %v1250
        %v1252 = vpop.xlane.xlu0 %1251
        %v1253 = vmul.f32 %v1249, %v1240
        %v1254 = vmul.f32 %v1252, %v1240
        %v1255 = vadd.f32 %v1253, 1e-12
        %v1256 = vadd.f32 %v1254, 1e-12
        %v1257 = vrsqrt.pop %v1255
        %v1258 = vrsqrt.pop %v1256
        %v1259 = vmul.f32 %v1243, %v1257
        %v1260 = vmul.f32 %v1244, %v1258
        %v1262 = vlaneseq
        %v1263 = vshrl.u32 %v1262, 7
        %v1264 = vsub.s32 0, %v1263
        %v1265 = vrot.slane %v1230, %v1264
        %v1267 = vmul.f32 %v1259, %v1265
        %v1268 = vmul.f32 %v1260, %v1265
        %v1270 = vlaneseq
        %v1271 = vshrl.u32 %v1270, 7
        %v1272 = vsub.s32 0, %v1271
        %v1273 = vrot.slane %v1231, %v1272
        %v1275 = vadd.f32 %v1267, %v1273
        %v1276 = vadd.f32 %v1268, %v1273
        %v1277 = vpack.c.bf16 %v1276, %v1275
        %v1278 = vld [vmem:[%s1032] sm:$0xf]
        %v1279 = vld [vmem:[%s1032 + $0x4] sm:$0xf]
        %v1280 = vld [vmem:[%s1032 + $0x8] sm:$0xf]
        %v1281 = vld [vmem:[%s1032 + $0xc] sm:$0xf]
        %v1282 = vld [vmem:[%s1035] sm:$0x1]
        %v1284 = vlaneseq
        %v1285 = vshrl.u32 %v1284, 7
        %v1286 = vsub.s32 0, %v1285
        %v1287 = vrot.slane %v1282, %v1286
        %v1293 = vunpack.c.l.b16 %v1278
        %v1294 = vunpack.c.l.b16 %v1279
        %v1295 = vunpack.c.l.b16 %v1280
        %v1296 = vunpack.c.l.b16 %v1281
        %v1297 = vpack.c.b16 %v1294, %v1293
        %v1298 = vpack.c.b16 %v1296, %v1295
        %v1302 = vsel %vm1232, %v1277, 0
        %1304 = vmatprep.subr.bf16.mxu0 0
        %1305 = vmatpush1.bf16.msra.mxu0 0
        %1306 = vmatprep.subr.bf16.mxu0 0
        %1307 = vmatpush1.bf16.msra.mxu0 0
        %1308 = vmatprep.subr.bf16.mxu0 0
        %1309 = vmatpush1.bf16.msra.mxu0 0
        %1310 = vmatprep.subr.bf16.mxu0 0
        %1311 = vmatpush1.bf16.msra.mxu0 0
        %1312 = vmatprep.subr.bf16.mxu0 0
        %1313 = vmatpush1.bf16.msra.mxu0 0
        %1314 = vmatprep.subr.bf16.mxu0 0
        %1315 = vmatpush1.bf16.msra.mxu0 0
        %1316 = vmatprep.subr.bf16.mxu0 0
        %1317 = vmatpush1.bf16.msra.mxu0 %v1298
        %1318 = vmatprep.subr.bf16.mxu0 0
        %1319 = vmatpush1.bf16.msra.mxu0 %v1297
        %1320 = vmatprep.subr.bf16.mxu0 0
        %1321 = vmatpush2.bf16.msra.mxu0 0
        %1322 = vmatprep.subr.bf16.mxu0 0
        %1323 = vmatpush2.bf16.msra.mxu0 0
        %1324 = vmatprep.subr.bf16.mxu0 0
        %1325 = vmatpush2.bf16.msra.mxu0 0
        %1326 = vmatprep.subr.bf16.mxu0 0
        %1327 = vmatpush2.bf16.msra.mxu0 0
        %1328 = vmatprep.subr.bf16.mxu0 0
        %1329 = vmatpush2.bf16.msra.mxu0 0
        %1330 = vmatprep.subr.bf16.mxu0 0
        %1331 = vmatpush2.bf16.msra.mxu0 0
        %1332 = vmatprep.subr.bf16.mxu0 0
        %1333 = vmatpush2.bf16.msra.mxu0 0
        %1334 = vmatprep.subr.bf16.mxu0 0
        %1335 = vmatpush2.bf16.msra.mxu0 0
        %1336 = vmatprep.mubr.bf16.mxu0 0
        %1337 = vmatmul.mubr.bf16.gmra.mxu0 %v1302
        %v1338 = vpop.f32.mrf.mxu0
        %v1339 = vadd.f32 %v1287, %v1338
        %v1340 = vpop.f32.mrf.mxu0
        %v1341 = vpop.f32.mrf.mxu0
        %v1342 = vadd.f32 %v1287, %v1341
        %v1343 = vpop.f32.mrf.mxu0
        %1344 = vdwg.mxu0
        %v1345 = vld [vmem:[%s1027] sm:$0x1]
        %v1346 = vpack.c.bf16 %v1342, %v1339
        %1348 = vrot.lane.b32.xlu0 %v1346, 96
        %v1349 = vpop.permute.xlu0 %1348
        %vm1350 = vcmask 64512
        %v1352 = vsel %vm1350, %v1346, 0
        %v1355 = vsel %vm1350, %v1349, 0
        %1357 = vmatprep.subr.bf16.mxu0 0
        %1358 = vmatpush1.bf16.xpose.msra.mxu0 0
        %1359 = vmatprep.subr.bf16.mxu0 0
        %1360 = vmatpush1.bf16.xpose.msra.mxu0 0
        %1361 = vmatprep.subr.bf16.mxu0 0
        %1362 = vmatpush1.bf16.xpose.msra.mxu0 0
        %1363 = vmatprep.subr.bf16.mxu0 0
        %1364 = vmatpush1.bf16.xpose.msra.mxu0 0
        %1365 = vmatprep.subr.bf16.mxu0 0
        %1366 = vmatpush1.bf16.xpose.msra.mxu0 0
        %1367 = vmatprep.subr.bf16.mxu0 0
        %1368 = vmatpush1.bf16.xpose.msra.mxu0 0
        %1369 = vmatprep.subr.bf16.mxu0 0
        %1370 = vmatpush1.bf16.xpose.msra.mxu0 0
        %1371 = vmatprep.subr.bf16.mxu0 0
        %1372 = vmatpush1.bf16.xpose.msra.mxu0 %v1355
        %1373 = vmatprep.subr.bf16.mxu0 0
        %1374 = vmatpush2.bf16.xpose.msra.mxu0 0
        %1375 = vmatprep.subr.bf16.mxu0 0
        %1376 = vmatpush2.bf16.xpose.msra.mxu0 0
        %1377 = vmatprep.subr.bf16.mxu0 0
        %1378 = vmatpush2.bf16.xpose.msra.mxu0 0
        %1379 = vmatprep.subr.bf16.mxu0 0
        %1380 = vmatpush2.bf16.xpose.msra.mxu0 0
        %1381 = vmatprep.subr.bf16.mxu0 0
        %1382 = vmatpush2.bf16.xpose.msra.mxu0 0
        %1383 = vmatprep.subr.bf16.mxu0 0
        %1384 = vmatpush2.bf16.xpose.msra.mxu0 0
        %1385 = vmatprep.subr.bf16.mxu0 0
        %1386 = vmatpush2.bf16.xpose.msra.mxu0 0
        %1387 = vmatprep.subr.bf16.mxu0 0
        %1388 = vmatpush2.bf16.xpose.msra.mxu0 0
        %1389 = vmatprep.mubr.bf16.mxu0 0
        %1390 = vmatmul.mubr.bf16.gmra.mxu0 %v1352
        %v1391 = vpop.f32.mrf.mxu0
        %v1392 = vadd.f32 0.0, %v1391
        %v1393 = vpop.f32.mrf.mxu0
        %v1394 = vpop.f32.mrf.mxu0
        %v1395 = vadd.f32 0.0, %v1394
        %v1396 = vpop.f32.mrf.mxu0
        %1397 = vdwg.mxu0
        %1398 = vrot.lane.b32.xlu0 %v1346, 120
        %v1399 = vpop.permute.xlu0 %1398
        %1400 = vrot.lane.b32.xlu0 %v1346, 88
        %v1401 = vpop.permute.xlu0 %1400
        %v1403 = vsel %vm1350, %v1399, 0
        %v1406 = vsel %vm1350, %v1401, 0
        %1408 = vmatprep.subr.bf16.mxu0 0
        %1409 = vmatpush1.bf16.xpose.msra.mxu0 0
        %1410 = vmatprep.subr.bf16.mxu0 0
        %1411 = vmatpush1.bf16.xpose.msra.mxu0 0
        %1412 = vmatprep.subr.bf16.mxu0 0
        %1413 = vmatpush1.bf16.xpose.msra.mxu0 0
        %1414 = vmatprep.subr.bf16.mxu0 0
        %1415 = vmatpush1.bf16.xpose.msra.mxu0 0
        %1416 = vmatprep.subr.bf16.mxu0 0
        %1417 = vmatpush1.bf16.xpose.msra.mxu0 0
        %1418 = vmatprep.subr.bf16.mxu0 0
        %1419 = vmatpush1.bf16.xpose.msra.mxu0 0
        %1420 = vmatprep.subr.bf16.mxu0 0
        %1421 = vmatpush1.bf16.xpose.msra.mxu0 0
        %1422 = vmatprep.subr.bf16.mxu0 0
        %1423 = vmatpush1.bf16.xpose.msra.mxu0 %v1406
        %1424 = vmatprep.subr.bf16.mxu0 0
        %1425 = vmatpush2.bf16.xpose.msra.mxu0 0
        %1426 = vmatprep.subr.bf16.mxu0 0
        %1427 = vmatpush2.bf16.xpose.msra.mxu0 0
        %1428 = vmatprep.subr.bf16.mxu0 0
        %1429 = vmatpush2.bf16.xpose.msra.mxu0 0
        %1430 = vmatprep.subr.bf16.mxu0 0
        %1431 = vmatpush2.bf16.xpose.msra.mxu0 0
        %1432 = vmatprep.subr.bf16.mxu0 0
        %1433 = vmatpush2.bf16.xpose.msra.mxu0 0
        %1434 = vmatprep.subr.bf16.mxu0 0
        %1435 = vmatpush2.bf16.xpose.msra.mxu0 0
        %1436 = vmatprep.subr.bf16.mxu0 0
        %1437 = vmatpush2.bf16.xpose.msra.mxu0 0
        %1438 = vmatprep.subr.bf16.mxu0 0
        %1439 = vmatpush2.bf16.xpose.msra.mxu0 0
        %1440 = vmatprep.mubr.bf16.mxu0 0
        %1441 = vmatmul.mubr.bf16.gmra.mxu0 %v1403
        %v1442 = vpop.f32.mrf.mxu0
        %v1443 = vadd.f32 0.0, %v1442
        %v1444 = vpop.f32.mrf.mxu0
        %v1445 = vpop.f32.mrf.mxu0
        %v1446 = vadd.f32 0.0, %v1445
        %v1447 = vpop.f32.mrf.mxu0
        %1448 = vdwg.mxu0
        %1449 = vrot.lane.b32.xlu0 %v1346, 112
        %v1450 = vpop.permute.xlu0 %1449
        %1451 = vrot.lane.b32.xlu0 %v1346, 80
        %v1452 = vpop.permute.xlu0 %1451
        %v1454 = vsel %vm1350, %v1450, 0
        %v1457 = vsel %vm1350, %v1452, 0
        %1459 = vmatprep.subr.bf16.mxu0 0
        %1460 = vmatpush1.bf16.xpose.msra.mxu0 0
        %1461 = vmatprep.subr.bf16.mxu0 0
        %1462 = vmatpush1.bf16.xpose.msra.mxu0 0
        %1463 = vmatprep.subr.bf16.mxu0 0
        %1464 = vmatpush1.bf16.xpose.msra.mxu0 0
        %1465 = vmatprep.subr.bf16.mxu0 0
        %1466 = vmatpush1.bf16.xpose.msra.mxu0 0
        %1467 = vmatprep.subr.bf16.mxu0 0
        %1468 = vmatpush1.bf16.xpose.msra.mxu0 0
        %1469 = vmatprep.subr.bf16.mxu0 0
        %1470 = vmatpush1.bf16.xpose.msra.mxu0 0
        %1471 = vmatprep.subr.bf16.mxu0 0
        %1472 = vmatpush1.bf16.xpose.msra.mxu0 0
        %1473 = vmatprep.subr.bf16.mxu0 0
        %1474 = vmatpush1.bf16.xpose.msra.mxu0 %v1457
        %1475 = vmatprep.subr.bf16.mxu0 0
        %1476 = vmatpush2.bf16.xpose.msra.mxu0 0
        %1477 = vmatprep.subr.bf16.mxu0 0
        %1478 = vmatpush2.bf16.xpose.msra.mxu0 0
        %1479 = vmatprep.subr.bf16.mxu0 0
        %1480 = vmatpush2.bf16.xpose.msra.mxu0 0
        %1481 = vmatprep.subr.bf16.mxu0 0
        %1482 = vmatpush2.bf16.xpose.msra.mxu0 0
        %1483 = vmatprep.subr.bf16.mxu0 0
        %1484 = vmatpush2.bf16.xpose.msra.mxu0 0
        %1485 = vmatprep.subr.bf16.mxu0 0
        %1486 = vmatpush2.bf16.xpose.msra.mxu0 0
        %1487 = vmatprep.subr.bf16.mxu0 0
        %1488 = vmatpush2.bf16.xpose.msra.mxu0 0
        %1489 = vmatprep.subr.bf16.mxu0 0
        %1490 = vmatpush2.bf16.xpose.msra.mxu0 0
        %1491 = vmatprep.mubr.bf16.mxu0 0
        %1492 = vmatmul.mubr.bf16.gmra.mxu0 %v1454
        %v1493 = vpop.f32.mrf.mxu0
        %v1494 = vadd.f32 0.0, %v1493
        %v1495 = vpop.f32.mrf.mxu0
        %v1496 = vpop.f32.mrf.mxu0
        %v1497 = vadd.f32 0.0, %v1496
        %v1498 = vpop.f32.mrf.mxu0
        %1499 = vdwg.mxu0
        %1500 = vrot.lane.b32.xlu0 %v1346, 104
        %v1501 = vpop.permute.xlu0 %1500
        %1502 = vrot.lane.b32.xlu0 %v1346, 72
        %v1503 = vpop.permute.xlu0 %1502
        %v1505 = vsel %vm1350, %v1501, 0
        %v1508 = vsel %vm1350, %v1503, 0
        %1510 = vmatprep.subr.bf16.mxu0 0
        %1511 = vmatpush1.bf16.xpose.msra.mxu0 0
        %1512 = vmatprep.subr.bf16.mxu0 0
        %1513 = vmatpush1.bf16.xpose.msra.mxu0 0
        %1514 = vmatprep.subr.bf16.mxu0 0
        %1515 = vmatpush1.bf16.xpose.msra.mxu0 0
        %1516 = vmatprep.subr.bf16.mxu0 0
        %1517 = vmatpush1.bf16.xpose.msra.mxu0 0
        %1518 = vmatprep.subr.bf16.mxu0 0
        %1519 = vmatpush1.bf16.xpose.msra.mxu0 0
        %1520 = vmatprep.subr.bf16.mxu0 0
        %1521 = vmatpush1.bf16.xpose.msra.mxu0 0
        %1522 = vmatprep.subr.bf16.mxu0 0
        %1523 = vmatpush1.bf16.xpose.msra.mxu0 0
        %1524 = vmatprep.subr.bf16.mxu0 0
        %1525 = vmatpush1.bf16.xpose.msra.mxu0 %v1508
        %1526 = vmatprep.subr.bf16.mxu0 0
        %1527 = vmatpush2.bf16.xpose.msra.mxu0 0
        %1528 = vmatprep.subr.bf16.mxu0 0
        %1529 = vmatpush2.bf16.xpose.msra.mxu0 0
        %1530 = vmatprep.subr.bf16.mxu0 0
        %1531 = vmatpush2.bf16.xpose.msra.mxu0 0
        %1532 = vmatprep.subr.bf16.mxu0 0
        %1533 = vmatpush2.bf16.xpose.msra.mxu0 0
        %1534 = vmatprep.subr.bf16.mxu0 0
        %1535 = vmatpush2.bf16.xpose.msra.mxu0 0
        %1536 = vmatprep.subr.bf16.mxu0 0
        %1537 = vmatpush2.bf16.xpose.msra.mxu0 0
        %1538 = vmatprep.subr.bf16.mxu0 0
        %1539 = vmatpush2.bf16.xpose.msra.mxu0 0
        %1540 = vmatprep.subr.bf16.mxu0 0
        %1541 = vmatpush2.bf16.xpose.msra.mxu0 0
        %1542 = vmatprep.mubr.bf16.mxu0 0
        %1543 = vmatmul.mubr.bf16.gmra.mxu0 %v1505
        %v1544 = vpop.f32.mrf.mxu0
        %v1545 = vadd.f32 0.0, %v1544
        %v1546 = vpop.f32.mrf.mxu0
        %v1547 = vpop.f32.mrf.mxu0
        %v1548 = vadd.f32 0.0, %v1547
        %v1549 = vpop.f32.mrf.mxu0
        %1550 = vdwg.mxu0
        %vm1553 = vcmask 1045504
        %v1554 = vrot.slane %v1443, 2
        %v1555 = vrot.slane %v1446, 2
        %v1556 = vsel %vm1553, %v1554, %v1555
        %vm1562 = vcmask 1043456
        %v1563 = vrot.slane %v1494, 4
        %v1564 = vrot.slane %v1497, 4
        %v1565 = vsel %vm1562, %v1563, %v1564
        %vm1571 = vcmask 1041408
        %v1572 = vrot.slane %v1545, 6
        %v1573 = vrot.slane %v1548, 6
        %v1574 = vsel %vm1571, %v1572, %v1573
        %v1577 = vsel %vm1553, %v1395, %v1554
        %v1578 = vsel %vm1562, %v1555, %v1563
        %v1579 = vsel %vm1571, %v1564, %v1572
        %v1581 = vlaneseq
        %v1582 = vshrl.u32 %v1581, 7
        %v1583 = vsub.s32 0, %v1582
        %v1584 = vrot.slane %v1345, %v1583
        %v1586 = vadd.f32 %v1392, %v1584
        %v1587 = vadd.f32 %v1577, %v1584
        %v1588 = vadd.f32 %v1556, %v1584
        %v1589 = vadd.f32 %v1578, %v1584
        %v1590 = vadd.f32 %v1565, %v1584
        %v1591 = vadd.f32 %v1579, %v1584
        %v1592 = vadd.f32 %v1574, %v1584
        %vm1593 = vcmask 113664
        %v1594 = vsel %vm1593, %v1586, -inf
        %1595 = vmax.xlane.f32.xlu0 %v1594
        %v1596 = vpop.xlane.xlu0 %1595
        %v1597 = vsel %vm1593, %v1587, -inf
        %1598 = vmax.xlane.f32.xlu0 %v1597
        %v1599 = vpop.xlane.xlu0 %1598
        %v1600 = vsel %vm1593, %v1588, -inf
        %1601 = vmax.xlane.f32.xlu0 %v1600
        %v1602 = vpop.xlane.xlu0 %1601
        %v1603 = vsel %vm1593, %v1589, -inf
        %1604 = vmax.xlane.f32.xlu0 %v1603
        %v1605 = vpop.xlane.xlu0 %1604
        %v1606 = vsel %vm1593, %v1590, -inf
        %1607 = vmax.xlane.f32.xlu0 %v1606
        %v1608 = vpop.xlane.xlu0 %1607
        %v1609 = vsel %vm1593, %v1591, -inf
        %1610 = vmax.xlane.f32.xlu0 %v1609
        %v1611 = vpop.xlane.xlu0 %1610
        %v1612 = vsel %vm1593, %v1592, -inf
        %1613 = vmax.xlane.f32.xlu0 %v1612
        %v1614 = vpop.xlane.xlu0 %1613
        %v1615 = vsub.f32 %v1586, %v1596
        %v1616 = vsub.f32 %v1587, %v1599
        %v1617 = vsub.f32 %v1588, %v1602
        %v1618 = vsub.f32 %v1589, %v1605
        %v1619 = vsub.f32 %v1590, %v1608
        %v1620 = vsub.f32 %v1591, %v1611
        %v1621 = vsub.f32 %v1592, %v1614
        %v1622 = vmul.f32 %v1615, 1.442695
        %v1623 = vpow.pop %v1622
        %v1624 = vmul.f32 %v1616, 1.442695
        %v1625 = vpow.pop %v1624
        %v1626 = vmul.f32 %v1617, 1.442695
        %v1627 = vpow.pop %v1626
        %v1628 = vmul.f32 %v1618, 1.442695
        %v1629 = vpow.pop %v1628
        %v1630 = vmul.f32 %v1619, 1.442695
        %v1631 = vpow.pop %v1630
        %v1632 = vmul.f32 %v1620, 1.442695
        %v1633 = vpow.pop %v1632
        %v1634 = vmul.f32 %v1621, 1.442695
        %v1635 = vpow.pop %v1634
        %v1636 = vsel %vm1593, %v1623, 0.0
        %1637 = vadd.xlane.f32.xlu0 %v1636
        %v1638 = vpop.xlane.xlu0 %1637
        %v1639 = vsel %vm1593, %v1625, 0.0
        %1640 = vadd.xlane.f32.xlu0 %v1639
        %v1641 = vpop.xlane.xlu0 %1640
        %v1642 = vsel %vm1593, %v1627, 0.0
        %1643 = vadd.xlane.f32.xlu0 %v1642
        %v1644 = vpop.xlane.xlu0 %1643
        %v1645 = vsel %vm1593, %v1629, 0.0
        %1646 = vadd.xlane.f32.xlu0 %v1645
        %v1647 = vpop.xlane.xlu0 %1646
        %v1648 = vsel %vm1593, %v1631, 0.0
        %1649 = vadd.xlane.f32.xlu0 %v1648
        %v1650 = vpop.xlane.xlu0 %1649
        %v1651 = vsel %vm1593, %v1633, 0.0
        %1652 = vadd.xlane.f32.xlu0 %v1651
        %v1653 = vpop.xlane.xlu0 %1652
        %v1654 = vsel %vm1593, %v1635, 0.0
        %1655 = vadd.xlane.f32.xlu0 %v1654
        %v1656 = vpop.xlane.xlu0 %1655
        %v1657 = vrcp.pop %v1638
        %v1658 = vrcp.pop %v1641
        %v1659 = vrcp.pop %v1644
        %v1660 = vrcp.pop %v1647
        %v1661 = vrcp.pop %v1650
        %v1662 = vrcp.pop %v1653
        %v1663 = vrcp.pop %v1656
        %v1664 = vmul.f32 %v1623, %v1657
        %v1665 = vmul.f32 %v1625, %v1658
        %v1666 = vmul.f32 %v1627, %v1659
        %v1667 = vmul.f32 %v1629, %v1660
        %v1668 = vmul.f32 %v1631, %v1661
        %v1669 = vmul.f32 %v1633, %v1662
        %v1670 = vmul.f32 %v1635, %v1663
        %v1671 = vpack.c.bf16 %v1665, %v1664
        %1672 = vrot.lane.b32.xlu0 %v1346, 64
        %v1673 = vpop.permute.xlu0 %1672
        %v1675 = vsel %vm1593, %v1671, 0
        %vm1677 = vcmask 1046528
        %v1679 = vsel %vm1677, %v1673, 0
        %1681 = vmatprep.subr.bf16.mxu0 0
        %1682 = vmatpush1.bf16.msra.mxu0 0
        %1683 = vmatprep.subr.bf16.mxu0 0
        %1684 = vmatpush1.bf16.msra.mxu0 0
        %1685 = vmatprep.subr.bf16.mxu0 0
        %1686 = vmatpush1.bf16.msra.mxu0 0
        %1687 = vmatprep.subr.bf16.mxu0 0
        %1688 = vmatpush1.bf16.msra.mxu0 0
        %1689 = vmatprep.subr.bf16.mxu0 0
        %1690 = vmatpush1.bf16.msra.mxu0 0
        %1691 = vmatprep.subr.bf16.mxu0 0
        %1692 = vmatpush1.bf16.msra.mxu0 0
        %1693 = vmatprep.subr.bf16.mxu0 0
        %1694 = vmatpush1.bf16.msra.mxu0 0
        %1695 = vmatprep.subr.bf16.mxu0 0
        %1696 = vmatpush1.bf16.msra.mxu0 %v1679
        %1697 = vmatprep.subr.bf16.mxu0 0
        %1698 = vmatpush2.bf16.msra.mxu0 0
        %1699 = vmatprep.subr.bf16.mxu0 0
        %1700 = vmatpush2.bf16.msra.mxu0 0
        %1701 = vmatprep.subr.bf16.mxu0 0
        %1702 = vmatpush2.bf16.msra.mxu0 0
        %1703 = vmatprep.subr.bf16.mxu0 0
        %1704 = vmatpush2.bf16.msra.mxu0 0
        %1705 = vmatprep.subr.bf16.mxu0 0
        %1706 = vmatpush2.bf16.msra.mxu0 0
        %1707 = vmatprep.subr.bf16.mxu0 0
        %1708 = vmatpush2.bf16.msra.mxu0 0
        %1709 = vmatprep.subr.bf16.mxu0 0
        %1710 = vmatpush2.bf16.msra.mxu0 0
        %1711 = vmatprep.subr.bf16.mxu0 0
        %1712 = vmatpush2.bf16.msra.mxu0 0
        %1713 = vmatprep.mubr.bf16.mxu0 0
        %1714 = vmatmul.mubr.bf16.gmra.mxu0 %v1675
        %v1715 = vpop.f32.mrf.mxu0
        %v1716 = vadd.f32 0.0, %v1715
        %v1717 = vpop.f32.mrf.mxu0
        %v1718 = vpop.f32.mrf.mxu0
        %v1719 = vadd.f32 0.0, %v1718
        %v1720 = vpop.f32.mrf.mxu0
        %1721 = vdwg.mxu0
        %v1722 = vpack.c.bf16 %v1666, %v1665
        %v1723 = vpack.c.bf16 %v1667, %v1667
        %vm1726 = vcmask 1044480
        %v1727 = vrot.slane %v1722, 3
        %v1728 = vrot.slane %v1723, 3
        %v1729 = vsel %vm1726, %v1727, %v1728
        %1730 = vrot.lane.b32.xlu0 %v1346, 56
        %v1731 = vpop.permute.xlu0 %1730
        %v1733 = vsel %vm1593, %v1729, 0
        %v1736 = vsel %vm1677, %v1731, 0
        %1738 = vmatprep.subr.bf16.mxu0 0
        %1739 = vmatpush1.bf16.msra.mxu0 0
        %1740 = vmatprep.subr.bf16.mxu0 0
        %1741 = vmatpush1.bf16.msra.mxu0 0
        %1742 = vmatprep.subr.bf16.mxu0 0
        %1743 = vmatpush1.bf16.msra.mxu0 0
        %1744 = vmatprep.subr.bf16.mxu0 0
        %1745 = vmatpush1.bf16.msra.mxu0 0
        %1746 = vmatprep.subr.bf16.mxu0 0
        %1747 = vmatpush1.bf16.msra.mxu0 0
        %1748 = vmatprep.subr.bf16.mxu0 0
        %1749 = vmatpush1.bf16.msra.mxu0 0
        %1750 = vmatprep.subr.bf16.mxu0 0
        %1751 = vmatpush1.bf16.msra.mxu0 0
        %1752 = vmatprep.subr.bf16.mxu0 0
        %1753 = vmatpush1.bf16.msra.mxu0 %v1736
        %1754 = vmatprep.subr.bf16.mxu0 0
        %1755 = vmatpush2.bf16.msra.mxu0 0
        %1756 = vmatprep.subr.bf16.mxu0 0
        %1757 = vmatpush2.bf16.msra.mxu0 0
        %1758 = vmatprep.subr.bf16.mxu0 0
        %1759 = vmatpush2.bf16.msra.mxu0 0
        %1760 = vmatprep.subr.bf16.mxu0 0
        %1761 = vmatpush2.bf16.msra.mxu0 0
        %1762 = vmatprep.subr.bf16.mxu0 0
        %1763 = vmatpush2.bf16.msra.mxu0 0
        %1764 = vmatprep.subr.bf16.mxu0 0
        %1765 = vmatpush2.bf16.msra.mxu0 0
        %1766 = vmatprep.subr.bf16.mxu0 0
        %1767 = vmatpush2.bf16.msra.mxu0 0
        %1768 = vmatprep.subr.bf16.mxu0 0
        %1769 = vmatpush2.bf16.msra.mxu0 0
        %1770 = vmatprep.mubr.bf16.mxu0 0
        %1771 = vmatmul.mubr.bf16.gmra.mxu0 %v1733
        %v1772 = vpop.f32.mrf.mxu0
        %v1773 = vadd.f32 0.0, %v1772
        %v1774 = vpop.f32.mrf.mxu0
        %v1775 = vpop.f32.mrf.mxu0
        %v1776 = vadd.f32 0.0, %v1775
        %v1777 = vpop.f32.mrf.mxu0
        %1778 = vdwg.mxu0
        %v1779 = vpack.c.bf16 %v1668, %v1667
        %v1780 = vpack.c.bf16 %v1669, %v1669
        %vm1783 = vcmask 1045504
        %v1784 = vrot.slane %v1779, 2
        %v1785 = vrot.slane %v1780, 2
        %v1786 = vsel %vm1783, %v1784, %v1785
        %1787 = vrot.lane.b32.xlu0 %v1346, 48
        %v1788 = vpop.permute.xlu0 %1787
        %v1790 = vsel %vm1593, %v1786, 0
        %v1793 = vsel %vm1677, %v1788, 0
        %1795 = vmatprep.subr.bf16.mxu0 0
        %1796 = vmatpush1.bf16.msra.mxu0 0
        %1797 = vmatprep.subr.bf16.mxu0 0
        %1798 = vmatpush1.bf16.msra.mxu0 0
        %1799 = vmatprep.subr.bf16.mxu0 0
        %1800 = vmatpush1.bf16.msra.mxu0 0
        %1801 = vmatprep.subr.bf16.mxu0 0
        %1802 = vmatpush1.bf16.msra.mxu0 0
        %1803 = vmatprep.subr.bf16.mxu0 0
        %1804 = vmatpush1.bf16.msra.mxu0 0
        %1805 = vmatprep.subr.bf16.mxu0 0
        %1806 = vmatpush1.bf16.msra.mxu0 0
        %1807 = vmatprep.subr.bf16.mxu0 0
        %1808 = vmatpush1.bf16.msra.mxu0 0
        %1809 = vmatprep.subr.bf16.mxu0 0
        %1810 = vmatpush1.bf16.msra.mxu0 %v1793
        %1811 = vmatprep.subr.bf16.mxu0 0
        %1812 = vmatpush2.bf16.msra.mxu0 0
        %1813 = vmatprep.subr.bf16.mxu0 0
        %1814 = vmatpush2.bf16.msra.mxu0 0
        %1815 = vmatprep.subr.bf16.mxu0 0
        %1816 = vmatpush2.bf16.msra.mxu0 0
        %1817 = vmatprep.subr.bf16.mxu0 0
        %1818 = vmatpush2.bf16.msra.mxu0 0
        %1819 = vmatprep.subr.bf16.mxu0 0
        %1820 = vmatpush2.bf16.msra.mxu0 0
        %1821 = vmatprep.subr.bf16.mxu0 0
        %1822 = vmatpush2.bf16.msra.mxu0 0
        %1823 = vmatprep.subr.bf16.mxu0 0
        %1824 = vmatpush2.bf16.msra.mxu0 0
        %1825 = vmatprep.subr.bf16.mxu0 0
        %1826 = vmatpush2.bf16.msra.mxu0 0
        %1827 = vmatprep.mubr.bf16.mxu0 0
        %1828 = vmatmul.mubr.bf16.gmra.mxu0 %v1790
        %v1829 = vpop.f32.mrf.mxu0
        %v1830 = vadd.f32 0.0, %v1829
        %v1831 = vpop.f32.mrf.mxu0
        %v1832 = vpop.f32.mrf.mxu0
        %v1833 = vadd.f32 0.0, %v1832
        %v1834 = vpop.f32.mrf.mxu0
        %1835 = vdwg.mxu0
        %v1836 = vpack.c.bf16 %v1670, %v1669
        %v1838 = vrot.slane %v1836, 1
        %1839 = vrot.lane.b32.xlu0 %v1346, 40
        %v1840 = vpop.permute.xlu0 %1839
        %v1842 = vsel %vm1593, %v1838, 0
        %v1845 = vsel %vm1677, %v1840, 0
        %1847 = vmatprep.subr.bf16.mxu0 0
        %1848 = vmatpush1.bf16.msra.mxu0 0
        %1849 = vmatprep.subr.bf16.mxu0 0
        %1850 = vmatpush1.bf16.msra.mxu0 0
        %1851 = vmatprep.subr.bf16.mxu0 0
        %1852 = vmatpush1.bf16.msra.mxu0 0
        %1853 = vmatprep.subr.bf16.mxu0 0
        %1854 = vmatpush1.bf16.msra.mxu0 0
        %1855 = vmatprep.subr.bf16.mxu0 0
        %1856 = vmatpush1.bf16.msra.mxu0 0
        %1857 = vmatprep.subr.bf16.mxu0 0
        %1858 = vmatpush1.bf16.msra.mxu0 0
        %1859 = vmatprep.subr.bf16.mxu0 0
        %1860 = vmatpush1.bf16.msra.mxu0 0
        %1861 = vmatprep.subr.bf16.mxu0 0
        %1862 = vmatpush1.bf16.msra.mxu0 %v1845
        %1863 = vmatprep.subr.bf16.mxu0 0
        %1864 = vmatpush2.bf16.msra.mxu0 0
        %1865 = vmatprep.subr.bf16.mxu0 0
        %1866 = vmatpush2.bf16.msra.mxu0 0
        %1867 = vmatprep.subr.bf16.mxu0 0
        %1868 = vmatpush2.bf16.msra.mxu0 0
        %1869 = vmatprep.subr.bf16.mxu0 0
        %1870 = vmatpush2.bf16.msra.mxu0 0
        %1871 = vmatprep.subr.bf16.mxu0 0
        %1872 = vmatpush2.bf16.msra.mxu0 0
        %1873 = vmatprep.subr.bf16.mxu0 0
        %1874 = vmatpush2.bf16.msra.mxu0 0
        %1875 = vmatprep.subr.bf16.mxu0 0
        %1876 = vmatpush2.bf16.msra.mxu0 0
        %1877 = vmatprep.subr.bf16.mxu0 0
        %1878 = vmatpush2.bf16.msra.mxu0 0
        %1879 = vmatprep.mubr.bf16.mxu0 0
        %1880 = vmatmul.mubr.bf16.gmra.mxu0 %v1842
        %v1881 = vpop.f32.mrf.mxu0
        %v1882 = vadd.f32 0.0, %v1881
        %v1883 = vpop.f32.mrf.mxu0
        %v1884 = vpop.f32.mrf.mxu0
        %v1885 = vadd.f32 0.0, %v1884
        %v1886 = vpop.f32.mrf.mxu0
        %1887 = vdwg.mxu0
        %1890 = vrot.lane.b32.xlu0 %v1773, 8
        %v1891 = vpop.permute.xlu0 %1890
        %1892 = vrot.lane.b32.xlu0 %v1776, 8
        %v1893 = vpop.permute.xlu0 %1892
        %1898 = vrot.lane.b32.xlu0 %v1830, 16
        %v1899 = vpop.permute.xlu0 %1898
        %1900 = vrot.lane.b32.xlu0 %v1833, 16
        %v1901 = vpop.permute.xlu0 %1900
        %1906 = vrot.lane.b32.xlu0 %v1882, 24
        %v1907 = vpop.permute.xlu0 %1906
        %1908 = vrot.lane.b32.xlu0 %v1885, 24
        %v1909 = vpop.permute.xlu0 %1908
        %v1912 = vsel %vm1350, %v1716, %v1891
        %v1913 = vsel %vm1350, %v1719, %v1893
        %vm1914 = vcmask 130048
        %v1915 = vsel %vm1914, %v1912, %v1899
        %v1916 = vsel %vm1914, %v1913, %v1901
        %vm1917 = vcmask 195584
        %v1918 = vsel %vm1917, %v1915, %v1907
        %v1919 = vsel %vm1917, %v1916, %v1909
        %v1920 = vpack.c.bf16 %v1919, %v1918
        %v1921 = vld [vmem:[%s1040] sm:$0xf]
        %v1922 = vld [vmem:[%s1040 + $0x4] sm:$0xf]
        %v1923 = vld [vmem:[%s1040 + $0x8] sm:$0xf]
        %v1924 = vld [vmem:[%s1040 + $0xc] sm:$0xf]
        %v1925 = vld [vmem:[%s1043] sm:$0x1]
        %v1927 = vlaneseq
        %v1928 = vshrl.u32 %v1927, 7
        %v1929 = vsub.s32 0, %v1928
        %v1930 = vrot.slane %v1925, %v1929
        %v1936 = vunpack.c.l.b16 %v1921
        %v1937 = vunpack.c.l.b16 %v1922
        %v1938 = vunpack.c.l.b16 %v1923
        %v1939 = vunpack.c.l.b16 %v1924
        %v1940 = vpack.c.b16 %v1937, %v1936
        %v1941 = vpack.c.b16 %v1939, %v1938
        %v1945 = vsel %vm1232, %v1920, 0
        %1947 = vmatprep.subr.bf16.mxu0 0
        %1948 = vmatpush1.bf16.msra.mxu0 0
        %1949 = vmatprep.subr.bf16.mxu0 0
        %1950 = vmatpush1.bf16.msra.mxu0 0
        %1951 = vmatprep.subr.bf16.mxu0 0
        %1952 = vmatpush1.bf16.msra.mxu0 0
        %1953 = vmatprep.subr.bf16.mxu0 0
        %1954 = vmatpush1.bf16.msra.mxu0 0
        %1955 = vmatprep.subr.bf16.mxu0 0
        %1956 = vmatpush1.bf16.msra.mxu0 0
        %1957 = vmatprep.subr.bf16.mxu0 0
        %1958 = vmatpush1.bf16.msra.mxu0 0
        %1959 = vmatprep.subr.bf16.mxu0 0
        %1960 = vmatpush1.bf16.msra.mxu0 %v1941
        %1961 = vmatprep.subr.bf16.mxu0 0
        %1962 = vmatpush1.bf16.msra.mxu0 %v1940
        %1963 = vmatprep.subr.bf16.mxu0 0
        %1964 = vmatpush2.bf16.msra.mxu0 0
        %1965 = vmatprep.subr.bf16.mxu0 0
        %1966 = vmatpush2.bf16.msra.mxu0 0
        %1967 = vmatprep.subr.bf16.mxu0 0
        %1968 = vmatpush2.bf16.msra.mxu0 0
        %1969 = vmatprep.subr.bf16.mxu0 0
        %1970 = vmatpush2.bf16.msra.mxu0 0
        %1971 = vmatprep.subr.bf16.mxu0 0
        %1972 = vmatpush2.bf16.msra.mxu0 0
        %1973 = vmatprep.subr.bf16.mxu0 0
        %1974 = vmatpush2.bf16.msra.mxu0 0
        %1975 = vmatprep.subr.bf16.mxu0 0
        %1976 = vmatpush2.bf16.msra.mxu0 0
        %1977 = vmatprep.subr.bf16.mxu0 0
        %1978 = vmatpush2.bf16.msra.mxu0 0
        %1979 = vmatprep.mubr.bf16.mxu0 0
        %1980 = vmatmul.mubr.bf16.gmra.mxu0 %v1945
        %v1981 = vpop.f32.mrf.mxu0
        %v1982 = vadd.f32 %v1930, %v1981
        %v1983 = vpop.f32.mrf.mxu0
        %v1984 = vpop.f32.mrf.mxu0
        %v1985 = vadd.f32 %v1930, %v1984
        %v1986 = vpop.f32.mrf.mxu0
        %1987 = vdwg.mxu0
        %v1988 = vadd.f32 %v1228, %v1982
        %v1989 = vadd.f32 %v1229, %v1985
        %v1990 = vld [vmem:[%s1052] sm:$0x1]
        %v1991 = vld [vmem:[%s1055] sm:$0x1]
        %v1992 = vsel %vm1232, %v1988, 0.0
        %1993 = vadd.xlane.f32.xlu0 %v1992
        %v1994 = vpop.xlane.xlu0 %1993
        %v1995 = vsel %vm1236, %v1989, 0.0
        %1996 = vadd.xlane.f32.xlu0 %v1995
        %v1997 = vpop.xlane.xlu0 %1996
        %v1998 = vmul.f32 %v1994, %v1240
        %v1999 = vmul.f32 %v1997, %v1240
        %v2000 = vsub.f32 %v1988, %v1998
        %v2001 = vsub.f32 %v1989, %v1999
        %v2002 = vmul.f32 %v2000, %v2000
        %v2003 = vmul.f32 %v2001, %v2001
        %v2004 = vsel %vm1232, %v2002, 0.0
        %2005 = vadd.xlane.f32.xlu0 %v2004
        %v2006 = vpop.xlane.xlu0 %2005
        %v2007 = vsel %vm1236, %v2003, 0.0
        %2008 = vadd.xlane.f32.xlu0 %v2007
        %v2009 = vpop.xlane.xlu0 %2008
        %v2010 = vmul.f32 %v2006, %v1240
        %v2011 = vmul.f32 %v2009, %v1240
        %v2012 = vadd.f32 %v2010, 1e-12
        %v2013 = vadd.f32 %v2011, 1e-12
        %v2014 = vrsqrt.pop %v2012
        %v2015 = vrsqrt.pop %v2013
        %v2016 = vmul.f32 %v2000, %v2014
        %v2017 = vmul.f32 %v2001, %v2015
        %v2019 = vlaneseq
        %v2020 = vshrl.u32 %v2019, 7
        %v2021 = vsub.s32 0, %v2020
        %v2022 = vrot.slane %v1990, %v2021
        %v2024 = vmul.f32 %v2016, %v2022
        %v2025 = vmul.f32 %v2017, %v2022
        %v2027 = vlaneseq
        %v2028 = vshrl.u32 %v2027, 7
        %v2029 = vsub.s32 0, %v2028
        %v2030 = vrot.slane %v1991, %v2029
        %v2032 = vadd.f32 %v2024, %v2030
        %v2033 = vadd.f32 %v2025, %v2030
        %v2034 = vpack.c.bf16 %v2033, %v2032
        %v2035 = vld [vmem:[%s1060] sm:$0xf]
        %v2036 = vld [vmem:[%s1060 + $0x4] sm:$0xf]
        %v2037 = vld [vmem:[%s1060 + $0x8] sm:$0xf]
        %v2038 = vld [vmem:[%s1060 + $0xc] sm:$0xf]
        %v2039 = vld [vmem:[%s1063] sm:$0x1]
        %v2041 = vlaneseq
        %v2042 = vshrl.u32 %v2041, 7
        %v2043 = vsub.s32 0, %v2042
        %v2044 = vrot.slane %v2039, %v2043
        %v2050 = vunpack.c.l.b16 %v2035
        %v2051 = vunpack.c.l.b16 %v2036
        %v2052 = vunpack.c.l.b16 %v2037
        %v2053 = vunpack.c.l.b16 %v2038
        %v2054 = vpack.c.b16 %v2051, %v2050
        %v2055 = vpack.c.b16 %v2053, %v2052
        %v2059 = vsel %vm1232, %v2034, 0
        %2061 = vmatprep.subr.bf16.mxu0 0
        %2062 = vmatpush1.bf16.msra.mxu0 0
        %2063 = vmatprep.subr.bf16.mxu0 0
        %2064 = vmatpush1.bf16.msra.mxu0 0
        %2065 = vmatprep.subr.bf16.mxu0 0
        %2066 = vmatpush1.bf16.msra.mxu0 0
        %2067 = vmatprep.subr.bf16.mxu0 0
        %2068 = vmatpush1.bf16.msra.mxu0 0
        %2069 = vmatprep.subr.bf16.mxu0 0
        %2070 = vmatpush1.bf16.msra.mxu0 0
        %2071 = vmatprep.subr.bf16.mxu0 0
        %2072 = vmatpush1.bf16.msra.mxu0 0
        %2073 = vmatprep.subr.bf16.mxu0 0
        %2074 = vmatpush1.bf16.msra.mxu0 %v2055
        %2075 = vmatprep.subr.bf16.mxu0 0
        %2076 = vmatpush1.bf16.msra.mxu0 %v2054
        %2077 = vmatprep.subr.bf16.mxu0 0
        %2078 = vmatpush2.bf16.msra.mxu0 0
        %2079 = vmatprep.subr.bf16.mxu0 0
        %2080 = vmatpush2.bf16.msra.mxu0 0
        %2081 = vmatprep.subr.bf16.mxu0 0
        %2082 = vmatpush2.bf16.msra.mxu0 0
        %2083 = vmatprep.subr.bf16.mxu0 0
        %2084 = vmatpush2.bf16.msra.mxu0 0
        %2085 = vmatprep.subr.bf16.mxu0 0
        %2086 = vmatpush2.bf16.msra.mxu0 0
        %2087 = vmatprep.subr.bf16.mxu0 0
        %2088 = vmatpush2.bf16.msra.mxu0 0
        %2089 = vmatprep.subr.bf16.mxu0 0
        %2090 = vmatpush2.bf16.msra.mxu0 0
        %2091 = vmatprep.subr.bf16.mxu0 0
        %2092 = vmatpush2.bf16.msra.mxu0 0
        %2093 = vmatprep.mubr.bf16.mxu0 0
        %2094 = vmatmul.mubr.bf16.gmra.mxu0 %v2059
        %v2095 = vpop.f32.mrf.mxu0
        %v2096 = vadd.f32 %v2044, %v2095
        %v2097 = vpop.f32.mrf.mxu0
        %v2098 = vpop.f32.mrf.mxu0
        %v2099 = vadd.f32 %v2044, %v2098
        %v2100 = vpop.f32.mrf.mxu0
        %2101 = vdwg.mxu0
        %v2102 = vmul.f32 %v2096, 0.5
        %v2103 = vmul.f32 %v2099, 0.5
        %v2104 = vmul.f32 %v2096, 0.70710677
        %v2105 = vmul.f32 %v2099, 0.70710677
        %v2106 = verf.f32.pop %v2104
        %v2107 = verf.f32.pop %v2105
        %v2108 = vadd.f32 %v2106, 1.0
        %v2109 = vadd.f32 %v2107, 1.0
        %v2110 = vmul.f32 %v2102, %v2108
        %v2111 = vmul.f32 %v2103, %v2109
        %v2112 = vpack.c.bf16 %v2111, %v2110
        %v2113 = vld [vmem:[%s1068] sm:$0xf]
        %v2114 = vld [vmem:[%s1068 + $0x4] sm:$0xf]
        %v2115 = vld [vmem:[%s1068 + $0x8] sm:$0xf]
        %v2116 = vld [vmem:[%s1068 + $0xc] sm:$0xf]
        %v2117 = vld [vmem:[%s1068 + $0x10] sm:$0xf]
        %v2118 = vld [vmem:[%s1068 + $0x14] sm:$0xf]
        %v2119 = vld [vmem:[%s1068 + $0x18] sm:$0xf]
        %v2120 = vld [vmem:[%s1068 + $0x1c] sm:$0xf]
        %v2121 = vld [vmem:[%s1071] sm:$0x1]
        %v2123 = vlaneseq
        %v2124 = vshrl.u32 %v2123, 7
        %v2125 = vsub.s32 0, %v2124
        %v2126 = vrot.slane %v2121, %v2125
        %v2136 = vunpack.c.l.b16 %v2113
        %v2137 = vunpack.c.l.b16 %v2114
        %v2138 = vunpack.c.l.b16 %v2115
        %v2139 = vunpack.c.l.b16 %v2116
        %v2140 = vunpack.c.l.b16 %v2117
        %v2141 = vunpack.c.l.b16 %v2118
        %v2142 = vunpack.c.l.b16 %v2119
        %v2143 = vunpack.c.l.b16 %v2120
        %v2144 = vpack.c.b16 %v2137, %v2136
        %v2145 = vpack.c.b16 %v2139, %v2138
        %v2146 = vpack.c.b16 %v2141, %v2140
        %v2147 = vpack.c.b16 %v2143, %v2142
        %vm2152 = vcmask 523264
        %v2154 = vsel %vm2152, %v2112, 0
        %2156 = vmatprep.subr.bf16.mxu0 0
        %2157 = vmatpush1.bf16.msra.mxu0 0
        %2158 = vmatprep.subr.bf16.mxu0 0
        %2159 = vmatpush1.bf16.msra.mxu0 0
        %2160 = vmatprep.subr.bf16.mxu0 0
        %2161 = vmatpush1.bf16.msra.mxu0 0
        %2162 = vmatprep.subr.bf16.mxu0 0
        %2163 = vmatpush1.bf16.msra.mxu0 0
        %2164 = vmatprep.subr.bf16.mxu0 0
        %2165 = vmatpush1.bf16.msra.mxu0 %v2147
        %2166 = vmatprep.subr.bf16.mxu0 0
        %2167 = vmatpush1.bf16.msra.mxu0 %v2146
        %2168 = vmatprep.subr.bf16.mxu0 0
        %2169 = vmatpush1.bf16.msra.mxu0 %v2145
        %2170 = vmatprep.subr.bf16.mxu0 0
        %2171 = vmatpush1.bf16.msra.mxu0 %v2144
        %2172 = vmatprep.subr.bf16.mxu0 0
        %2173 = vmatpush2.bf16.msra.mxu0 0
        %2174 = vmatprep.subr.bf16.mxu0 0
        %2175 = vmatpush2.bf16.msra.mxu0 0
        %2176 = vmatprep.subr.bf16.mxu0 0
        %2177 = vmatpush2.bf16.msra.mxu0 0
        %2178 = vmatprep.subr.bf16.mxu0 0
        %2179 = vmatpush2.bf16.msra.mxu0 0
        %2180 = vmatprep.subr.bf16.mxu0 0
        %2181 = vmatpush2.bf16.msra.mxu0 0
        %2182 = vmatprep.subr.bf16.mxu0 0
        %2183 = vmatpush2.bf16.msra.mxu0 0
        %2184 = vmatprep.subr.bf16.mxu0 0
        %2185 = vmatpush2.bf16.msra.mxu0 0
        %2186 = vmatprep.subr.bf16.mxu0 0
        %2187 = vmatpush2.bf16.msra.mxu0 0
        %2188 = vmatprep.mubr.bf16.mxu0 0
        %2189 = vmatmul.mubr.bf16.gmra.mxu0 %v2154
        %v2190 = vpop.f32.mrf.mxu0
        %v2191 = vadd.f32 %v2126, %v2190
        %v2192 = vpop.f32.mrf.mxu0
        %v2193 = vpop.f32.mrf.mxu0
        %v2194 = vadd.f32 %v2126, %v2193
        %v2195 = vpop.f32.mrf.mxu0
        %2196 = vdwg.mxu0
        %v2197 = vadd.f32 %v1988, %v2191
        %v2198 = vadd.f32 %v1989, %v2194
        %2199 = vst.msk [vmem:[#allocation2] sm:$0xff] %vm1232, %v2197
        %2200 = vst.msk [vmem:[#allocation2 + $0x8] sm:$0x3f] %vm1236, %v2198
        %p2201 = scmp.eq.s32.totalorder %s51, 1
        // Predicated region
        $region133: #{flava_forward.5} parent=123 // pred_check
          %p2202 = pneg %p2201
        $region134: #{flava_forward.5} parent=123 // pred_check_branch
          %2204 = sbr.rel (%p2202) target = $region136
        $region135: #{flava_forward.5} parent=123 // pred_region
          %v2205 = vld [vmem:[%s20] sm:$0x1]
          %v2206 = vld [vmem:[%s21] sm:$0x1]
          %v2207 = vsel %vm1232, %v2197, 0.0
          %2208 = vadd.xlane.f32.xlu0 %v2207
          %v2209 = vpop.xlane.xlu0 %2208
          %v2210 = vsel %vm1236, %v2198, 0.0
          %2211 = vadd.xlane.f32.xlu0 %v2210
          %v2212 = vpop.xlane.xlu0 %2211
          %v2213 = vmul.f32 %v2209, %v1240
          %v2214 = vmul.f32 %v2212, %v1240
          %v2215 = vsub.f32 %v2197, %v2213
          %v2216 = vsub.f32 %v2198, %v2214
          %v2217 = vmul.f32 %v2215, %v2215
          %v2218 = vmul.f32 %v2216, %v2216
          %v2219 = vsel %vm1232, %v2217, 0.0
          %2220 = vadd.xlane.f32.xlu0 %v2219
          %v2221 = vpop.xlane.xlu0 %2220
          %v2222 = vsel %vm1236, %v2218, 0.0
          %2223 = vadd.xlane.f32.xlu0 %v2222
          %v2224 = vpop.xlane.xlu0 %2223
          %v2225 = vmul.f32 %v2221, %v1240
          %v2226 = vmul.f32 %v2224, %v1240
          %v2227 = vadd.f32 %v2225, 1e-12
          %v2228 = vadd.f32 %v2226, 1e-12
          %v2229 = vrsqrt.pop %v2227
          %v2230 = vrsqrt.pop %v2228
          %v2231 = vmul.f32 %v2215, %v2229
          %v2232 = vmul.f32 %v2216, %v2230
          %v2234 = vlaneseq
          %v2235 = vshrl.u32 %v2234, 7
          %v2236 = vsub.s32 0, %v2235
          %v2237 = vrot.slane %v2205, %v2236
          %v2239 = vmul.f32 %v2231, %v2237
          %v2240 = vmul.f32 %v2232, %v2237
          %v2242 = vlaneseq
          %v2243 = vshrl.u32 %v2242, 7
          %v2244 = vsub.s32 0, %v2243
          %v2245 = vrot.slane %v2206, %v2244
          %v2247 = vadd.f32 %v2239, %v2245
          %v2248 = vadd.f32 %v2240, %v2245
          %2249 = vst.msk [vmem:[%s1010] sm:$0xff] %vm1232, %v2247
          %2250 = vst.msk [vmem:[%s1010 + $0x8] sm:$0x3f] %vm1236, %v2248
          %v2251 = vld [vmem:[%s22] sm:$0xff]
          %v2252 = vld [vmem:[%s22 + $0x8] sm:$0xff]
          %v2253 = vld [vmem:[%s22 + $0x10] sm:$0xff]
          %v2254 = vld [vmem:[%s22 + $0x18] sm:$0xff]
          %v2255 = vld [vmem:[%s23] sm:$0x1]
          %v2257 = vsel %vm1232, %v2247, 0
          %2259 = vmatprep.subr.mxu0 0.0
          %2260 = vmatpush1.msra.mxu0 0.0
          %2261 = vmatprep.subr.mxu0 0.0
          %2262 = vmatpush1.msra.mxu0 0.0
          %2263 = vmatprep.subr.mxu0 0.0
          %2264 = vmatpush1.msra.mxu0 0.0
          %2265 = vmatprep.subr.mxu0 0.0
          %2266 = vmatpush1.msra.mxu0 0.0
          %2267 = vmatprep.subr.mxu0 0.0
          %2268 = vmatpush1.msra.mxu0 0.0
          %2269 = vmatprep.subr.mxu0 0.0
          %2270 = vmatpush1.msra.mxu0 0.0
          %2271 = vmatprep.subr.mxu0 0.0
          %2272 = vmatpush1.msra.mxu0 0.0
          %2273 = vmatprep.subr.mxu0 0.0
          %2274 = vmatpush1.msra.mxu0 0.0
          %2275 = vmatprep.subr.mxu0 0.0
          %2276 = vmatpush1.msra.mxu0 0.0
          %2277 = vmatprep.subr.mxu0 0.0
          %2278 = vmatpush1.msra.mxu0 0.0
          %2279 = vmatprep.subr.mxu0 0.0
          %2280 = vmatpush1.msra.mxu0 0.0
          %2281 = vmatprep.subr.mxu0 0.0
          %2282 = vmatpush1.msra.mxu0 0.0
          %2283 = vmatprep.subr.mxu0 0.0
          %2284 = vmatpush1.msra.mxu0 %v2254
          %2285 = vmatprep.subr.mxu0 0.0
          %2286 = vmatpush1.msra.mxu0 %v2253
          %2287 = vmatprep.subr.mxu0 0.0
          %2288 = vmatpush1.msra.mxu0 %v2252
          %2289 = vmatprep.subr.mxu0 0.0
          %2290 = vmatpush1.msra.mxu0 %v2251
          %2291 = vmatprep.subr.mxu0 0.0
          %2292 = vmatpush2.msra.mxu0 0.0
          %2293 = vmatprep.subr.mxu0 0.0
          %2294 = vmatpush2.msra.mxu0 0.0
          %2295 = vmatprep.subr.mxu0 0.0
          %2296 = vmatpush2.msra.mxu0 0.0
          %2297 = vmatprep.subr.mxu0 0.0
          %2298 = vmatpush2.msra.mxu0 0.0
          %2299 = vmatprep.subr.mxu0 0.0
          %2300 = vmatpush2.msra.mxu0 0.0
          %2301 = vmatprep.subr.mxu0 0.0
          %2302 = vmatpush2.msra.mxu0 0.0
          %2303 = vmatprep.subr.mxu0 0.0
          %2304 = vmatpush2.msra.mxu0 0.0
          %2305 = vmatprep.subr.mxu0 0.0
          %2306 = vmatpush2.msra.mxu0 0.0
          %2307 = vmatprep.subr.mxu0 0.0
          %2308 = vmatpush2.msra.mxu0 0.0
          %2309 = vmatprep.subr.mxu0 0.0
          %2310 = vmatpush2.msra.mxu0 0.0
          %2311 = vmatprep.subr.mxu0 0.0
          %2312 = vmatpush2.msra.mxu0 0.0
          %2313 = vmatprep.subr.mxu0 0.0
          %2314 = vmatpush2.msra.mxu0 0.0
          %2315 = vmatprep.subr.mxu0 0.0
          %2316 = vmatpush2.msra.mxu0 0.0
          %2317 = vmatprep.subr.mxu0 0.0
          %2318 = vmatpush2.msra.mxu0 0.0
          %2319 = vmatprep.subr.mxu0 0.0
          %2320 = vmatpush2.msra.mxu0 0.0
          %2321 = vmatprep.subr.mxu0 0.0
          %2322 = vmatpush2.msra.mxu0 0.0
          %2323 = vmatprep.mubr.f32.mxu0 0.0
          %2324 = vmatmul.mubr.f32.gmra.mxu0 %v2257
          %v2325 = vpop.f32.mrf.mxu0
          %v2326 = vadd.f32 %v2255, %v2325
          %v2327 = vpop.f32.mrf.mxu0
          %2328 = vdwg.mxu0
          %v2329 = vtanh.pop %v2326
          %v2330 = vld [vmem:[%s24] sm:$0xff]
          %v2331 = vld [vmem:[%s24 + $0x8] sm:$0xff]
          %v2332 = vld [vmem:[%s24 + $0x10] sm:$0xff]
          %v2333 = vld [vmem:[%s24 + $0x18] sm:$0xff]
          %v2334 = vld [vmem:[#allocation3] sm:$0x1]
          %v2336 = vsel %vm1232, %v2329, 0
          %2338 = vmatprep.subr.mxu0 0.0
          %2339 = vmatpush1.msra.mxu0 0.0
          %2340 = vmatprep.subr.mxu0 0.0
          %2341 = vmatpush1.msra.mxu0 0.0
          %2342 = vmatprep.subr.mxu0 0.0
          %2343 = vmatpush1.msra.mxu0 0.0
          %2344 = vmatprep.subr.mxu0 0.0
          %2345 = vmatpush1.msra.mxu0 0.0
          %2346 = vmatprep.subr.mxu0 0.0
          %2347 = vmatpush1.msra.mxu0 0.0
          %2348 = vmatprep.subr.mxu0 0.0
          %2349 = vmatpush1.msra.mxu0 0.0
          %2350 = vmatprep.subr.mxu0 0.0
          %2351 = vmatpush1.msra.mxu0 0.0
          %2352 = vmatprep.subr.mxu0 0.0
          %2353 = vmatpush1.msra.mxu0 0.0
          %2354 = vmatprep.subr.mxu0 0.0
          %2355 = vmatpush1.msra.mxu0 0.0
          %2356 = vmatprep.subr.mxu0 0.0
          %2357 = vmatpush1.msra.mxu0 0.0
          %2358 = vmatprep.subr.mxu0 0.0
          %2359 = vmatpush1.msra.mxu0 0.0
          %2360 = vmatprep.subr.mxu0 0.0
          %2361 = vmatpush1.msra.mxu0 0.0
          %2362 = vmatprep.subr.mxu0 0.0
          %2363 = vmatpush1.msra.mxu0 %v2333
          %2364 = vmatprep.subr.mxu0 0.0
          %2365 = vmatpush1.msra.mxu0 %v2332
          %2366 = vmatprep.subr.mxu0 0.0
          %2367 = vmatpush1.msra.mxu0 %v2331
          %2368 = vmatprep.subr.mxu0 0.0
          %2369 = vmatpush1.msra.mxu0 %v2330
          %2370 = vmatprep.subr.mxu0 0.0
          %2371 = vmatpush2.msra.mxu0 0.0
          %2372 = vmatprep.subr.mxu0 0.0
          %2373 = vmatpush2.msra.mxu0 0.0
          %2374 = vmatprep.subr.mxu0 0.0
          %2375 = vmatpush2.msra.mxu0 0.0
          %2376 = vmatprep.subr.mxu0 0.0
          %2377 = vmatpush2.msra.mxu0 0.0
          %2378 = vmatprep.subr.mxu0 0.0
          %2379 = vmatpush2.msra.mxu0 0.0
          %2380 = vmatprep.subr.mxu0 0.0
          %2381 = vmatpush2.msra.mxu0 0.0
          %2382 = vmatprep.subr.mxu0 0.0
          %2383 = vmatpush2.msra.mxu0 0.0
          %2384 = vmatprep.subr.mxu0 0.0
          %2385 = vmatpush2.msra.mxu0 0.0
          %2386 = vmatprep.subr.mxu0 0.0
          %2387 = vmatpush2.msra.mxu0 0.0
          %2388 = vmatprep.subr.mxu0 0.0
          %2389 = vmatpush2.msra.mxu0 0.0
          %2390 = vmatprep.subr.mxu0 0.0
          %2391 = vmatpush2.msra.mxu0 0.0
          %2392 = vmatprep.subr.mxu0 0.0
          %2393 = vmatpush2.msra.mxu0 0.0
          %2394 = vmatprep.subr.mxu0 0.0
          %2395 = vmatpush2.msra.mxu0 0.0
          %2396 = vmatprep.subr.mxu0 0.0
          %2397 = vmatpush2.msra.mxu0 0.0
          %2398 = vmatprep.subr.mxu0 0.0
          %2399 = vmatpush2.msra.mxu0 0.0
          %2400 = vmatprep.subr.mxu0 0.0
          %2401 = vmatpush2.msra.mxu0 0.0
          %2402 = vmatprep.mubr.f32.mxu0 0.0
          %2403 = vmatmul.mubr.f32.gmra.mxu0 %v2336
          %v2404 = vpop.f32.mrf.mxu0
          %v2405 = vadd.f32 %v2334, %v2404
          %v2406 = vpop.f32.mrf.mxu0
          %2407 = vdwg.mxu0
          %vm2408 = vcmask 16384
          %2409 = vst.msk [vmem:[%s1016] sm:$0x1] %vm2408, %v2405
        $region136: #{flava_forward.5} parent=123 // pred_fallthru
          _
        %s2410 = sand.u32 %s687, 1
        %s2411 = scalar_lea.sflag [#allocation5], %s2410
        %s2412 = sand.u32 %s687, 1
        %s2413 = smul.addr %s2412, 16
        %s2414 = scalar_lea.vmem [#allocation6], %s2413
        %s2415 = sand.u32 %s713, 1
        %s2416 = scalar_lea.sflag [#allocation8], %s2415
        %s2417 = sand.u32 %s713, 1
        %s2418 = scalar_lea.vmem [#allocation7], %s2417
        // Predicated region
        $region137: #{flava_forward.5} parent=123 // pred_check
          %p2419 = pneg %p697
        $region138: #{flava_forward.5} parent=123 // pred_check_branch
          %2421 = sbr.rel (%p2419) target = $region140
        $region139: #{flava_forward.5} parent=123 // pred_region
          %s2423 = ssub.s32 256, 256
          %2424 = vsyncadd %s2411, %s2423
          %s2425 = smul.addr %s50, 2
          %s2426 = smul.addr %s2425, 128
          %s2427 = scalar_lea.hbm %s26, %s2426
          %s2428 = sshll.u32 %s2414, 4
          %s2429 = int_to_ptr.vmem [resolvable:$true] %s2428
          %2434 = dma.vmem_to_hbm [thread:$0]  %s2429, 256, %s2427, %s2411, 128, 128, 8
        $region140: #{flava_forward.5} parent=123 // pred_fallthru
          _
        // Predicated region
        $region141: #{flava_forward.5} parent=123 // pred_check
          %p2435 = pneg %p723
        $region142: #{flava_forward.5} parent=123 // pred_check_branch
          %2437 = sbr.rel (%p2435) target = $region144
        $region143: #{flava_forward.5} parent=123 // pred_region
          %s2439 = ssub.s32 16, 16
          %2440 = vsyncadd %s2416, %s2439
          %s2441 = smul.addr %s50, 16
          %s2442 = scalar_lea.hbm %s27, %s2441
          %s2444 = sshll.u32 %s2418, 4
          %s2445 = int_to_ptr.vmem [resolvable:$true] %s2444
          %2447 = dma.vmem_to_hbm [thread:$0]  %s2445, 16, %s2442, %s2416
        $region144: #{flava_forward.5} parent=123 // pred_fallthru
          _
      $region124: #{flava_forward.5} parent=5 // pred_fallthru
        _
      %p2448 = scmp.le.s32.totalorder 2, %s41
      // Predicated region
      $region145: #{flava_forward.5} parent=5 // pred_check
        %p2449 = pneg %p2448
      $region146: #{flava_forward.5} parent=5 // pred_check_branch
        %2451 = sbr.rel (%p2449) target = $region148
      $region147: #{flava_forward.5} parent=5 // pred_region
        %s2452 = ssub.s32 %s41, 2
        // Predicated region
        $region149: #{flava_forward.5} parent=147 // pred_check
          %p2453 = pneg %p703
        $region150: #{flava_forward.5} parent=147 // pred_check_branch
          %2455 = sbr.rel (%p2453) target = $region152
        $region151: #{flava_forward.5} parent=147 // pred_region
          %s2456 = sand.u32 %s688, 1
          %s2457 = scalar_lea.sflag [#allocation5], %s2456
          %s2458 = sand.u32 %s688, 1
          %s2459 = smul.addr %s2458, 16
          %s2460 = scalar_lea.vmem [#allocation6], %s2459
          %2461 = dma.done %s2457, 256
        $region152: #{flava_forward.5} parent=147 // pred_fallthru
          _
        // Predicated region
        $region153: #{flava_forward.5} parent=147 // pred_check
          %p2462 = pneg %p729
        $region154: #{flava_forward.5} parent=147 // pred_check_branch
          %2464 = sbr.rel (%p2462) target = $region156
        $region155: #{flava_forward.5} parent=147 // pred_region
          %s2465 = sand.u32 %s714, 1
          %s2466 = scalar_lea.sflag [#allocation8], %s2465
          %s2467 = sand.u32 %s714, 1
          %s2468 = scalar_lea.vmem [#allocation7], %s2467
          %2469 = dma.done %s2466, 16
        $region156: #{flava_forward.5} parent=147 // pred_fallthru
          _
      $region148: #{flava_forward.5} parent=5 // pred_fallthru
        _
    $region6: #{flava_forward.5} parent=1 // loop_footer
      %s45 = sadd.s32 1, %s41
    $region7: #{flava_forward.5} parent=1 // loop_footer_branch
      %40 = sbr.rel target = $region3
    $region8: #{flava_forward.5} parent=1 // loop_exit
      _
    %2470 = vsyncpa [#allocation4], 1
    %s2471 = scalar_lea.sflag [#allocation4], 1
    %2472 = vsyncpa %s2471, 1
    %2473 = vsyncpa [#allocation5], 1
    %s2474 = scalar_lea.sflag [#allocation5], 1
    %2475 = vsyncpa %s2474, 1
    %2476 = vsyncpa [#allocation8], 1
    %s2477 = scalar_lea.sflag [#allocation8], 1
    %2478 = vsyncpa %s2477, 1

</llo_original>
